<compile_context>
chip_gen: v5e
topology: v5e:2x2
jax: 0.10.0
libtpu: 0.0.40
codegen_flags: <defaults>
</compile_context>

<pallas_src>
import numpy as np

import jax
import jax.numpy as jnp
from jax.experimental import pallas as pl
from jax.experimental.pallas import tpu as pltpu

BN_EPS = 1e-5
XLEN = 788          # 28*28 input flat length + 4 tail zeros (max tap off 58 + M1 730)


# ------------------------------ in-kernel helpers ----------------------------

def _conv_bn(x, w_ref, aff_ref, *, K, W, M, relu):
    """Valid KxK conv (stride 1) on a flattened (Cin, L) slab -> (Cout, M).

    x:       (Cin, L) value, row-major flat spatial with row width W, L >= (K-1)*(W+1)+M
    w_ref:   (K*K, Cout, Cin) weights (tap-major)
    aff_ref: (2, Cout, 1) folded BatchNorm (+bias) affine: [scale, shift]
    """
    acc = jnp.dot(w_ref[0], x[:, 0:M], preferred_element_type=jnp.float32)
    for t in range(1, K * K):
        off = (t // K) * W + (t % K)
        acc = acc + jnp.dot(w_ref[t], x[:, off:off + M],
                            preferred_element_type=jnp.float32)
    if relu:
        acc = jnp.maximum(acc, 0.0)
    return acc * aff_ref[0] + aff_ref[1]


def _maxpool2x2(x, s_ref, *, W):
    """2x2 / stride-2 max pool on a flat (C, L) slab with row width W.

    Tap-shifted lane slices + elementwise max build the window maxima; a single
    constant selection matmul gathers the stride-2 positions into a dense flat
    layout (dropping garbage / right-edge columns in the same op).
    """
    L = s_ref.shape[0]
    m = x[:, 0:L]
    for d in (1, W, W + 1):
        m = jnp.maximum(m, x[:, d:d + L])
    return jnp.dot(m, s_ref[...], preferred_element_type=jnp.float32)


# --------------------------------- fused kernel ------------------------------

def fused_forward_kernel(x_ref,
                         w1, a1, w2, a2, w3, a3, w4, a4, w5, a5, w6, a6, w7, a7,
                         s1_ref, s2_ref, o_ref):
    x = x_ref[0]                                              # (8, 788), Cin padded to 8
    t = _conv_bn(x, w1, a1, K=3, W=28, M=730, relu=True)      # (8, 730)   28->26
    t = _conv_bn(t, w2, a2, K=3, W=28, M=672, relu=True)      # (16, 672)  26->24
    t = _maxpool2x2(t, s1_ref, W=28)                          # (16, 148)  24->12 (+4 pad cols)
    t = _conv_bn(t, w3, a3, K=1, W=12, M=148, relu=False)     # (8, 148)   1x1
    t = _conv_bn(t, w4, a4, K=3, W=12, M=122, relu=True)      # (16, 122)  12->10
    t = _conv_bn(t, w5, a5, K=3, W=12, M=96, relu=True)       # (20, 96)   10->8
    t = _maxpool2x2(t, s2_ref, W=12)                          # (20, 18)   8->4 (+2 pad cols)
    t = _conv_bn(t, w6, a6, K=1, W=4, M=18, relu=False)       # (16, 18)   1x1
    t = _conv_bn(t, w7, a7, K=3, W=4, M=8, relu=True)         # (10, 8)    4->2
    # 2x2 avg pool over the valid 2x2 block (flat width 4 -> taps 0,1,4,5)
    pooled = (t[:, 0:1] + t[:, 1:2] + t[:, 4:5] + t[:, 5:6]) * 0.25   # (10, 1)
    # log-softmax over the 10 channels (sublane axis)
    mx = jnp.max(pooled, axis=0, keepdims=True)
    s = pooled - mx
    lse = jnp.log(jnp.sum(jnp.exp(s), axis=0, keepdims=True))
    o_ref[0] = s - lse                                        # (10, 1)


# --------------------------- constant pooling matrices ------------------------

def _maxpool_select_matrix(w_in, h_valid, w_valid, n_rows, n_cols):
    """0/1 matrix gathering flat index 2p*w_in + 2q -> p*(w_valid//2) + q."""
    ho, wo = h_valid // 2, w_valid // 2
    s = np.zeros((n_rows, n_cols), np.float32)
    for p in range(ho):
        for q in range(wo):
            s[2 * p * w_in + 2 * q, p * wo + q] = 1.0
    return jnp.asarray(s)


# ------------------------------ wrapper / forward -----------------------------

def prepare_kernel_inputs(params):
    """HWIO weights + BN affine -> kernel layout: (K*K, Cout, Cin) and (2, Cout, 1)."""
    ops = []
    for p in params:
        w = p["w"]                                   # (K, K, Cin, Cout)
        K, _, cin, cout = w.shape
        if cin < 8:                                  # keep MXU contraction dim sane
            w = jnp.pad(w, ((0, 0), (0, 0), (0, 8 - cin), (0, 0)))
            cin = 8
        wk = jnp.transpose(w.reshape(K * K, cin, cout), (0, 2, 1))   # (K*K, Cout, Cin)
        aff = jnp.stack([p["scale"], p["shift"]]).reshape(2, cout, 1)
        ops += [wk, aff]
    return ops


def model4_forward(x_nchw, params, s1, s2):
    # Inference semantics: Dropout(0.02) = identity, BatchNorm uses running stats.
    n = x_nchw.shape[0]
    x = x_nchw.astype(jnp.float32).reshape(n, 1, 28 * 28)
    x = jnp.pad(x, ((0, 0), (0, 7), (0, XLEN - 28 * 28)))    # Cin 1->8, flat tail pad
    layer_inputs = prepare_kernel_inputs(params)

    in_specs = [pl.BlockSpec((1, 8, XLEN), lambda i: (i, 0, 0))]
    in_specs += [pl.BlockSpec(a.shape, lambda i: (0, 0, 0)) for a in layer_inputs]
    in_specs += [pl.BlockSpec(s1.shape, lambda i: (0, 0)),
                 pl.BlockSpec(s2.shape, lambda i: (0, 0))]

    out = pl.pallas_call(
        fused_forward_kernel,
        out_shape=jax.ShapeDtypeStruct((n, 10, 1), jnp.float32),
        grid=(n,),
        in_specs=in_specs,
        out_specs=pl.BlockSpec((1, 10, 1), lambda i: (i, 0, 0)),
        compiler_params=pltpu.CompilerParams(dimension_semantics=("parallel",)),
    )(x, *layer_inputs, s1, s2)
    return out.reshape(n, 10)


# --------------------------- parameters (deterministic) -----------------------

def _bn_affine(key, c):
    kg, kb, km, kv = jax.random.split(key, 4)
    gamma = jax.random.uniform(kg, (c,), jnp.float32, 0.5, 1.5)
    beta = jax.random.uniform(kb, (c,), jnp.float32, -0.1, 0.1)
    rmean = jax.random.uniform(km, (c,), jnp.float32, -0.1, 0.1)
    rvar = jax.random.uniform(kv, (c,), jnp.float32, 0.5, 1.5)
    scale = gamma / jnp.sqrt(rvar + BN_EPS)
    shift = beta - rmean * scale
    return scale, shift


def _conv_w(key, k, cin, cout):
    bound = (1.0 / (cin * k * k)) ** 0.5
    return jax.random.uniform(key, (k, k, cin, cout), jnp.float32, -bound, bound)


def init_params(key):
    # (K, Cin, Cout, relu_before_bn, conv_has_bias) matching Model_4.conv1 structure.
    layer_defs = [
        (3, 1, 8, True, False),
        (3, 8, 16, True, False),
        (1, 16, 8, False, True),
        (3, 8, 16, True, False),
        (3, 16, 20, True, False),
        (1, 20, 16, False, True),
        (3, 16, 10, True, False),
    ]
    params = []
    for (k, cin, cout, relu, has_bias) in layer_defs:
        key, kw, kb, kbn = jax.random.split(key, 4)
        w = _conv_w(kw, k, cin, cout)
        scale, shift = _bn_affine(kbn, cout)
        if has_bias:
            bias = jax.random.uniform(kb, (cout,), jnp.float32, -0.1, 0.1)
            shift = shift + bias * scale          # conv bias folded through BN affine
        params.append({"w": w, "scale": scale, "shift": shift, "relu": relu})
    return params


# ------------------------------ pure-JAX reference ----------------------------

def _ref_forward(x_nchw, params):
    x = jnp.transpose(x_nchw, (0, 2, 3, 1)).astype(jnp.float32)

    def conv(x, w):
        return jax.lax.conv_general_dilated(
            x, w, (1, 1), "VALID", dimension_numbers=("NHWC", "HWIO", "NHWC"))

    def pool(x, op):
        N, H, W, C = x.shape
        xr = x.reshape(N, H // 2, 2, W // 2, 2, C)
        return xr.max(axis=(2, 4)) if op == "max" else xr.mean(axis=(2, 4))

    def block(x, p):
        y = conv(x, p["w"])
        if p["relu"]:
            y = jnp.maximum(y, 0.0)
        return y * p["scale"] + p["shift"]

    p = params
    x = block(x, p[0]); x = block(x, p[1]); x = pool(x, "max")
    x = block(x, p[2]); x = block(x, p[3]); x = block(x, p[4]); x = pool(x, "max")
    x = block(x, p[5]); x = block(x, p[6]); x = pool(x, "avg")
    x = x.reshape(-1, 10)
    return jax.nn.log_softmax(x, axis=-1)


# ----------------------------------- main -------------------------------------

if __name__ == "__main__":
    key = jax.random.PRNGKey(0)
    pkey, xkey = jax.random.split(key)
    params = init_params(pkey)

    # Constant pooling selection matrices (built once, passed as kernel inputs).
    s1 = _maxpool_select_matrix(28, 24, 24, 640, 148)   # 24x24 -> 12x12 (+4 pad cols)
    s2 = _maxpool_select_matrix(12, 8, 8, 80, 18)       # 8x8   -> 4x4  (+2 pad cols)

    # MNIST-like input implied by the module (final feature map must be 1x1x10).
    x = jax.random.normal(xkey, (2, 1, 28, 28), jnp.float32)      # NCHW, like PyTorch

    fwd = jax.jit(lambda inp: model4_forward(inp, params, s1, s2))
    out = fwd(x)
    jax.block_until_ready(out)

    assert out.shape == (2, 10), out.shape
    ref = _ref_forward(x, params)
    assert bool(jnp.allclose(jnp.sum(jnp.exp(out), axis=-1), 1.0, atol=1e-4))
    assert bool(jnp.allclose(out, ref, atol=1e-3, rtol=1e-3)), "mismatch vs JAX reference"

    print("KERNEL_OK")
</pallas_src>

<mosaic_0001>
module attributes {stable_mosaic.version = 11 : i64} {
  func.func @fused_forward_kernel(%arg0: i32, %arg1: memref<1x8x788xf32, #tpu.memory_space<vmem>>, %arg2: memref<9x8x8xf32, #tpu.memory_space<vmem>>, %arg3: memref<2x8x1xf32, #tpu.memory_space<vmem>>, %arg4: memref<9x16x8xf32, #tpu.memory_space<vmem>>, %arg5: memref<2x16x1xf32, #tpu.memory_space<vmem>>, %arg6: memref<1x8x16xf32, #tpu.memory_space<vmem>>, %arg7: memref<2x8x1xf32, #tpu.memory_space<vmem>>, %arg8: memref<9x16x8xf32, #tpu.memory_space<vmem>>, %arg9: memref<2x16x1xf32, #tpu.memory_space<vmem>>, %arg10: memref<9x20x16xf32, #tpu.memory_space<vmem>>, %arg11: memref<2x20x1xf32, #tpu.memory_space<vmem>>, %arg12: memref<1x16x20xf32, #tpu.memory_space<vmem>>, %arg13: memref<2x16x1xf32, #tpu.memory_space<vmem>>, %arg14: memref<9x10x16xf32, #tpu.memory_space<vmem>>, %arg15: memref<2x10x1xf32, #tpu.memory_space<vmem>>, %arg16: memref<640x148xf32, #tpu.memory_space<vmem>>, %arg17: memref<80x18xf32, #tpu.memory_space<vmem>>, %arg18: memref<1x10x1xf32, #tpu.memory_space<vmem>>) attributes {dimension_semantics = [#tpu.dimension_semantics<parallel>], iteration_bounds = array<i64: 2>, scalar_prefetch = 0 : i64, scratch_operands = 0 : i64, tpu.core_type = #tpu.core_type<tc>, window_params = [{transform_indices = @transform_0, window_bounds = array<i64: 1, 8, 788>}, {pipeline_mode = #tpu.pipeline_mode<synchronous>, transform_indices = @transform_1, window_bounds = array<i64: 9, 8, 8>}, {pipeline_mode = #tpu.pipeline_mode<synchronous>, transform_indices = @transform_2, window_bounds = array<i64: 2, 8, 1>}, {pipeline_mode = #tpu.pipeline_mode<synchronous>, transform_indices = @transform_3, window_bounds = array<i64: 9, 16, 8>}, {pipeline_mode = #tpu.pipeline_mode<synchronous>, transform_indices = @transform_4, window_bounds = array<i64: 2, 16, 1>}, {pipeline_mode = #tpu.pipeline_mode<synchronous>, transform_indices = @transform_5, window_bounds = array<i64: 1, 8, 16>}, {pipeline_mode = #tpu.pipeline_mode<synchronous>, transform_indices = @transform_6, window_bounds = array<i64: 2, 8, 1>}, {pipeline_mode = #tpu.pipeline_mode<synchronous>, transform_indices = @transform_7, window_bounds = array<i64: 9, 16, 8>}, {pipeline_mode = #tpu.pipeline_mode<synchronous>, transform_indices = @transform_8, window_bounds = array<i64: 2, 16, 1>}, {pipeline_mode = #tpu.pipeline_mode<synchronous>, transform_indices = @transform_9, window_bounds = array<i64: 9, 20, 16>}, {pipeline_mode = #tpu.pipeline_mode<synchronous>, transform_indices = @transform_10, window_bounds = array<i64: 2, 20, 1>}, {pipeline_mode = #tpu.pipeline_mode<synchronous>, transform_indices = @transform_11, window_bounds = array<i64: 1, 16, 20>}, {pipeline_mode = #tpu.pipeline_mode<synchronous>, transform_indices = @transform_12, window_bounds = array<i64: 2, 16, 1>}, {pipeline_mode = #tpu.pipeline_mode<synchronous>, transform_indices = @transform_13, window_bounds = array<i64: 9, 10, 16>}, {pipeline_mode = #tpu.pipeline_mode<synchronous>, transform_indices = @transform_14, window_bounds = array<i64: 2, 10, 1>}, {pipeline_mode = #tpu.pipeline_mode<synchronous>, transform_indices = @transform_15, window_bounds = array<i64: 640, 148>}, {pipeline_mode = #tpu.pipeline_mode<synchronous>, transform_indices = @transform_16, window_bounds = array<i64: 80, 18>}, {transform_indices = @transform_17, window_bounds = array<i64: 1, 10, 1>}]} {
    %c0 = arith.constant 0 : index
    %c0_0 = arith.constant 0 : index
    %c0_1 = arith.constant 0 : index
    %0 = vector.load %arg1[%c0, %c0_0, %c0_1] : memref<1x8x788xf32, #tpu.memory_space<vmem>>, vector<1x8x788xf32>
    %1 = vector.shape_cast %0 : vector<1x8x788xf32> to vector<8x788xf32>
    %c0_2 = arith.constant 0 : index
    %c0_3 = arith.constant 0 : index
    %c0_4 = arith.constant 0 : index
    %2 = vector.load %arg2[%c0_2, %c0_3, %c0_4] : memref<9x8x8xf32, #tpu.memory_space<vmem>>, vector<1x8x8xf32>
    %3 = vector.shape_cast %2 : vector<1x8x8xf32> to vector<8x8xf32>
    %4 = vector.extract_strided_slice %1 {offsets = [0, 0], sizes = [8, 730], strides = [1, 1]} : vector<8x788xf32> to vector<8x730xf32>
    %cst = arith.constant dense<0.000000e+00> : vector<8x730xf32>
    %5 = tpu.matmul %3, %4, %cst {dimension_numbers = #tpu.dot_dimension_numbers<[1], [0], [0], [1], [0, 0, 1, 1], [], []>} : vector<8x8xf32>, vector<8x730xf32>, vector<8x730xf32> -> vector<8x730xf32>
    %c1 = arith.constant 1 : index
    %c0_5 = arith.constant 0 : index
    %c0_6 = arith.constant 0 : index
    %6 = vector.load %arg2[%c1, %c0_5, %c0_6] : memref<9x8x8xf32, #tpu.memory_space<vmem>>, vector<1x8x8xf32>
    %7 = vector.shape_cast %6 : vector<1x8x8xf32> to vector<8x8xf32>
    %8 = vector.extract_strided_slice %1 {offsets = [0, 1], sizes = [8, 730], strides = [1, 1]} : vector<8x788xf32> to vector<8x730xf32>
    %cst_7 = arith.constant dense<0.000000e+00> : vector<8x730xf32>
    %9 = tpu.matmul %7, %8, %cst_7 {dimension_numbers = #tpu.dot_dimension_numbers<[1], [0], [0], [1], [0, 0, 1, 1], [], []>} : vector<8x8xf32>, vector<8x730xf32>, vector<8x730xf32> -> vector<8x730xf32>
    %10 = arith.addf %5, %9 : vector<8x730xf32>
    %c2 = arith.constant 2 : index
    %c0_8 = arith.constant 0 : index
    %c0_9 = arith.constant 0 : index
    %11 = vector.load %arg2[%c2, %c0_8, %c0_9] : memref<9x8x8xf32, #tpu.memory_space<vmem>>, vector<1x8x8xf32>
    %12 = vector.shape_cast %11 : vector<1x8x8xf32> to vector<8x8xf32>
    %13 = vector.extract_strided_slice %1 {offsets = [0, 2], sizes = [8, 730], strides = [1, 1]} : vector<8x788xf32> to vector<8x730xf32>
    %cst_10 = arith.constant dense<0.000000e+00> : vector<8x730xf32>
    %14 = tpu.matmul %12, %13, %cst_10 {dimension_numbers = #tpu.dot_dimension_numbers<[1], [0], [0], [1], [0, 0, 1, 1], [], []>} : vector<8x8xf32>, vector<8x730xf32>, vector<8x730xf32> -> vector<8x730xf32>
    %15 = arith.addf %10, %14 : vector<8x730xf32>
    %c3 = arith.constant 3 : index
    %c0_11 = arith.constant 0 : index
    %c0_12 = arith.constant 0 : index
    %16 = vector.load %arg2[%c3, %c0_11, %c0_12] : memref<9x8x8xf32, #tpu.memory_space<vmem>>, vector<1x8x8xf32>
    %17 = vector.shape_cast %16 : vector<1x8x8xf32> to vector<8x8xf32>
    %18 = vector.extract_strided_slice %1 {offsets = [0, 28], sizes = [8, 730], strides = [1, 1]} : vector<8x788xf32> to vector<8x730xf32>
    %cst_13 = arith.constant dense<0.000000e+00> : vector<8x730xf32>
    %19 = tpu.matmul %17, %18, %cst_13 {dimension_numbers = #tpu.dot_dimension_numbers<[1], [0], [0], [1], [0, 0, 1, 1], [], []>} : vector<8x8xf32>, vector<8x730xf32>, vector<8x730xf32> -> vector<8x730xf32>
    %20 = arith.addf %15, %19 : vector<8x730xf32>
    %c4 = arith.constant 4 : index
    %c0_14 = arith.constant 0 : index
    %c0_15 = arith.constant 0 : index
    %21 = vector.load %arg2[%c4, %c0_14, %c0_15] : memref<9x8x8xf32, #tpu.memory_space<vmem>>, vector<1x8x8xf32>
    %22 = vector.shape_cast %21 : vector<1x8x8xf32> to vector<8x8xf32>
    %23 = vector.extract_strided_slice %1 {offsets = [0, 29], sizes = [8, 730], strides = [1, 1]} : vector<8x788xf32> to vector<8x730xf32>
    %cst_16 = arith.constant dense<0.000000e+00> : vector<8x730xf32>
    %24 = tpu.matmul %22, %23, %cst_16 {dimension_numbers = #tpu.dot_dimension_numbers<[1], [0], [0], [1], [0, 0, 1, 1], [], []>} : vector<8x8xf32>, vector<8x730xf32>, vector<8x730xf32> -> vector<8x730xf32>
    %25 = arith.addf %20, %24 : vector<8x730xf32>
    %c5 = arith.constant 5 : index
    %c0_17 = arith.constant 0 : index
    %c0_18 = arith.constant 0 : index
    %26 = vector.load %arg2[%c5, %c0_17, %c0_18] : memref<9x8x8xf32, #tpu.memory_space<vmem>>, vector<1x8x8xf32>
    %27 = vector.shape_cast %26 : vector<1x8x8xf32> to vector<8x8xf32>
    %28 = vector.extract_strided_slice %1 {offsets = [0, 30], sizes = [8, 730], strides = [1, 1]} : vector<8x788xf32> to vector<8x730xf32>
    %cst_19 = arith.constant dense<0.000000e+00> : vector<8x730xf32>
    %29 = tpu.matmul %27, %28, %cst_19 {dimension_numbers = #tpu.dot_dimension_numbers<[1], [0], [0], [1], [0, 0, 1, 1], [], []>} : vector<8x8xf32>, vector<8x730xf32>, vector<8x730xf32> -> vector<8x730xf32>
    %30 = arith.addf %25, %29 : vector<8x730xf32>
    %c6 = arith.constant 6 : index
    %c0_20 = arith.constant 0 : index
    %c0_21 = arith.constant 0 : index
    %31 = vector.load %arg2[%c6, %c0_20, %c0_21] : memref<9x8x8xf32, #tpu.memory_space<vmem>>, vector<1x8x8xf32>
    %32 = vector.shape_cast %31 : vector<1x8x8xf32> to vector<8x8xf32>
    %33 = vector.extract_strided_slice %1 {offsets = [0, 56], sizes = [8, 730], strides = [1, 1]} : vector<8x788xf32> to vector<8x730xf32>
    %cst_22 = arith.constant dense<0.000000e+00> : vector<8x730xf32>
    %34 = tpu.matmul %32, %33, %cst_22 {dimension_numbers = #tpu.dot_dimension_numbers<[1], [0], [0], [1], [0, 0, 1, 1], [], []>} : vector<8x8xf32>, vector<8x730xf32>, vector<8x730xf32> -> vector<8x730xf32>
    %35 = arith.addf %30, %34 : vector<8x730xf32>
    %c7 = arith.constant 7 : index
    %c0_23 = arith.constant 0 : index
    %c0_24 = arith.constant 0 : index
    %36 = vector.load %arg2[%c7, %c0_23, %c0_24] : memref<9x8x8xf32, #tpu.memory_space<vmem>>, vector<1x8x8xf32>
    %37 = vector.shape_cast %36 : vector<1x8x8xf32> to vector<8x8xf32>
    %38 = vector.extract_strided_slice %1 {offsets = [0, 57], sizes = [8, 730], strides = [1, 1]} : vector<8x788xf32> to vector<8x730xf32>
    %cst_25 = arith.constant dense<0.000000e+00> : vector<8x730xf32>
    %39 = tpu.matmul %37, %38, %cst_25 {dimension_numbers = #tpu.dot_dimension_numbers<[1], [0], [0], [1], [0, 0, 1, 1], [], []>} : vector<8x8xf32>, vector<8x730xf32>, vector<8x730xf32> -> vector<8x730xf32>
    %40 = arith.addf %35, %39 : vector<8x730xf32>
    %c8 = arith.constant 8 : index
    %c0_26 = arith.constant 0 : index
    %c0_27 = arith.constant 0 : index
    %41 = vector.load %arg2[%c8, %c0_26, %c0_27] : memref<9x8x8xf32, #tpu.memory_space<vmem>>, vector<1x8x8xf32>
    %42 = vector.shape_cast %41 : vector<1x8x8xf32> to vector<8x8xf32>
    %43 = vector.extract_strided_slice %1 {offsets = [0, 58], sizes = [8, 730], strides = [1, 1]} : vector<8x788xf32> to vector<8x730xf32>
    %cst_28 = arith.constant dense<0.000000e+00> : vector<8x730xf32>
    %44 = tpu.matmul %42, %43, %cst_28 {dimension_numbers = #tpu.dot_dimension_numbers<[1], [0], [0], [1], [0, 0, 1, 1], [], []>} : vector<8x8xf32>, vector<8x730xf32>, vector<8x730xf32> -> vector<8x730xf32>
    %45 = arith.addf %40, %44 : vector<8x730xf32>
    %cst_29 = arith.constant 0.000000e+00 : f32
    %46 = vector.broadcast %cst_29 : f32 to vector<8x730xf32>
    %47 = arith.maximumf %45, %46 : vector<8x730xf32>
    %c0_30 = arith.constant 0 : index
    %c0_31 = arith.constant 0 : index
    %c0_32 = arith.constant 0 : index
    %48 = vector.load %arg3[%c0_30, %c0_31, %c0_32] : memref<2x8x1xf32, #tpu.memory_space<vmem>>, vector<1x8x1xf32>
    %49 = vector.shape_cast %48 : vector<1x8x1xf32> to vector<8x1xf32>
    %50 = vector.broadcast %49 : vector<8x1xf32> to vector<8x730xf32>
    %51 = arith.mulf %47, %50 : vector<8x730xf32>
    %c1_33 = arith.constant 1 : index
    %c0_34 = arith.constant 0 : index
    %c0_35 = arith.constant 0 : index
    %52 = vector.load %arg3[%c1_33, %c0_34, %c0_35] : memref<2x8x1xf32, #tpu.memory_space<vmem>>, vector<1x8x1xf32>
    %53 = vector.shape_cast %52 : vector<1x8x1xf32> to vector<8x1xf32>
    %54 = vector.broadcast %53 : vector<8x1xf32> to vector<8x730xf32>
    %55 = arith.addf %51, %54 : vector<8x730xf32>
    %c0_36 = arith.constant 0 : index
    %c0_37 = arith.constant 0 : index
    %c0_38 = arith.constant 0 : index
    %56 = vector.load %arg4[%c0_36, %c0_37, %c0_38] : memref<9x16x8xf32, #tpu.memory_space<vmem>>, vector<1x16x8xf32>
    %57 = vector.shape_cast %56 : vector<1x16x8xf32> to vector<16x8xf32>
    %58 = vector.extract_strided_slice %55 {offsets = [0, 0], sizes = [8, 672], strides = [1, 1]} : vector<8x730xf32> to vector<8x672xf32>
    %cst_39 = arith.constant dense<0.000000e+00> : vector<16x672xf32>
    %59 = tpu.matmul %57, %58, %cst_39 {dimension_numbers = #tpu.dot_dimension_numbers<[1], [0], [0], [1], [0, 0, 1, 1], [], []>} : vector<16x8xf32>, vector<8x672xf32>, vector<16x672xf32> -> vector<16x672xf32>
    %c1_40 = arith.constant 1 : index
    %c0_41 = arith.constant 0 : index
    %c0_42 = arith.constant 0 : index
    %60 = vector.load %arg4[%c1_40, %c0_41, %c0_42] : memref<9x16x8xf32, #tpu.memory_space<vmem>>, vector<1x16x8xf32>
    %61 = vector.shape_cast %60 : vector<1x16x8xf32> to vector<16x8xf32>
    %62 = vector.extract_strided_slice %55 {offsets = [0, 1], sizes = [8, 672], strides = [1, 1]} : vector<8x730xf32> to vector<8x672xf32>
    %cst_43 = arith.constant dense<0.000000e+00> : vector<16x672xf32>
    %63 = tpu.matmul %61, %62, %cst_43 {dimension_numbers = #tpu.dot_dimension_numbers<[1], [0], [0], [1], [0, 0, 1, 1], [], []>} : vector<16x8xf32>, vector<8x672xf32>, vector<16x672xf32> -> vector<16x672xf32>
    %64 = arith.addf %59, %63 : vector<16x672xf32>
    %c2_44 = arith.constant 2 : index
    %c0_45 = arith.constant 0 : index
    %c0_46 = arith.constant 0 : index
    %65 = vector.load %arg4[%c2_44, %c0_45, %c0_46] : memref<9x16x8xf32, #tpu.memory_space<vmem>>, vector<1x16x8xf32>
    %66 = vector.shape_cast %65 : vector<1x16x8xf32> to vector<16x8xf32>
    %67 = vector.extract_strided_slice %55 {offsets = [0, 2], sizes = [8, 672], strides = [1, 1]} : vector<8x730xf32> to vector<8x672xf32>
    %cst_47 = arith.constant dense<0.000000e+00> : vector<16x672xf32>
    %68 = tpu.matmul %66, %67, %cst_47 {dimension_numbers = #tpu.dot_dimension_numbers<[1], [0], [0], [1], [0, 0, 1, 1], [], []>} : vector<16x8xf32>, vector<8x672xf32>, vector<16x672xf32> -> vector<16x672xf32>
    %69 = arith.addf %64, %68 : vector<16x672xf32>
    %c3_48 = arith.constant 3 : index
    %c0_49 = arith.constant 0 : index
    %c0_50 = arith.constant 0 : index
    %70 = vector.load %arg4[%c3_48, %c0_49, %c0_50] : memref<9x16x8xf32, #tpu.memory_space<vmem>>, vector<1x16x8xf32>
    %71 = vector.shape_cast %70 : vector<1x16x8xf32> to vector<16x8xf32>
    %72 = vector.extract_strided_slice %55 {offsets = [0, 28], sizes = [8, 672], strides = [1, 1]} : vector<8x730xf32> to vector<8x672xf32>
    %cst_51 = arith.constant dense<0.000000e+00> : vector<16x672xf32>
    %73 = tpu.matmul %71, %72, %cst_51 {dimension_numbers = #tpu.dot_dimension_numbers<[1], [0], [0], [1], [0, 0, 1, 1], [], []>} : vector<16x8xf32>, vector<8x672xf32>, vector<16x672xf32> -> vector<16x672xf32>
    %74 = arith.addf %69, %73 : vector<16x672xf32>
    %c4_52 = arith.constant 4 : index
    %c0_53 = arith.constant 0 : index
    %c0_54 = arith.constant 0 : index
    %75 = vector.load %arg4[%c4_52, %c0_53, %c0_54] : memref<9x16x8xf32, #tpu.memory_space<vmem>>, vector<1x16x8xf32>
    %76 = vector.shape_cast %75 : vector<1x16x8xf32> to vector<16x8xf32>
    %77 = vector.extract_strided_slice %55 {offsets = [0, 29], sizes = [8, 672], strides = [1, 1]} : vector<8x730xf32> to vector<8x672xf32>
    %cst_55 = arith.constant dense<0.000000e+00> : vector<16x672xf32>
    %78 = tpu.matmul %76, %77, %cst_55 {dimension_numbers = #tpu.dot_dimension_numbers<[1], [0], [0], [1], [0, 0, 1, 1], [], []>} : vector<16x8xf32>, vector<8x672xf32>, vector<16x672xf32> -> vector<16x672xf32>
    %79 = arith.addf %74, %78 : vector<16x672xf32>
    %c5_56 = arith.constant 5 : index
    %c0_57 = arith.constant 0 : index
    %c0_58 = arith.constant 0 : index
    %80 = vector.load %arg4[%c5_56, %c0_57, %c0_58] : memref<9x16x8xf32, #tpu.memory_space<vmem>>, vector<1x16x8xf32>
    %81 = vector.shape_cast %80 : vector<1x16x8xf32> to vector<16x8xf32>
    %82 = vector.extract_strided_slice %55 {offsets = [0, 30], sizes = [8, 672], strides = [1, 1]} : vector<8x730xf32> to vector<8x672xf32>
    %cst_59 = arith.constant dense<0.000000e+00> : vector<16x672xf32>
    %83 = tpu.matmul %81, %82, %cst_59 {dimension_numbers = #tpu.dot_dimension_numbers<[1], [0], [0], [1], [0, 0, 1, 1], [], []>} : vector<16x8xf32>, vector<8x672xf32>, vector<16x672xf32> -> vector<16x672xf32>
    %84 = arith.addf %79, %83 : vector<16x672xf32>
    %c6_60 = arith.constant 6 : index
    %c0_61 = arith.constant 0 : index
    %c0_62 = arith.constant 0 : index
    %85 = vector.load %arg4[%c6_60, %c0_61, %c0_62] : memref<9x16x8xf32, #tpu.memory_space<vmem>>, vector<1x16x8xf32>
    %86 = vector.shape_cast %85 : vector<1x16x8xf32> to vector<16x8xf32>
    %87 = vector.extract_strided_slice %55 {offsets = [0, 56], sizes = [8, 672], strides = [1, 1]} : vector<8x730xf32> to vector<8x672xf32>
    %cst_63 = arith.constant dense<0.000000e+00> : vector<16x672xf32>
    %88 = tpu.matmul %86, %87, %cst_63 {dimension_numbers = #tpu.dot_dimension_numbers<[1], [0], [0], [1], [0, 0, 1, 1], [], []>} : vector<16x8xf32>, vector<8x672xf32>, vector<16x672xf32> -> vector<16x672xf32>
    %89 = arith.addf %84, %88 : vector<16x672xf32>
    %c7_64 = arith.constant 7 : index
    %c0_65 = arith.constant 0 : index
    %c0_66 = arith.constant 0 : index
    %90 = vector.load %arg4[%c7_64, %c0_65, %c0_66] : memref<9x16x8xf32, #tpu.memory_space<vmem>>, vector<1x16x8xf32>
    %91 = vector.shape_cast %90 : vector<1x16x8xf32> to vector<16x8xf32>
    %92 = vector.extract_strided_slice %55 {offsets = [0, 57], sizes = [8, 672], strides = [1, 1]} : vector<8x730xf32> to vector<8x672xf32>
    %cst_67 = arith.constant dense<0.000000e+00> : vector<16x672xf32>
    %93 = tpu.matmul %91, %92, %cst_67 {dimension_numbers = #tpu.dot_dimension_numbers<[1], [0], [0], [1], [0, 0, 1, 1], [], []>} : vector<16x8xf32>, vector<8x672xf32>, vector<16x672xf32> -> vector<16x672xf32>
    %94 = arith.addf %89, %93 : vector<16x672xf32>
    %c8_68 = arith.constant 8 : index
    %c0_69 = arith.constant 0 : index
    %c0_70 = arith.constant 0 : index
    %95 = vector.load %arg4[%c8_68, %c0_69, %c0_70] : memref<9x16x8xf32, #tpu.memory_space<vmem>>, vector<1x16x8xf32>
    %96 = vector.shape_cast %95 : vector<1x16x8xf32> to vector<16x8xf32>
    %97 = vector.extract_strided_slice %55 {offsets = [0, 58], sizes = [8, 672], strides = [1, 1]} : vector<8x730xf32> to vector<8x672xf32>
    %cst_71 = arith.constant dense<0.000000e+00> : vector<16x672xf32>
    %98 = tpu.matmul %96, %97, %cst_71 {dimension_numbers = #tpu.dot_dimension_numbers<[1], [0], [0], [1], [0, 0, 1, 1], [], []>} : vector<16x8xf32>, vector<8x672xf32>, vector<16x672xf32> -> vector<16x672xf32>
    %99 = arith.addf %94, %98 : vector<16x672xf32>
    %cst_72 = arith.constant 0.000000e+00 : f32
    %100 = vector.broadcast %cst_72 : f32 to vector<16x672xf32>
    %101 = arith.maximumf %99, %100 : vector<16x672xf32>
    %c0_73 = arith.constant 0 : index
    %c0_74 = arith.constant 0 : index
    %c0_75 = arith.constant 0 : index
    %102 = vector.load %arg5[%c0_73, %c0_74, %c0_75] : memref<2x16x1xf32, #tpu.memory_space<vmem>>, vector<1x16x1xf32>
    %103 = vector.shape_cast %102 : vector<1x16x1xf32> to vector<16x1xf32>
    %104 = vector.broadcast %103 : vector<16x1xf32> to vector<16x672xf32>
    %105 = arith.mulf %101, %104 : vector<16x672xf32>
    %c1_76 = arith.constant 1 : index
    %c0_77 = arith.constant 0 : index
    %c0_78 = arith.constant 0 : index
    %106 = vector.load %arg5[%c1_76, %c0_77, %c0_78] : memref<2x16x1xf32, #tpu.memory_space<vmem>>, vector<1x16x1xf32>
    %107 = vector.shape_cast %106 : vector<1x16x1xf32> to vector<16x1xf32>
    %108 = vector.broadcast %107 : vector<16x1xf32> to vector<16x672xf32>
    %109 = arith.addf %105, %108 : vector<16x672xf32>
    %110 = vector.extract_strided_slice %109 {offsets = [0, 0], sizes = [16, 640], strides = [1, 1]} : vector<16x672xf32> to vector<16x640xf32>
    %111 = vector.extract_strided_slice %109 {offsets = [0, 1], sizes = [16, 640], strides = [1, 1]} : vector<16x672xf32> to vector<16x640xf32>
    %112 = arith.maximumf %110, %111 : vector<16x640xf32>
    %113 = vector.extract_strided_slice %109 {offsets = [0, 28], sizes = [16, 640], strides = [1, 1]} : vector<16x672xf32> to vector<16x640xf32>
    %114 = arith.maximumf %112, %113 : vector<16x640xf32>
    %115 = vector.extract_strided_slice %109 {offsets = [0, 29], sizes = [16, 640], strides = [1, 1]} : vector<16x672xf32> to vector<16x640xf32>
    %116 = arith.maximumf %114, %115 : vector<16x640xf32>
    %c0_79 = arith.constant 0 : index
    %c0_80 = arith.constant 0 : index
    %117 = vector.load %arg16[%c0_79, %c0_80] : memref<640x148xf32, #tpu.memory_space<vmem>>, vector<640x148xf32>
    %cst_81 = arith.constant dense<0.000000e+00> : vector<16x148xf32>
    %118 = tpu.matmul %116, %117, %cst_81 {dimension_numbers = #tpu.dot_dimension_numbers<[1], [0], [0], [1], [0, 0, 1, 1], [], []>} : vector<16x640xf32>, vector<640x148xf32>, vector<16x148xf32> -> vector<16x148xf32>
    %c0_82 = arith.constant 0 : index
    %c0_83 = arith.constant 0 : index
    %c0_84 = arith.constant 0 : index
    %119 = vector.load %arg6[%c0_82, %c0_83, %c0_84] : memref<1x8x16xf32, #tpu.memory_space<vmem>>, vector<1x8x16xf32>
    %120 = vector.shape_cast %119 : vector<1x8x16xf32> to vector<8x16xf32>
    %cst_85 = arith.constant dense<0.000000e+00> : vector<8x148xf32>
    %121 = tpu.matmul %120, %118, %cst_85 {dimension_numbers = #tpu.dot_dimension_numbers<[1], [0], [0], [1], [0, 0, 1, 1], [], []>} : vector<8x16xf32>, vector<16x148xf32>, vector<8x148xf32> -> vector<8x148xf32>
    %c0_86 = arith.constant 0 : index
    %c0_87 = arith.constant 0 : index
    %c0_88 = arith.constant 0 : index
    %122 = vector.load %arg7[%c0_86, %c0_87, %c0_88] : memref<2x8x1xf32, #tpu.memory_space<vmem>>, vector<1x8x1xf32>
    %123 = vector.shape_cast %122 : vector<1x8x1xf32> to vector<8x1xf32>
    %124 = vector.broadcast %123 : vector<8x1xf32> to vector<8x148xf32>
    %125 = arith.mulf %121, %124 : vector<8x148xf32>
    %c1_89 = arith.constant 1 : index
    %c0_90 = arith.constant 0 : index
    %c0_91 = arith.constant 0 : index
    %126 = vector.load %arg7[%c1_89, %c0_90, %c0_91] : memref<2x8x1xf32, #tpu.memory_space<vmem>>, vector<1x8x1xf32>
    %127 = vector.shape_cast %126 : vector<1x8x1xf32> to vector<8x1xf32>
    %128 = vector.broadcast %127 : vector<8x1xf32> to vector<8x148xf32>
    %129 = arith.addf %125, %128 : vector<8x148xf32>
    %c0_92 = arith.constant 0 : index
    %c0_93 = arith.constant 0 : index
    %c0_94 = arith.constant 0 : index
    %130 = vector.load %arg8[%c0_92, %c0_93, %c0_94] : memref<9x16x8xf32, #tpu.memory_space<vmem>>, vector<1x16x8xf32>
    %131 = vector.shape_cast %130 : vector<1x16x8xf32> to vector<16x8xf32>
    %132 = vector.extract_strided_slice %129 {offsets = [0, 0], sizes = [8, 122], strides = [1, 1]} : vector<8x148xf32> to vector<8x122xf32>
    %cst_95 = arith.constant dense<0.000000e+00> : vector<16x122xf32>
    %133 = tpu.matmul %131, %132, %cst_95 {dimension_numbers = #tpu.dot_dimension_numbers<[1], [0], [0], [1], [0, 0, 1, 1], [], []>} : vector<16x8xf32>, vector<8x122xf32>, vector<16x122xf32> -> vector<16x122xf32>
    %c1_96 = arith.constant 1 : index
    %c0_97 = arith.constant 0 : index
    %c0_98 = arith.constant 0 : index
    %134 = vector.load %arg8[%c1_96, %c0_97, %c0_98] : memref<9x16x8xf32, #tpu.memory_space<vmem>>, vector<1x16x8xf32>
    %135 = vector.shape_cast %134 : vector<1x16x8xf32> to vector<16x8xf32>
    %136 = vector.extract_strided_slice %129 {offsets = [0, 1], sizes = [8, 122], strides = [1, 1]} : vector<8x148xf32> to vector<8x122xf32>
    %cst_99 = arith.constant dense<0.000000e+00> : vector<16x122xf32>
    %137 = tpu.matmul %135, %136, %cst_99 {dimension_numbers = #tpu.dot_dimension_numbers<[1], [0], [0], [1], [0, 0, 1, 1], [], []>} : vector<16x8xf32>, vector<8x122xf32>, vector<16x122xf32> -> vector<16x122xf32>
    %138 = arith.addf %133, %137 : vector<16x122xf32>
    %c2_100 = arith.constant 2 : index
    %c0_101 = arith.constant 0 : index
    %c0_102 = arith.constant 0 : index
    %139 = vector.load %arg8[%c2_100, %c0_101, %c0_102] : memref<9x16x8xf32, #tpu.memory_space<vmem>>, vector<1x16x8xf32>
    %140 = vector.shape_cast %139 : vector<1x16x8xf32> to vector<16x8xf32>
    %141 = vector.extract_strided_slice %129 {offsets = [0, 2], sizes = [8, 122], strides = [1, 1]} : vector<8x148xf32> to vector<8x122xf32>
    %cst_103 = arith.constant dense<0.000000e+00> : vector<16x122xf32>
    %142 = tpu.matmul %140, %141, %cst_103 {dimension_numbers = #tpu.dot_dimension_numbers<[1], [0], [0], [1], [0, 0, 1, 1], [], []>} : vector<16x8xf32>, vector<8x122xf32>, vector<16x122xf32> -> vector<16x122xf32>
    %143 = arith.addf %138, %142 : vector<16x122xf32>
    %c3_104 = arith.constant 3 : index
    %c0_105 = arith.constant 0 : index
    %c0_106 = arith.constant 0 : index
    %144 = vector.load %arg8[%c3_104, %c0_105, %c0_106] : memref<9x16x8xf32, #tpu.memory_space<vmem>>, vector<1x16x8xf32>
    %145 = vector.shape_cast %144 : vector<1x16x8xf32> to vector<16x8xf32>
    %146 = vector.extract_strided_slice %129 {offsets = [0, 12], sizes = [8, 122], strides = [1, 1]} : vector<8x148xf32> to vector<8x122xf32>
    %cst_107 = arith.constant dense<0.000000e+00> : vector<16x122xf32>
    %147 = tpu.matmul %145, %146, %cst_107 {dimension_numbers = #tpu.dot_dimension_numbers<[1], [0], [0], [1], [0, 0, 1, 1], [], []>} : vector<16x8xf32>, vector<8x122xf32>, vector<16x122xf32> -> vector<16x122xf32>
    %148 = arith.addf %143, %147 : vector<16x122xf32>
    %c4_108 = arith.constant 4 : index
    %c0_109 = arith.constant 0 : index
    %c0_110 = arith.constant 0 : index
    %149 = vector.load %arg8[%c4_108, %c0_109, %c0_110] : memref<9x16x8xf32, #tpu.memory_space<vmem>>, vector<1x16x8xf32>
    %150 = vector.shape_cast %149 : vector<1x16x8xf32> to vector<16x8xf32>
    %151 = vector.extract_strided_slice %129 {offsets = [0, 13], sizes = [8, 122], strides = [1, 1]} : vector<8x148xf32> to vector<8x122xf32>
    %cst_111 = arith.constant dense<0.000000e+00> : vector<16x122xf32>
    %152 = tpu.matmul %150, %151, %cst_111 {dimension_numbers = #tpu.dot_dimension_numbers<[1], [0], [0], [1], [0, 0, 1, 1], [], []>} : vector<16x8xf32>, vector<8x122xf32>, vector<16x122xf32> -> vector<16x122xf32>
    %153 = arith.addf %148, %152 : vector<16x122xf32>
    %c5_112 = arith.constant 5 : index
    %c0_113 = arith.constant 0 : index
    %c0_114 = arith.constant 0 : index
    %154 = vector.load %arg8[%c5_112, %c0_113, %c0_114] : memref<9x16x8xf32, #tpu.memory_space<vmem>>, vector<1x16x8xf32>
    %155 = vector.shape_cast %154 : vector<1x16x8xf32> to vector<16x8xf32>
    %156 = vector.extract_strided_slice %129 {offsets = [0, 14], sizes = [8, 122], strides = [1, 1]} : vector<8x148xf32> to vector<8x122xf32>
    %cst_115 = arith.constant dense<0.000000e+00> : vector<16x122xf32>
    %157 = tpu.matmul %155, %156, %cst_115 {dimension_numbers = #tpu.dot_dimension_numbers<[1], [0], [0], [1], [0, 0, 1, 1], [], []>} : vector<16x8xf32>, vector<8x122xf32>, vector<16x122xf32> -> vector<16x122xf32>
    %158 = arith.addf %153, %157 : vector<16x122xf32>
    %c6_116 = arith.constant 6 : index
    %c0_117 = arith.constant 0 : index
    %c0_118 = arith.constant 0 : index
    %159 = vector.load %arg8[%c6_116, %c0_117, %c0_118] : memref<9x16x8xf32, #tpu.memory_space<vmem>>, vector<1x16x8xf32>
    %160 = vector.shape_cast %159 : vector<1x16x8xf32> to vector<16x8xf32>
    %161 = vector.extract_strided_slice %129 {offsets = [0, 24], sizes = [8, 122], strides = [1, 1]} : vector<8x148xf32> to vector<8x122xf32>
    %cst_119 = arith.constant dense<0.000000e+00> : vector<16x122xf32>
    %162 = tpu.matmul %160, %161, %cst_119 {dimension_numbers = #tpu.dot_dimension_numbers<[1], [0], [0], [1], [0, 0, 1, 1], [], []>} : vector<16x8xf32>, vector<8x122xf32>, vector<16x122xf32> -> vector<16x122xf32>
    %163 = arith.addf %158, %162 : vector<16x122xf32>
    %c7_120 = arith.constant 7 : index
    %c0_121 = arith.constant 0 : index
    %c0_122 = arith.constant 0 : index
    %164 = vector.load %arg8[%c7_120, %c0_121, %c0_122] : memref<9x16x8xf32, #tpu.memory_space<vmem>>, vector<1x16x8xf32>
    %165 = vector.shape_cast %164 : vector<1x16x8xf32> to vector<16x8xf32>
    %166 = vector.extract_strided_slice %129 {offsets = [0, 25], sizes = [8, 122], strides = [1, 1]} : vector<8x148xf32> to vector<8x122xf32>
    %cst_123 = arith.constant dense<0.000000e+00> : vector<16x122xf32>
    %167 = tpu.matmul %165, %166, %cst_123 {dimension_numbers = #tpu.dot_dimension_numbers<[1], [0], [0], [1], [0, 0, 1, 1], [], []>} : vector<16x8xf32>, vector<8x122xf32>, vector<16x122xf32> -> vector<16x122xf32>
    %168 = arith.addf %163, %167 : vector<16x122xf32>
    %c8_124 = arith.constant 8 : index
    %c0_125 = arith.constant 0 : index
    %c0_126 = arith.constant 0 : index
    %169 = vector.load %arg8[%c8_124, %c0_125, %c0_126] : memref<9x16x8xf32, #tpu.memory_space<vmem>>, vector<1x16x8xf32>
    %170 = vector.shape_cast %169 : vector<1x16x8xf32> to vector<16x8xf32>
    %171 = vector.extract_strided_slice %129 {offsets = [0, 26], sizes = [8, 122], strides = [1, 1]} : vector<8x148xf32> to vector<8x122xf32>
    %cst_127 = arith.constant dense<0.000000e+00> : vector<16x122xf32>
    %172 = tpu.matmul %170, %171, %cst_127 {dimension_numbers = #tpu.dot_dimension_numbers<[1], [0], [0], [1], [0, 0, 1, 1], [], []>} : vector<16x8xf32>, vector<8x122xf32>, vector<16x122xf32> -> vector<16x122xf32>
    %173 = arith.addf %168, %172 : vector<16x122xf32>
    %cst_128 = arith.constant 0.000000e+00 : f32
    %174 = vector.broadcast %cst_128 : f32 to vector<16x122xf32>
    %175 = arith.maximumf %173, %174 : vector<16x122xf32>
    %c0_129 = arith.constant 0 : index
    %c0_130 = arith.constant 0 : index
    %c0_131 = arith.constant 0 : index
    %176 = vector.load %arg9[%c0_129, %c0_130, %c0_131] : memref<2x16x1xf32, #tpu.memory_space<vmem>>, vector<1x16x1xf32>
    %177 = vector.shape_cast %176 : vector<1x16x1xf32> to vector<16x1xf32>
    %178 = vector.broadcast %177 : vector<16x1xf32> to vector<16x122xf32>
    %179 = arith.mulf %175, %178 : vector<16x122xf32>
    %c1_132 = arith.constant 1 : index
    %c0_133 = arith.constant 0 : index
    %c0_134 = arith.constant 0 : index
    %180 = vector.load %arg9[%c1_132, %c0_133, %c0_134] : memref<2x16x1xf32, #tpu.memory_space<vmem>>, vector<1x16x1xf32>
    %181 = vector.shape_cast %180 : vector<1x16x1xf32> to vector<16x1xf32>
    %182 = vector.broadcast %181 : vector<16x1xf32> to vector<16x122xf32>
    %183 = arith.addf %179, %182 : vector<16x122xf32>
    %c0_135 = arith.constant 0 : index
    %c0_136 = arith.constant 0 : index
    %c0_137 = arith.constant 0 : index
    %184 = vector.load %arg10[%c0_135, %c0_136, %c0_137] : memref<9x20x16xf32, #tpu.memory_space<vmem>>, vector<1x20x16xf32>
    %185 = vector.shape_cast %184 : vector<1x20x16xf32> to vector<20x16xf32>
    %186 = vector.extract_strided_slice %183 {offsets = [0, 0], sizes = [16, 96], strides = [1, 1]} : vector<16x122xf32> to vector<16x96xf32>
    %cst_138 = arith.constant dense<0.000000e+00> : vector<20x96xf32>
    %187 = tpu.matmul %185, %186, %cst_138 {dimension_numbers = #tpu.dot_dimension_numbers<[1], [0], [0], [1], [0, 0, 1, 1], [], []>} : vector<20x16xf32>, vector<16x96xf32>, vector<20x96xf32> -> vector<20x96xf32>
    %c1_139 = arith.constant 1 : index
    %c0_140 = arith.constant 0 : index
    %c0_141 = arith.constant 0 : index
    %188 = vector.load %arg10[%c1_139, %c0_140, %c0_141] : memref<9x20x16xf32, #tpu.memory_space<vmem>>, vector<1x20x16xf32>
    %189 = vector.shape_cast %188 : vector<1x20x16xf32> to vector<20x16xf32>
    %190 = vector.extract_strided_slice %183 {offsets = [0, 1], sizes = [16, 96], strides = [1, 1]} : vector<16x122xf32> to vector<16x96xf32>
    %cst_142 = arith.constant dense<0.000000e+00> : vector<20x96xf32>
    %191 = tpu.matmul %189, %190, %cst_142 {dimension_numbers = #tpu.dot_dimension_numbers<[1], [0], [0], [1], [0, 0, 1, 1], [], []>} : vector<20x16xf32>, vector<16x96xf32>, vector<20x96xf32> -> vector<20x96xf32>
    %192 = arith.addf %187, %191 : vector<20x96xf32>
    %c2_143 = arith.constant 2 : index
    %c0_144 = arith.constant 0 : index
    %c0_145 = arith.constant 0 : index
    %193 = vector.load %arg10[%c2_143, %c0_144, %c0_145] : memref<9x20x16xf32, #tpu.memory_space<vmem>>, vector<1x20x16xf32>
    %194 = vector.shape_cast %193 : vector<1x20x16xf32> to vector<20x16xf32>
    %195 = vector.extract_strided_slice %183 {offsets = [0, 2], sizes = [16, 96], strides = [1, 1]} : vector<16x122xf32> to vector<16x96xf32>
    %cst_146 = arith.constant dense<0.000000e+00> : vector<20x96xf32>
    %196 = tpu.matmul %194, %195, %cst_146 {dimension_numbers = #tpu.dot_dimension_numbers<[1], [0], [0], [1], [0, 0, 1, 1], [], []>} : vector<20x16xf32>, vector<16x96xf32>, vector<20x96xf32> -> vector<20x96xf32>
    %197 = arith.addf %192, %196 : vector<20x96xf32>
    %c3_147 = arith.constant 3 : index
    %c0_148 = arith.constant 0 : index
    %c0_149 = arith.constant 0 : index
    %198 = vector.load %arg10[%c3_147, %c0_148, %c0_149] : memref<9x20x16xf32, #tpu.memory_space<vmem>>, vector<1x20x16xf32>
    %199 = vector.shape_cast %198 : vector<1x20x16xf32> to vector<20x16xf32>
    %200 = vector.extract_strided_slice %183 {offsets = [0, 12], sizes = [16, 96], strides = [1, 1]} : vector<16x122xf32> to vector<16x96xf32>
    %cst_150 = arith.constant dense<0.000000e+00> : vector<20x96xf32>
    %201 = tpu.matmul %199, %200, %cst_150 {dimension_numbers = #tpu.dot_dimension_numbers<[1], [0], [0], [1], [0, 0, 1, 1], [], []>} : vector<20x16xf32>, vector<16x96xf32>, vector<20x96xf32> -> vector<20x96xf32>
    %202 = arith.addf %197, %201 : vector<20x96xf32>
    %c4_151 = arith.constant 4 : index
    %c0_152 = arith.constant 0 : index
    %c0_153 = arith.constant 0 : index
    %203 = vector.load %arg10[%c4_151, %c0_152, %c0_153] : memref<9x20x16xf32, #tpu.memory_space<vmem>>, vector<1x20x16xf32>
    %204 = vector.shape_cast %203 : vector<1x20x16xf32> to vector<20x16xf32>
    %205 = vector.extract_strided_slice %183 {offsets = [0, 13], sizes = [16, 96], strides = [1, 1]} : vector<16x122xf32> to vector<16x96xf32>
    %cst_154 = arith.constant dense<0.000000e+00> : vector<20x96xf32>
    %206 = tpu.matmul %204, %205, %cst_154 {dimension_numbers = #tpu.dot_dimension_numbers<[1], [0], [0], [1], [0, 0, 1, 1], [], []>} : vector<20x16xf32>, vector<16x96xf32>, vector<20x96xf32> -> vector<20x96xf32>
    %207 = arith.addf %202, %206 : vector<20x96xf32>
    %c5_155 = arith.constant 5 : index
    %c0_156 = arith.constant 0 : index
    %c0_157 = arith.constant 0 : index
    %208 = vector.load %arg10[%c5_155, %c0_156, %c0_157] : memref<9x20x16xf32, #tpu.memory_space<vmem>>, vector<1x20x16xf32>
    %209 = vector.shape_cast %208 : vector<1x20x16xf32> to vector<20x16xf32>
    %210 = vector.extract_strided_slice %183 {offsets = [0, 14], sizes = [16, 96], strides = [1, 1]} : vector<16x122xf32> to vector<16x96xf32>
    %cst_158 = arith.constant dense<0.000000e+00> : vector<20x96xf32>
    %211 = tpu.matmul %209, %210, %cst_158 {dimension_numbers = #tpu.dot_dimension_numbers<[1], [0], [0], [1], [0, 0, 1, 1], [], []>} : vector<20x16xf32>, vector<16x96xf32>, vector<20x96xf32> -> vector<20x96xf32>
    %212 = arith.addf %207, %211 : vector<20x96xf32>
    %c6_159 = arith.constant 6 : index
    %c0_160 = arith.constant 0 : index
    %c0_161 = arith.constant 0 : index
    %213 = vector.load %arg10[%c6_159, %c0_160, %c0_161] : memref<9x20x16xf32, #tpu.memory_space<vmem>>, vector<1x20x16xf32>
    %214 = vector.shape_cast %213 : vector<1x20x16xf32> to vector<20x16xf32>
    %215 = vector.extract_strided_slice %183 {offsets = [0, 24], sizes = [16, 96], strides = [1, 1]} : vector<16x122xf32> to vector<16x96xf32>
    %cst_162 = arith.constant dense<0.000000e+00> : vector<20x96xf32>
    %216 = tpu.matmul %214, %215, %cst_162 {dimension_numbers = #tpu.dot_dimension_numbers<[1], [0], [0], [1], [0, 0, 1, 1], [], []>} : vector<20x16xf32>, vector<16x96xf32>, vector<20x96xf32> -> vector<20x96xf32>
    %217 = arith.addf %212, %216 : vector<20x96xf32>
    %c7_163 = arith.constant 7 : index
    %c0_164 = arith.constant 0 : index
    %c0_165 = arith.constant 0 : index
    %218 = vector.load %arg10[%c7_163, %c0_164, %c0_165] : memref<9x20x16xf32, #tpu.memory_space<vmem>>, vector<1x20x16xf32>
    %219 = vector.shape_cast %218 : vector<1x20x16xf32> to vector<20x16xf32>
    %220 = vector.extract_strided_slice %183 {offsets = [0, 25], sizes = [16, 96], strides = [1, 1]} : vector<16x122xf32> to vector<16x96xf32>
    %cst_166 = arith.constant dense<0.000000e+00> : vector<20x96xf32>
    %221 = tpu.matmul %219, %220, %cst_166 {dimension_numbers = #tpu.dot_dimension_numbers<[1], [0], [0], [1], [0, 0, 1, 1], [], []>} : vector<20x16xf32>, vector<16x96xf32>, vector<20x96xf32> -> vector<20x96xf32>
    %222 = arith.addf %217, %221 : vector<20x96xf32>
    %c8_167 = arith.constant 8 : index
    %c0_168 = arith.constant 0 : index
    %c0_169 = arith.constant 0 : index
    %223 = vector.load %arg10[%c8_167, %c0_168, %c0_169] : memref<9x20x16xf32, #tpu.memory_space<vmem>>, vector<1x20x16xf32>
    %224 = vector.shape_cast %223 : vector<1x20x16xf32> to vector<20x16xf32>
    %225 = vector.extract_strided_slice %183 {offsets = [0, 26], sizes = [16, 96], strides = [1, 1]} : vector<16x122xf32> to vector<16x96xf32>
    %cst_170 = arith.constant dense<0.000000e+00> : vector<20x96xf32>
    %226 = tpu.matmul %224, %225, %cst_170 {dimension_numbers = #tpu.dot_dimension_numbers<[1], [0], [0], [1], [0, 0, 1, 1], [], []>} : vector<20x16xf32>, vector<16x96xf32>, vector<20x96xf32> -> vector<20x96xf32>
    %227 = arith.addf %222, %226 : vector<20x96xf32>
    %cst_171 = arith.constant 0.000000e+00 : f32
    %228 = vector.broadcast %cst_171 : f32 to vector<20x96xf32>
    %229 = arith.maximumf %227, %228 : vector<20x96xf32>
    %c0_172 = arith.constant 0 : index
    %c0_173 = arith.constant 0 : index
    %c0_174 = arith.constant 0 : index
    %230 = vector.load %arg11[%c0_172, %c0_173, %c0_174] : memref<2x20x1xf32, #tpu.memory_space<vmem>>, vector<1x20x1xf32>
    %231 = vector.shape_cast %230 : vector<1x20x1xf32> to vector<20x1xf32>
    %232 = vector.broadcast %231 : vector<20x1xf32> to vector<20x96xf32>
    %233 = arith.mulf %229, %232 : vector<20x96xf32>
    %c1_175 = arith.constant 1 : index
    %c0_176 = arith.constant 0 : index
    %c0_177 = arith.constant 0 : index
    %234 = vector.load %arg11[%c1_175, %c0_176, %c0_177] : memref<2x20x1xf32, #tpu.memory_space<vmem>>, vector<1x20x1xf32>
    %235 = vector.shape_cast %234 : vector<1x20x1xf32> to vector<20x1xf32>
    %236 = vector.broadcast %235 : vector<20x1xf32> to vector<20x96xf32>
    %237 = arith.addf %233, %236 : vector<20x96xf32>
    %238 = vector.extract_strided_slice %237 {offsets = [0, 0], sizes = [20, 80], strides = [1, 1]} : vector<20x96xf32> to vector<20x80xf32>
    %239 = vector.extract_strided_slice %237 {offsets = [0, 1], sizes = [20, 80], strides = [1, 1]} : vector<20x96xf32> to vector<20x80xf32>
    %240 = arith.maximumf %238, %239 : vector<20x80xf32>
    %241 = vector.extract_strided_slice %237 {offsets = [0, 12], sizes = [20, 80], strides = [1, 1]} : vector<20x96xf32> to vector<20x80xf32>
    %242 = arith.maximumf %240, %241 : vector<20x80xf32>
    %243 = vector.extract_strided_slice %237 {offsets = [0, 13], sizes = [20, 80], strides = [1, 1]} : vector<20x96xf32> to vector<20x80xf32>
    %244 = arith.maximumf %242, %243 : vector<20x80xf32>
    %c0_178 = arith.constant 0 : index
    %c0_179 = arith.constant 0 : index
    %245 = vector.load %arg17[%c0_178, %c0_179] : memref<80x18xf32, #tpu.memory_space<vmem>>, vector<80x18xf32>
    %cst_180 = arith.constant dense<0.000000e+00> : vector<20x18xf32>
    %246 = tpu.matmul %244, %245, %cst_180 {dimension_numbers = #tpu.dot_dimension_numbers<[1], [0], [0], [1], [0, 0, 1, 1], [], []>} : vector<20x80xf32>, vector<80x18xf32>, vector<20x18xf32> -> vector<20x18xf32>
    %c0_181 = arith.constant 0 : index
    %c0_182 = arith.constant 0 : index
    %c0_183 = arith.constant 0 : index
    %247 = vector.load %arg12[%c0_181, %c0_182, %c0_183] : memref<1x16x20xf32, #tpu.memory_space<vmem>>, vector<1x16x20xf32>
    %248 = vector.shape_cast %247 : vector<1x16x20xf32> to vector<16x20xf32>
    %cst_184 = arith.constant dense<0.000000e+00> : vector<16x18xf32>
    %249 = tpu.matmul %248, %246, %cst_184 {dimension_numbers = #tpu.dot_dimension_numbers<[1], [0], [0], [1], [0, 0, 1, 1], [], []>} : vector<16x20xf32>, vector<20x18xf32>, vector<16x18xf32> -> vector<16x18xf32>
    %c0_185 = arith.constant 0 : index
    %c0_186 = arith.constant 0 : index
    %c0_187 = arith.constant 0 : index
    %250 = vector.load %arg13[%c0_185, %c0_186, %c0_187] : memref<2x16x1xf32, #tpu.memory_space<vmem>>, vector<1x16x1xf32>
    %251 = vector.shape_cast %250 : vector<1x16x1xf32> to vector<16x1xf32>
    %252 = vector.broadcast %251 : vector<16x1xf32> to vector<16x18xf32>
    %253 = arith.mulf %249, %252 : vector<16x18xf32>
    %c1_188 = arith.constant 1 : index
    %c0_189 = arith.constant 0 : index
    %c0_190 = arith.constant 0 : index
    %254 = vector.load %arg13[%c1_188, %c0_189, %c0_190] : memref<2x16x1xf32, #tpu.memory_space<vmem>>, vector<1x16x1xf32>
    %255 = vector.shape_cast %254 : vector<1x16x1xf32> to vector<16x1xf32>
    %256 = vector.broadcast %255 : vector<16x1xf32> to vector<16x18xf32>
    %257 = arith.addf %253, %256 : vector<16x18xf32>
    %c0_191 = arith.constant 0 : index
    %c0_192 = arith.constant 0 : index
    %c0_193 = arith.constant 0 : index
    %258 = vector.load %arg14[%c0_191, %c0_192, %c0_193] : memref<9x10x16xf32, #tpu.memory_space<vmem>>, vector<1x10x16xf32>
    %259 = vector.shape_cast %258 : vector<1x10x16xf32> to vector<10x16xf32>
    %260 = vector.extract_strided_slice %257 {offsets = [0, 0], sizes = [16, 8], strides = [1, 1]} : vector<16x18xf32> to vector<16x8xf32>
    %cst_194 = arith.constant dense<0.000000e+00> : vector<10x8xf32>
    %261 = tpu.matmul %259, %260, %cst_194 {dimension_numbers = #tpu.dot_dimension_numbers<[1], [0], [0], [1], [0, 0, 1, 1], [], []>} : vector<10x16xf32>, vector<16x8xf32>, vector<10x8xf32> -> vector<10x8xf32>
    %c1_195 = arith.constant 1 : index
    %c0_196 = arith.constant 0 : index
    %c0_197 = arith.constant 0 : index
    %262 = vector.load %arg14[%c1_195, %c0_196, %c0_197] : memref<9x10x16xf32, #tpu.memory_space<vmem>>, vector<1x10x16xf32>
    %263 = vector.shape_cast %262 : vector<1x10x16xf32> to vector<10x16xf32>
    %264 = vector.extract_strided_slice %257 {offsets = [0, 1], sizes = [16, 8], strides = [1, 1]} : vector<16x18xf32> to vector<16x8xf32>
    %cst_198 = arith.constant dense<0.000000e+00> : vector<10x8xf32>
    %265 = tpu.matmul %263, %264, %cst_198 {dimension_numbers = #tpu.dot_dimension_numbers<[1], [0], [0], [1], [0, 0, 1, 1], [], []>} : vector<10x16xf32>, vector<16x8xf32>, vector<10x8xf32> -> vector<10x8xf32>
    %266 = arith.addf %261, %265 : vector<10x8xf32>
    %c2_199 = arith.constant 2 : index
    %c0_200 = arith.constant 0 : index
    %c0_201 = arith.constant 0 : index
    %267 = vector.load %arg14[%c2_199, %c0_200, %c0_201] : memref<9x10x16xf32, #tpu.memory_space<vmem>>, vector<1x10x16xf32>
    %268 = vector.shape_cast %267 : vector<1x10x16xf32> to vector<10x16xf32>
    %269 = vector.extract_strided_slice %257 {offsets = [0, 2], sizes = [16, 8], strides = [1, 1]} : vector<16x18xf32> to vector<16x8xf32>
    %cst_202 = arith.constant dense<0.000000e+00> : vector<10x8xf32>
    %270 = tpu.matmul %268, %269, %cst_202 {dimension_numbers = #tpu.dot_dimension_numbers<[1], [0], [0], [1], [0, 0, 1, 1], [], []>} : vector<10x16xf32>, vector<16x8xf32>, vector<10x8xf32> -> vector<10x8xf32>
    %271 = arith.addf %266, %270 : vector<10x8xf32>
    %c3_203 = arith.constant 3 : index
    %c0_204 = arith.constant 0 : index
    %c0_205 = arith.constant 0 : index
    %272 = vector.load %arg14[%c3_203, %c0_204, %c0_205] : memref<9x10x16xf32, #tpu.memory_space<vmem>>, vector<1x10x16xf32>
    %273 = vector.shape_cast %272 : vector<1x10x16xf32> to vector<10x16xf32>
    %274 = vector.extract_strided_slice %257 {offsets = [0, 4], sizes = [16, 8], strides = [1, 1]} : vector<16x18xf32> to vector<16x8xf32>
    %cst_206 = arith.constant dense<0.000000e+00> : vector<10x8xf32>
    %275 = tpu.matmul %273, %274, %cst_206 {dimension_numbers = #tpu.dot_dimension_numbers<[1], [0], [0], [1], [0, 0, 1, 1], [], []>} : vector<10x16xf32>, vector<16x8xf32>, vector<10x8xf32> -> vector<10x8xf32>
    %276 = arith.addf %271, %275 : vector<10x8xf32>
    %c4_207 = arith.constant 4 : index
    %c0_208 = arith.constant 0 : index
    %c0_209 = arith.constant 0 : index
    %277 = vector.load %arg14[%c4_207, %c0_208, %c0_209] : memref<9x10x16xf32, #tpu.memory_space<vmem>>, vector<1x10x16xf32>
    %278 = vector.shape_cast %277 : vector<1x10x16xf32> to vector<10x16xf32>
    %279 = vector.extract_strided_slice %257 {offsets = [0, 5], sizes = [16, 8], strides = [1, 1]} : vector<16x18xf32> to vector<16x8xf32>
    %cst_210 = arith.constant dense<0.000000e+00> : vector<10x8xf32>
    %280 = tpu.matmul %278, %279, %cst_210 {dimension_numbers = #tpu.dot_dimension_numbers<[1], [0], [0], [1], [0, 0, 1, 1], [], []>} : vector<10x16xf32>, vector<16x8xf32>, vector<10x8xf32> -> vector<10x8xf32>
    %281 = arith.addf %276, %280 : vector<10x8xf32>
    %c5_211 = arith.constant 5 : index
    %c0_212 = arith.constant 0 : index
    %c0_213 = arith.constant 0 : index
    %282 = vector.load %arg14[%c5_211, %c0_212, %c0_213] : memref<9x10x16xf32, #tpu.memory_space<vmem>>, vector<1x10x16xf32>
    %283 = vector.shape_cast %282 : vector<1x10x16xf32> to vector<10x16xf32>
    %284 = vector.extract_strided_slice %257 {offsets = [0, 6], sizes = [16, 8], strides = [1, 1]} : vector<16x18xf32> to vector<16x8xf32>
    %cst_214 = arith.constant dense<0.000000e+00> : vector<10x8xf32>
    %285 = tpu.matmul %283, %284, %cst_214 {dimension_numbers = #tpu.dot_dimension_numbers<[1], [0], [0], [1], [0, 0, 1, 1], [], []>} : vector<10x16xf32>, vector<16x8xf32>, vector<10x8xf32> -> vector<10x8xf32>
    %286 = arith.addf %281, %285 : vector<10x8xf32>
    %c6_215 = arith.constant 6 : index
    %c0_216 = arith.constant 0 : index
    %c0_217 = arith.constant 0 : index
    %287 = vector.load %arg14[%c6_215, %c0_216, %c0_217] : memref<9x10x16xf32, #tpu.memory_space<vmem>>, vector<1x10x16xf32>
    %288 = vector.shape_cast %287 : vector<1x10x16xf32> to vector<10x16xf32>
    %289 = vector.extract_strided_slice %257 {offsets = [0, 8], sizes = [16, 8], strides = [1, 1]} : vector<16x18xf32> to vector<16x8xf32>
    %cst_218 = arith.constant dense<0.000000e+00> : vector<10x8xf32>
    %290 = tpu.matmul %288, %289, %cst_218 {dimension_numbers = #tpu.dot_dimension_numbers<[1], [0], [0], [1], [0, 0, 1, 1], [], []>} : vector<10x16xf32>, vector<16x8xf32>, vector<10x8xf32> -> vector<10x8xf32>
    %291 = arith.addf %286, %290 : vector<10x8xf32>
    %c7_219 = arith.constant 7 : index
    %c0_220 = arith.constant 0 : index
    %c0_221 = arith.constant 0 : index
    %292 = vector.load %arg14[%c7_219, %c0_220, %c0_221] : memref<9x10x16xf32, #tpu.memory_space<vmem>>, vector<1x10x16xf32>
    %293 = vector.shape_cast %292 : vector<1x10x16xf32> to vector<10x16xf32>
    %294 = vector.extract_strided_slice %257 {offsets = [0, 9], sizes = [16, 8], strides = [1, 1]} : vector<16x18xf32> to vector<16x8xf32>
    %cst_222 = arith.constant dense<0.000000e+00> : vector<10x8xf32>
    %295 = tpu.matmul %293, %294, %cst_222 {dimension_numbers = #tpu.dot_dimension_numbers<[1], [0], [0], [1], [0, 0, 1, 1], [], []>} : vector<10x16xf32>, vector<16x8xf32>, vector<10x8xf32> -> vector<10x8xf32>
    %296 = arith.addf %291, %295 : vector<10x8xf32>
    %c8_223 = arith.constant 8 : index
    %c0_224 = arith.constant 0 : index
    %c0_225 = arith.constant 0 : index
    %297 = vector.load %arg14[%c8_223, %c0_224, %c0_225] : memref<9x10x16xf32, #tpu.memory_space<vmem>>, vector<1x10x16xf32>
    %298 = vector.shape_cast %297 : vector<1x10x16xf32> to vector<10x16xf32>
    %299 = vector.extract_strided_slice %257 {offsets = [0, 10], sizes = [16, 8], strides = [1, 1]} : vector<16x18xf32> to vector<16x8xf32>
    %cst_226 = arith.constant dense<0.000000e+00> : vector<10x8xf32>
    %300 = tpu.matmul %298, %299, %cst_226 {dimension_numbers = #tpu.dot_dimension_numbers<[1], [0], [0], [1], [0, 0, 1, 1], [], []>} : vector<10x16xf32>, vector<16x8xf32>, vector<10x8xf32> -> vector<10x8xf32>
    %301 = arith.addf %296, %300 : vector<10x8xf32>
    %cst_227 = arith.constant 0.000000e+00 : f32
    %302 = vector.broadcast %cst_227 : f32 to vector<10x8xf32>
    %303 = arith.maximumf %301, %302 : vector<10x8xf32>
    %c0_228 = arith.constant 0 : index
    %c0_229 = arith.constant 0 : index
    %c0_230 = arith.constant 0 : index
    %304 = vector.load %arg15[%c0_228, %c0_229, %c0_230] : memref<2x10x1xf32, #tpu.memory_space<vmem>>, vector<1x10x1xf32>
    %305 = vector.shape_cast %304 : vector<1x10x1xf32> to vector<10x1xf32>
    %306 = vector.broadcast %305 : vector<10x1xf32> to vector<10x8xf32>
    %307 = arith.mulf %303, %306 : vector<10x8xf32>
    %c1_231 = arith.constant 1 : index
    %c0_232 = arith.constant 0 : index
    %c0_233 = arith.constant 0 : index
    %308 = vector.load %arg15[%c1_231, %c0_232, %c0_233] : memref<2x10x1xf32, #tpu.memory_space<vmem>>, vector<1x10x1xf32>
    %309 = vector.shape_cast %308 : vector<1x10x1xf32> to vector<10x1xf32>
    %310 = vector.broadcast %309 : vector<10x1xf32> to vector<10x8xf32>
    %311 = arith.addf %307, %310 : vector<10x8xf32>
    %312 = vector.extract_strided_slice %311 {offsets = [0, 0], sizes = [10, 1], strides = [1, 1]} : vector<10x8xf32> to vector<10x1xf32>
    %313 = vector.extract_strided_slice %311 {offsets = [0, 1], sizes = [10, 1], strides = [1, 1]} : vector<10x8xf32> to vector<10x1xf32>
    %314 = arith.addf %312, %313 : vector<10x1xf32>
    %315 = vector.extract_strided_slice %311 {offsets = [0, 4], sizes = [10, 1], strides = [1, 1]} : vector<10x8xf32> to vector<10x1xf32>
    %316 = arith.addf %314, %315 : vector<10x1xf32>
    %317 = vector.extract_strided_slice %311 {offsets = [0, 5], sizes = [10, 1], strides = [1, 1]} : vector<10x8xf32> to vector<10x1xf32>
    %318 = arith.addf %316, %317 : vector<10x1xf32>
    %cst_234 = arith.constant 2.500000e-01 : f32
    %319 = vector.broadcast %cst_234 : f32 to vector<10x1xf32>
    %320 = arith.mulf %318, %319 : vector<10x1xf32>
    %cst_235 = arith.constant dense<0xFF800000> : vector<1xf32>
    %321 = vector.multi_reduction <maximumf>, %320, %cst_235 [0] : vector<10x1xf32> to vector<1xf32>
    %322 = vector.shape_cast %321 : vector<1xf32> to vector<1x1xf32>
    %323 = vector.broadcast %322 : vector<1x1xf32> to vector<10x1xf32>
    %324 = arith.subf %320, %323 : vector<10x1xf32>
    %325 = math.exp %324 : vector<10x1xf32>
    %cst_236 = arith.constant dense<0.000000e+00> : vector<1xf32>
    %326 = vector.multi_reduction <add>, %325, %cst_236 [0] : vector<10x1xf32> to vector<1xf32>
    %327 = vector.shape_cast %326 : vector<1xf32> to vector<1x1xf32>
    %328 = math.log %327 : vector<1x1xf32>
    %329 = vector.broadcast %328 : vector<1x1xf32> to vector<10x1xf32>
    %330 = arith.subf %324, %329 : vector<10x1xf32>
    %c0_237 = arith.constant 0 : index
    %c0_238 = arith.constant 0 : index
    %c0_239 = arith.constant 0 : index
    %331 = vector.load %arg18[%c0_237, %c0_238, %c0_239] : memref<1x10x1xf32, #tpu.memory_space<vmem>>, vector<1x10x1xf32>
    %332 = vector.shape_cast %331 : vector<1x10x1xf32> to vector<10x1xf32>
    %333 = vector.shape_cast %330 : vector<10x1xf32> to vector<1x10x1xf32>
    tpu.vector_store %arg18[%c0_237, %c0_238, %c0_239], %333 {strides = array<i32>} : memref<1x10x1xf32, #tpu.memory_space<vmem>>, vector<1x10x1xf32>,
    return
  }
  func.func @transform_0(%arg0: i32) -> (i32, i32, i32) {
    %c0_i32 = arith.constant 0 : i32
    %c0_i32_0 = arith.constant 0 : i32
    %c0_i32_1 = arith.constant 0 : i32
    return %arg0, %c0_i32, %c0_i32_0 : i32, i32, i32
  }
  func.func @transform_1(%arg0: i32) -> (i32, i32, i32) {
    %c0_i32 = arith.constant 0 : i32
    %c0_i32_0 = arith.constant 0 : i32
    %c0_i32_1 = arith.constant 0 : i32
    %c0_i32_2 = arith.constant 0 : i32
    return %c0_i32, %c0_i32_0, %c0_i32_1 : i32, i32, i32
  }
  func.func @transform_2(%arg0: i32) -> (i32, i32, i32) {
    %c0_i32 = arith.constant 0 : i32
    %c0_i32_0 = arith.constant 0 : i32
    %c0_i32_1 = arith.constant 0 : i32
    %c0_i32_2 = arith.constant 0 : i32
    return %c0_i32, %c0_i32_0, %c0_i32_1 : i32, i32, i32
  }
  func.func @transform_3(%arg0: i32) -> (i32, i32, i32) {
    %c0_i32 = arith.constant 0 : i32
    %c0_i32_0 = arith.constant 0 : i32
    %c0_i32_1 = arith.constant 0 : i32
    %c0_i32_2 = arith.constant 0 : i32
    return %c0_i32, %c0_i32_0, %c0_i32_1 : i32, i32, i32
  }
  func.func @transform_4(%arg0: i32) -> (i32, i32, i32) {
    %c0_i32 = arith.constant 0 : i32
    %c0_i32_0 = arith.constant 0 : i32
    %c0_i32_1 = arith.constant 0 : i32
    %c0_i32_2 = arith.constant 0 : i32
    return %c0_i32, %c0_i32_0, %c0_i32_1 : i32, i32, i32
  }
  func.func @transform_5(%arg0: i32) -> (i32, i32, i32) {
    %c0_i32 = arith.constant 0 : i32
    %c0_i32_0 = arith.constant 0 : i32
    %c0_i32_1 = arith.constant 0 : i32
    %c0_i32_2 = arith.constant 0 : i32
    return %c0_i32, %c0_i32_0, %c0_i32_1 : i32, i32, i32
  }
  func.func @transform_6(%arg0: i32) -> (i32, i32, i32) {
    %c0_i32 = arith.constant 0 : i32
    %c0_i32_0 = arith.constant 0 : i32
    %c0_i32_1 = arith.constant 0 : i32
    %c0_i32_2 = arith.constant 0 : i32
    return %c0_i32, %c0_i32_0, %c0_i32_1 : i32, i32, i32
  }
  func.func @transform_7(%arg0: i32) -> (i32, i32, i32) {
    %c0_i32 = arith.constant 0 : i32
    %c0_i32_0 = arith.constant 0 : i32
    %c0_i32_1 = arith.constant 0 : i32
    %c0_i32_2 = arith.constant 0 : i32
    return %c0_i32, %c0_i32_0, %c0_i32_1 : i32, i32, i32
  }
  func.func @transform_8(%arg0: i32) -> (i32, i32, i32) {
    %c0_i32 = arith.constant 0 : i32
    %c0_i32_0 = arith.constant 0 : i32
    %c0_i32_1 = arith.constant 0 : i32
    %c0_i32_2 = arith.constant 0 : i32
    return %c0_i32, %c0_i32_0, %c0_i32_1 : i32, i32, i32
  }
  func.func @transform_9(%arg0: i32) -> (i32, i32, i32) {
    %c0_i32 = arith.constant 0 : i32
    %c0_i32_0 = arith.constant 0 : i32
    %c0_i32_1 = arith.constant 0 : i32
    %c0_i32_2 = arith.constant 0 : i32
    return %c0_i32, %c0_i32_0, %c0_i32_1 : i32, i32, i32
  }
  func.func @transform_10(%arg0: i32) -> (i32, i32, i32) {
    %c0_i32 = arith.constant 0 : i32
    %c0_i32_0 = arith.constant 0 : i32
    %c0_i32_1 = arith.constant 0 : i32
    %c0_i32_2 = arith.constant 0 : i32
    return %c0_i32, %c0_i32_0, %c0_i32_1 : i32, i32, i32
  }
  func.func @transform_11(%arg0: i32) -> (i32, i32, i32) {
    %c0_i32 = arith.constant 0 : i32
    %c0_i32_0 = arith.constant 0 : i32
    %c0_i32_1 = arith.constant 0 : i32
    %c0_i32_2 = arith.constant 0 : i32
    return %c0_i32, %c0_i32_0, %c0_i32_1 : i32, i32, i32
  }
  func.func @transform_12(%arg0: i32) -> (i32, i32, i32) {
    %c0_i32 = arith.constant 0 : i32
    %c0_i32_0 = arith.constant 0 : i32
    %c0_i32_1 = arith.constant 0 : i32
    %c0_i32_2 = arith.constant 0 : i32
    return %c0_i32, %c0_i32_0, %c0_i32_1 : i32, i32, i32
  }
  func.func @transform_13(%arg0: i32) -> (i32, i32, i32) {
    %c0_i32 = arith.constant 0 : i32
    %c0_i32_0 = arith.constant 0 : i32
    %c0_i32_1 = arith.constant 0 : i32
    %c0_i32_2 = arith.constant 0 : i32
    return %c0_i32, %c0_i32_0, %c0_i32_1 : i32, i32, i32
  }
  func.func @transform_14(%arg0: i32) -> (i32, i32, i32) {
    %c0_i32 = arith.constant 0 : i32
    %c0_i32_0 = arith.constant 0 : i32
    %c0_i32_1 = arith.constant 0 : i32
    %c0_i32_2 = arith.constant 0 : i32
    return %c0_i32, %c0_i32_0, %c0_i32_1 : i32, i32, i32
  }
  func.func @transform_15(%arg0: i32) -> (i32, i32) {
    %c0_i32 = arith.constant 0 : i32
    %c0_i32_0 = arith.constant 0 : i32
    %c0_i32_1 = arith.constant 0 : i32
    return %c0_i32, %c0_i32_0 : i32, i32
  }
  func.func @transform_16(%arg0: i32) -> (i32, i32) {
    %c0_i32 = arith.constant 0 : i32
    %c0_i32_0 = arith.constant 0 : i32
    %c0_i32_1 = arith.constant 0 : i32
    return %c0_i32, %c0_i32_0 : i32, i32
  }
  func.func @transform_17(%arg0: i32) -> (i32, i32, i32) {
    %c0_i32 = arith.constant 0 : i32
    %c0_i32_0 = arith.constant 0 : i32
    %c0_i32_1 = arith.constant 0 : i32
    return %arg0, %c0_i32, %c0_i32_0 : i32, i32, i32
  }
}

</mosaic_0001>

<llo_original>
// kernel: _lambda_.1
$region0: #{_lambda_.1}
  #allocation0 [shape = 'u32[]', space=smem, size = 0x4, offset = 0x4, fixed_abs, tag = 'smem constant byte address 0x4 - core index']
  #allocation1 [shape = 'u32[72,128]{1,0:T(1,128)}', space=vmem, size = 0x9000, scoped, tag = 'internal scratch']
  %s0 = inlined_call_operand.vmem [shape: f32[2,8,788], index: 0, kind: input, shape index: {}]
  %s1 = inlined_call_operand.hbm [shape: f32[9,8,8], index: 1, kind: input, shape index: {}]
  %s2 = inlined_call_operand.hbm [shape: f32[2,8,1], index: 2, kind: input, shape index: {}]
  %s3 = inlined_call_operand.hbm [shape: f32[9,16,8], index: 3, kind: input, shape index: {}]
  %s4 = inlined_call_operand.vmem [shape: f32[2,16,1], index: 4, kind: input, shape index: {}]
  %s5 = inlined_call_operand.hbm [shape: f32[1,8,16], index: 5, kind: input, shape index: {}]
  %s6 = inlined_call_operand.hbm [shape: f32[2,8,1], index: 6, kind: input, shape index: {}]
  %s7 = inlined_call_operand.hbm [shape: f32[9,16,8], index: 7, kind: input, shape index: {}]
  %s8 = inlined_call_operand.hbm [shape: f32[2,16,1], index: 8, kind: input, shape index: {}]
  %s9 = inlined_call_operand.vmem [shape: f32[9,20,16], index: 9, kind: input, shape index: {}]
  %s10 = inlined_call_operand.hbm [shape: f32[2,20,1], index: 10, kind: input, shape index: {}]
  %s11 = inlined_call_operand.hbm [shape: f32[1,16,20], index: 11, kind: input, shape index: {}]
  %s12 = inlined_call_operand.hbm [shape: f32[2,16,1], index: 12, kind: input, shape index: {}]
  %s13 = inlined_call_operand.hbm [shape: f32[9,10,16], index: 13, kind: input, shape index: {}]
  %s14 = inlined_call_operand.hbm [shape: f32[2,10,1], index: 14, kind: input, shape index: {}]
  %s15 = inlined_call_operand.hbm [shape: f32[640,148], index: 15, kind: input, shape index: {}]
  %s16 = inlined_call_operand.vmem [shape: f32[80,18], index: 16, kind: input, shape index: {}]
  %s17 = inlined_call_operand.vmem [shape: f32[2,10,1], index: 17, kind: output, shape index: {}]
  %s18 = sld [smem:[#allocation0]]
  $region153: #{_lambda_.1} parent=0
    _
  %s20 = ssub.s32 1, %s18
  %s21 = scalar_select 0, %s20, %s18
  $region1: #{_lambda_.1} parent=0
    #allocation2 [shape = 'u8[36864]{0}', space=vmem, size = 0x9000, scoped, tag = 'input window, operand 1, single buffered']
    #allocation3 [shape = 's32[2]{0}', space=sflag, size = 0x8, scoped, tag = 'scoped memory for _lambda_.1']
    #allocation4 [shape = 'u8[8192]{0}', space=vmem, size = 0x2000, scoped, tag = 'input window, operand 2, single buffered']
    #allocation5 [shape = 's32[1]{0}', space=sflag, size = 0x4, scoped, tag = 'scoped memory for _lambda_.1']
    #allocation6 [shape = 'u8[73728]{0}', space=vmem, size = 0x12000, scoped, tag = 'input window, operand 3, single buffered']
    #allocation7 [shape = 'u8[4096]{0}', space=vmem, size = 0x1000, scoped, tag = 'input window, operand 5, single buffered']
    #allocation8 [shape = 's32[1]{0}', space=sflag, size = 0x4, scoped, tag = 'scoped memory for _lambda_.1']
    #allocation9 [shape = 'u8[8192]{0}', space=vmem, size = 0x2000, scoped, tag = 'input window, operand 6, single buffered']
    #allocation10 [shape = 'u8[73728]{0}', space=vmem, size = 0x12000, scoped, tag = 'input window, operand 7, single buffered']
    #allocation11 [shape = 's32[1]{0}', space=sflag, size = 0x4, scoped, tag = 'scoped memory for _lambda_.1']
    #allocation12 [shape = 'u8[16384]{0}', space=vmem, size = 0x4000, scoped, tag = 'input window, operand 8, single buffered']
    #allocation13 [shape = 'u8[24576]{0}', space=vmem, size = 0x6000, scoped, tag = 'input window, operand 10, single buffered']
    #allocation14 [shape = 's32[1]{0}', space=sflag, size = 0x4, scoped, tag = 'scoped memory for _lambda_.1']
    #allocation15 [shape = 'u8[8192]{0}', space=vmem, size = 0x2000, scoped, tag = 'input window, operand 11, single buffered']
    #allocation16 [shape = 'u8[16384]{0}', space=vmem, size = 0x4000, scoped, tag = 'input window, operand 12, single buffered']
    #allocation17 [shape = 's32[1]{0}', space=sflag, size = 0x4, scoped, tag = 'scoped memory for _lambda_.1']
    #allocation18 [shape = 'u8[73728]{0}', space=vmem, size = 0x12000, scoped, tag = 'input window, operand 13, single buffered']
    #allocation19 [shape = 'u8[16384]{0}', space=vmem, size = 0x4000, scoped, tag = 'input window, operand 14, single buffered']
    #allocation20 [shape = 's32[1]{0}', space=sflag, size = 0x4, scoped, tag = 'scoped memory for _lambda_.1']
    #allocation21 [shape = 'u8[655360]{0}', space=vmem, size = 0xa0000, scoped, tag = 'input window, operand 15, single buffered']
    %22 = vsyncpa [#allocation3], 0
    %23 = vsyncpa [#allocation5], 0
    %24 = vsyncpa [#allocation8], 0
    %25 = vsyncpa [#allocation11], 0
    %26 = vsyncpa [#allocation14], 0
    %27 = vsyncpa [#allocation17], 0
    %28 = vsyncpa [#allocation20], 0
    loop: start=0, step=1, limit=4
    $region2: #{_lambda_.1} parent=1 // loop_pre_header
      _
    $region3: #{_lambda_.1} parent=1 // loop_header
      %s30 = sphi 0, %s34
      %p31 = scmp.ge.s32.totalorder %s30, 4
      %s40 = sphi 0, %s42
      %s43 = sphi 0, %s40
      %s44 = sphi 0, %s43
      %s60 = sphi 0, %s44
      %s64 = sphi 0, %s64
      %s66 = sphi 0, %s64
      %s67 = sphi 0, %s66
      %s81 = sphi 0, %s67
      %s85 = sphi 0, %s85
      %s87 = sphi 0, %s85
      %s88 = sphi 0, %s87
      %s102 = sphi 0, %s88
      %s106 = sphi 0, %s106
      %s108 = sphi 0, %s106
      %s109 = sphi 0, %s108
      %s123 = sphi 0, %s109
      %s127 = sphi 0, %s127
      %s129 = sphi 0, %s127
      %s130 = sphi 0, %s129
      %s144 = sphi 0, %s130
      %s148 = sphi 0, %s148
      %s150 = sphi 0, %s148
      %s151 = sphi 0, %s150
      %s165 = sphi 0, %s151
      %s169 = sphi 0, %s169
      %s171 = sphi 0, %s169
      %s172 = sphi 0, %s171
      %s186 = sphi 0, %s172
      %s190 = sphi 0, %s190
      %s192 = sphi 0, %s190
      %s193 = sphi 0, %s192
      %s207 = sphi 0, %s193
      %s211 = sphi 0, %s211
      %s213 = sphi 0, %s211
      %s214 = sphi 0, %s213
      %s228 = sphi 0, %s214
      %s232 = sphi 0, %s232
      %s234 = sphi 0, %s232
      %s235 = sphi 0, %s234
      %s249 = sphi 0, %s235
      %s253 = sphi 0, %s253
      %s255 = sphi 0, %s253
      %s256 = sphi 0, %s255
      %s270 = sphi 0, %s256
      %s274 = sphi 0, %s274
      %s276 = sphi 0, %s274
      %s277 = sphi 0, %s276
      %s291 = sphi 0, %s277
      %s295 = sphi 0, %s295
      %s297 = sphi 0, %s295
      %s298 = sphi 0, %s297
      %s312 = sphi 0, %s298
      %s316 = sphi 0, %s316
      %s318 = sphi 0, %s316
      %s319 = sphi 0, %s318
      %s333 = sphi 0, %s319
      %s337 = sphi 0, %s337
      %s339 = sphi 0, %s337
      %s340 = sphi 0, %s339
      %s354 = sphi 0, %s340
      %s358 = sphi 0, %s358
      %s360 = sphi 0, %s358
      %s361 = sphi 0, %s360
      %s375 = sphi 0, %s361
      %s379 = sphi 0, %s379
      %s381 = sphi 0, %s379
      %s382 = sphi 0, %s381
      %s396 = sphi 0, %s382
      %s402 = sphi 0, %s404
      %s405 = sphi 0, %s402
      %s406 = sphi 0, %s405
      %s422 = sphi 0, %s406
    $region4: #{_lambda_.1} parent=1 // loop_header_branch
      %33 = sbr.rel (%p31) target = $region8
    $region5: #{_lambda_.1} parent=1 // loop_body
      %s35 = ssub.s32 %s30, 1
      %s36 = ssub.s32 %s30, 2
      %s37 = sadd.s32 %s30, 1
      %s38 = ssub.s32 %s30, %s37
      %p39 = scmp.eq.s32.totalorder %s38, 0
      %s41 = sadd.s32 %s40, 1
      %s42 = scalar_select %p39, %s40, %s41
      %p45 = pneg %p39
      %p46 = scmp.eq.s32.totalorder %s30, 1
      %p47 = por %p45, %p46
      %p48 = scmp.ne.s32.totalorder %s40, %s43
      %p49 = scmp.eq.s32.totalorder %s30, 0
      %p50 = por %p48, %p49
      %p51 = scmp.ne.s32.totalorder %s40, %s43
      %p52 = scmp.eq.s32.totalorder %s35, 1
      %p53 = por %p51, %p52
      %p54 = scmp.ne.s32.totalorder %s43, %s44
      %p55 = scmp.eq.s32.totalorder %s35, 0
      %p56 = por %p54, %p55
      %p57 = scmp.ne.s32.totalorder %s43, %s44
      %p58 = scmp.eq.s32.totalorder %s36, 1
      %p59 = por %p57, %p58
      %p61 = scmp.ne.s32.totalorder %s44, %s60
      %p62 = scmp.eq.s32.totalorder %s36, 0
      %p63 = por %p61, %p62
      %s65 = sadd.s32 %s64, 1
      %p68 = scmp.eq.s32.totalorder %s30, 1
      %p69 = scmp.ne.s32.totalorder %s64, %s66
      %p70 = scmp.eq.s32.totalorder %s30, 0
      %p71 = por %p69, %p70
      %p72 = scmp.ne.s32.totalorder %s64, %s66
      %p73 = scmp.eq.s32.totalorder %s35, 1
      %p74 = por %p72, %p73
      %p75 = scmp.ne.s32.totalorder %s66, %s67
      %p76 = scmp.eq.s32.totalorder %s35, 0
      %p77 = por %p75, %p76
      %p78 = scmp.ne.s32.totalorder %s66, %s67
      %p79 = scmp.eq.s32.totalorder %s36, 1
      %p80 = por %p78, %p79
      %p82 = scmp.ne.s32.totalorder %s67, %s81
      %p83 = scmp.eq.s32.totalorder %s36, 0
      %p84 = por %p82, %p83
      %s86 = sadd.s32 %s85, 1
      %p89 = scmp.eq.s32.totalorder %s30, 1
      %p90 = scmp.ne.s32.totalorder %s85, %s87
      %p91 = scmp.eq.s32.totalorder %s30, 0
      %p92 = por %p90, %p91
      %p93 = scmp.ne.s32.totalorder %s85, %s87
      %p94 = scmp.eq.s32.totalorder %s35, 1
      %p95 = por %p93, %p94
      %p96 = scmp.ne.s32.totalorder %s87, %s88
      %p97 = scmp.eq.s32.totalorder %s35, 0
      %p98 = por %p96, %p97
      %p99 = scmp.ne.s32.totalorder %s87, %s88
      %p100 = scmp.eq.s32.totalorder %s36, 1
      %p101 = por %p99, %p100
      %p103 = scmp.ne.s32.totalorder %s88, %s102
      %p104 = scmp.eq.s32.totalorder %s36, 0
      %p105 = por %p103, %p104
      %s107 = sadd.s32 %s106, 1
      %p110 = scmp.eq.s32.totalorder %s30, 1
      %p111 = scmp.ne.s32.totalorder %s106, %s108
      %p112 = scmp.eq.s32.totalorder %s30, 0
      %p113 = por %p111, %p112
      %p114 = scmp.ne.s32.totalorder %s106, %s108
      %p115 = scmp.eq.s32.totalorder %s35, 1
      %p116 = por %p114, %p115
      %p117 = scmp.ne.s32.totalorder %s108, %s109
      %p118 = scmp.eq.s32.totalorder %s35, 0
      %p119 = por %p117, %p118
      %p120 = scmp.ne.s32.totalorder %s108, %s109
      %p121 = scmp.eq.s32.totalorder %s36, 1
      %p122 = por %p120, %p121
      %p124 = scmp.ne.s32.totalorder %s109, %s123
      %p125 = scmp.eq.s32.totalorder %s36, 0
      %p126 = por %p124, %p125
      %s128 = sadd.s32 %s127, 1
      %p131 = scmp.eq.s32.totalorder %s30, 1
      %p132 = scmp.ne.s32.totalorder %s127, %s129
      %p133 = scmp.eq.s32.totalorder %s30, 0
      %p134 = por %p132, %p133
      %p135 = scmp.ne.s32.totalorder %s127, %s129
      %p136 = scmp.eq.s32.totalorder %s35, 1
      %p137 = por %p135, %p136
      %p138 = scmp.ne.s32.totalorder %s129, %s130
      %p139 = scmp.eq.s32.totalorder %s35, 0
      %p140 = por %p138, %p139
      %p141 = scmp.ne.s32.totalorder %s129, %s130
      %p142 = scmp.eq.s32.totalorder %s36, 1
      %p143 = por %p141, %p142
      %p145 = scmp.ne.s32.totalorder %s130, %s144
      %p146 = scmp.eq.s32.totalorder %s36, 0
      %p147 = por %p145, %p146
      %s149 = sadd.s32 %s148, 1
      %p152 = scmp.eq.s32.totalorder %s30, 1
      %p153 = scmp.ne.s32.totalorder %s148, %s150
      %p154 = scmp.eq.s32.totalorder %s30, 0
      %p155 = por %p153, %p154
      %p156 = scmp.ne.s32.totalorder %s148, %s150
      %p157 = scmp.eq.s32.totalorder %s35, 1
      %p158 = por %p156, %p157
      %p159 = scmp.ne.s32.totalorder %s150, %s151
      %p160 = scmp.eq.s32.totalorder %s35, 0
      %p161 = por %p159, %p160
      %p162 = scmp.ne.s32.totalorder %s150, %s151
      %p163 = scmp.eq.s32.totalorder %s36, 1
      %p164 = por %p162, %p163
      %p166 = scmp.ne.s32.totalorder %s151, %s165
      %p167 = scmp.eq.s32.totalorder %s36, 0
      %p168 = por %p166, %p167
      %s170 = sadd.s32 %s169, 1
      %p173 = scmp.eq.s32.totalorder %s30, 1
      %p174 = scmp.ne.s32.totalorder %s169, %s171
      %p175 = scmp.eq.s32.totalorder %s30, 0
      %p176 = por %p174, %p175
      %p177 = scmp.ne.s32.totalorder %s169, %s171
      %p178 = scmp.eq.s32.totalorder %s35, 1
      %p179 = por %p177, %p178
      %p180 = scmp.ne.s32.totalorder %s171, %s172
      %p181 = scmp.eq.s32.totalorder %s35, 0
      %p182 = por %p180, %p181
      %p183 = scmp.ne.s32.totalorder %s171, %s172
      %p184 = scmp.eq.s32.totalorder %s36, 1
      %p185 = por %p183, %p184
      %p187 = scmp.ne.s32.totalorder %s172, %s186
      %p188 = scmp.eq.s32.totalorder %s36, 0
      %p189 = por %p187, %p188
      %s191 = sadd.s32 %s190, 1
      %p194 = scmp.eq.s32.totalorder %s30, 1
      %p195 = scmp.ne.s32.totalorder %s190, %s192
      %p196 = scmp.eq.s32.totalorder %s30, 0
      %p197 = por %p195, %p196
      %p198 = scmp.ne.s32.totalorder %s190, %s192
      %p199 = scmp.eq.s32.totalorder %s35, 1
      %p200 = por %p198, %p199
      %p201 = scmp.ne.s32.totalorder %s192, %s193
      %p202 = scmp.eq.s32.totalorder %s35, 0
      %p203 = por %p201, %p202
      %p204 = scmp.ne.s32.totalorder %s192, %s193
      %p205 = scmp.eq.s32.totalorder %s36, 1
      %p206 = por %p204, %p205
      %p208 = scmp.ne.s32.totalorder %s193, %s207
      %p209 = scmp.eq.s32.totalorder %s36, 0
      %p210 = por %p208, %p209
      %s212 = sadd.s32 %s211, 1
      %p215 = scmp.eq.s32.totalorder %s30, 1
      %p216 = scmp.ne.s32.totalorder %s211, %s213
      %p217 = scmp.eq.s32.totalorder %s30, 0
      %p218 = por %p216, %p217
      %p219 = scmp.ne.s32.totalorder %s211, %s213
      %p220 = scmp.eq.s32.totalorder %s35, 1
      %p221 = por %p219, %p220
      %p222 = scmp.ne.s32.totalorder %s213, %s214
      %p223 = scmp.eq.s32.totalorder %s35, 0
      %p224 = por %p222, %p223
      %p225 = scmp.ne.s32.totalorder %s213, %s214
      %p226 = scmp.eq.s32.totalorder %s36, 1
      %p227 = por %p225, %p226
      %p229 = scmp.ne.s32.totalorder %s214, %s228
      %p230 = scmp.eq.s32.totalorder %s36, 0
      %p231 = por %p229, %p230
      %s233 = sadd.s32 %s232, 1
      %p236 = scmp.eq.s32.totalorder %s30, 1
      %p237 = scmp.ne.s32.totalorder %s232, %s234
      %p238 = scmp.eq.s32.totalorder %s30, 0
      %p239 = por %p237, %p238
      %p240 = scmp.ne.s32.totalorder %s232, %s234
      %p241 = scmp.eq.s32.totalorder %s35, 1
      %p242 = por %p240, %p241
      %p243 = scmp.ne.s32.totalorder %s234, %s235
      %p244 = scmp.eq.s32.totalorder %s35, 0
      %p245 = por %p243, %p244
      %p246 = scmp.ne.s32.totalorder %s234, %s235
      %p247 = scmp.eq.s32.totalorder %s36, 1
      %p248 = por %p246, %p247
      %p250 = scmp.ne.s32.totalorder %s235, %s249
      %p251 = scmp.eq.s32.totalorder %s36, 0
      %p252 = por %p250, %p251
      %s254 = sadd.s32 %s253, 1
      %p257 = scmp.eq.s32.totalorder %s30, 1
      %p258 = scmp.ne.s32.totalorder %s253, %s255
      %p259 = scmp.eq.s32.totalorder %s30, 0
      %p260 = por %p258, %p259
      %p261 = scmp.ne.s32.totalorder %s253, %s255
      %p262 = scmp.eq.s32.totalorder %s35, 1
      %p263 = por %p261, %p262
      %p264 = scmp.ne.s32.totalorder %s255, %s256
      %p265 = scmp.eq.s32.totalorder %s35, 0
      %p266 = por %p264, %p265
      %p267 = scmp.ne.s32.totalorder %s255, %s256
      %p268 = scmp.eq.s32.totalorder %s36, 1
      %p269 = por %p267, %p268
      %p271 = scmp.ne.s32.totalorder %s256, %s270
      %p272 = scmp.eq.s32.totalorder %s36, 0
      %p273 = por %p271, %p272
      %s275 = sadd.s32 %s274, 1
      %p278 = scmp.eq.s32.totalorder %s30, 1
      %p279 = scmp.ne.s32.totalorder %s274, %s276
      %p280 = scmp.eq.s32.totalorder %s30, 0
      %p281 = por %p279, %p280
      %p282 = scmp.ne.s32.totalorder %s274, %s276
      %p283 = scmp.eq.s32.totalorder %s35, 1
      %p284 = por %p282, %p283
      %p285 = scmp.ne.s32.totalorder %s276, %s277
      %p286 = scmp.eq.s32.totalorder %s35, 0
      %p287 = por %p285, %p286
      %p288 = scmp.ne.s32.totalorder %s276, %s277
      %p289 = scmp.eq.s32.totalorder %s36, 1
      %p290 = por %p288, %p289
      %p292 = scmp.ne.s32.totalorder %s277, %s291
      %p293 = scmp.eq.s32.totalorder %s36, 0
      %p294 = por %p292, %p293
      %s296 = sadd.s32 %s295, 1
      %p299 = scmp.eq.s32.totalorder %s30, 1
      %p300 = scmp.ne.s32.totalorder %s295, %s297
      %p301 = scmp.eq.s32.totalorder %s30, 0
      %p302 = por %p300, %p301
      %p303 = scmp.ne.s32.totalorder %s295, %s297
      %p304 = scmp.eq.s32.totalorder %s35, 1
      %p305 = por %p303, %p304
      %p306 = scmp.ne.s32.totalorder %s297, %s298
      %p307 = scmp.eq.s32.totalorder %s35, 0
      %p308 = por %p306, %p307
      %p309 = scmp.ne.s32.totalorder %s297, %s298
      %p310 = scmp.eq.s32.totalorder %s36, 1
      %p311 = por %p309, %p310
      %p313 = scmp.ne.s32.totalorder %s298, %s312
      %p314 = scmp.eq.s32.totalorder %s36, 0
      %p315 = por %p313, %p314
      %s317 = sadd.s32 %s316, 1
      %p320 = scmp.eq.s32.totalorder %s30, 1
      %p321 = scmp.ne.s32.totalorder %s316, %s318
      %p322 = scmp.eq.s32.totalorder %s30, 0
      %p323 = por %p321, %p322
      %p324 = scmp.ne.s32.totalorder %s316, %s318
      %p325 = scmp.eq.s32.totalorder %s35, 1
      %p326 = por %p324, %p325
      %p327 = scmp.ne.s32.totalorder %s318, %s319
      %p328 = scmp.eq.s32.totalorder %s35, 0
      %p329 = por %p327, %p328
      %p330 = scmp.ne.s32.totalorder %s318, %s319
      %p331 = scmp.eq.s32.totalorder %s36, 1
      %p332 = por %p330, %p331
      %p334 = scmp.ne.s32.totalorder %s319, %s333
      %p335 = scmp.eq.s32.totalorder %s36, 0
      %p336 = por %p334, %p335
      %s338 = sadd.s32 %s337, 1
      %p341 = scmp.eq.s32.totalorder %s30, 1
      %p342 = scmp.ne.s32.totalorder %s337, %s339
      %p343 = scmp.eq.s32.totalorder %s30, 0
      %p344 = por %p342, %p343
      %p345 = scmp.ne.s32.totalorder %s337, %s339
      %p346 = scmp.eq.s32.totalorder %s35, 1
      %p347 = por %p345, %p346
      %p348 = scmp.ne.s32.totalorder %s339, %s340
      %p349 = scmp.eq.s32.totalorder %s35, 0
      %p350 = por %p348, %p349
      %p351 = scmp.ne.s32.totalorder %s339, %s340
      %p352 = scmp.eq.s32.totalorder %s36, 1
      %p353 = por %p351, %p352
      %p355 = scmp.ne.s32.totalorder %s340, %s354
      %p356 = scmp.eq.s32.totalorder %s36, 0
      %p357 = por %p355, %p356
      %s359 = sadd.s32 %s358, 1
      %p362 = scmp.eq.s32.totalorder %s30, 1
      %p363 = scmp.ne.s32.totalorder %s358, %s360
      %p364 = scmp.eq.s32.totalorder %s30, 0
      %p365 = por %p363, %p364
      %p366 = scmp.ne.s32.totalorder %s358, %s360
      %p367 = scmp.eq.s32.totalorder %s35, 1
      %p368 = por %p366, %p367
      %p369 = scmp.ne.s32.totalorder %s360, %s361
      %p370 = scmp.eq.s32.totalorder %s35, 0
      %p371 = por %p369, %p370
      %p372 = scmp.ne.s32.totalorder %s360, %s361
      %p373 = scmp.eq.s32.totalorder %s36, 1
      %p374 = por %p372, %p373
      %p376 = scmp.ne.s32.totalorder %s361, %s375
      %p377 = scmp.eq.s32.totalorder %s36, 0
      %p378 = por %p376, %p377
      %s380 = sadd.s32 %s379, 1
      %p383 = scmp.eq.s32.totalorder %s30, 1
      %p384 = scmp.ne.s32.totalorder %s379, %s381
      %p385 = scmp.eq.s32.totalorder %s30, 0
      %p386 = por %p384, %p385
      %p387 = scmp.ne.s32.totalorder %s379, %s381
      %p388 = scmp.eq.s32.totalorder %s35, 1
      %p389 = por %p387, %p388
      %p390 = scmp.ne.s32.totalorder %s381, %s382
      %p391 = scmp.eq.s32.totalorder %s35, 0
      %p392 = por %p390, %p391
      %p393 = scmp.ne.s32.totalorder %s381, %s382
      %p394 = scmp.eq.s32.totalorder %s36, 1
      %p395 = por %p393, %p394
      %p397 = scmp.ne.s32.totalorder %s382, %s396
      %p398 = scmp.eq.s32.totalorder %s36, 0
      %p399 = por %p397, %p398
      %s400 = ssub.s32 %s30, %s37
      %p401 = scmp.eq.s32.totalorder %s400, 0
      %s403 = sadd.s32 %s402, 1
      %s404 = scalar_select %p401, %s402, %s403
      %p407 = pneg %p401
      %p408 = scmp.eq.s32.totalorder %s30, 1
      %p409 = por %p407, %p408
      %p410 = scmp.ne.s32.totalorder %s402, %s405
      %p411 = scmp.eq.s32.totalorder %s30, 0
      %p412 = por %p410, %p411
      %p413 = scmp.ne.s32.totalorder %s402, %s405
      %p414 = scmp.eq.s32.totalorder %s35, 1
      %p415 = por %p413, %p414
      %p416 = scmp.ne.s32.totalorder %s405, %s406
      %p417 = scmp.eq.s32.totalorder %s35, 0
      %p418 = por %p416, %p417
      %p419 = scmp.ne.s32.totalorder %s405, %s406
      %p420 = scmp.eq.s32.totalorder %s36, 1
      %p421 = por %p419, %p420
      %p423 = scmp.ne.s32.totalorder %s406, %s422
      %p424 = scmp.eq.s32.totalorder %s36, 0
      %p425 = por %p423, %p424
      %p426 = scmp.le.s32.totalorder 1, %s30
      %p427 = scmp.lt.s32.totalorder %s30, 3
      %p428 = pnand %p426, %p427
      %p429 = pneg %p428
      // Predicated region
      $region9: #{_lambda_.1} parent=5 // pred_check
        _
      $region10: #{_lambda_.1} parent=5 // pred_check_branch
        %431 = sbr.rel (%p428) target = $region12
      $region11: #{_lambda_.1} parent=5 // pred_region
        %s432 = ssub.s32 %s30, 1
        // Predicated region
        $region13: #{_lambda_.1} parent=11 // pred_check
          %p433 = pneg %p77
        $region14: #{_lambda_.1} parent=11 // pred_check_branch
          %435 = sbr.rel (%p433) target = $region16
        $region15: #{_lambda_.1} parent=11 // pred_region
          %437 = vsyncadd [#allocation3], 0
          %s438 = sshll.u32 %s1, 4
          %s439 = int_to_ptr.hbm [resolvable:$true] %s438
          %s440 = sshll.u32 [#allocation2], 4
          %s441 = int_to_ptr.vmem [resolvable:$true] %s440
          %446 = dma.hbm_to_vmem [thread:$0]  %s439, 1152, %s441, [#allocation3], 128, 128, 8
        $region16: #{_lambda_.1} parent=11 // pred_fallthru
          _
        // Predicated region
        $region17: #{_lambda_.1} parent=11 // pred_check
          %p447 = pneg %p98
        $region18: #{_lambda_.1} parent=11 // pred_check_branch
          %449 = sbr.rel (%p447) target = $region20
        $region19: #{_lambda_.1} parent=11 // pred_region
          %451 = vsyncadd [#allocation5], 0
          %s452 = sshll.u32 %s2, 4
          %s453 = int_to_ptr.hbm [resolvable:$true] %s452
          %s454 = sshll.u32 [#allocation4], 4
          %s455 = int_to_ptr.vmem [resolvable:$true] %s454
          %460 = dma.hbm_to_vmem [thread:$0]  %s453, 256, %s455, [#allocation5], 128, 128, 8
        $region20: #{_lambda_.1} parent=11 // pred_fallthru
          _
        // Predicated region
        $region21: #{_lambda_.1} parent=11 // pred_check
          %p461 = pneg %p119
        $region22: #{_lambda_.1} parent=11 // pred_check_branch
          %463 = sbr.rel (%p461) target = $region24
        $region23: #{_lambda_.1} parent=11 // pred_region
          %465 = vsyncadd [#allocation5], 0
          %s466 = sshll.u32 %s3, 4
          %s467 = int_to_ptr.hbm [resolvable:$true] %s466
          %s468 = sshll.u32 [#allocation6], 4
          %s469 = int_to_ptr.vmem [resolvable:$true] %s468
          %474 = dma.hbm_to_vmem [thread:$0]  %s467, 2304, %s469, [#allocation5], 128, 128, 8
        $region24: #{_lambda_.1} parent=11 // pred_fallthru
          _
        // Predicated region
        $region25: #{_lambda_.1} parent=11 // pred_check
          %p475 = pneg %p140
        $region26: #{_lambda_.1} parent=11 // pred_check_branch
          %477 = sbr.rel (%p475) target = $region28
        $region27: #{_lambda_.1} parent=11 // pred_region
          _
        $region28: #{_lambda_.1} parent=11 // pred_fallthru
          _
        // Predicated region
        $region29: #{_lambda_.1} parent=11 // pred_check
          %p478 = pneg %p161
        $region30: #{_lambda_.1} parent=11 // pred_check_branch
          %480 = sbr.rel (%p478) target = $region32
        $region31: #{_lambda_.1} parent=11 // pred_region
          %482 = vsyncadd [#allocation8], 0
          %s484 = sshll.u32 %s5, 4
          %s485 = int_to_ptr.hbm [resolvable:$true] %s484
          %s486 = sshll.u32 [#allocation7], 4
          %s487 = int_to_ptr.vmem [resolvable:$true] %s486
          %489 = dma.hbm_to_vmem [thread:$0]  %s485, 128, %s487, [#allocation8]
        $region32: #{_lambda_.1} parent=11 // pred_fallthru
          _
        // Predicated region
        $region33: #{_lambda_.1} parent=11 // pred_check
          %p490 = pneg %p182
        $region34: #{_lambda_.1} parent=11 // pred_check_branch
          %492 = sbr.rel (%p490) target = $region36
        $region35: #{_lambda_.1} parent=11 // pred_region
          %494 = vsyncadd [#allocation8], 0
          %s495 = sshll.u32 %s6, 4
          %s496 = int_to_ptr.hbm [resolvable:$true] %s495
          %s497 = sshll.u32 [#allocation9], 4
          %s498 = int_to_ptr.vmem [resolvable:$true] %s497
          %503 = dma.hbm_to_vmem [thread:$0]  %s496, 256, %s498, [#allocation8], 128, 128, 8
        $region36: #{_lambda_.1} parent=11 // pred_fallthru
          _
        // Predicated region
        $region37: #{_lambda_.1} parent=11 // pred_check
          %p504 = pneg %p203
        $region38: #{_lambda_.1} parent=11 // pred_check_branch
          %506 = sbr.rel (%p504) target = $region40
        $region39: #{_lambda_.1} parent=11 // pred_region
          %508 = vsyncadd [#allocation11], 0
          %s509 = sshll.u32 %s7, 4
          %s510 = int_to_ptr.hbm [resolvable:$true] %s509
          %s511 = sshll.u32 [#allocation10], 4
          %s512 = int_to_ptr.vmem [resolvable:$true] %s511
          %517 = dma.hbm_to_vmem [thread:$0]  %s510, 2304, %s512, [#allocation11], 128, 128, 8
        $region40: #{_lambda_.1} parent=11 // pred_fallthru
          _
        // Predicated region
        $region41: #{_lambda_.1} parent=11 // pred_check
          %p518 = pneg %p224
        $region42: #{_lambda_.1} parent=11 // pred_check_branch
          %520 = sbr.rel (%p518) target = $region44
        $region43: #{_lambda_.1} parent=11 // pred_region
          %522 = vsyncadd [#allocation11], 0
          %s523 = sshll.u32 %s8, 4
          %s524 = int_to_ptr.hbm [resolvable:$true] %s523
          %s525 = sshll.u32 [#allocation12], 4
          %s526 = int_to_ptr.vmem [resolvable:$true] %s525
          %531 = dma.hbm_to_vmem [thread:$0]  %s524, 512, %s526, [#allocation11], 128, 128, 8
        $region44: #{_lambda_.1} parent=11 // pred_fallthru
          _
        // Predicated region
        $region45: #{_lambda_.1} parent=11 // pred_check
          %p532 = pneg %p245
        $region46: #{_lambda_.1} parent=11 // pred_check_branch
          %534 = sbr.rel (%p532) target = $region48
        $region47: #{_lambda_.1} parent=11 // pred_region
          _
        $region48: #{_lambda_.1} parent=11 // pred_fallthru
          _
        // Predicated region
        $region49: #{_lambda_.1} parent=11 // pred_check
          %p535 = pneg %p266
        $region50: #{_lambda_.1} parent=11 // pred_check_branch
          %537 = sbr.rel (%p535) target = $region52
        $region51: #{_lambda_.1} parent=11 // pred_region
          %539 = vsyncadd [#allocation14], 0
          %s540 = sshll.u32 %s10, 4
          %s541 = int_to_ptr.hbm [resolvable:$true] %s540
          %s542 = sshll.u32 [#allocation13], 4
          %s543 = int_to_ptr.vmem [resolvable:$true] %s542
          %548 = dma.hbm_to_vmem [thread:$0]  %s541, 768, %s543, [#allocation14], 128, 128, 8
        $region52: #{_lambda_.1} parent=11 // pred_fallthru
          _
        // Predicated region
        $region53: #{_lambda_.1} parent=11 // pred_check
          %p549 = pneg %p287
        $region54: #{_lambda_.1} parent=11 // pred_check_branch
          %551 = sbr.rel (%p549) target = $region56
        $region55: #{_lambda_.1} parent=11 // pred_region
          %553 = vsyncadd [#allocation14], 0
          %s554 = sshll.u32 %s11, 4
          %s555 = int_to_ptr.hbm [resolvable:$true] %s554
          %s556 = sshll.u32 [#allocation15], 4
          %s557 = int_to_ptr.vmem [resolvable:$true] %s556
          %562 = dma.hbm_to_vmem [thread:$0]  %s555, 256, %s557, [#allocation14], 128, 128, 8
        $region56: #{_lambda_.1} parent=11 // pred_fallthru
          _
        // Predicated region
        $region57: #{_lambda_.1} parent=11 // pred_check
          %p563 = pneg %p308
        $region58: #{_lambda_.1} parent=11 // pred_check_branch
          %565 = sbr.rel (%p563) target = $region60
        $region59: #{_lambda_.1} parent=11 // pred_region
          %567 = vsyncadd [#allocation17], 0
          %s568 = sshll.u32 %s12, 4
          %s569 = int_to_ptr.hbm [resolvable:$true] %s568
          %s570 = sshll.u32 [#allocation16], 4
          %s571 = int_to_ptr.vmem [resolvable:$true] %s570
          %576 = dma.hbm_to_vmem [thread:$0]  %s569, 512, %s571, [#allocation17], 128, 128, 8
        $region60: #{_lambda_.1} parent=11 // pred_fallthru
          _
        // Predicated region
        $region61: #{_lambda_.1} parent=11 // pred_check
          %p577 = pneg %p329
        $region62: #{_lambda_.1} parent=11 // pred_check_branch
          %579 = sbr.rel (%p577) target = $region64
        $region63: #{_lambda_.1} parent=11 // pred_region
          %581 = vsyncadd [#allocation17], 0
          %s582 = sshll.u32 %s13, 4
          %s583 = int_to_ptr.hbm [resolvable:$true] %s582
          %s584 = sshll.u32 [#allocation18], 4
          %s585 = int_to_ptr.vmem [resolvable:$true] %s584
          %590 = dma.hbm_to_vmem [thread:$0]  %s583, 2304, %s585, [#allocation17], 128, 128, 8
        $region64: #{_lambda_.1} parent=11 // pred_fallthru
          _
        // Predicated region
        $region65: #{_lambda_.1} parent=11 // pred_check
          %p591 = pneg %p350
        $region66: #{_lambda_.1} parent=11 // pred_check_branch
          %593 = sbr.rel (%p591) target = $region68
        $region67: #{_lambda_.1} parent=11 // pred_region
          %595 = vsyncadd [#allocation20], 0
          %s596 = sshll.u32 %s14, 4
          %s597 = int_to_ptr.hbm [resolvable:$true] %s596
          %s598 = sshll.u32 [#allocation19], 4
          %s599 = int_to_ptr.vmem [resolvable:$true] %s598
          %604 = dma.hbm_to_vmem [thread:$0]  %s597, 512, %s599, [#allocation20], 128, 128, 8
        $region68: #{_lambda_.1} parent=11 // pred_fallthru
          _
        // Predicated region
        $region69: #{_lambda_.1} parent=11 // pred_check
          %p605 = pneg %p371
        $region70: #{_lambda_.1} parent=11 // pred_check_branch
          %607 = sbr.rel (%p605) target = $region72
        $region71: #{_lambda_.1} parent=11 // pred_region
          %609 = vsyncadd [#allocation20], 0
          %s610 = sshll.u32 %s15, 4
          %s611 = int_to_ptr.hbm [resolvable:$true] %s610
          %s612 = sshll.u32 [#allocation21], 4
          %s613 = int_to_ptr.vmem [resolvable:$true] %s612
          %618 = dma.hbm_to_vmem [thread:$0]  %s611, 20480, %s613, [#allocation20], 256, 256, 16
        $region72: #{_lambda_.1} parent=11 // pred_fallthru
          _
        // Predicated region
        $region73: #{_lambda_.1} parent=11 // pred_check
          %p619 = pneg %p392
        $region74: #{_lambda_.1} parent=11 // pred_check_branch
          %621 = sbr.rel (%p619) target = $region76
        $region75: #{_lambda_.1} parent=11 // pred_region
          _
        $region76: #{_lambda_.1} parent=11 // pred_fallthru
          _
      $region12: #{_lambda_.1} parent=5 // pred_fallthru
        _
      %p622 = scmp.lt.s32.totalorder %s30, 2
      // Predicated region
      $region77: #{_lambda_.1} parent=5 // pred_check
        %p623 = pneg %p622
      $region78: #{_lambda_.1} parent=5 // pred_check_branch
        %625 = sbr.rel (%p623) target = $region80
      $region79: #{_lambda_.1} parent=5 // pred_region
        // Predicated region
        $region81: #{_lambda_.1} parent=79 // pred_check
          %p626 = pneg %p50
        $region82: #{_lambda_.1} parent=79 // pred_check_branch
          %628 = sbr.rel (%p626) target = $region84
        $region83: #{_lambda_.1} parent=79 // pred_region
          %p629 = scmp.lt.s32.totalorder %s30, 1
          %s630 = scalar_select %p629, %s30, 1
          %s631 = smul.addr %s630, 7
          %s632 = smul.addr %s631, 8
          %s633 = scalar_lea.vmem %s0, %s632
        $region84: #{_lambda_.1} parent=79 // pred_fallthru
          _
      $region80: #{_lambda_.1} parent=5 // pred_fallthru
        _
      %p634 = scmp.le.s32.totalorder 1, %s30
      %p635 = scmp.lt.s32.totalorder %s30, 3
      %p636 = pnand %p634, %p635
      %p637 = pneg %p636
      // Predicated region
      $region85: #{_lambda_.1} parent=5 // pred_check
        _
      $region86: #{_lambda_.1} parent=5 // pred_check_branch
        %639 = sbr.rel (%p636) target = $region88
      $region87: #{_lambda_.1} parent=5 // pred_region
        %s640 = ssub.s32 %s30, 1
        // Predicated region
        $region89: #{_lambda_.1} parent=87 // pred_check
          %p641 = pneg %p77
        $region90: #{_lambda_.1} parent=87 // pred_check_branch
          %643 = sbr.rel (%p641) target = $region92
        $region91: #{_lambda_.1} parent=87 // pred_region
          %645 = dma.done [#allocation3], 1152
        $region92: #{_lambda_.1} parent=87 // pred_fallthru
          _
        // Predicated region
        $region93: #{_lambda_.1} parent=87 // pred_check
          %p646 = pneg %p98
        $region94: #{_lambda_.1} parent=87 // pred_check_branch
          %648 = sbr.rel (%p646) target = $region96
        $region95: #{_lambda_.1} parent=87 // pred_region
          %650 = dma.done [#allocation5], 256
        $region96: #{_lambda_.1} parent=87 // pred_fallthru
          _
        // Predicated region
        $region97: #{_lambda_.1} parent=87 // pred_check
          %p651 = pneg %p119
        $region98: #{_lambda_.1} parent=87 // pred_check_branch
          %653 = sbr.rel (%p651) target = $region100
        $region99: #{_lambda_.1} parent=87 // pred_region
          %655 = dma.done [#allocation5], 2304
        $region100: #{_lambda_.1} parent=87 // pred_fallthru
          _
        // Predicated region
        $region101: #{_lambda_.1} parent=87 // pred_check
          %p656 = pneg %p161
        $region102: #{_lambda_.1} parent=87 // pred_check_branch
          %658 = sbr.rel (%p656) target = $region104
        $region103: #{_lambda_.1} parent=87 // pred_region
          %660 = dma.done [#allocation8], 128
        $region104: #{_lambda_.1} parent=87 // pred_fallthru
          _
        // Predicated region
        $region105: #{_lambda_.1} parent=87 // pred_check
          %p661 = pneg %p182
        $region106: #{_lambda_.1} parent=87 // pred_check_branch
          %663 = sbr.rel (%p661) target = $region108
        $region107: #{_lambda_.1} parent=87 // pred_region
          %665 = dma.done [#allocation8], 256
        $region108: #{_lambda_.1} parent=87 // pred_fallthru
          _
        // Predicated region
        $region109: #{_lambda_.1} parent=87 // pred_check
          %p666 = pneg %p203
        $region110: #{_lambda_.1} parent=87 // pred_check_branch
          %668 = sbr.rel (%p666) target = $region112
        $region111: #{_lambda_.1} parent=87 // pred_region
          %670 = dma.done [#allocation11], 2304
        $region112: #{_lambda_.1} parent=87 // pred_fallthru
          _
        // Predicated region
        $region113: #{_lambda_.1} parent=87 // pred_check
          %p671 = pneg %p224
        $region114: #{_lambda_.1} parent=87 // pred_check_branch
          %673 = sbr.rel (%p671) target = $region116
        $region115: #{_lambda_.1} parent=87 // pred_region
          %675 = dma.done [#allocation11], 512
        $region116: #{_lambda_.1} parent=87 // pred_fallthru
          _
        // Predicated region
        $region117: #{_lambda_.1} parent=87 // pred_check
          %p676 = pneg %p266
        $region118: #{_lambda_.1} parent=87 // pred_check_branch
          %678 = sbr.rel (%p676) target = $region120
        $region119: #{_lambda_.1} parent=87 // pred_region
          %680 = dma.done [#allocation14], 768
        $region120: #{_lambda_.1} parent=87 // pred_fallthru
          _
        // Predicated region
        $region121: #{_lambda_.1} parent=87 // pred_check
          %p681 = pneg %p287
        $region122: #{_lambda_.1} parent=87 // pred_check_branch
          %683 = sbr.rel (%p681) target = $region124
        $region123: #{_lambda_.1} parent=87 // pred_region
          %685 = dma.done [#allocation14], 256
        $region124: #{_lambda_.1} parent=87 // pred_fallthru
          _
        // Predicated region
        $region125: #{_lambda_.1} parent=87 // pred_check
          %p686 = pneg %p308
        $region126: #{_lambda_.1} parent=87 // pred_check_branch
          %688 = sbr.rel (%p686) target = $region128
        $region127: #{_lambda_.1} parent=87 // pred_region
          %690 = dma.done [#allocation17], 512
        $region128: #{_lambda_.1} parent=87 // pred_fallthru
          _
        // Predicated region
        $region129: #{_lambda_.1} parent=87 // pred_check
          %p691 = pneg %p329
        $region130: #{_lambda_.1} parent=87 // pred_check_branch
          %693 = sbr.rel (%p691) target = $region132
        $region131: #{_lambda_.1} parent=87 // pred_region
          %695 = dma.done [#allocation17], 2304
        $region132: #{_lambda_.1} parent=87 // pred_fallthru
          _
        // Predicated region
        $region133: #{_lambda_.1} parent=87 // pred_check
          %p696 = pneg %p350
        $region134: #{_lambda_.1} parent=87 // pred_check_branch
          %698 = sbr.rel (%p696) target = $region136
        $region135: #{_lambda_.1} parent=87 // pred_region
          %700 = dma.done [#allocation20], 512
        $region136: #{_lambda_.1} parent=87 // pred_fallthru
          _
        // Predicated region
        $region137: #{_lambda_.1} parent=87 // pred_check
          %p701 = pneg %p371
        $region138: #{_lambda_.1} parent=87 // pred_check_branch
          %703 = sbr.rel (%p701) target = $region140
        $region139: #{_lambda_.1} parent=87 // pred_region
          %705 = dma.done [#allocation20], 20480
        $region140: #{_lambda_.1} parent=87 // pred_fallthru
          _
        %p706 = scmp.lt.s32.totalorder %s35, 1
        %s707 = scalar_select %p706, %s35, 1
        %s708 = smul.addr %s707, 7
        %s709 = smul.addr %s708, 8
        %s710 = scalar_lea.vmem %s0, %s709
        %p711 = pneg %p56
        %p712 = pneg %p53
        %p713 = pneg %p77
        %p714 = pneg %p74
        %p715 = pneg %p98
        %p716 = pneg %p95
        %p717 = pneg %p119
        %p718 = pneg %p116
        %p719 = pneg %p140
        %p720 = pneg %p137
        %p721 = pneg %p161
        %p722 = pneg %p158
        %p723 = pneg %p182
        %p724 = pneg %p179
        %p725 = pneg %p203
        %p726 = pneg %p200
        %p727 = pneg %p224
        %p728 = pneg %p221
        %p729 = pneg %p245
        %p730 = pneg %p242
        %p731 = pneg %p266
        %p732 = pneg %p263
        %p733 = pneg %p287
        %p734 = pneg %p284
        %p735 = pneg %p308
        %p736 = pneg %p305
        %p737 = pneg %p329
        %p738 = pneg %p326
        %p739 = pneg %p350
        %p740 = pneg %p347
        %p741 = pneg %p371
        %p742 = pneg %p368
        %p743 = pneg %p392
        %p744 = pneg %p389
        %p745 = pneg %p418
        %p746 = pneg %p415
        %p747 = scmp.lt.s32.totalorder %s35, 1
        %s748 = scalar_select %p747, %s35, 1
        %s749 = smul.addr %s748, 2
        %s750 = smul.addr %s749, 8
        %s751 = scalar_lea.vmem %s17, %s750
        %p752 = scmp.lt.s32.totalorder %s35, 1
        %s753 = scalar_select %p752, %s35, 1
        %s754 = smul.addr %s753, 7
        %s755 = smul.addr %s754, 8
        %s756 = scalar_lea.vmem %s0, %s755
        %p757 = scmp.lt.s32.totalorder %s35, 1
        %s758 = scalar_select %p757, %s35, 1
        %s759 = smul.addr %s758, 2
        %s760 = smul.addr %s759, 8
        %s761 = scalar_lea.vmem %s17, %s760
        %v762 = vld [vmem:[%s756] sm:$0xff]
        %v763 = vld [vmem:[%s756 + $0x8] sm:$0xff]
        %v764 = vld [vmem:[%s756 + $0x10] sm:$0xff]
        %v765 = vld [vmem:[%s756 + $0x18] sm:$0xff]
        %v766 = vld [vmem:[%s756 + $0x20] sm:$0xff]
        %v767 = vld [vmem:[%s756 + $0x28] sm:$0xff]
        %v768 = vld [vmem:[%s756 + $0x30] sm:$0xff]
        %v769 = vld [vmem:[#allocation2] sm:$0xff]
        %s770 = scalar_lea.vmem [#allocation2], 8
        %v771 = vld [vmem:[%s770] sm:$0xff]
        %778 = vrot.lane.b32.xlu0 %v762, 127
        %v779 = vpop.permute.xlu0 %778
        %780 = vrot.lane.b32.xlu0 %v763, 127
        %v781 = vpop.permute.xlu0 %780
        %782 = vrot.lane.b32.xlu0 %v764, 127
        %v783 = vpop.permute.xlu0 %782
        %784 = vrot.lane.b32.xlu0 %v765, 127
        %v785 = vpop.permute.xlu0 %784
        %786 = vrot.lane.b32.xlu0 %v766, 127
        %v787 = vpop.permute.xlu0 %786
        %788 = vrot.lane.b32.xlu0 %v767, 127
        %v789 = vpop.permute.xlu0 %788
        %vm790 = vcmask 1039360
        %v791 = vsel %vm790, %v779, %v781
        %v792 = vsel %vm790, %v781, %v783
        %v793 = vsel %vm790, %v783, %v785
        %v794 = vsel %vm790, %v785, %v787
        %v795 = vsel %vm790, %v787, %v789
        %vm802 = vcmask 64512
        %v804 = vsel %vm802, %v771, 0
        %806 = vmatpush.msra.mxu0 0.0
        %807 = vmatpush.msra.mxu0 0.0
        %808 = vmatpush.msra.mxu0 0.0
        %809 = vmatpush.msra.mxu0 0.0
        %810 = vmatpush.msra.mxu0 0.0
        %811 = vmatpush.msra.mxu0 0.0
        %812 = vmatpush.msra.mxu0 0.0
        %813 = vmatpush.msra.mxu0 0.0
        %814 = vmatpush.msra.mxu0 0.0
        %815 = vmatpush.msra.mxu0 0.0
        %816 = vmatpush.msra.mxu0 0.0
        %817 = vmatpush.msra.mxu0 0.0
        %818 = vmatpush.msra.mxu0 0.0
        %819 = vmatpush.msra.mxu0 0.0
        %820 = vmatpush.msra.mxu0 0.0
        %821 = vmatpush.msra.mxu0 %v791
        %822 = vmatmul.f32.gmra.mxu0 %v804
        %v823 = vpop.f32.mrf.mxu0
        %v824 = vadd.f32 0.0, %v823
        %825 = vdwg.mxu0
        %826 = vmatpush.msra.mxu0 0.0
        %827 = vmatpush.msra.mxu0 0.0
        %828 = vmatpush.msra.mxu0 0.0
        %829 = vmatpush.msra.mxu0 0.0
        %830 = vmatpush.msra.mxu0 0.0
        %831 = vmatpush.msra.mxu0 0.0
        %832 = vmatpush.msra.mxu0 0.0
        %833 = vmatpush.msra.mxu0 0.0
        %834 = vmatpush.msra.mxu0 0.0
        %835 = vmatpush.msra.mxu0 0.0
        %836 = vmatpush.msra.mxu0 0.0
        %837 = vmatpush.msra.mxu0 0.0
        %838 = vmatpush.msra.mxu0 0.0
        %839 = vmatpush.msra.mxu0 0.0
        %840 = vmatpush.msra.mxu0 0.0
        %841 = vmatpush.msra.mxu0 %v792
        %842 = vmatmul.f32.gmra.mxu0 %v804
        %v843 = vpop.f32.mrf.mxu0
        %v844 = vadd.f32 0.0, %v843
        %845 = vdwg.mxu0
        %846 = vmatpush.msra.mxu0 0.0
        %847 = vmatpush.msra.mxu0 0.0
        %848 = vmatpush.msra.mxu0 0.0
        %849 = vmatpush.msra.mxu0 0.0
        %850 = vmatpush.msra.mxu0 0.0
        %851 = vmatpush.msra.mxu0 0.0
        %852 = vmatpush.msra.mxu0 0.0
        %853 = vmatpush.msra.mxu0 0.0
        %854 = vmatpush.msra.mxu0 0.0
        %855 = vmatpush.msra.mxu0 0.0
        %856 = vmatpush.msra.mxu0 0.0
        %857 = vmatpush.msra.mxu0 0.0
        %858 = vmatpush.msra.mxu0 0.0
        %859 = vmatpush.msra.mxu0 0.0
        %860 = vmatpush.msra.mxu0 0.0
        %861 = vmatpush.msra.mxu0 %v793
        %862 = vmatmul.f32.gmra.mxu0 %v804
        %v863 = vpop.f32.mrf.mxu0
        %v864 = vadd.f32 0.0, %v863
        %865 = vdwg.mxu0
        %866 = vmatpush.msra.mxu0 0.0
        %867 = vmatpush.msra.mxu0 0.0
        %868 = vmatpush.msra.mxu0 0.0
        %869 = vmatpush.msra.mxu0 0.0
        %870 = vmatpush.msra.mxu0 0.0
        %871 = vmatpush.msra.mxu0 0.0
        %872 = vmatpush.msra.mxu0 0.0
        %873 = vmatpush.msra.mxu0 0.0
        %874 = vmatpush.msra.mxu0 0.0
        %875 = vmatpush.msra.mxu0 0.0
        %876 = vmatpush.msra.mxu0 0.0
        %877 = vmatpush.msra.mxu0 0.0
        %878 = vmatpush.msra.mxu0 0.0
        %879 = vmatpush.msra.mxu0 0.0
        %880 = vmatpush.msra.mxu0 0.0
        %881 = vmatpush.msra.mxu0 %v794
        %882 = vmatmul.f32.gmra.mxu0 %v804
        %v883 = vpop.f32.mrf.mxu0
        %v884 = vadd.f32 0.0, %v883
        %885 = vdwg.mxu0
        %886 = vmatpush.msra.mxu0 0.0
        %887 = vmatpush.msra.mxu0 0.0
        %888 = vmatpush.msra.mxu0 0.0
        %889 = vmatpush.msra.mxu0 0.0
        %890 = vmatpush.msra.mxu0 0.0
        %891 = vmatpush.msra.mxu0 0.0
        %892 = vmatpush.msra.mxu0 0.0
        %893 = vmatpush.msra.mxu0 0.0
        %894 = vmatpush.msra.mxu0 0.0
        %895 = vmatpush.msra.mxu0 0.0
        %896 = vmatpush.msra.mxu0 0.0
        %897 = vmatpush.msra.mxu0 0.0
        %898 = vmatpush.msra.mxu0 0.0
        %899 = vmatpush.msra.mxu0 0.0
        %900 = vmatpush.msra.mxu0 0.0
        %901 = vmatpush.msra.mxu0 %v795
        %902 = vmatmul.f32.gmra.mxu0 %v804
        %v903 = vpop.f32.mrf.mxu0
        %v904 = vadd.f32 0.0, %v903
        %905 = vdwg.mxu0
        %906 = vmatpush.msra.mxu0 0.0
        %907 = vmatpush.msra.mxu0 0.0
        %908 = vmatpush.msra.mxu0 0.0
        %909 = vmatpush.msra.mxu0 0.0
        %910 = vmatpush.msra.mxu0 0.0
        %911 = vmatpush.msra.mxu0 0.0
        %912 = vmatpush.msra.mxu0 0.0
        %913 = vmatpush.msra.mxu0 0.0
        %914 = vmatpush.msra.mxu0 0.0
        %915 = vmatpush.msra.mxu0 0.0
        %916 = vmatpush.msra.mxu0 0.0
        %917 = vmatpush.msra.mxu0 0.0
        %918 = vmatpush.msra.mxu0 0.0
        %919 = vmatpush.msra.mxu0 0.0
        %920 = vmatpush.msra.mxu0 0.0
        %921 = vmatpush.msra.mxu0 %v789
        %922 = vmatmul.f32.gmra.mxu0 %v804
        %v923 = vpop.f32.mrf.mxu0
        %v924 = vadd.f32 0.0, %v923
        %925 = vdwg.mxu0
        %v927 = vsel %vm802, %v769, 0
        %929 = vmatpush.msra.mxu0 0.0
        %930 = vmatpush.msra.mxu0 0.0
        %931 = vmatpush.msra.mxu0 0.0
        %932 = vmatpush.msra.mxu0 0.0
        %933 = vmatpush.msra.mxu0 0.0
        %934 = vmatpush.msra.mxu0 0.0
        %935 = vmatpush.msra.mxu0 0.0
        %936 = vmatpush.msra.mxu0 0.0
        %937 = vmatpush.msra.mxu0 0.0
        %938 = vmatpush.msra.mxu0 0.0
        %939 = vmatpush.msra.mxu0 0.0
        %940 = vmatpush.msra.mxu0 0.0
        %941 = vmatpush.msra.mxu0 0.0
        %942 = vmatpush.msra.mxu0 0.0
        %943 = vmatpush.msra.mxu0 0.0
        %944 = vmatpush.msra.mxu0 %v762
        %945 = vmatmul.f32.gmra.mxu0 %v927
        %v946 = vpop.f32.mrf.mxu0
        %v947 = vadd.f32 %v824, %v946
        %948 = vdwg.mxu0
        %949 = vmatpush.msra.mxu0 0.0
        %950 = vmatpush.msra.mxu0 0.0
        %951 = vmatpush.msra.mxu0 0.0
        %952 = vmatpush.msra.mxu0 0.0
        %953 = vmatpush.msra.mxu0 0.0
        %954 = vmatpush.msra.mxu0 0.0
        %955 = vmatpush.msra.mxu0 0.0
        %956 = vmatpush.msra.mxu0 0.0
        %957 = vmatpush.msra.mxu0 0.0
        %958 = vmatpush.msra.mxu0 0.0
        %959 = vmatpush.msra.mxu0 0.0
        %960 = vmatpush.msra.mxu0 0.0
        %961 = vmatpush.msra.mxu0 0.0
        %962 = vmatpush.msra.mxu0 0.0
        %963 = vmatpush.msra.mxu0 0.0
        %964 = vmatpush.msra.mxu0 %v763
        %965 = vmatmul.f32.gmra.mxu0 %v927
        %v966 = vpop.f32.mrf.mxu0
        %v967 = vadd.f32 %v844, %v966
        %968 = vdwg.mxu0
        %969 = vmatpush.msra.mxu0 0.0
        %970 = vmatpush.msra.mxu0 0.0
        %971 = vmatpush.msra.mxu0 0.0
        %972 = vmatpush.msra.mxu0 0.0
        %973 = vmatpush.msra.mxu0 0.0
        %974 = vmatpush.msra.mxu0 0.0
        %975 = vmatpush.msra.mxu0 0.0
        %976 = vmatpush.msra.mxu0 0.0
        %977 = vmatpush.msra.mxu0 0.0
        %978 = vmatpush.msra.mxu0 0.0
        %979 = vmatpush.msra.mxu0 0.0
        %980 = vmatpush.msra.mxu0 0.0
        %981 = vmatpush.msra.mxu0 0.0
        %982 = vmatpush.msra.mxu0 0.0
        %983 = vmatpush.msra.mxu0 0.0
        %984 = vmatpush.msra.mxu0 %v764
        %985 = vmatmul.f32.gmra.mxu0 %v927
        %v986 = vpop.f32.mrf.mxu0
        %v987 = vadd.f32 %v864, %v986
        %988 = vdwg.mxu0
        %989 = vmatpush.msra.mxu0 0.0
        %990 = vmatpush.msra.mxu0 0.0
        %991 = vmatpush.msra.mxu0 0.0
        %992 = vmatpush.msra.mxu0 0.0
        %993 = vmatpush.msra.mxu0 0.0
        %994 = vmatpush.msra.mxu0 0.0
        %995 = vmatpush.msra.mxu0 0.0
        %996 = vmatpush.msra.mxu0 0.0
        %997 = vmatpush.msra.mxu0 0.0
        %998 = vmatpush.msra.mxu0 0.0
        %999 = vmatpush.msra.mxu0 0.0
        %1000 = vmatpush.msra.mxu0 0.0
        %1001 = vmatpush.msra.mxu0 0.0
        %1002 = vmatpush.msra.mxu0 0.0
        %1003 = vmatpush.msra.mxu0 0.0
        %1004 = vmatpush.msra.mxu0 %v765
        %1005 = vmatmul.f32.gmra.mxu0 %v927
        %v1006 = vpop.f32.mrf.mxu0
        %v1007 = vadd.f32 %v884, %v1006
        %1008 = vdwg.mxu0
        %1009 = vmatpush.msra.mxu0 0.0
        %1010 = vmatpush.msra.mxu0 0.0
        %1011 = vmatpush.msra.mxu0 0.0
        %1012 = vmatpush.msra.mxu0 0.0
        %1013 = vmatpush.msra.mxu0 0.0
        %1014 = vmatpush.msra.mxu0 0.0
        %1015 = vmatpush.msra.mxu0 0.0
        %1016 = vmatpush.msra.mxu0 0.0
        %1017 = vmatpush.msra.mxu0 0.0
        %1018 = vmatpush.msra.mxu0 0.0
        %1019 = vmatpush.msra.mxu0 0.0
        %1020 = vmatpush.msra.mxu0 0.0
        %1021 = vmatpush.msra.mxu0 0.0
        %1022 = vmatpush.msra.mxu0 0.0
        %1023 = vmatpush.msra.mxu0 0.0
        %1024 = vmatpush.msra.mxu0 %v766
        %1025 = vmatmul.f32.gmra.mxu0 %v927
        %v1026 = vpop.f32.mrf.mxu0
        %v1027 = vadd.f32 %v904, %v1026
        %1028 = vdwg.mxu0
        %1029 = vmatpush.msra.mxu0 0.0
        %1030 = vmatpush.msra.mxu0 0.0
        %1031 = vmatpush.msra.mxu0 0.0
        %1032 = vmatpush.msra.mxu0 0.0
        %1033 = vmatpush.msra.mxu0 0.0
        %1034 = vmatpush.msra.mxu0 0.0
        %1035 = vmatpush.msra.mxu0 0.0
        %1036 = vmatpush.msra.mxu0 0.0
        %1037 = vmatpush.msra.mxu0 0.0
        %1038 = vmatpush.msra.mxu0 0.0
        %1039 = vmatpush.msra.mxu0 0.0
        %1040 = vmatpush.msra.mxu0 0.0
        %1041 = vmatpush.msra.mxu0 0.0
        %1042 = vmatpush.msra.mxu0 0.0
        %1043 = vmatpush.msra.mxu0 0.0
        %1044 = vmatpush.msra.mxu0 %v767
        %1045 = vmatmul.f32.gmra.mxu0 %v927
        %v1046 = vpop.f32.mrf.mxu0
        %v1047 = vadd.f32 %v924, %v1046
        %1048 = vdwg.mxu0
        %s1049 = scalar_lea.vmem [#allocation2], 16
        %v1050 = vld [vmem:[%s1049] sm:$0xff]
        %1051 = vrot.lane.b32.xlu0 %v762, 126
        %v1052 = vpop.permute.xlu0 %1051
        %1053 = vrot.lane.b32.xlu0 %v763, 126
        %v1054 = vpop.permute.xlu0 %1053
        %1055 = vrot.lane.b32.xlu0 %v764, 126
        %v1056 = vpop.permute.xlu0 %1055
        %1057 = vrot.lane.b32.xlu0 %v765, 126
        %v1058 = vpop.permute.xlu0 %1057
        %1059 = vrot.lane.b32.xlu0 %v766, 126
        %v1060 = vpop.permute.xlu0 %1059
        %1061 = vrot.lane.b32.xlu0 %v767, 126
        %v1062 = vpop.permute.xlu0 %1061
        %vm1063 = vcmask 1031168
        %v1064 = vsel %vm1063, %v1052, %v1054
        %v1065 = vsel %vm1063, %v1054, %v1056
        %v1066 = vsel %vm1063, %v1056, %v1058
        %v1067 = vsel %vm1063, %v1058, %v1060
        %v1068 = vsel %vm1063, %v1060, %v1062
        %v1076 = vsel %vm802, %v1050, 0
        %1078 = vmatpush.msra.mxu0 0.0
        %1079 = vmatpush.msra.mxu0 0.0
        %1080 = vmatpush.msra.mxu0 0.0
        %1081 = vmatpush.msra.mxu0 0.0
        %1082 = vmatpush.msra.mxu0 0.0
        %1083 = vmatpush.msra.mxu0 0.0
        %1084 = vmatpush.msra.mxu0 0.0
        %1085 = vmatpush.msra.mxu0 0.0
        %1086 = vmatpush.msra.mxu0 0.0
        %1087 = vmatpush.msra.mxu0 0.0
        %1088 = vmatpush.msra.mxu0 0.0
        %1089 = vmatpush.msra.mxu0 0.0
        %1090 = vmatpush.msra.mxu0 0.0
        %1091 = vmatpush.msra.mxu0 0.0
        %1092 = vmatpush.msra.mxu0 0.0
        %1093 = vmatpush.msra.mxu0 %v1064
        %1094 = vmatmul.f32.gmra.mxu0 %v1076
        %v1095 = vpop.f32.mrf.mxu0
        %v1096 = vadd.f32 0.0, %v1095
        %1097 = vdwg.mxu0
        %1098 = vmatpush.msra.mxu0 0.0
        %1099 = vmatpush.msra.mxu0 0.0
        %1100 = vmatpush.msra.mxu0 0.0
        %1101 = vmatpush.msra.mxu0 0.0
        %1102 = vmatpush.msra.mxu0 0.0
        %1103 = vmatpush.msra.mxu0 0.0
        %1104 = vmatpush.msra.mxu0 0.0
        %1105 = vmatpush.msra.mxu0 0.0
        %1106 = vmatpush.msra.mxu0 0.0
        %1107 = vmatpush.msra.mxu0 0.0
        %1108 = vmatpush.msra.mxu0 0.0
        %1109 = vmatpush.msra.mxu0 0.0
        %1110 = vmatpush.msra.mxu0 0.0
        %1111 = vmatpush.msra.mxu0 0.0
        %1112 = vmatpush.msra.mxu0 0.0
        %1113 = vmatpush.msra.mxu0 %v1065
        %1114 = vmatmul.f32.gmra.mxu0 %v1076
        %v1115 = vpop.f32.mrf.mxu0
        %v1116 = vadd.f32 0.0, %v1115
        %1117 = vdwg.mxu0
        %1118 = vmatpush.msra.mxu0 0.0
        %1119 = vmatpush.msra.mxu0 0.0
        %1120 = vmatpush.msra.mxu0 0.0
        %1121 = vmatpush.msra.mxu0 0.0
        %1122 = vmatpush.msra.mxu0 0.0
        %1123 = vmatpush.msra.mxu0 0.0
        %1124 = vmatpush.msra.mxu0 0.0
        %1125 = vmatpush.msra.mxu0 0.0
        %1126 = vmatpush.msra.mxu0 0.0
        %1127 = vmatpush.msra.mxu0 0.0
        %1128 = vmatpush.msra.mxu0 0.0
        %1129 = vmatpush.msra.mxu0 0.0
        %1130 = vmatpush.msra.mxu0 0.0
        %1131 = vmatpush.msra.mxu0 0.0
        %1132 = vmatpush.msra.mxu0 0.0
        %1133 = vmatpush.msra.mxu0 %v1066
        %1134 = vmatmul.f32.gmra.mxu0 %v1076
        %v1135 = vpop.f32.mrf.mxu0
        %v1136 = vadd.f32 0.0, %v1135
        %1137 = vdwg.mxu0
        %1138 = vmatpush.msra.mxu0 0.0
        %1139 = vmatpush.msra.mxu0 0.0
        %1140 = vmatpush.msra.mxu0 0.0
        %1141 = vmatpush.msra.mxu0 0.0
        %1142 = vmatpush.msra.mxu0 0.0
        %1143 = vmatpush.msra.mxu0 0.0
        %1144 = vmatpush.msra.mxu0 0.0
        %1145 = vmatpush.msra.mxu0 0.0
        %1146 = vmatpush.msra.mxu0 0.0
        %1147 = vmatpush.msra.mxu0 0.0
        %1148 = vmatpush.msra.mxu0 0.0
        %1149 = vmatpush.msra.mxu0 0.0
        %1150 = vmatpush.msra.mxu0 0.0
        %1151 = vmatpush.msra.mxu0 0.0
        %1152 = vmatpush.msra.mxu0 0.0
        %1153 = vmatpush.msra.mxu0 %v1067
        %1154 = vmatmul.f32.gmra.mxu0 %v1076
        %v1155 = vpop.f32.mrf.mxu0
        %v1156 = vadd.f32 0.0, %v1155
        %1157 = vdwg.mxu0
        %1158 = vmatpush.msra.mxu0 0.0
        %1159 = vmatpush.msra.mxu0 0.0
        %1160 = vmatpush.msra.mxu0 0.0
        %1161 = vmatpush.msra.mxu0 0.0
        %1162 = vmatpush.msra.mxu0 0.0
        %1163 = vmatpush.msra.mxu0 0.0
        %1164 = vmatpush.msra.mxu0 0.0
        %1165 = vmatpush.msra.mxu0 0.0
        %1166 = vmatpush.msra.mxu0 0.0
        %1167 = vmatpush.msra.mxu0 0.0
        %1168 = vmatpush.msra.mxu0 0.0
        %1169 = vmatpush.msra.mxu0 0.0
        %1170 = vmatpush.msra.mxu0 0.0
        %1171 = vmatpush.msra.mxu0 0.0
        %1172 = vmatpush.msra.mxu0 0.0
        %1173 = vmatpush.msra.mxu0 %v1068
        %1174 = vmatmul.f32.gmra.mxu0 %v1076
        %v1175 = vpop.f32.mrf.mxu0
        %v1176 = vadd.f32 0.0, %v1175
        %1177 = vdwg.mxu0
        %1178 = vmatpush.msra.mxu0 0.0
        %1179 = vmatpush.msra.mxu0 0.0
        %1180 = vmatpush.msra.mxu0 0.0
        %1181 = vmatpush.msra.mxu0 0.0
        %1182 = vmatpush.msra.mxu0 0.0
        %1183 = vmatpush.msra.mxu0 0.0
        %1184 = vmatpush.msra.mxu0 0.0
        %1185 = vmatpush.msra.mxu0 0.0
        %1186 = vmatpush.msra.mxu0 0.0
        %1187 = vmatpush.msra.mxu0 0.0
        %1188 = vmatpush.msra.mxu0 0.0
        %1189 = vmatpush.msra.mxu0 0.0
        %1190 = vmatpush.msra.mxu0 0.0
        %1191 = vmatpush.msra.mxu0 0.0
        %1192 = vmatpush.msra.mxu0 0.0
        %1193 = vmatpush.msra.mxu0 %v1062
        %1194 = vmatmul.f32.gmra.mxu0 %v1076
        %v1195 = vpop.f32.mrf.mxu0
        %v1196 = vadd.f32 0.0, %v1195
        %1197 = vdwg.mxu0
        %v1198 = vadd.f32 %v947, %v1096
        %v1199 = vadd.f32 %v967, %v1116
        %v1200 = vadd.f32 %v987, %v1136
        %v1201 = vadd.f32 %v1007, %v1156
        %v1202 = vadd.f32 %v1027, %v1176
        %v1203 = vadd.f32 %v1047, %v1196
        %s1204 = scalar_lea.vmem [#allocation2], 24
        %v1205 = vld [vmem:[%s1204] sm:$0xff]
        %1206 = vrot.lane.b32.xlu0 %v762, 100
        %v1207 = vpop.permute.xlu0 %1206
        %1208 = vrot.lane.b32.xlu0 %v763, 100
        %v1209 = vpop.permute.xlu0 %1208
        %1210 = vrot.lane.b32.xlu0 %v764, 100
        %v1211 = vpop.permute.xlu0 %1210
        %1212 = vrot.lane.b32.xlu0 %v765, 100
        %v1213 = vpop.permute.xlu0 %1212
        %1214 = vrot.lane.b32.xlu0 %v766, 100
        %v1215 = vpop.permute.xlu0 %1214
        %1216 = vrot.lane.b32.xlu0 %v767, 100
        %v1217 = vpop.permute.xlu0 %1216
        %vm1218 = vcmask 818176
        %v1219 = vsel %vm1218, %v1207, %v1209
        %v1220 = vsel %vm1218, %v1209, %v1211
        %v1221 = vsel %vm1218, %v1211, %v1213
        %v1222 = vsel %vm1218, %v1213, %v1215
        %v1223 = vsel %vm1218, %v1215, %v1217
        %v1231 = vsel %vm802, %v1205, 0
        %1233 = vmatpush.msra.mxu0 0.0
        %1234 = vmatpush.msra.mxu0 0.0
        %1235 = vmatpush.msra.mxu0 0.0
        %1236 = vmatpush.msra.mxu0 0.0
        %1237 = vmatpush.msra.mxu0 0.0
        %1238 = vmatpush.msra.mxu0 0.0
        %1239 = vmatpush.msra.mxu0 0.0
        %1240 = vmatpush.msra.mxu0 0.0
        %1241 = vmatpush.msra.mxu0 0.0
        %1242 = vmatpush.msra.mxu0 0.0
        %1243 = vmatpush.msra.mxu0 0.0
        %1244 = vmatpush.msra.mxu0 0.0
        %1245 = vmatpush.msra.mxu0 0.0
        %1246 = vmatpush.msra.mxu0 0.0
        %1247 = vmatpush.msra.mxu0 0.0
        %1248 = vmatpush.msra.mxu0 %v1219
        %1249 = vmatmul.f32.gmra.mxu0 %v1231
        %v1250 = vpop.f32.mrf.mxu0
        %v1251 = vadd.f32 0.0, %v1250
        %1252 = vdwg.mxu0
        %1253 = vmatpush.msra.mxu0 0.0
        %1254 = vmatpush.msra.mxu0 0.0
        %1255 = vmatpush.msra.mxu0 0.0
        %1256 = vmatpush.msra.mxu0 0.0
        %1257 = vmatpush.msra.mxu0 0.0
        %1258 = vmatpush.msra.mxu0 0.0
        %1259 = vmatpush.msra.mxu0 0.0
        %1260 = vmatpush.msra.mxu0 0.0
        %1261 = vmatpush.msra.mxu0 0.0
        %1262 = vmatpush.msra.mxu0 0.0
        %1263 = vmatpush.msra.mxu0 0.0
        %1264 = vmatpush.msra.mxu0 0.0
        %1265 = vmatpush.msra.mxu0 0.0
        %1266 = vmatpush.msra.mxu0 0.0
        %1267 = vmatpush.msra.mxu0 0.0
        %1268 = vmatpush.msra.mxu0 %v1220
        %1269 = vmatmul.f32.gmra.mxu0 %v1231
        %v1270 = vpop.f32.mrf.mxu0
        %v1271 = vadd.f32 0.0, %v1270
        %1272 = vdwg.mxu0
        %1273 = vmatpush.msra.mxu0 0.0
        %1274 = vmatpush.msra.mxu0 0.0
        %1275 = vmatpush.msra.mxu0 0.0
        %1276 = vmatpush.msra.mxu0 0.0
        %1277 = vmatpush.msra.mxu0 0.0
        %1278 = vmatpush.msra.mxu0 0.0
        %1279 = vmatpush.msra.mxu0 0.0
        %1280 = vmatpush.msra.mxu0 0.0
        %1281 = vmatpush.msra.mxu0 0.0
        %1282 = vmatpush.msra.mxu0 0.0
        %1283 = vmatpush.msra.mxu0 0.0
        %1284 = vmatpush.msra.mxu0 0.0
        %1285 = vmatpush.msra.mxu0 0.0
        %1286 = vmatpush.msra.mxu0 0.0
        %1287 = vmatpush.msra.mxu0 0.0
        %1288 = vmatpush.msra.mxu0 %v1221
        %1289 = vmatmul.f32.gmra.mxu0 %v1231
        %v1290 = vpop.f32.mrf.mxu0
        %v1291 = vadd.f32 0.0, %v1290
        %1292 = vdwg.mxu0
        %1293 = vmatpush.msra.mxu0 0.0
        %1294 = vmatpush.msra.mxu0 0.0
        %1295 = vmatpush.msra.mxu0 0.0
        %1296 = vmatpush.msra.mxu0 0.0
        %1297 = vmatpush.msra.mxu0 0.0
        %1298 = vmatpush.msra.mxu0 0.0
        %1299 = vmatpush.msra.mxu0 0.0
        %1300 = vmatpush.msra.mxu0 0.0
        %1301 = vmatpush.msra.mxu0 0.0
        %1302 = vmatpush.msra.mxu0 0.0
        %1303 = vmatpush.msra.mxu0 0.0
        %1304 = vmatpush.msra.mxu0 0.0
        %1305 = vmatpush.msra.mxu0 0.0
        %1306 = vmatpush.msra.mxu0 0.0
        %1307 = vmatpush.msra.mxu0 0.0
        %1308 = vmatpush.msra.mxu0 %v1222
        %1309 = vmatmul.f32.gmra.mxu0 %v1231
        %v1310 = vpop.f32.mrf.mxu0
        %v1311 = vadd.f32 0.0, %v1310
        %1312 = vdwg.mxu0
        %1313 = vmatpush.msra.mxu0 0.0
        %1314 = vmatpush.msra.mxu0 0.0
        %1315 = vmatpush.msra.mxu0 0.0
        %1316 = vmatpush.msra.mxu0 0.0
        %1317 = vmatpush.msra.mxu0 0.0
        %1318 = vmatpush.msra.mxu0 0.0
        %1319 = vmatpush.msra.mxu0 0.0
        %1320 = vmatpush.msra.mxu0 0.0
        %1321 = vmatpush.msra.mxu0 0.0
        %1322 = vmatpush.msra.mxu0 0.0
        %1323 = vmatpush.msra.mxu0 0.0
        %1324 = vmatpush.msra.mxu0 0.0
        %1325 = vmatpush.msra.mxu0 0.0
        %1326 = vmatpush.msra.mxu0 0.0
        %1327 = vmatpush.msra.mxu0 0.0
        %1328 = vmatpush.msra.mxu0 %v1223
        %1329 = vmatmul.f32.gmra.mxu0 %v1231
        %v1330 = vpop.f32.mrf.mxu0
        %v1331 = vadd.f32 0.0, %v1330
        %1332 = vdwg.mxu0
        %1333 = vmatpush.msra.mxu0 0.0
        %1334 = vmatpush.msra.mxu0 0.0
        %1335 = vmatpush.msra.mxu0 0.0
        %1336 = vmatpush.msra.mxu0 0.0
        %1337 = vmatpush.msra.mxu0 0.0
        %1338 = vmatpush.msra.mxu0 0.0
        %1339 = vmatpush.msra.mxu0 0.0
        %1340 = vmatpush.msra.mxu0 0.0
        %1341 = vmatpush.msra.mxu0 0.0
        %1342 = vmatpush.msra.mxu0 0.0
        %1343 = vmatpush.msra.mxu0 0.0
        %1344 = vmatpush.msra.mxu0 0.0
        %1345 = vmatpush.msra.mxu0 0.0
        %1346 = vmatpush.msra.mxu0 0.0
        %1347 = vmatpush.msra.mxu0 0.0
        %1348 = vmatpush.msra.mxu0 %v1217
        %1349 = vmatmul.f32.gmra.mxu0 %v1231
        %v1350 = vpop.f32.mrf.mxu0
        %v1351 = vadd.f32 0.0, %v1350
        %1352 = vdwg.mxu0
        %v1353 = vadd.f32 %v1198, %v1251
        %v1354 = vadd.f32 %v1199, %v1271
        %v1355 = vadd.f32 %v1200, %v1291
        %v1356 = vadd.f32 %v1201, %v1311
        %v1357 = vadd.f32 %v1202, %v1331
        %v1358 = vadd.f32 %v1203, %v1351
        %s1359 = scalar_lea.vmem [#allocation2], 32
        %v1360 = vld [vmem:[%s1359] sm:$0xff]
        %1361 = vrot.lane.b32.xlu0 %v762, 99
        %v1362 = vpop.permute.xlu0 %1361
        %1363 = vrot.lane.b32.xlu0 %v763, 99
        %v1364 = vpop.permute.xlu0 %1363
        %1365 = vrot.lane.b32.xlu0 %v764, 99
        %v1366 = vpop.permute.xlu0 %1365
        %1367 = vrot.lane.b32.xlu0 %v765, 99
        %v1368 = vpop.permute.xlu0 %1367
        %1369 = vrot.lane.b32.xlu0 %v766, 99
        %v1370 = vpop.permute.xlu0 %1369
        %1371 = vrot.lane.b32.xlu0 %v767, 99
        %v1372 = vpop.permute.xlu0 %1371
        %vm1373 = vcmask 809984
        %v1374 = vsel %vm1373, %v1362, %v1364
        %v1375 = vsel %vm1373, %v1364, %v1366
        %v1376 = vsel %vm1373, %v1366, %v1368
        %v1377 = vsel %vm1373, %v1368, %v1370
        %v1378 = vsel %vm1373, %v1370, %v1372
        %v1386 = vsel %vm802, %v1360, 0
        %1388 = vmatpush.msra.mxu0 0.0
        %1389 = vmatpush.msra.mxu0 0.0
        %1390 = vmatpush.msra.mxu0 0.0
        %1391 = vmatpush.msra.mxu0 0.0
        %1392 = vmatpush.msra.mxu0 0.0
        %1393 = vmatpush.msra.mxu0 0.0
        %1394 = vmatpush.msra.mxu0 0.0
        %1395 = vmatpush.msra.mxu0 0.0
        %1396 = vmatpush.msra.mxu0 0.0
        %1397 = vmatpush.msra.mxu0 0.0
        %1398 = vmatpush.msra.mxu0 0.0
        %1399 = vmatpush.msra.mxu0 0.0
        %1400 = vmatpush.msra.mxu0 0.0
        %1401 = vmatpush.msra.mxu0 0.0
        %1402 = vmatpush.msra.mxu0 0.0
        %1403 = vmatpush.msra.mxu0 %v1374
        %1404 = vmatmul.f32.gmra.mxu0 %v1386
        %v1405 = vpop.f32.mrf.mxu0
        %v1406 = vadd.f32 0.0, %v1405
        %1407 = vdwg.mxu0
        %1408 = vmatpush.msra.mxu0 0.0
        %1409 = vmatpush.msra.mxu0 0.0
        %1410 = vmatpush.msra.mxu0 0.0
        %1411 = vmatpush.msra.mxu0 0.0
        %1412 = vmatpush.msra.mxu0 0.0
        %1413 = vmatpush.msra.mxu0 0.0
        %1414 = vmatpush.msra.mxu0 0.0
        %1415 = vmatpush.msra.mxu0 0.0
        %1416 = vmatpush.msra.mxu0 0.0
        %1417 = vmatpush.msra.mxu0 0.0
        %1418 = vmatpush.msra.mxu0 0.0
        %1419 = vmatpush.msra.mxu0 0.0
        %1420 = vmatpush.msra.mxu0 0.0
        %1421 = vmatpush.msra.mxu0 0.0
        %1422 = vmatpush.msra.mxu0 0.0
        %1423 = vmatpush.msra.mxu0 %v1375
        %1424 = vmatmul.f32.gmra.mxu0 %v1386
        %v1425 = vpop.f32.mrf.mxu0
        %v1426 = vadd.f32 0.0, %v1425
        %1427 = vdwg.mxu0
        %1428 = vmatpush.msra.mxu0 0.0
        %1429 = vmatpush.msra.mxu0 0.0
        %1430 = vmatpush.msra.mxu0 0.0
        %1431 = vmatpush.msra.mxu0 0.0
        %1432 = vmatpush.msra.mxu0 0.0
        %1433 = vmatpush.msra.mxu0 0.0
        %1434 = vmatpush.msra.mxu0 0.0
        %1435 = vmatpush.msra.mxu0 0.0
        %1436 = vmatpush.msra.mxu0 0.0
        %1437 = vmatpush.msra.mxu0 0.0
        %1438 = vmatpush.msra.mxu0 0.0
        %1439 = vmatpush.msra.mxu0 0.0
        %1440 = vmatpush.msra.mxu0 0.0
        %1441 = vmatpush.msra.mxu0 0.0
        %1442 = vmatpush.msra.mxu0 0.0
        %1443 = vmatpush.msra.mxu0 %v1376
        %1444 = vmatmul.f32.gmra.mxu0 %v1386
        %v1445 = vpop.f32.mrf.mxu0
        %v1446 = vadd.f32 0.0, %v1445
        %1447 = vdwg.mxu0
        %1448 = vmatpush.msra.mxu0 0.0
        %1449 = vmatpush.msra.mxu0 0.0
        %1450 = vmatpush.msra.mxu0 0.0
        %1451 = vmatpush.msra.mxu0 0.0
        %1452 = vmatpush.msra.mxu0 0.0
        %1453 = vmatpush.msra.mxu0 0.0
        %1454 = vmatpush.msra.mxu0 0.0
        %1455 = vmatpush.msra.mxu0 0.0
        %1456 = vmatpush.msra.mxu0 0.0
        %1457 = vmatpush.msra.mxu0 0.0
        %1458 = vmatpush.msra.mxu0 0.0
        %1459 = vmatpush.msra.mxu0 0.0
        %1460 = vmatpush.msra.mxu0 0.0
        %1461 = vmatpush.msra.mxu0 0.0
        %1462 = vmatpush.msra.mxu0 0.0
        %1463 = vmatpush.msra.mxu0 %v1377
        %1464 = vmatmul.f32.gmra.mxu0 %v1386
        %v1465 = vpop.f32.mrf.mxu0
        %v1466 = vadd.f32 0.0, %v1465
        %1467 = vdwg.mxu0
        %1468 = vmatpush.msra.mxu0 0.0
        %1469 = vmatpush.msra.mxu0 0.0
        %1470 = vmatpush.msra.mxu0 0.0
        %1471 = vmatpush.msra.mxu0 0.0
        %1472 = vmatpush.msra.mxu0 0.0
        %1473 = vmatpush.msra.mxu0 0.0
        %1474 = vmatpush.msra.mxu0 0.0
        %1475 = vmatpush.msra.mxu0 0.0
        %1476 = vmatpush.msra.mxu0 0.0
        %1477 = vmatpush.msra.mxu0 0.0
        %1478 = vmatpush.msra.mxu0 0.0
        %1479 = vmatpush.msra.mxu0 0.0
        %1480 = vmatpush.msra.mxu0 0.0
        %1481 = vmatpush.msra.mxu0 0.0
        %1482 = vmatpush.msra.mxu0 0.0
        %1483 = vmatpush.msra.mxu0 %v1378
        %1484 = vmatmul.f32.gmra.mxu0 %v1386
        %v1485 = vpop.f32.mrf.mxu0
        %v1486 = vadd.f32 0.0, %v1485
        %1487 = vdwg.mxu0
        %1488 = vmatpush.msra.mxu0 0.0
        %1489 = vmatpush.msra.mxu0 0.0
        %1490 = vmatpush.msra.mxu0 0.0
        %1491 = vmatpush.msra.mxu0 0.0
        %1492 = vmatpush.msra.mxu0 0.0
        %1493 = vmatpush.msra.mxu0 0.0
        %1494 = vmatpush.msra.mxu0 0.0
        %1495 = vmatpush.msra.mxu0 0.0
        %1496 = vmatpush.msra.mxu0 0.0
        %1497 = vmatpush.msra.mxu0 0.0
        %1498 = vmatpush.msra.mxu0 0.0
        %1499 = vmatpush.msra.mxu0 0.0
        %1500 = vmatpush.msra.mxu0 0.0
        %1501 = vmatpush.msra.mxu0 0.0
        %1502 = vmatpush.msra.mxu0 0.0
        %1503 = vmatpush.msra.mxu0 %v1372
        %1504 = vmatmul.f32.gmra.mxu0 %v1386
        %v1505 = vpop.f32.mrf.mxu0
        %v1506 = vadd.f32 0.0, %v1505
        %1507 = vdwg.mxu0
        %v1508 = vadd.f32 %v1353, %v1406
        %v1509 = vadd.f32 %v1354, %v1426
        %v1510 = vadd.f32 %v1355, %v1446
        %v1511 = vadd.f32 %v1356, %v1466
        %v1512 = vadd.f32 %v1357, %v1486
        %v1513 = vadd.f32 %v1358, %v1506
        %s1514 = scalar_lea.vmem [#allocation2], 40
        %v1515 = vld [vmem:[%s1514] sm:$0xff]
        %1516 = vrot.lane.b32.xlu0 %v762, 98
        %v1517 = vpop.permute.xlu0 %1516
        %1518 = vrot.lane.b32.xlu0 %v763, 98
        %v1519 = vpop.permute.xlu0 %1518
        %1520 = vrot.lane.b32.xlu0 %v764, 98
        %v1521 = vpop.permute.xlu0 %1520
        %1522 = vrot.lane.b32.xlu0 %v765, 98
        %v1523 = vpop.permute.xlu0 %1522
        %1524 = vrot.lane.b32.xlu0 %v766, 98
        %v1525 = vpop.permute.xlu0 %1524
        %1526 = vrot.lane.b32.xlu0 %v767, 98
        %v1527 = vpop.permute.xlu0 %1526
        %vm1528 = vcmask 801792
        %v1529 = vsel %vm1528, %v1517, %v1519
        %v1530 = vsel %vm1528, %v1519, %v1521
        %v1531 = vsel %vm1528, %v1521, %v1523
        %v1532 = vsel %vm1528, %v1523, %v1525
        %v1533 = vsel %vm1528, %v1525, %v1527
        %v1541 = vsel %vm802, %v1515, 0
        %1543 = vmatpush.msra.mxu0 0.0
        %1544 = vmatpush.msra.mxu0 0.0
        %1545 = vmatpush.msra.mxu0 0.0
        %1546 = vmatpush.msra.mxu0 0.0
        %1547 = vmatpush.msra.mxu0 0.0
        %1548 = vmatpush.msra.mxu0 0.0
        %1549 = vmatpush.msra.mxu0 0.0
        %1550 = vmatpush.msra.mxu0 0.0
        %1551 = vmatpush.msra.mxu0 0.0
        %1552 = vmatpush.msra.mxu0 0.0
        %1553 = vmatpush.msra.mxu0 0.0
        %1554 = vmatpush.msra.mxu0 0.0
        %1555 = vmatpush.msra.mxu0 0.0
        %1556 = vmatpush.msra.mxu0 0.0
        %1557 = vmatpush.msra.mxu0 0.0
        %1558 = vmatpush.msra.mxu0 %v1529
        %1559 = vmatmul.f32.gmra.mxu0 %v1541
        %v1560 = vpop.f32.mrf.mxu0
        %v1561 = vadd.f32 0.0, %v1560
        %1562 = vdwg.mxu0
        %1563 = vmatpush.msra.mxu0 0.0
        %1564 = vmatpush.msra.mxu0 0.0
        %1565 = vmatpush.msra.mxu0 0.0
        %1566 = vmatpush.msra.mxu0 0.0
        %1567 = vmatpush.msra.mxu0 0.0
        %1568 = vmatpush.msra.mxu0 0.0
        %1569 = vmatpush.msra.mxu0 0.0
        %1570 = vmatpush.msra.mxu0 0.0
        %1571 = vmatpush.msra.mxu0 0.0
        %1572 = vmatpush.msra.mxu0 0.0
        %1573 = vmatpush.msra.mxu0 0.0
        %1574 = vmatpush.msra.mxu0 0.0
        %1575 = vmatpush.msra.mxu0 0.0
        %1576 = vmatpush.msra.mxu0 0.0
        %1577 = vmatpush.msra.mxu0 0.0
        %1578 = vmatpush.msra.mxu0 %v1530
        %1579 = vmatmul.f32.gmra.mxu0 %v1541
        %v1580 = vpop.f32.mrf.mxu0
        %v1581 = vadd.f32 0.0, %v1580
        %1582 = vdwg.mxu0
        %1583 = vmatpush.msra.mxu0 0.0
        %1584 = vmatpush.msra.mxu0 0.0
        %1585 = vmatpush.msra.mxu0 0.0
        %1586 = vmatpush.msra.mxu0 0.0
        %1587 = vmatpush.msra.mxu0 0.0
        %1588 = vmatpush.msra.mxu0 0.0
        %1589 = vmatpush.msra.mxu0 0.0
        %1590 = vmatpush.msra.mxu0 0.0
        %1591 = vmatpush.msra.mxu0 0.0
        %1592 = vmatpush.msra.mxu0 0.0
        %1593 = vmatpush.msra.mxu0 0.0
        %1594 = vmatpush.msra.mxu0 0.0
        %1595 = vmatpush.msra.mxu0 0.0
        %1596 = vmatpush.msra.mxu0 0.0
        %1597 = vmatpush.msra.mxu0 0.0
        %1598 = vmatpush.msra.mxu0 %v1531
        %1599 = vmatmul.f32.gmra.mxu0 %v1541
        %v1600 = vpop.f32.mrf.mxu0
        %v1601 = vadd.f32 0.0, %v1600
        %1602 = vdwg.mxu0
        %1603 = vmatpush.msra.mxu0 0.0
        %1604 = vmatpush.msra.mxu0 0.0
        %1605 = vmatpush.msra.mxu0 0.0
        %1606 = vmatpush.msra.mxu0 0.0
        %1607 = vmatpush.msra.mxu0 0.0
        %1608 = vmatpush.msra.mxu0 0.0
        %1609 = vmatpush.msra.mxu0 0.0
        %1610 = vmatpush.msra.mxu0 0.0
        %1611 = vmatpush.msra.mxu0 0.0
        %1612 = vmatpush.msra.mxu0 0.0
        %1613 = vmatpush.msra.mxu0 0.0
        %1614 = vmatpush.msra.mxu0 0.0
        %1615 = vmatpush.msra.mxu0 0.0
        %1616 = vmatpush.msra.mxu0 0.0
        %1617 = vmatpush.msra.mxu0 0.0
        %1618 = vmatpush.msra.mxu0 %v1532
        %1619 = vmatmul.f32.gmra.mxu0 %v1541
        %v1620 = vpop.f32.mrf.mxu0
        %v1621 = vadd.f32 0.0, %v1620
        %1622 = vdwg.mxu0
        %1623 = vmatpush.msra.mxu0 0.0
        %1624 = vmatpush.msra.mxu0 0.0
        %1625 = vmatpush.msra.mxu0 0.0
        %1626 = vmatpush.msra.mxu0 0.0
        %1627 = vmatpush.msra.mxu0 0.0
        %1628 = vmatpush.msra.mxu0 0.0
        %1629 = vmatpush.msra.mxu0 0.0
        %1630 = vmatpush.msra.mxu0 0.0
        %1631 = vmatpush.msra.mxu0 0.0
        %1632 = vmatpush.msra.mxu0 0.0
        %1633 = vmatpush.msra.mxu0 0.0
        %1634 = vmatpush.msra.mxu0 0.0
        %1635 = vmatpush.msra.mxu0 0.0
        %1636 = vmatpush.msra.mxu0 0.0
        %1637 = vmatpush.msra.mxu0 0.0
        %1638 = vmatpush.msra.mxu0 %v1533
        %1639 = vmatmul.f32.gmra.mxu0 %v1541
        %v1640 = vpop.f32.mrf.mxu0
        %v1641 = vadd.f32 0.0, %v1640
        %1642 = vdwg.mxu0
        %1643 = vmatpush.msra.mxu0 0.0
        %1644 = vmatpush.msra.mxu0 0.0
        %1645 = vmatpush.msra.mxu0 0.0
        %1646 = vmatpush.msra.mxu0 0.0
        %1647 = vmatpush.msra.mxu0 0.0
        %1648 = vmatpush.msra.mxu0 0.0
        %1649 = vmatpush.msra.mxu0 0.0
        %1650 = vmatpush.msra.mxu0 0.0
        %1651 = vmatpush.msra.mxu0 0.0
        %1652 = vmatpush.msra.mxu0 0.0
        %1653 = vmatpush.msra.mxu0 0.0
        %1654 = vmatpush.msra.mxu0 0.0
        %1655 = vmatpush.msra.mxu0 0.0
        %1656 = vmatpush.msra.mxu0 0.0
        %1657 = vmatpush.msra.mxu0 0.0
        %1658 = vmatpush.msra.mxu0 %v1527
        %1659 = vmatmul.f32.gmra.mxu0 %v1541
        %v1660 = vpop.f32.mrf.mxu0
        %v1661 = vadd.f32 0.0, %v1660
        %1662 = vdwg.mxu0
        %v1663 = vadd.f32 %v1508, %v1561
        %v1664 = vadd.f32 %v1509, %v1581
        %v1665 = vadd.f32 %v1510, %v1601
        %v1666 = vadd.f32 %v1511, %v1621
        %v1667 = vadd.f32 %v1512, %v1641
        %v1668 = vadd.f32 %v1513, %v1661
        %s1669 = scalar_lea.vmem [#allocation2], 48
        %v1670 = vld [vmem:[%s1669] sm:$0xff]
        %1672 = vrot.lane.b32.xlu0 %v762, 72
        %v1673 = vpop.permute.xlu0 %1672
        %1674 = vrot.lane.b32.xlu0 %v763, 72
        %v1675 = vpop.permute.xlu0 %1674
        %1676 = vrot.lane.b32.xlu0 %v764, 72
        %v1677 = vpop.permute.xlu0 %1676
        %1678 = vrot.lane.b32.xlu0 %v765, 72
        %v1679 = vpop.permute.xlu0 %1678
        %1680 = vrot.lane.b32.xlu0 %v766, 72
        %v1681 = vpop.permute.xlu0 %1680
        %1682 = vrot.lane.b32.xlu0 %v767, 72
        %v1683 = vpop.permute.xlu0 %1682
        %1684 = vrot.lane.b32.xlu0 %v768, 72
        %v1685 = vpop.permute.xlu0 %1684
        %vm1686 = vcmask 588800
        %v1687 = vsel %vm1686, %v1673, %v1675
        %v1688 = vsel %vm1686, %v1675, %v1677
        %v1689 = vsel %vm1686, %v1677, %v1679
        %v1690 = vsel %vm1686, %v1679, %v1681
        %v1691 = vsel %vm1686, %v1681, %v1683
        %v1692 = vsel %vm1686, %v1683, %v1685
        %v1700 = vsel %vm802, %v1670, 0
        %1702 = vmatpush.msra.mxu0 0.0
        %1703 = vmatpush.msra.mxu0 0.0
        %1704 = vmatpush.msra.mxu0 0.0
        %1705 = vmatpush.msra.mxu0 0.0
        %1706 = vmatpush.msra.mxu0 0.0
        %1707 = vmatpush.msra.mxu0 0.0
        %1708 = vmatpush.msra.mxu0 0.0
        %1709 = vmatpush.msra.mxu0 0.0
        %1710 = vmatpush.msra.mxu0 0.0
        %1711 = vmatpush.msra.mxu0 0.0
        %1712 = vmatpush.msra.mxu0 0.0
        %1713 = vmatpush.msra.mxu0 0.0
        %1714 = vmatpush.msra.mxu0 0.0
        %1715 = vmatpush.msra.mxu0 0.0
        %1716 = vmatpush.msra.mxu0 0.0
        %1717 = vmatpush.msra.mxu0 %v1687
        %1718 = vmatmul.f32.gmra.mxu0 %v1700
        %v1719 = vpop.f32.mrf.mxu0
        %v1720 = vadd.f32 0.0, %v1719
        %1721 = vdwg.mxu0
        %1722 = vmatpush.msra.mxu0 0.0
        %1723 = vmatpush.msra.mxu0 0.0
        %1724 = vmatpush.msra.mxu0 0.0
        %1725 = vmatpush.msra.mxu0 0.0
        %1726 = vmatpush.msra.mxu0 0.0
        %1727 = vmatpush.msra.mxu0 0.0
        %1728 = vmatpush.msra.mxu0 0.0
        %1729 = vmatpush.msra.mxu0 0.0
        %1730 = vmatpush.msra.mxu0 0.0
        %1731 = vmatpush.msra.mxu0 0.0
        %1732 = vmatpush.msra.mxu0 0.0
        %1733 = vmatpush.msra.mxu0 0.0
        %1734 = vmatpush.msra.mxu0 0.0
        %1735 = vmatpush.msra.mxu0 0.0
        %1736 = vmatpush.msra.mxu0 0.0
        %1737 = vmatpush.msra.mxu0 %v1688
        %1738 = vmatmul.f32.gmra.mxu0 %v1700
        %v1739 = vpop.f32.mrf.mxu0
        %v1740 = vadd.f32 0.0, %v1739
        %1741 = vdwg.mxu0
        %1742 = vmatpush.msra.mxu0 0.0
        %1743 = vmatpush.msra.mxu0 0.0
        %1744 = vmatpush.msra.mxu0 0.0
        %1745 = vmatpush.msra.mxu0 0.0
        %1746 = vmatpush.msra.mxu0 0.0
        %1747 = vmatpush.msra.mxu0 0.0
        %1748 = vmatpush.msra.mxu0 0.0
        %1749 = vmatpush.msra.mxu0 0.0
        %1750 = vmatpush.msra.mxu0 0.0
        %1751 = vmatpush.msra.mxu0 0.0
        %1752 = vmatpush.msra.mxu0 0.0
        %1753 = vmatpush.msra.mxu0 0.0
        %1754 = vmatpush.msra.mxu0 0.0
        %1755 = vmatpush.msra.mxu0 0.0
        %1756 = vmatpush.msra.mxu0 0.0
        %1757 = vmatpush.msra.mxu0 %v1689
        %1758 = vmatmul.f32.gmra.mxu0 %v1700
        %v1759 = vpop.f32.mrf.mxu0
        %v1760 = vadd.f32 0.0, %v1759
        %1761 = vdwg.mxu0
        %1762 = vmatpush.msra.mxu0 0.0
        %1763 = vmatpush.msra.mxu0 0.0
        %1764 = vmatpush.msra.mxu0 0.0
        %1765 = vmatpush.msra.mxu0 0.0
        %1766 = vmatpush.msra.mxu0 0.0
        %1767 = vmatpush.msra.mxu0 0.0
        %1768 = vmatpush.msra.mxu0 0.0
        %1769 = vmatpush.msra.mxu0 0.0
        %1770 = vmatpush.msra.mxu0 0.0
        %1771 = vmatpush.msra.mxu0 0.0
        %1772 = vmatpush.msra.mxu0 0.0
        %1773 = vmatpush.msra.mxu0 0.0
        %1774 = vmatpush.msra.mxu0 0.0
        %1775 = vmatpush.msra.mxu0 0.0
        %1776 = vmatpush.msra.mxu0 0.0
        %1777 = vmatpush.msra.mxu0 %v1690
        %1778 = vmatmul.f32.gmra.mxu0 %v1700
        %v1779 = vpop.f32.mrf.mxu0
        %v1780 = vadd.f32 0.0, %v1779
        %1781 = vdwg.mxu0
        %1782 = vmatpush.msra.mxu0 0.0
        %1783 = vmatpush.msra.mxu0 0.0
        %1784 = vmatpush.msra.mxu0 0.0
        %1785 = vmatpush.msra.mxu0 0.0
        %1786 = vmatpush.msra.mxu0 0.0
        %1787 = vmatpush.msra.mxu0 0.0
        %1788 = vmatpush.msra.mxu0 0.0
        %1789 = vmatpush.msra.mxu0 0.0
        %1790 = vmatpush.msra.mxu0 0.0
        %1791 = vmatpush.msra.mxu0 0.0
        %1792 = vmatpush.msra.mxu0 0.0
        %1793 = vmatpush.msra.mxu0 0.0
        %1794 = vmatpush.msra.mxu0 0.0
        %1795 = vmatpush.msra.mxu0 0.0
        %1796 = vmatpush.msra.mxu0 0.0
        %1797 = vmatpush.msra.mxu0 %v1691
        %1798 = vmatmul.f32.gmra.mxu0 %v1700
        %v1799 = vpop.f32.mrf.mxu0
        %v1800 = vadd.f32 0.0, %v1799
        %1801 = vdwg.mxu0
        %1802 = vmatpush.msra.mxu0 0.0
        %1803 = vmatpush.msra.mxu0 0.0
        %1804 = vmatpush.msra.mxu0 0.0
        %1805 = vmatpush.msra.mxu0 0.0
        %1806 = vmatpush.msra.mxu0 0.0
        %1807 = vmatpush.msra.mxu0 0.0
        %1808 = vmatpush.msra.mxu0 0.0
        %1809 = vmatpush.msra.mxu0 0.0
        %1810 = vmatpush.msra.mxu0 0.0
        %1811 = vmatpush.msra.mxu0 0.0
        %1812 = vmatpush.msra.mxu0 0.0
        %1813 = vmatpush.msra.mxu0 0.0
        %1814 = vmatpush.msra.mxu0 0.0
        %1815 = vmatpush.msra.mxu0 0.0
        %1816 = vmatpush.msra.mxu0 0.0
        %1817 = vmatpush.msra.mxu0 %v1692
        %1818 = vmatmul.f32.gmra.mxu0 %v1700
        %v1819 = vpop.f32.mrf.mxu0
        %v1820 = vadd.f32 0.0, %v1819
        %1821 = vdwg.mxu0
        %v1822 = vadd.f32 %v1663, %v1720
        %v1823 = vadd.f32 %v1664, %v1740
        %v1824 = vadd.f32 %v1665, %v1760
        %v1825 = vadd.f32 %v1666, %v1780
        %v1826 = vadd.f32 %v1667, %v1800
        %v1827 = vadd.f32 %v1668, %v1820
        %s1828 = scalar_lea.vmem [#allocation2], 56
        %v1829 = vld [vmem:[%s1828] sm:$0xff]
        %1830 = vrot.lane.b32.xlu0 %v762, 71
        %v1831 = vpop.permute.xlu0 %1830
        %1832 = vrot.lane.b32.xlu0 %v763, 71
        %v1833 = vpop.permute.xlu0 %1832
        %1834 = vrot.lane.b32.xlu0 %v764, 71
        %v1835 = vpop.permute.xlu0 %1834
        %1836 = vrot.lane.b32.xlu0 %v765, 71
        %v1837 = vpop.permute.xlu0 %1836
        %1838 = vrot.lane.b32.xlu0 %v766, 71
        %v1839 = vpop.permute.xlu0 %1838
        %1840 = vrot.lane.b32.xlu0 %v767, 71
        %v1841 = vpop.permute.xlu0 %1840
        %1842 = vrot.lane.b32.xlu0 %v768, 71
        %v1843 = vpop.permute.xlu0 %1842
        %vm1844 = vcmask 580608
        %v1845 = vsel %vm1844, %v1831, %v1833
        %v1846 = vsel %vm1844, %v1833, %v1835
        %v1847 = vsel %vm1844, %v1835, %v1837
        %v1848 = vsel %vm1844, %v1837, %v1839
        %v1849 = vsel %vm1844, %v1839, %v1841
        %v1850 = vsel %vm1844, %v1841, %v1843
        %v1858 = vsel %vm802, %v1829, 0
        %1860 = vmatpush.msra.mxu0 0.0
        %1861 = vmatpush.msra.mxu0 0.0
        %1862 = vmatpush.msra.mxu0 0.0
        %1863 = vmatpush.msra.mxu0 0.0
        %1864 = vmatpush.msra.mxu0 0.0
        %1865 = vmatpush.msra.mxu0 0.0
        %1866 = vmatpush.msra.mxu0 0.0
        %1867 = vmatpush.msra.mxu0 0.0
        %1868 = vmatpush.msra.mxu0 0.0
        %1869 = vmatpush.msra.mxu0 0.0
        %1870 = vmatpush.msra.mxu0 0.0
        %1871 = vmatpush.msra.mxu0 0.0
        %1872 = vmatpush.msra.mxu0 0.0
        %1873 = vmatpush.msra.mxu0 0.0
        %1874 = vmatpush.msra.mxu0 0.0
        %1875 = vmatpush.msra.mxu0 %v1845
        %1876 = vmatmul.f32.gmra.mxu0 %v1858
        %v1877 = vpop.f32.mrf.mxu0
        %v1878 = vadd.f32 0.0, %v1877
        %1879 = vdwg.mxu0
        %1880 = vmatpush.msra.mxu0 0.0
        %1881 = vmatpush.msra.mxu0 0.0
        %1882 = vmatpush.msra.mxu0 0.0
        %1883 = vmatpush.msra.mxu0 0.0
        %1884 = vmatpush.msra.mxu0 0.0
        %1885 = vmatpush.msra.mxu0 0.0
        %1886 = vmatpush.msra.mxu0 0.0
        %1887 = vmatpush.msra.mxu0 0.0
        %1888 = vmatpush.msra.mxu0 0.0
        %1889 = vmatpush.msra.mxu0 0.0
        %1890 = vmatpush.msra.mxu0 0.0
        %1891 = vmatpush.msra.mxu0 0.0
        %1892 = vmatpush.msra.mxu0 0.0
        %1893 = vmatpush.msra.mxu0 0.0
        %1894 = vmatpush.msra.mxu0 0.0
        %1895 = vmatpush.msra.mxu0 %v1846
        %1896 = vmatmul.f32.gmra.mxu0 %v1858
        %v1897 = vpop.f32.mrf.mxu0
        %v1898 = vadd.f32 0.0, %v1897
        %1899 = vdwg.mxu0
        %1900 = vmatpush.msra.mxu0 0.0
        %1901 = vmatpush.msra.mxu0 0.0
        %1902 = vmatpush.msra.mxu0 0.0
        %1903 = vmatpush.msra.mxu0 0.0
        %1904 = vmatpush.msra.mxu0 0.0
        %1905 = vmatpush.msra.mxu0 0.0
        %1906 = vmatpush.msra.mxu0 0.0
        %1907 = vmatpush.msra.mxu0 0.0
        %1908 = vmatpush.msra.mxu0 0.0
        %1909 = vmatpush.msra.mxu0 0.0
        %1910 = vmatpush.msra.mxu0 0.0
        %1911 = vmatpush.msra.mxu0 0.0
        %1912 = vmatpush.msra.mxu0 0.0
        %1913 = vmatpush.msra.mxu0 0.0
        %1914 = vmatpush.msra.mxu0 0.0
        %1915 = vmatpush.msra.mxu0 %v1847
        %1916 = vmatmul.f32.gmra.mxu0 %v1858
        %v1917 = vpop.f32.mrf.mxu0
        %v1918 = vadd.f32 0.0, %v1917
        %1919 = vdwg.mxu0
        %1920 = vmatpush.msra.mxu0 0.0
        %1921 = vmatpush.msra.mxu0 0.0
        %1922 = vmatpush.msra.mxu0 0.0
        %1923 = vmatpush.msra.mxu0 0.0
        %1924 = vmatpush.msra.mxu0 0.0
        %1925 = vmatpush.msra.mxu0 0.0
        %1926 = vmatpush.msra.mxu0 0.0
        %1927 = vmatpush.msra.mxu0 0.0
        %1928 = vmatpush.msra.mxu0 0.0
        %1929 = vmatpush.msra.mxu0 0.0
        %1930 = vmatpush.msra.mxu0 0.0
        %1931 = vmatpush.msra.mxu0 0.0
        %1932 = vmatpush.msra.mxu0 0.0
        %1933 = vmatpush.msra.mxu0 0.0
        %1934 = vmatpush.msra.mxu0 0.0
        %1935 = vmatpush.msra.mxu0 %v1848
        %1936 = vmatmul.f32.gmra.mxu0 %v1858
        %v1937 = vpop.f32.mrf.mxu0
        %v1938 = vadd.f32 0.0, %v1937
        %1939 = vdwg.mxu0
        %1940 = vmatpush.msra.mxu0 0.0
        %1941 = vmatpush.msra.mxu0 0.0
        %1942 = vmatpush.msra.mxu0 0.0
        %1943 = vmatpush.msra.mxu0 0.0
        %1944 = vmatpush.msra.mxu0 0.0
        %1945 = vmatpush.msra.mxu0 0.0
        %1946 = vmatpush.msra.mxu0 0.0
        %1947 = vmatpush.msra.mxu0 0.0
        %1948 = vmatpush.msra.mxu0 0.0
        %1949 = vmatpush.msra.mxu0 0.0
        %1950 = vmatpush.msra.mxu0 0.0
        %1951 = vmatpush.msra.mxu0 0.0
        %1952 = vmatpush.msra.mxu0 0.0
        %1953 = vmatpush.msra.mxu0 0.0
        %1954 = vmatpush.msra.mxu0 0.0
        %1955 = vmatpush.msra.mxu0 %v1849
        %1956 = vmatmul.f32.gmra.mxu0 %v1858
        %v1957 = vpop.f32.mrf.mxu0
        %v1958 = vadd.f32 0.0, %v1957
        %1959 = vdwg.mxu0
        %1960 = vmatpush.msra.mxu0 0.0
        %1961 = vmatpush.msra.mxu0 0.0
        %1962 = vmatpush.msra.mxu0 0.0
        %1963 = vmatpush.msra.mxu0 0.0
        %1964 = vmatpush.msra.mxu0 0.0
        %1965 = vmatpush.msra.mxu0 0.0
        %1966 = vmatpush.msra.mxu0 0.0
        %1967 = vmatpush.msra.mxu0 0.0
        %1968 = vmatpush.msra.mxu0 0.0
        %1969 = vmatpush.msra.mxu0 0.0
        %1970 = vmatpush.msra.mxu0 0.0
        %1971 = vmatpush.msra.mxu0 0.0
        %1972 = vmatpush.msra.mxu0 0.0
        %1973 = vmatpush.msra.mxu0 0.0
        %1974 = vmatpush.msra.mxu0 0.0
        %1975 = vmatpush.msra.mxu0 %v1850
        %1976 = vmatmul.f32.gmra.mxu0 %v1858
        %v1977 = vpop.f32.mrf.mxu0
        %v1978 = vadd.f32 0.0, %v1977
        %1979 = vdwg.mxu0
        %v1980 = vadd.f32 %v1822, %v1878
        %v1981 = vadd.f32 %v1823, %v1898
        %v1982 = vadd.f32 %v1824, %v1918
        %v1983 = vadd.f32 %v1825, %v1938
        %v1984 = vadd.f32 %v1826, %v1958
        %v1985 = vadd.f32 %v1827, %v1978
        %s1986 = scalar_lea.vmem [#allocation2], 64
        %v1987 = vld [vmem:[%s1986] sm:$0xff]
        %1988 = vrot.lane.b32.xlu0 %v762, 70
        %v1989 = vpop.permute.xlu0 %1988
        %1990 = vrot.lane.b32.xlu0 %v763, 70
        %v1991 = vpop.permute.xlu0 %1990
        %1992 = vrot.lane.b32.xlu0 %v764, 70
        %v1993 = vpop.permute.xlu0 %1992
        %1994 = vrot.lane.b32.xlu0 %v765, 70
        %v1995 = vpop.permute.xlu0 %1994
        %1996 = vrot.lane.b32.xlu0 %v766, 70
        %v1997 = vpop.permute.xlu0 %1996
        %1998 = vrot.lane.b32.xlu0 %v767, 70
        %v1999 = vpop.permute.xlu0 %1998
        %2000 = vrot.lane.b32.xlu0 %v768, 70
        %v2001 = vpop.permute.xlu0 %2000
        %vm2002 = vcmask 572416
        %v2003 = vsel %vm2002, %v1989, %v1991
        %v2004 = vsel %vm2002, %v1991, %v1993
        %v2005 = vsel %vm2002, %v1993, %v1995
        %v2006 = vsel %vm2002, %v1995, %v1997
        %v2007 = vsel %vm2002, %v1997, %v1999
        %v2008 = vsel %vm2002, %v1999, %v2001
        %v2016 = vsel %vm802, %v1987, 0
        %2018 = vmatpush.msra.mxu0 0.0
        %2019 = vmatpush.msra.mxu0 0.0
        %2020 = vmatpush.msra.mxu0 0.0
        %2021 = vmatpush.msra.mxu0 0.0
        %2022 = vmatpush.msra.mxu0 0.0
        %2023 = vmatpush.msra.mxu0 0.0
        %2024 = vmatpush.msra.mxu0 0.0
        %2025 = vmatpush.msra.mxu0 0.0
        %2026 = vmatpush.msra.mxu0 0.0
        %2027 = vmatpush.msra.mxu0 0.0
        %2028 = vmatpush.msra.mxu0 0.0
        %2029 = vmatpush.msra.mxu0 0.0
        %2030 = vmatpush.msra.mxu0 0.0
        %2031 = vmatpush.msra.mxu0 0.0
        %2032 = vmatpush.msra.mxu0 0.0
        %2033 = vmatpush.msra.mxu0 %v2003
        %2034 = vmatmul.f32.gmra.mxu0 %v2016
        %v2035 = vpop.f32.mrf.mxu0
        %v2036 = vadd.f32 0.0, %v2035
        %2037 = vdwg.mxu0
        %2038 = vmatpush.msra.mxu0 0.0
        %2039 = vmatpush.msra.mxu0 0.0
        %2040 = vmatpush.msra.mxu0 0.0
        %2041 = vmatpush.msra.mxu0 0.0
        %2042 = vmatpush.msra.mxu0 0.0
        %2043 = vmatpush.msra.mxu0 0.0
        %2044 = vmatpush.msra.mxu0 0.0
        %2045 = vmatpush.msra.mxu0 0.0
        %2046 = vmatpush.msra.mxu0 0.0
        %2047 = vmatpush.msra.mxu0 0.0
        %2048 = vmatpush.msra.mxu0 0.0
        %2049 = vmatpush.msra.mxu0 0.0
        %2050 = vmatpush.msra.mxu0 0.0
        %2051 = vmatpush.msra.mxu0 0.0
        %2052 = vmatpush.msra.mxu0 0.0
        %2053 = vmatpush.msra.mxu0 %v2004
        %2054 = vmatmul.f32.gmra.mxu0 %v2016
        %v2055 = vpop.f32.mrf.mxu0
        %v2056 = vadd.f32 0.0, %v2055
        %2057 = vdwg.mxu0
        %2058 = vmatpush.msra.mxu0 0.0
        %2059 = vmatpush.msra.mxu0 0.0
        %2060 = vmatpush.msra.mxu0 0.0
        %2061 = vmatpush.msra.mxu0 0.0
        %2062 = vmatpush.msra.mxu0 0.0
        %2063 = vmatpush.msra.mxu0 0.0
        %2064 = vmatpush.msra.mxu0 0.0
        %2065 = vmatpush.msra.mxu0 0.0
        %2066 = vmatpush.msra.mxu0 0.0
        %2067 = vmatpush.msra.mxu0 0.0
        %2068 = vmatpush.msra.mxu0 0.0
        %2069 = vmatpush.msra.mxu0 0.0
        %2070 = vmatpush.msra.mxu0 0.0
        %2071 = vmatpush.msra.mxu0 0.0
        %2072 = vmatpush.msra.mxu0 0.0
        %2073 = vmatpush.msra.mxu0 %v2005
        %2074 = vmatmul.f32.gmra.mxu0 %v2016
        %v2075 = vpop.f32.mrf.mxu0
        %v2076 = vadd.f32 0.0, %v2075
        %2077 = vdwg.mxu0
        %2078 = vmatpush.msra.mxu0 0.0
        %2079 = vmatpush.msra.mxu0 0.0
        %2080 = vmatpush.msra.mxu0 0.0
        %2081 = vmatpush.msra.mxu0 0.0
        %2082 = vmatpush.msra.mxu0 0.0
        %2083 = vmatpush.msra.mxu0 0.0
        %2084 = vmatpush.msra.mxu0 0.0
        %2085 = vmatpush.msra.mxu0 0.0
        %2086 = vmatpush.msra.mxu0 0.0
        %2087 = vmatpush.msra.mxu0 0.0
        %2088 = vmatpush.msra.mxu0 0.0
        %2089 = vmatpush.msra.mxu0 0.0
        %2090 = vmatpush.msra.mxu0 0.0
        %2091 = vmatpush.msra.mxu0 0.0
        %2092 = vmatpush.msra.mxu0 0.0
        %2093 = vmatpush.msra.mxu0 %v2006
        %2094 = vmatmul.f32.gmra.mxu0 %v2016
        %v2095 = vpop.f32.mrf.mxu0
        %v2096 = vadd.f32 0.0, %v2095
        %2097 = vdwg.mxu0
        %2098 = vmatpush.msra.mxu0 0.0
        %2099 = vmatpush.msra.mxu0 0.0
        %2100 = vmatpush.msra.mxu0 0.0
        %2101 = vmatpush.msra.mxu0 0.0
        %2102 = vmatpush.msra.mxu0 0.0
        %2103 = vmatpush.msra.mxu0 0.0
        %2104 = vmatpush.msra.mxu0 0.0
        %2105 = vmatpush.msra.mxu0 0.0
        %2106 = vmatpush.msra.mxu0 0.0
        %2107 = vmatpush.msra.mxu0 0.0
        %2108 = vmatpush.msra.mxu0 0.0
        %2109 = vmatpush.msra.mxu0 0.0
        %2110 = vmatpush.msra.mxu0 0.0
        %2111 = vmatpush.msra.mxu0 0.0
        %2112 = vmatpush.msra.mxu0 0.0
        %2113 = vmatpush.msra.mxu0 %v2007
        %2114 = vmatmul.f32.gmra.mxu0 %v2016
        %v2115 = vpop.f32.mrf.mxu0
        %v2116 = vadd.f32 0.0, %v2115
        %2117 = vdwg.mxu0
        %2118 = vmatpush.msra.mxu0 0.0
        %2119 = vmatpush.msra.mxu0 0.0
        %2120 = vmatpush.msra.mxu0 0.0
        %2121 = vmatpush.msra.mxu0 0.0
        %2122 = vmatpush.msra.mxu0 0.0
        %2123 = vmatpush.msra.mxu0 0.0
        %2124 = vmatpush.msra.mxu0 0.0
        %2125 = vmatpush.msra.mxu0 0.0
        %2126 = vmatpush.msra.mxu0 0.0
        %2127 = vmatpush.msra.mxu0 0.0
        %2128 = vmatpush.msra.mxu0 0.0
        %2129 = vmatpush.msra.mxu0 0.0
        %2130 = vmatpush.msra.mxu0 0.0
        %2131 = vmatpush.msra.mxu0 0.0
        %2132 = vmatpush.msra.mxu0 0.0
        %2133 = vmatpush.msra.mxu0 %v2008
        %2134 = vmatmul.f32.gmra.mxu0 %v2016
        %v2135 = vpop.f32.mrf.mxu0
        %v2136 = vadd.f32 0.0, %v2135
        %2137 = vdwg.mxu0
        %v2138 = vadd.f32 %v1980, %v2036
        %v2139 = vadd.f32 %v1981, %v2056
        %v2140 = vadd.f32 %v1982, %v2076
        %v2141 = vadd.f32 %v1983, %v2096
        %v2142 = vadd.f32 %v1984, %v2116
        %v2143 = vadd.f32 %v1985, %v2136
        %v2144 = vmax.f32 %v2138, 0.0
        %v2145 = vmax.f32 %v2139, 0.0
        %v2146 = vmax.f32 %v2140, 0.0
        %v2147 = vmax.f32 %v2141, 0.0
        %v2148 = vmax.f32 %v2142, 0.0
        %v2149 = vmax.f32 %v2143, 0.0
        %v2150 = vld [vmem:[#allocation4] sm:$0xff]
        %2152 = vset.pattern.permute.xlu0 0
        %2153 = vperm.xlu0 %2152, %v2150
        %v2154 = vpop.permute.xlu0 %2153
        %v2156 = vmul.f32 %v2144, %v2154
        %v2157 = vmul.f32 %v2145, %v2154
        %v2158 = vmul.f32 %v2146, %v2154
        %v2159 = vmul.f32 %v2147, %v2154
        %v2160 = vmul.f32 %v2148, %v2154
        %v2161 = vmul.f32 %v2149, %v2154
        %s2162 = scalar_lea.vmem [#allocation4], 8
        %v2163 = vld [vmem:[%s2162] sm:$0xff]
        %2165 = vset.pattern.permute.xlu0 0
        %2166 = vperm.xlu0 %2165, %v2163
        %v2167 = vpop.permute.xlu0 %2166
        %v2169 = vadd.f32 %v2156, %v2167
        %v2170 = vadd.f32 %v2157, %v2167
        %v2171 = vadd.f32 %v2158, %v2167
        %v2172 = vadd.f32 %v2159, %v2167
        %v2173 = vadd.f32 %v2160, %v2167
        %v2174 = vadd.f32 %v2161, %v2167
        %v2175 = vld [vmem:[#allocation6] sm:$0xff]
        %v2176 = vld [vmem:[#allocation6 + $0x8] sm:$0xff]
        %s2177 = scalar_lea.vmem [#allocation6], 16
        %v2178 = vld [vmem:[%s2177] sm:$0xff]
        %v2179 = vld [vmem:[%s2177 + $0x8] sm:$0xff]
        %2186 = vrot.lane.b32.xlu0 %v2169, 127
        %v2187 = vpop.permute.xlu0 %2186
        %2188 = vrot.lane.b32.xlu0 %v2170, 127
        %v2189 = vpop.permute.xlu0 %2188
        %2190 = vrot.lane.b32.xlu0 %v2171, 127
        %v2191 = vpop.permute.xlu0 %2190
        %2192 = vrot.lane.b32.xlu0 %v2172, 127
        %v2193 = vpop.permute.xlu0 %2192
        %2194 = vrot.lane.b32.xlu0 %v2173, 127
        %v2195 = vpop.permute.xlu0 %2194
        %2196 = vrot.lane.b32.xlu0 %v2174, 127
        %v2197 = vpop.permute.xlu0 %2196
        %v2198 = vsel %vm790, %v2187, %v2189
        %v2199 = vsel %vm790, %v2189, %v2191
        %v2200 = vsel %vm790, %v2191, %v2193
        %v2201 = vsel %vm790, %v2193, %v2195
        %v2202 = vsel %vm790, %v2195, %v2197
        %v2210 = vsel %vm802, %v2178, 0
        %v2213 = vsel %vm802, %v2179, 0
        %2215 = vmatpush.msra.mxu0 0.0
        %2216 = vmatpush.msra.mxu0 0.0
        %2217 = vmatpush.msra.mxu0 0.0
        %2218 = vmatpush.msra.mxu0 0.0
        %2219 = vmatpush.msra.mxu0 0.0
        %2220 = vmatpush.msra.mxu0 0.0
        %2221 = vmatpush.msra.mxu0 0.0
        %2222 = vmatpush.msra.mxu0 0.0
        %2223 = vmatpush.msra.mxu0 0.0
        %2224 = vmatpush.msra.mxu0 0.0
        %2225 = vmatpush.msra.mxu0 0.0
        %2226 = vmatpush.msra.mxu0 0.0
        %2227 = vmatpush.msra.mxu0 0.0
        %2228 = vmatpush.msra.mxu0 0.0
        %2229 = vmatpush.msra.mxu0 0.0
        %2230 = vmatpush.msra.mxu0 %v2198
        %2231 = vmatmul.f32.gmra.mxu0 %v2210
        %v2232 = vpop.f32.mrf.mxu0
        %v2233 = vadd.f32 0.0, %v2232
        %2234 = vmatmul.f32.gmra.mxu0 %v2213
        %v2235 = vpop.f32.mrf.mxu0
        %v2236 = vadd.f32 0.0, %v2235
        %2237 = vdwg.mxu0
        %2238 = vmatpush.msra.mxu0 0.0
        %2239 = vmatpush.msra.mxu0 0.0
        %2240 = vmatpush.msra.mxu0 0.0
        %2241 = vmatpush.msra.mxu0 0.0
        %2242 = vmatpush.msra.mxu0 0.0
        %2243 = vmatpush.msra.mxu0 0.0
        %2244 = vmatpush.msra.mxu0 0.0
        %2245 = vmatpush.msra.mxu0 0.0
        %2246 = vmatpush.msra.mxu0 0.0
        %2247 = vmatpush.msra.mxu0 0.0
        %2248 = vmatpush.msra.mxu0 0.0
        %2249 = vmatpush.msra.mxu0 0.0
        %2250 = vmatpush.msra.mxu0 0.0
        %2251 = vmatpush.msra.mxu0 0.0
        %2252 = vmatpush.msra.mxu0 0.0
        %2253 = vmatpush.msra.mxu0 %v2199
        %2254 = vmatmul.f32.gmra.mxu0 %v2210
        %v2255 = vpop.f32.mrf.mxu0
        %v2256 = vadd.f32 0.0, %v2255
        %2257 = vmatmul.f32.gmra.mxu0 %v2213
        %v2258 = vpop.f32.mrf.mxu0
        %v2259 = vadd.f32 0.0, %v2258
        %2260 = vdwg.mxu0
        %2261 = vmatpush.msra.mxu0 0.0
        %2262 = vmatpush.msra.mxu0 0.0
        %2263 = vmatpush.msra.mxu0 0.0
        %2264 = vmatpush.msra.mxu0 0.0
        %2265 = vmatpush.msra.mxu0 0.0
        %2266 = vmatpush.msra.mxu0 0.0
        %2267 = vmatpush.msra.mxu0 0.0
        %2268 = vmatpush.msra.mxu0 0.0
        %2269 = vmatpush.msra.mxu0 0.0
        %2270 = vmatpush.msra.mxu0 0.0
        %2271 = vmatpush.msra.mxu0 0.0
        %2272 = vmatpush.msra.mxu0 0.0
        %2273 = vmatpush.msra.mxu0 0.0
        %2274 = vmatpush.msra.mxu0 0.0
        %2275 = vmatpush.msra.mxu0 0.0
        %2276 = vmatpush.msra.mxu0 %v2200
        %2277 = vmatmul.f32.gmra.mxu0 %v2210
        %v2278 = vpop.f32.mrf.mxu0
        %v2279 = vadd.f32 0.0, %v2278
        %2280 = vmatmul.f32.gmra.mxu0 %v2213
        %v2281 = vpop.f32.mrf.mxu0
        %v2282 = vadd.f32 0.0, %v2281
        %2283 = vdwg.mxu0
        %2284 = vmatpush.msra.mxu0 0.0
        %2285 = vmatpush.msra.mxu0 0.0
        %2286 = vmatpush.msra.mxu0 0.0
        %2287 = vmatpush.msra.mxu0 0.0
        %2288 = vmatpush.msra.mxu0 0.0
        %2289 = vmatpush.msra.mxu0 0.0
        %2290 = vmatpush.msra.mxu0 0.0
        %2291 = vmatpush.msra.mxu0 0.0
        %2292 = vmatpush.msra.mxu0 0.0
        %2293 = vmatpush.msra.mxu0 0.0
        %2294 = vmatpush.msra.mxu0 0.0
        %2295 = vmatpush.msra.mxu0 0.0
        %2296 = vmatpush.msra.mxu0 0.0
        %2297 = vmatpush.msra.mxu0 0.0
        %2298 = vmatpush.msra.mxu0 0.0
        %2299 = vmatpush.msra.mxu0 %v2201
        %2300 = vmatmul.f32.gmra.mxu0 %v2210
        %v2301 = vpop.f32.mrf.mxu0
        %v2302 = vadd.f32 0.0, %v2301
        %2303 = vmatmul.f32.gmra.mxu0 %v2213
        %v2304 = vpop.f32.mrf.mxu0
        %v2305 = vadd.f32 0.0, %v2304
        %2306 = vdwg.mxu0
        %2307 = vmatpush.msra.mxu0 0.0
        %2308 = vmatpush.msra.mxu0 0.0
        %2309 = vmatpush.msra.mxu0 0.0
        %2310 = vmatpush.msra.mxu0 0.0
        %2311 = vmatpush.msra.mxu0 0.0
        %2312 = vmatpush.msra.mxu0 0.0
        %2313 = vmatpush.msra.mxu0 0.0
        %2314 = vmatpush.msra.mxu0 0.0
        %2315 = vmatpush.msra.mxu0 0.0
        %2316 = vmatpush.msra.mxu0 0.0
        %2317 = vmatpush.msra.mxu0 0.0
        %2318 = vmatpush.msra.mxu0 0.0
        %2319 = vmatpush.msra.mxu0 0.0
        %2320 = vmatpush.msra.mxu0 0.0
        %2321 = vmatpush.msra.mxu0 0.0
        %2322 = vmatpush.msra.mxu0 %v2202
        %2323 = vmatmul.f32.gmra.mxu0 %v2210
        %v2324 = vpop.f32.mrf.mxu0
        %v2325 = vadd.f32 0.0, %v2324
        %2326 = vmatmul.f32.gmra.mxu0 %v2213
        %v2327 = vpop.f32.mrf.mxu0
        %v2328 = vadd.f32 0.0, %v2327
        %2329 = vdwg.mxu0
        %2330 = vmatpush.msra.mxu0 0.0
        %2331 = vmatpush.msra.mxu0 0.0
        %2332 = vmatpush.msra.mxu0 0.0
        %2333 = vmatpush.msra.mxu0 0.0
        %2334 = vmatpush.msra.mxu0 0.0
        %2335 = vmatpush.msra.mxu0 0.0
        %2336 = vmatpush.msra.mxu0 0.0
        %2337 = vmatpush.msra.mxu0 0.0
        %2338 = vmatpush.msra.mxu0 0.0
        %2339 = vmatpush.msra.mxu0 0.0
        %2340 = vmatpush.msra.mxu0 0.0
        %2341 = vmatpush.msra.mxu0 0.0
        %2342 = vmatpush.msra.mxu0 0.0
        %2343 = vmatpush.msra.mxu0 0.0
        %2344 = vmatpush.msra.mxu0 0.0
        %2345 = vmatpush.msra.mxu0 %v2197
        %2346 = vmatmul.f32.gmra.mxu0 %v2210
        %v2347 = vpop.f32.mrf.mxu0
        %v2348 = vadd.f32 0.0, %v2347
        %2349 = vmatmul.f32.gmra.mxu0 %v2213
        %v2350 = vpop.f32.mrf.mxu0
        %v2351 = vadd.f32 0.0, %v2350
        %2352 = vdwg.mxu0
        %v2354 = vsel %vm802, %v2175, 0
        %v2357 = vsel %vm802, %v2176, 0
        %2359 = vmatpush.msra.mxu0 0.0
        %2360 = vmatpush.msra.mxu0 0.0
        %2361 = vmatpush.msra.mxu0 0.0
        %2362 = vmatpush.msra.mxu0 0.0
        %2363 = vmatpush.msra.mxu0 0.0
        %2364 = vmatpush.msra.mxu0 0.0
        %2365 = vmatpush.msra.mxu0 0.0
        %2366 = vmatpush.msra.mxu0 0.0
        %2367 = vmatpush.msra.mxu0 0.0
        %2368 = vmatpush.msra.mxu0 0.0
        %2369 = vmatpush.msra.mxu0 0.0
        %2370 = vmatpush.msra.mxu0 0.0
        %2371 = vmatpush.msra.mxu0 0.0
        %2372 = vmatpush.msra.mxu0 0.0
        %2373 = vmatpush.msra.mxu0 0.0
        %2374 = vmatpush.msra.mxu0 %v2169
        %2375 = vmatmul.f32.gmra.mxu0 %v2354
        %v2376 = vpop.f32.mrf.mxu0
        %v2377 = vadd.f32 %v2233, %v2376
        %2378 = vmatmul.f32.gmra.mxu0 %v2357
        %v2379 = vpop.f32.mrf.mxu0
        %v2380 = vadd.f32 %v2236, %v2379
        %2381 = vdwg.mxu0
        %2382 = vmatpush.msra.mxu0 0.0
        %2383 = vmatpush.msra.mxu0 0.0
        %2384 = vmatpush.msra.mxu0 0.0
        %2385 = vmatpush.msra.mxu0 0.0
        %2386 = vmatpush.msra.mxu0 0.0
        %2387 = vmatpush.msra.mxu0 0.0
        %2388 = vmatpush.msra.mxu0 0.0
        %2389 = vmatpush.msra.mxu0 0.0
        %2390 = vmatpush.msra.mxu0 0.0
        %2391 = vmatpush.msra.mxu0 0.0
        %2392 = vmatpush.msra.mxu0 0.0
        %2393 = vmatpush.msra.mxu0 0.0
        %2394 = vmatpush.msra.mxu0 0.0
        %2395 = vmatpush.msra.mxu0 0.0
        %2396 = vmatpush.msra.mxu0 0.0
        %2397 = vmatpush.msra.mxu0 %v2170
        %2398 = vmatmul.f32.gmra.mxu0 %v2354
        %v2399 = vpop.f32.mrf.mxu0
        %v2400 = vadd.f32 %v2256, %v2399
        %2401 = vmatmul.f32.gmra.mxu0 %v2357
        %v2402 = vpop.f32.mrf.mxu0
        %v2403 = vadd.f32 %v2259, %v2402
        %2404 = vdwg.mxu0
        %2405 = vmatpush.msra.mxu0 0.0
        %2406 = vmatpush.msra.mxu0 0.0
        %2407 = vmatpush.msra.mxu0 0.0
        %2408 = vmatpush.msra.mxu0 0.0
        %2409 = vmatpush.msra.mxu0 0.0
        %2410 = vmatpush.msra.mxu0 0.0
        %2411 = vmatpush.msra.mxu0 0.0
        %2412 = vmatpush.msra.mxu0 0.0
        %2413 = vmatpush.msra.mxu0 0.0
        %2414 = vmatpush.msra.mxu0 0.0
        %2415 = vmatpush.msra.mxu0 0.0
        %2416 = vmatpush.msra.mxu0 0.0
        %2417 = vmatpush.msra.mxu0 0.0
        %2418 = vmatpush.msra.mxu0 0.0
        %2419 = vmatpush.msra.mxu0 0.0
        %2420 = vmatpush.msra.mxu0 %v2171
        %2421 = vmatmul.f32.gmra.mxu0 %v2354
        %v2422 = vpop.f32.mrf.mxu0
        %v2423 = vadd.f32 %v2279, %v2422
        %2424 = vmatmul.f32.gmra.mxu0 %v2357
        %v2425 = vpop.f32.mrf.mxu0
        %v2426 = vadd.f32 %v2282, %v2425
        %2427 = vdwg.mxu0
        %2428 = vmatpush.msra.mxu0 0.0
        %2429 = vmatpush.msra.mxu0 0.0
        %2430 = vmatpush.msra.mxu0 0.0
        %2431 = vmatpush.msra.mxu0 0.0
        %2432 = vmatpush.msra.mxu0 0.0
        %2433 = vmatpush.msra.mxu0 0.0
        %2434 = vmatpush.msra.mxu0 0.0
        %2435 = vmatpush.msra.mxu0 0.0
        %2436 = vmatpush.msra.mxu0 0.0
        %2437 = vmatpush.msra.mxu0 0.0
        %2438 = vmatpush.msra.mxu0 0.0
        %2439 = vmatpush.msra.mxu0 0.0
        %2440 = vmatpush.msra.mxu0 0.0
        %2441 = vmatpush.msra.mxu0 0.0
        %2442 = vmatpush.msra.mxu0 0.0
        %2443 = vmatpush.msra.mxu0 %v2172
        %2444 = vmatmul.f32.gmra.mxu0 %v2354
        %v2445 = vpop.f32.mrf.mxu0
        %v2446 = vadd.f32 %v2302, %v2445
        %2447 = vmatmul.f32.gmra.mxu0 %v2357
        %v2448 = vpop.f32.mrf.mxu0
        %v2449 = vadd.f32 %v2305, %v2448
        %2450 = vdwg.mxu0
        %2451 = vmatpush.msra.mxu0 0.0
        %2452 = vmatpush.msra.mxu0 0.0
        %2453 = vmatpush.msra.mxu0 0.0
        %2454 = vmatpush.msra.mxu0 0.0
        %2455 = vmatpush.msra.mxu0 0.0
        %2456 = vmatpush.msra.mxu0 0.0
        %2457 = vmatpush.msra.mxu0 0.0
        %2458 = vmatpush.msra.mxu0 0.0
        %2459 = vmatpush.msra.mxu0 0.0
        %2460 = vmatpush.msra.mxu0 0.0
        %2461 = vmatpush.msra.mxu0 0.0
        %2462 = vmatpush.msra.mxu0 0.0
        %2463 = vmatpush.msra.mxu0 0.0
        %2464 = vmatpush.msra.mxu0 0.0
        %2465 = vmatpush.msra.mxu0 0.0
        %2466 = vmatpush.msra.mxu0 %v2173
        %2467 = vmatmul.f32.gmra.mxu0 %v2354
        %v2468 = vpop.f32.mrf.mxu0
        %v2469 = vadd.f32 %v2325, %v2468
        %2470 = vmatmul.f32.gmra.mxu0 %v2357
        %v2471 = vpop.f32.mrf.mxu0
        %v2472 = vadd.f32 %v2328, %v2471
        %2473 = vdwg.mxu0
        %2474 = vmatpush.msra.mxu0 0.0
        %2475 = vmatpush.msra.mxu0 0.0
        %2476 = vmatpush.msra.mxu0 0.0
        %2477 = vmatpush.msra.mxu0 0.0
        %2478 = vmatpush.msra.mxu0 0.0
        %2479 = vmatpush.msra.mxu0 0.0
        %2480 = vmatpush.msra.mxu0 0.0
        %2481 = vmatpush.msra.mxu0 0.0
        %2482 = vmatpush.msra.mxu0 0.0
        %2483 = vmatpush.msra.mxu0 0.0
        %2484 = vmatpush.msra.mxu0 0.0
        %2485 = vmatpush.msra.mxu0 0.0
        %2486 = vmatpush.msra.mxu0 0.0
        %2487 = vmatpush.msra.mxu0 0.0
        %2488 = vmatpush.msra.mxu0 0.0
        %2489 = vmatpush.msra.mxu0 %v2174
        %2490 = vmatmul.f32.gmra.mxu0 %v2354
        %v2491 = vpop.f32.mrf.mxu0
        %v2492 = vadd.f32 %v2348, %v2491
        %2493 = vmatmul.f32.gmra.mxu0 %v2357
        %v2494 = vpop.f32.mrf.mxu0
        %v2495 = vadd.f32 %v2351, %v2494
        %2496 = vdwg.mxu0
        %s2497 = scalar_lea.vmem [#allocation6], 32
        %v2498 = vld [vmem:[%s2497] sm:$0xff]
        %v2499 = vld [vmem:[%s2497 + $0x8] sm:$0xff]
        %2500 = vrot.lane.b32.xlu0 %v2169, 126
        %v2501 = vpop.permute.xlu0 %2500
        %2502 = vrot.lane.b32.xlu0 %v2170, 126
        %v2503 = vpop.permute.xlu0 %2502
        %2504 = vrot.lane.b32.xlu0 %v2171, 126
        %v2505 = vpop.permute.xlu0 %2504
        %2506 = vrot.lane.b32.xlu0 %v2172, 126
        %v2507 = vpop.permute.xlu0 %2506
        %2508 = vrot.lane.b32.xlu0 %v2173, 126
        %v2509 = vpop.permute.xlu0 %2508
        %2510 = vrot.lane.b32.xlu0 %v2174, 126
        %v2511 = vpop.permute.xlu0 %2510
        %v2512 = vsel %vm1063, %v2501, %v2503
        %v2513 = vsel %vm1063, %v2503, %v2505
        %v2514 = vsel %vm1063, %v2505, %v2507
        %v2515 = vsel %vm1063, %v2507, %v2509
        %v2516 = vsel %vm1063, %v2509, %v2511
        %v2524 = vsel %vm802, %v2498, 0
        %v2527 = vsel %vm802, %v2499, 0
        %2529 = vmatpush.msra.mxu0 0.0
        %2530 = vmatpush.msra.mxu0 0.0
        %2531 = vmatpush.msra.mxu0 0.0
        %2532 = vmatpush.msra.mxu0 0.0
        %2533 = vmatpush.msra.mxu0 0.0
        %2534 = vmatpush.msra.mxu0 0.0
        %2535 = vmatpush.msra.mxu0 0.0
        %2536 = vmatpush.msra.mxu0 0.0
        %2537 = vmatpush.msra.mxu0 0.0
        %2538 = vmatpush.msra.mxu0 0.0
        %2539 = vmatpush.msra.mxu0 0.0
        %2540 = vmatpush.msra.mxu0 0.0
        %2541 = vmatpush.msra.mxu0 0.0
        %2542 = vmatpush.msra.mxu0 0.0
        %2543 = vmatpush.msra.mxu0 0.0
        %2544 = vmatpush.msra.mxu0 %v2512
        %2545 = vmatmul.f32.gmra.mxu0 %v2524
        %v2546 = vpop.f32.mrf.mxu0
        %v2547 = vadd.f32 0.0, %v2546
        %2548 = vmatmul.f32.gmra.mxu0 %v2527
        %v2549 = vpop.f32.mrf.mxu0
        %v2550 = vadd.f32 0.0, %v2549
        %2551 = vdwg.mxu0
        %2552 = vmatpush.msra.mxu0 0.0
        %2553 = vmatpush.msra.mxu0 0.0
        %2554 = vmatpush.msra.mxu0 0.0
        %2555 = vmatpush.msra.mxu0 0.0
        %2556 = vmatpush.msra.mxu0 0.0
        %2557 = vmatpush.msra.mxu0 0.0
        %2558 = vmatpush.msra.mxu0 0.0
        %2559 = vmatpush.msra.mxu0 0.0
        %2560 = vmatpush.msra.mxu0 0.0
        %2561 = vmatpush.msra.mxu0 0.0
        %2562 = vmatpush.msra.mxu0 0.0
        %2563 = vmatpush.msra.mxu0 0.0
        %2564 = vmatpush.msra.mxu0 0.0
        %2565 = vmatpush.msra.mxu0 0.0
        %2566 = vmatpush.msra.mxu0 0.0
        %2567 = vmatpush.msra.mxu0 %v2513
        %2568 = vmatmul.f32.gmra.mxu0 %v2524
        %v2569 = vpop.f32.mrf.mxu0
        %v2570 = vadd.f32 0.0, %v2569
        %2571 = vmatmul.f32.gmra.mxu0 %v2527
        %v2572 = vpop.f32.mrf.mxu0
        %v2573 = vadd.f32 0.0, %v2572
        %2574 = vdwg.mxu0
        %2575 = vmatpush.msra.mxu0 0.0
        %2576 = vmatpush.msra.mxu0 0.0
        %2577 = vmatpush.msra.mxu0 0.0
        %2578 = vmatpush.msra.mxu0 0.0
        %2579 = vmatpush.msra.mxu0 0.0
        %2580 = vmatpush.msra.mxu0 0.0
        %2581 = vmatpush.msra.mxu0 0.0
        %2582 = vmatpush.msra.mxu0 0.0
        %2583 = vmatpush.msra.mxu0 0.0
        %2584 = vmatpush.msra.mxu0 0.0
        %2585 = vmatpush.msra.mxu0 0.0
        %2586 = vmatpush.msra.mxu0 0.0
        %2587 = vmatpush.msra.mxu0 0.0
        %2588 = vmatpush.msra.mxu0 0.0
        %2589 = vmatpush.msra.mxu0 0.0
        %2590 = vmatpush.msra.mxu0 %v2514
        %2591 = vmatmul.f32.gmra.mxu0 %v2524
        %v2592 = vpop.f32.mrf.mxu0
        %v2593 = vadd.f32 0.0, %v2592
        %2594 = vmatmul.f32.gmra.mxu0 %v2527
        %v2595 = vpop.f32.mrf.mxu0
        %v2596 = vadd.f32 0.0, %v2595
        %2597 = vdwg.mxu0
        %2598 = vmatpush.msra.mxu0 0.0
        %2599 = vmatpush.msra.mxu0 0.0
        %2600 = vmatpush.msra.mxu0 0.0
        %2601 = vmatpush.msra.mxu0 0.0
        %2602 = vmatpush.msra.mxu0 0.0
        %2603 = vmatpush.msra.mxu0 0.0
        %2604 = vmatpush.msra.mxu0 0.0
        %2605 = vmatpush.msra.mxu0 0.0
        %2606 = vmatpush.msra.mxu0 0.0
        %2607 = vmatpush.msra.mxu0 0.0
        %2608 = vmatpush.msra.mxu0 0.0
        %2609 = vmatpush.msra.mxu0 0.0
        %2610 = vmatpush.msra.mxu0 0.0
        %2611 = vmatpush.msra.mxu0 0.0
        %2612 = vmatpush.msra.mxu0 0.0
        %2613 = vmatpush.msra.mxu0 %v2515
        %2614 = vmatmul.f32.gmra.mxu0 %v2524
        %v2615 = vpop.f32.mrf.mxu0
        %v2616 = vadd.f32 0.0, %v2615
        %2617 = vmatmul.f32.gmra.mxu0 %v2527
        %v2618 = vpop.f32.mrf.mxu0
        %v2619 = vadd.f32 0.0, %v2618
        %2620 = vdwg.mxu0
        %2621 = vmatpush.msra.mxu0 0.0
        %2622 = vmatpush.msra.mxu0 0.0
        %2623 = vmatpush.msra.mxu0 0.0
        %2624 = vmatpush.msra.mxu0 0.0
        %2625 = vmatpush.msra.mxu0 0.0
        %2626 = vmatpush.msra.mxu0 0.0
        %2627 = vmatpush.msra.mxu0 0.0
        %2628 = vmatpush.msra.mxu0 0.0
        %2629 = vmatpush.msra.mxu0 0.0
        %2630 = vmatpush.msra.mxu0 0.0
        %2631 = vmatpush.msra.mxu0 0.0
        %2632 = vmatpush.msra.mxu0 0.0
        %2633 = vmatpush.msra.mxu0 0.0
        %2634 = vmatpush.msra.mxu0 0.0
        %2635 = vmatpush.msra.mxu0 0.0
        %2636 = vmatpush.msra.mxu0 %v2516
        %2637 = vmatmul.f32.gmra.mxu0 %v2524
        %v2638 = vpop.f32.mrf.mxu0
        %v2639 = vadd.f32 0.0, %v2638
        %2640 = vmatmul.f32.gmra.mxu0 %v2527
        %v2641 = vpop.f32.mrf.mxu0
        %v2642 = vadd.f32 0.0, %v2641
        %2643 = vdwg.mxu0
        %2644 = vmatpush.msra.mxu0 0.0
        %2645 = vmatpush.msra.mxu0 0.0
        %2646 = vmatpush.msra.mxu0 0.0
        %2647 = vmatpush.msra.mxu0 0.0
        %2648 = vmatpush.msra.mxu0 0.0
        %2649 = vmatpush.msra.mxu0 0.0
        %2650 = vmatpush.msra.mxu0 0.0
        %2651 = vmatpush.msra.mxu0 0.0
        %2652 = vmatpush.msra.mxu0 0.0
        %2653 = vmatpush.msra.mxu0 0.0
        %2654 = vmatpush.msra.mxu0 0.0
        %2655 = vmatpush.msra.mxu0 0.0
        %2656 = vmatpush.msra.mxu0 0.0
        %2657 = vmatpush.msra.mxu0 0.0
        %2658 = vmatpush.msra.mxu0 0.0
        %2659 = vmatpush.msra.mxu0 %v2511
        %2660 = vmatmul.f32.gmra.mxu0 %v2524
        %v2661 = vpop.f32.mrf.mxu0
        %v2662 = vadd.f32 0.0, %v2661
        %2663 = vmatmul.f32.gmra.mxu0 %v2527
        %v2664 = vpop.f32.mrf.mxu0
        %v2665 = vadd.f32 0.0, %v2664
        %2666 = vdwg.mxu0
        %v2667 = vadd.f32 %v2377, %v2547
        %v2668 = vadd.f32 %v2400, %v2570
        %v2669 = vadd.f32 %v2423, %v2593
        %v2670 = vadd.f32 %v2446, %v2616
        %v2671 = vadd.f32 %v2469, %v2639
        %v2672 = vadd.f32 %v2492, %v2662
        %v2673 = vadd.f32 %v2380, %v2550
        %v2674 = vadd.f32 %v2403, %v2573
        %v2675 = vadd.f32 %v2426, %v2596
        %v2676 = vadd.f32 %v2449, %v2619
        %v2677 = vadd.f32 %v2472, %v2642
        %v2678 = vadd.f32 %v2495, %v2665
        %s2679 = scalar_lea.vmem [#allocation6], 48
        %v2680 = vld [vmem:[%s2679] sm:$0xff]
        %v2681 = vld [vmem:[%s2679 + $0x8] sm:$0xff]
        %2682 = vrot.lane.b32.xlu0 %v2169, 100
        %v2683 = vpop.permute.xlu0 %2682
        %2684 = vrot.lane.b32.xlu0 %v2170, 100
        %v2685 = vpop.permute.xlu0 %2684
        %2686 = vrot.lane.b32.xlu0 %v2171, 100
        %v2687 = vpop.permute.xlu0 %2686
        %2688 = vrot.lane.b32.xlu0 %v2172, 100
        %v2689 = vpop.permute.xlu0 %2688
        %2690 = vrot.lane.b32.xlu0 %v2173, 100
        %v2691 = vpop.permute.xlu0 %2690
        %2692 = vrot.lane.b32.xlu0 %v2174, 100
        %v2693 = vpop.permute.xlu0 %2692
        %v2694 = vsel %vm1218, %v2683, %v2685
        %v2695 = vsel %vm1218, %v2685, %v2687
        %v2696 = vsel %vm1218, %v2687, %v2689
        %v2697 = vsel %vm1218, %v2689, %v2691
        %v2698 = vsel %vm1218, %v2691, %v2693
        %v2706 = vsel %vm802, %v2680, 0
        %v2709 = vsel %vm802, %v2681, 0
        %2711 = vmatpush.msra.mxu0 0.0
        %2712 = vmatpush.msra.mxu0 0.0
        %2713 = vmatpush.msra.mxu0 0.0
        %2714 = vmatpush.msra.mxu0 0.0
        %2715 = vmatpush.msra.mxu0 0.0
        %2716 = vmatpush.msra.mxu0 0.0
        %2717 = vmatpush.msra.mxu0 0.0
        %2718 = vmatpush.msra.mxu0 0.0
        %2719 = vmatpush.msra.mxu0 0.0
        %2720 = vmatpush.msra.mxu0 0.0
        %2721 = vmatpush.msra.mxu0 0.0
        %2722 = vmatpush.msra.mxu0 0.0
        %2723 = vmatpush.msra.mxu0 0.0
        %2724 = vmatpush.msra.mxu0 0.0
        %2725 = vmatpush.msra.mxu0 0.0
        %2726 = vmatpush.msra.mxu0 %v2694
        %2727 = vmatmul.f32.gmra.mxu0 %v2706
        %v2728 = vpop.f32.mrf.mxu0
        %v2729 = vadd.f32 0.0, %v2728
        %2730 = vmatmul.f32.gmra.mxu0 %v2709
        %v2731 = vpop.f32.mrf.mxu0
        %v2732 = vadd.f32 0.0, %v2731
        %2733 = vdwg.mxu0
        %2734 = vmatpush.msra.mxu0 0.0
        %2735 = vmatpush.msra.mxu0 0.0
        %2736 = vmatpush.msra.mxu0 0.0
        %2737 = vmatpush.msra.mxu0 0.0
        %2738 = vmatpush.msra.mxu0 0.0
        %2739 = vmatpush.msra.mxu0 0.0
        %2740 = vmatpush.msra.mxu0 0.0
        %2741 = vmatpush.msra.mxu0 0.0
        %2742 = vmatpush.msra.mxu0 0.0
        %2743 = vmatpush.msra.mxu0 0.0
        %2744 = vmatpush.msra.mxu0 0.0
        %2745 = vmatpush.msra.mxu0 0.0
        %2746 = vmatpush.msra.mxu0 0.0
        %2747 = vmatpush.msra.mxu0 0.0
        %2748 = vmatpush.msra.mxu0 0.0
        %2749 = vmatpush.msra.mxu0 %v2695
        %2750 = vmatmul.f32.gmra.mxu0 %v2706
        %v2751 = vpop.f32.mrf.mxu0
        %v2752 = vadd.f32 0.0, %v2751
        %2753 = vmatmul.f32.gmra.mxu0 %v2709
        %v2754 = vpop.f32.mrf.mxu0
        %v2755 = vadd.f32 0.0, %v2754
        %2756 = vdwg.mxu0
        %2757 = vmatpush.msra.mxu0 0.0
        %2758 = vmatpush.msra.mxu0 0.0
        %2759 = vmatpush.msra.mxu0 0.0
        %2760 = vmatpush.msra.mxu0 0.0
        %2761 = vmatpush.msra.mxu0 0.0
        %2762 = vmatpush.msra.mxu0 0.0
        %2763 = vmatpush.msra.mxu0 0.0
        %2764 = vmatpush.msra.mxu0 0.0
        %2765 = vmatpush.msra.mxu0 0.0
        %2766 = vmatpush.msra.mxu0 0.0
        %2767 = vmatpush.msra.mxu0 0.0
        %2768 = vmatpush.msra.mxu0 0.0
        %2769 = vmatpush.msra.mxu0 0.0
        %2770 = vmatpush.msra.mxu0 0.0
        %2771 = vmatpush.msra.mxu0 0.0
        %2772 = vmatpush.msra.mxu0 %v2696
        %2773 = vmatmul.f32.gmra.mxu0 %v2706
        %v2774 = vpop.f32.mrf.mxu0
        %v2775 = vadd.f32 0.0, %v2774
        %2776 = vmatmul.f32.gmra.mxu0 %v2709
        %v2777 = vpop.f32.mrf.mxu0
        %v2778 = vadd.f32 0.0, %v2777
        %2779 = vdwg.mxu0
        %2780 = vmatpush.msra.mxu0 0.0
        %2781 = vmatpush.msra.mxu0 0.0
        %2782 = vmatpush.msra.mxu0 0.0
        %2783 = vmatpush.msra.mxu0 0.0
        %2784 = vmatpush.msra.mxu0 0.0
        %2785 = vmatpush.msra.mxu0 0.0
        %2786 = vmatpush.msra.mxu0 0.0
        %2787 = vmatpush.msra.mxu0 0.0
        %2788 = vmatpush.msra.mxu0 0.0
        %2789 = vmatpush.msra.mxu0 0.0
        %2790 = vmatpush.msra.mxu0 0.0
        %2791 = vmatpush.msra.mxu0 0.0
        %2792 = vmatpush.msra.mxu0 0.0
        %2793 = vmatpush.msra.mxu0 0.0
        %2794 = vmatpush.msra.mxu0 0.0
        %2795 = vmatpush.msra.mxu0 %v2697
        %2796 = vmatmul.f32.gmra.mxu0 %v2706
        %v2797 = vpop.f32.mrf.mxu0
        %v2798 = vadd.f32 0.0, %v2797
        %2799 = vmatmul.f32.gmra.mxu0 %v2709
        %v2800 = vpop.f32.mrf.mxu0
        %v2801 = vadd.f32 0.0, %v2800
        %2802 = vdwg.mxu0
        %2803 = vmatpush.msra.mxu0 0.0
        %2804 = vmatpush.msra.mxu0 0.0
        %2805 = vmatpush.msra.mxu0 0.0
        %2806 = vmatpush.msra.mxu0 0.0
        %2807 = vmatpush.msra.mxu0 0.0
        %2808 = vmatpush.msra.mxu0 0.0
        %2809 = vmatpush.msra.mxu0 0.0
        %2810 = vmatpush.msra.mxu0 0.0
        %2811 = vmatpush.msra.mxu0 0.0
        %2812 = vmatpush.msra.mxu0 0.0
        %2813 = vmatpush.msra.mxu0 0.0
        %2814 = vmatpush.msra.mxu0 0.0
        %2815 = vmatpush.msra.mxu0 0.0
        %2816 = vmatpush.msra.mxu0 0.0
        %2817 = vmatpush.msra.mxu0 0.0
        %2818 = vmatpush.msra.mxu0 %v2698
        %2819 = vmatmul.f32.gmra.mxu0 %v2706
        %v2820 = vpop.f32.mrf.mxu0
        %v2821 = vadd.f32 0.0, %v2820
        %2822 = vmatmul.f32.gmra.mxu0 %v2709
        %v2823 = vpop.f32.mrf.mxu0
        %v2824 = vadd.f32 0.0, %v2823
        %2825 = vdwg.mxu0
        %2826 = vmatpush.msra.mxu0 0.0
        %2827 = vmatpush.msra.mxu0 0.0
        %2828 = vmatpush.msra.mxu0 0.0
        %2829 = vmatpush.msra.mxu0 0.0
        %2830 = vmatpush.msra.mxu0 0.0
        %2831 = vmatpush.msra.mxu0 0.0
        %2832 = vmatpush.msra.mxu0 0.0
        %2833 = vmatpush.msra.mxu0 0.0
        %2834 = vmatpush.msra.mxu0 0.0
        %2835 = vmatpush.msra.mxu0 0.0
        %2836 = vmatpush.msra.mxu0 0.0
        %2837 = vmatpush.msra.mxu0 0.0
        %2838 = vmatpush.msra.mxu0 0.0
        %2839 = vmatpush.msra.mxu0 0.0
        %2840 = vmatpush.msra.mxu0 0.0
        %2841 = vmatpush.msra.mxu0 %v2693
        %2842 = vmatmul.f32.gmra.mxu0 %v2706
        %v2843 = vpop.f32.mrf.mxu0
        %v2844 = vadd.f32 0.0, %v2843
        %2845 = vmatmul.f32.gmra.mxu0 %v2709
        %v2846 = vpop.f32.mrf.mxu0
        %v2847 = vadd.f32 0.0, %v2846
        %2848 = vdwg.mxu0
        %v2849 = vadd.f32 %v2667, %v2729
        %v2850 = vadd.f32 %v2668, %v2752
        %v2851 = vadd.f32 %v2669, %v2775
        %v2852 = vadd.f32 %v2670, %v2798
        %v2853 = vadd.f32 %v2671, %v2821
        %v2854 = vadd.f32 %v2672, %v2844
        %v2855 = vadd.f32 %v2673, %v2732
        %v2856 = vadd.f32 %v2674, %v2755
        %v2857 = vadd.f32 %v2675, %v2778
        %v2858 = vadd.f32 %v2676, %v2801
        %v2859 = vadd.f32 %v2677, %v2824
        %v2860 = vadd.f32 %v2678, %v2847
        %s2861 = scalar_lea.vmem [#allocation6], 64
        %v2862 = vld [vmem:[%s2861] sm:$0xff]
        %v2863 = vld [vmem:[%s2861 + $0x8] sm:$0xff]
        %2864 = vrot.lane.b32.xlu0 %v2169, 99
        %v2865 = vpop.permute.xlu0 %2864
        %2866 = vrot.lane.b32.xlu0 %v2170, 99
        %v2867 = vpop.permute.xlu0 %2866
        %2868 = vrot.lane.b32.xlu0 %v2171, 99
        %v2869 = vpop.permute.xlu0 %2868
        %2870 = vrot.lane.b32.xlu0 %v2172, 99
        %v2871 = vpop.permute.xlu0 %2870
        %2872 = vrot.lane.b32.xlu0 %v2173, 99
        %v2873 = vpop.permute.xlu0 %2872
        %2874 = vrot.lane.b32.xlu0 %v2174, 99
        %v2875 = vpop.permute.xlu0 %2874
        %v2876 = vsel %vm1373, %v2865, %v2867
        %v2877 = vsel %vm1373, %v2867, %v2869
        %v2878 = vsel %vm1373, %v2869, %v2871
        %v2879 = vsel %vm1373, %v2871, %v2873
        %v2880 = vsel %vm1373, %v2873, %v2875
        %v2888 = vsel %vm802, %v2862, 0
        %v2891 = vsel %vm802, %v2863, 0
        %2893 = vmatpush.msra.mxu0 0.0
        %2894 = vmatpush.msra.mxu0 0.0
        %2895 = vmatpush.msra.mxu0 0.0
        %2896 = vmatpush.msra.mxu0 0.0
        %2897 = vmatpush.msra.mxu0 0.0
        %2898 = vmatpush.msra.mxu0 0.0
        %2899 = vmatpush.msra.mxu0 0.0
        %2900 = vmatpush.msra.mxu0 0.0
        %2901 = vmatpush.msra.mxu0 0.0
        %2902 = vmatpush.msra.mxu0 0.0
        %2903 = vmatpush.msra.mxu0 0.0
        %2904 = vmatpush.msra.mxu0 0.0
        %2905 = vmatpush.msra.mxu0 0.0
        %2906 = vmatpush.msra.mxu0 0.0
        %2907 = vmatpush.msra.mxu0 0.0
        %2908 = vmatpush.msra.mxu0 %v2876
        %2909 = vmatmul.f32.gmra.mxu0 %v2888
        %v2910 = vpop.f32.mrf.mxu0
        %v2911 = vadd.f32 0.0, %v2910
        %2912 = vmatmul.f32.gmra.mxu0 %v2891
        %v2913 = vpop.f32.mrf.mxu0
        %v2914 = vadd.f32 0.0, %v2913
        %2915 = vdwg.mxu0
        %2916 = vmatpush.msra.mxu0 0.0
        %2917 = vmatpush.msra.mxu0 0.0
        %2918 = vmatpush.msra.mxu0 0.0
        %2919 = vmatpush.msra.mxu0 0.0
        %2920 = vmatpush.msra.mxu0 0.0
        %2921 = vmatpush.msra.mxu0 0.0
        %2922 = vmatpush.msra.mxu0 0.0
        %2923 = vmatpush.msra.mxu0 0.0
        %2924 = vmatpush.msra.mxu0 0.0
        %2925 = vmatpush.msra.mxu0 0.0
        %2926 = vmatpush.msra.mxu0 0.0
        %2927 = vmatpush.msra.mxu0 0.0
        %2928 = vmatpush.msra.mxu0 0.0
        %2929 = vmatpush.msra.mxu0 0.0
        %2930 = vmatpush.msra.mxu0 0.0
        %2931 = vmatpush.msra.mxu0 %v2877
        %2932 = vmatmul.f32.gmra.mxu0 %v2888
        %v2933 = vpop.f32.mrf.mxu0
        %v2934 = vadd.f32 0.0, %v2933
        %2935 = vmatmul.f32.gmra.mxu0 %v2891
        %v2936 = vpop.f32.mrf.mxu0
        %v2937 = vadd.f32 0.0, %v2936
        %2938 = vdwg.mxu0
        %2939 = vmatpush.msra.mxu0 0.0
        %2940 = vmatpush.msra.mxu0 0.0
        %2941 = vmatpush.msra.mxu0 0.0
        %2942 = vmatpush.msra.mxu0 0.0
        %2943 = vmatpush.msra.mxu0 0.0
        %2944 = vmatpush.msra.mxu0 0.0
        %2945 = vmatpush.msra.mxu0 0.0
        %2946 = vmatpush.msra.mxu0 0.0
        %2947 = vmatpush.msra.mxu0 0.0
        %2948 = vmatpush.msra.mxu0 0.0
        %2949 = vmatpush.msra.mxu0 0.0
        %2950 = vmatpush.msra.mxu0 0.0
        %2951 = vmatpush.msra.mxu0 0.0
        %2952 = vmatpush.msra.mxu0 0.0
        %2953 = vmatpush.msra.mxu0 0.0
        %2954 = vmatpush.msra.mxu0 %v2878
        %2955 = vmatmul.f32.gmra.mxu0 %v2888
        %v2956 = vpop.f32.mrf.mxu0
        %v2957 = vadd.f32 0.0, %v2956
        %2958 = vmatmul.f32.gmra.mxu0 %v2891
        %v2959 = vpop.f32.mrf.mxu0
        %v2960 = vadd.f32 0.0, %v2959
        %2961 = vdwg.mxu0
        %2962 = vmatpush.msra.mxu0 0.0
        %2963 = vmatpush.msra.mxu0 0.0
        %2964 = vmatpush.msra.mxu0 0.0
        %2965 = vmatpush.msra.mxu0 0.0
        %2966 = vmatpush.msra.mxu0 0.0
        %2967 = vmatpush.msra.mxu0 0.0
        %2968 = vmatpush.msra.mxu0 0.0
        %2969 = vmatpush.msra.mxu0 0.0
        %2970 = vmatpush.msra.mxu0 0.0
        %2971 = vmatpush.msra.mxu0 0.0
        %2972 = vmatpush.msra.mxu0 0.0
        %2973 = vmatpush.msra.mxu0 0.0
        %2974 = vmatpush.msra.mxu0 0.0
        %2975 = vmatpush.msra.mxu0 0.0
        %2976 = vmatpush.msra.mxu0 0.0
        %2977 = vmatpush.msra.mxu0 %v2879
        %2978 = vmatmul.f32.gmra.mxu0 %v2888
        %v2979 = vpop.f32.mrf.mxu0
        %v2980 = vadd.f32 0.0, %v2979
        %2981 = vmatmul.f32.gmra.mxu0 %v2891
        %v2982 = vpop.f32.mrf.mxu0
        %v2983 = vadd.f32 0.0, %v2982
        %2984 = vdwg.mxu0
        %2985 = vmatpush.msra.mxu0 0.0
        %2986 = vmatpush.msra.mxu0 0.0
        %2987 = vmatpush.msra.mxu0 0.0
        %2988 = vmatpush.msra.mxu0 0.0
        %2989 = vmatpush.msra.mxu0 0.0
        %2990 = vmatpush.msra.mxu0 0.0
        %2991 = vmatpush.msra.mxu0 0.0
        %2992 = vmatpush.msra.mxu0 0.0
        %2993 = vmatpush.msra.mxu0 0.0
        %2994 = vmatpush.msra.mxu0 0.0
        %2995 = vmatpush.msra.mxu0 0.0
        %2996 = vmatpush.msra.mxu0 0.0
        %2997 = vmatpush.msra.mxu0 0.0
        %2998 = vmatpush.msra.mxu0 0.0
        %2999 = vmatpush.msra.mxu0 0.0
        %3000 = vmatpush.msra.mxu0 %v2880
        %3001 = vmatmul.f32.gmra.mxu0 %v2888
        %v3002 = vpop.f32.mrf.mxu0
        %v3003 = vadd.f32 0.0, %v3002
        %3004 = vmatmul.f32.gmra.mxu0 %v2891
        %v3005 = vpop.f32.mrf.mxu0
        %v3006 = vadd.f32 0.0, %v3005
        %3007 = vdwg.mxu0
        %3008 = vmatpush.msra.mxu0 0.0
        %3009 = vmatpush.msra.mxu0 0.0
        %3010 = vmatpush.msra.mxu0 0.0
        %3011 = vmatpush.msra.mxu0 0.0
        %3012 = vmatpush.msra.mxu0 0.0
        %3013 = vmatpush.msra.mxu0 0.0
        %3014 = vmatpush.msra.mxu0 0.0
        %3015 = vmatpush.msra.mxu0 0.0
        %3016 = vmatpush.msra.mxu0 0.0
        %3017 = vmatpush.msra.mxu0 0.0
        %3018 = vmatpush.msra.mxu0 0.0
        %3019 = vmatpush.msra.mxu0 0.0
        %3020 = vmatpush.msra.mxu0 0.0
        %3021 = vmatpush.msra.mxu0 0.0
        %3022 = vmatpush.msra.mxu0 0.0
        %3023 = vmatpush.msra.mxu0 %v2875
        %3024 = vmatmul.f32.gmra.mxu0 %v2888
        %v3025 = vpop.f32.mrf.mxu0
        %v3026 = vadd.f32 0.0, %v3025
        %3027 = vmatmul.f32.gmra.mxu0 %v2891
        %v3028 = vpop.f32.mrf.mxu0
        %v3029 = vadd.f32 0.0, %v3028
        %3030 = vdwg.mxu0
        %v3031 = vadd.f32 %v2849, %v2911
        %v3032 = vadd.f32 %v2850, %v2934
        %v3033 = vadd.f32 %v2851, %v2957
        %v3034 = vadd.f32 %v2852, %v2980
        %v3035 = vadd.f32 %v2853, %v3003
        %v3036 = vadd.f32 %v2854, %v3026
        %v3037 = vadd.f32 %v2855, %v2914
        %v3038 = vadd.f32 %v2856, %v2937
        %v3039 = vadd.f32 %v2857, %v2960
        %v3040 = vadd.f32 %v2858, %v2983
        %v3041 = vadd.f32 %v2859, %v3006
        %v3042 = vadd.f32 %v2860, %v3029
        %s3043 = scalar_lea.vmem [#allocation6], 80
        %v3044 = vld [vmem:[%s3043] sm:$0xff]
        %v3045 = vld [vmem:[%s3043 + $0x8] sm:$0xff]
        %3046 = vrot.lane.b32.xlu0 %v2169, 98
        %v3047 = vpop.permute.xlu0 %3046
        %3048 = vrot.lane.b32.xlu0 %v2170, 98
        %v3049 = vpop.permute.xlu0 %3048
        %3050 = vrot.lane.b32.xlu0 %v2171, 98
        %v3051 = vpop.permute.xlu0 %3050
        %3052 = vrot.lane.b32.xlu0 %v2172, 98
        %v3053 = vpop.permute.xlu0 %3052
        %3054 = vrot.lane.b32.xlu0 %v2173, 98
        %v3055 = vpop.permute.xlu0 %3054
        %3056 = vrot.lane.b32.xlu0 %v2174, 98
        %v3057 = vpop.permute.xlu0 %3056
        %v3058 = vsel %vm1528, %v3047, %v3049
        %v3059 = vsel %vm1528, %v3049, %v3051
        %v3060 = vsel %vm1528, %v3051, %v3053
        %v3061 = vsel %vm1528, %v3053, %v3055
        %v3062 = vsel %vm1528, %v3055, %v3057
        %v3070 = vsel %vm802, %v3044, 0
        %v3073 = vsel %vm802, %v3045, 0
        %3075 = vmatpush.msra.mxu0 0.0
        %3076 = vmatpush.msra.mxu0 0.0
        %3077 = vmatpush.msra.mxu0 0.0
        %3078 = vmatpush.msra.mxu0 0.0
        %3079 = vmatpush.msra.mxu0 0.0
        %3080 = vmatpush.msra.mxu0 0.0
        %3081 = vmatpush.msra.mxu0 0.0
        %3082 = vmatpush.msra.mxu0 0.0
        %3083 = vmatpush.msra.mxu0 0.0
        %3084 = vmatpush.msra.mxu0 0.0
        %3085 = vmatpush.msra.mxu0 0.0
        %3086 = vmatpush.msra.mxu0 0.0
        %3087 = vmatpush.msra.mxu0 0.0
        %3088 = vmatpush.msra.mxu0 0.0
        %3089 = vmatpush.msra.mxu0 0.0
        %3090 = vmatpush.msra.mxu0 %v3058
        %3091 = vmatmul.f32.gmra.mxu0 %v3070
        %v3092 = vpop.f32.mrf.mxu0
        %v3093 = vadd.f32 0.0, %v3092
        %3094 = vmatmul.f32.gmra.mxu0 %v3073
        %v3095 = vpop.f32.mrf.mxu0
        %v3096 = vadd.f32 0.0, %v3095
        %3097 = vdwg.mxu0
        %3098 = vmatpush.msra.mxu0 0.0
        %3099 = vmatpush.msra.mxu0 0.0
        %3100 = vmatpush.msra.mxu0 0.0
        %3101 = vmatpush.msra.mxu0 0.0
        %3102 = vmatpush.msra.mxu0 0.0
        %3103 = vmatpush.msra.mxu0 0.0
        %3104 = vmatpush.msra.mxu0 0.0
        %3105 = vmatpush.msra.mxu0 0.0
        %3106 = vmatpush.msra.mxu0 0.0
        %3107 = vmatpush.msra.mxu0 0.0
        %3108 = vmatpush.msra.mxu0 0.0
        %3109 = vmatpush.msra.mxu0 0.0
        %3110 = vmatpush.msra.mxu0 0.0
        %3111 = vmatpush.msra.mxu0 0.0
        %3112 = vmatpush.msra.mxu0 0.0
        %3113 = vmatpush.msra.mxu0 %v3059
        %3114 = vmatmul.f32.gmra.mxu0 %v3070
        %v3115 = vpop.f32.mrf.mxu0
        %v3116 = vadd.f32 0.0, %v3115
        %3117 = vmatmul.f32.gmra.mxu0 %v3073
        %v3118 = vpop.f32.mrf.mxu0
        %v3119 = vadd.f32 0.0, %v3118
        %3120 = vdwg.mxu0
        %3121 = vmatpush.msra.mxu0 0.0
        %3122 = vmatpush.msra.mxu0 0.0
        %3123 = vmatpush.msra.mxu0 0.0
        %3124 = vmatpush.msra.mxu0 0.0
        %3125 = vmatpush.msra.mxu0 0.0
        %3126 = vmatpush.msra.mxu0 0.0
        %3127 = vmatpush.msra.mxu0 0.0
        %3128 = vmatpush.msra.mxu0 0.0
        %3129 = vmatpush.msra.mxu0 0.0
        %3130 = vmatpush.msra.mxu0 0.0
        %3131 = vmatpush.msra.mxu0 0.0
        %3132 = vmatpush.msra.mxu0 0.0
        %3133 = vmatpush.msra.mxu0 0.0
        %3134 = vmatpush.msra.mxu0 0.0
        %3135 = vmatpush.msra.mxu0 0.0
        %3136 = vmatpush.msra.mxu0 %v3060
        %3137 = vmatmul.f32.gmra.mxu0 %v3070
        %v3138 = vpop.f32.mrf.mxu0
        %v3139 = vadd.f32 0.0, %v3138
        %3140 = vmatmul.f32.gmra.mxu0 %v3073
        %v3141 = vpop.f32.mrf.mxu0
        %v3142 = vadd.f32 0.0, %v3141
        %3143 = vdwg.mxu0
        %3144 = vmatpush.msra.mxu0 0.0
        %3145 = vmatpush.msra.mxu0 0.0
        %3146 = vmatpush.msra.mxu0 0.0
        %3147 = vmatpush.msra.mxu0 0.0
        %3148 = vmatpush.msra.mxu0 0.0
        %3149 = vmatpush.msra.mxu0 0.0
        %3150 = vmatpush.msra.mxu0 0.0
        %3151 = vmatpush.msra.mxu0 0.0
        %3152 = vmatpush.msra.mxu0 0.0
        %3153 = vmatpush.msra.mxu0 0.0
        %3154 = vmatpush.msra.mxu0 0.0
        %3155 = vmatpush.msra.mxu0 0.0
        %3156 = vmatpush.msra.mxu0 0.0
        %3157 = vmatpush.msra.mxu0 0.0
        %3158 = vmatpush.msra.mxu0 0.0
        %3159 = vmatpush.msra.mxu0 %v3061
        %3160 = vmatmul.f32.gmra.mxu0 %v3070
        %v3161 = vpop.f32.mrf.mxu0
        %v3162 = vadd.f32 0.0, %v3161
        %3163 = vmatmul.f32.gmra.mxu0 %v3073
        %v3164 = vpop.f32.mrf.mxu0
        %v3165 = vadd.f32 0.0, %v3164
        %3166 = vdwg.mxu0
        %3167 = vmatpush.msra.mxu0 0.0
        %3168 = vmatpush.msra.mxu0 0.0
        %3169 = vmatpush.msra.mxu0 0.0
        %3170 = vmatpush.msra.mxu0 0.0
        %3171 = vmatpush.msra.mxu0 0.0
        %3172 = vmatpush.msra.mxu0 0.0
        %3173 = vmatpush.msra.mxu0 0.0
        %3174 = vmatpush.msra.mxu0 0.0
        %3175 = vmatpush.msra.mxu0 0.0
        %3176 = vmatpush.msra.mxu0 0.0
        %3177 = vmatpush.msra.mxu0 0.0
        %3178 = vmatpush.msra.mxu0 0.0
        %3179 = vmatpush.msra.mxu0 0.0
        %3180 = vmatpush.msra.mxu0 0.0
        %3181 = vmatpush.msra.mxu0 0.0
        %3182 = vmatpush.msra.mxu0 %v3062
        %3183 = vmatmul.f32.gmra.mxu0 %v3070
        %v3184 = vpop.f32.mrf.mxu0
        %v3185 = vadd.f32 0.0, %v3184
        %3186 = vmatmul.f32.gmra.mxu0 %v3073
        %v3187 = vpop.f32.mrf.mxu0
        %v3188 = vadd.f32 0.0, %v3187
        %3189 = vdwg.mxu0
        %3190 = vmatpush.msra.mxu0 0.0
        %3191 = vmatpush.msra.mxu0 0.0
        %3192 = vmatpush.msra.mxu0 0.0
        %3193 = vmatpush.msra.mxu0 0.0
        %3194 = vmatpush.msra.mxu0 0.0
        %3195 = vmatpush.msra.mxu0 0.0
        %3196 = vmatpush.msra.mxu0 0.0
        %3197 = vmatpush.msra.mxu0 0.0
        %3198 = vmatpush.msra.mxu0 0.0
        %3199 = vmatpush.msra.mxu0 0.0
        %3200 = vmatpush.msra.mxu0 0.0
        %3201 = vmatpush.msra.mxu0 0.0
        %3202 = vmatpush.msra.mxu0 0.0
        %3203 = vmatpush.msra.mxu0 0.0
        %3204 = vmatpush.msra.mxu0 0.0
        %3205 = vmatpush.msra.mxu0 %v3057
        %3206 = vmatmul.f32.gmra.mxu0 %v3070
        %v3207 = vpop.f32.mrf.mxu0
        %v3208 = vadd.f32 0.0, %v3207
        %3209 = vmatmul.f32.gmra.mxu0 %v3073
        %v3210 = vpop.f32.mrf.mxu0
        %v3211 = vadd.f32 0.0, %v3210
        %3212 = vdwg.mxu0
        %v3213 = vadd.f32 %v3031, %v3093
        %v3214 = vadd.f32 %v3032, %v3116
        %v3215 = vadd.f32 %v3033, %v3139
        %v3216 = vadd.f32 %v3034, %v3162
        %v3217 = vadd.f32 %v3035, %v3185
        %v3218 = vadd.f32 %v3036, %v3208
        %v3219 = vadd.f32 %v3037, %v3096
        %v3220 = vadd.f32 %v3038, %v3119
        %v3221 = vadd.f32 %v3039, %v3142
        %v3222 = vadd.f32 %v3040, %v3165
        %v3223 = vadd.f32 %v3041, %v3188
        %v3224 = vadd.f32 %v3042, %v3211
        %s3225 = scalar_lea.vmem [#allocation6], 96
        %v3226 = vld [vmem:[%s3225] sm:$0xff]
        %v3227 = vld [vmem:[%s3225 + $0x8] sm:$0xff]
        %3228 = vrot.lane.b32.xlu0 %v2169, 72
        %v3229 = vpop.permute.xlu0 %3228
        %3230 = vrot.lane.b32.xlu0 %v2170, 72
        %v3231 = vpop.permute.xlu0 %3230
        %3232 = vrot.lane.b32.xlu0 %v2171, 72
        %v3233 = vpop.permute.xlu0 %3232
        %3234 = vrot.lane.b32.xlu0 %v2172, 72
        %v3235 = vpop.permute.xlu0 %3234
        %3236 = vrot.lane.b32.xlu0 %v2173, 72
        %v3237 = vpop.permute.xlu0 %3236
        %3238 = vrot.lane.b32.xlu0 %v2174, 72
        %v3239 = vpop.permute.xlu0 %3238
        %v3240 = vsel %vm1686, %v3229, %v3231
        %v3241 = vsel %vm1686, %v3231, %v3233
        %v3242 = vsel %vm1686, %v3233, %v3235
        %v3243 = vsel %vm1686, %v3235, %v3237
        %v3244 = vsel %vm1686, %v3237, %v3239
        %v3252 = vsel %vm802, %v3226, 0
        %v3255 = vsel %vm802, %v3227, 0
        %3257 = vmatpush.msra.mxu0 0.0
        %3258 = vmatpush.msra.mxu0 0.0
        %3259 = vmatpush.msra.mxu0 0.0
        %3260 = vmatpush.msra.mxu0 0.0
        %3261 = vmatpush.msra.mxu0 0.0
        %3262 = vmatpush.msra.mxu0 0.0
        %3263 = vmatpush.msra.mxu0 0.0
        %3264 = vmatpush.msra.mxu0 0.0
        %3265 = vmatpush.msra.mxu0 0.0
        %3266 = vmatpush.msra.mxu0 0.0
        %3267 = vmatpush.msra.mxu0 0.0
        %3268 = vmatpush.msra.mxu0 0.0
        %3269 = vmatpush.msra.mxu0 0.0
        %3270 = vmatpush.msra.mxu0 0.0
        %3271 = vmatpush.msra.mxu0 0.0
        %3272 = vmatpush.msra.mxu0 %v3240
        %3273 = vmatmul.f32.gmra.mxu0 %v3252
        %v3274 = vpop.f32.mrf.mxu0
        %v3275 = vadd.f32 0.0, %v3274
        %3276 = vmatmul.f32.gmra.mxu0 %v3255
        %v3277 = vpop.f32.mrf.mxu0
        %v3278 = vadd.f32 0.0, %v3277
        %3279 = vdwg.mxu0
        %3280 = vmatpush.msra.mxu0 0.0
        %3281 = vmatpush.msra.mxu0 0.0
        %3282 = vmatpush.msra.mxu0 0.0
        %3283 = vmatpush.msra.mxu0 0.0
        %3284 = vmatpush.msra.mxu0 0.0
        %3285 = vmatpush.msra.mxu0 0.0
        %3286 = vmatpush.msra.mxu0 0.0
        %3287 = vmatpush.msra.mxu0 0.0
        %3288 = vmatpush.msra.mxu0 0.0
        %3289 = vmatpush.msra.mxu0 0.0
        %3290 = vmatpush.msra.mxu0 0.0
        %3291 = vmatpush.msra.mxu0 0.0
        %3292 = vmatpush.msra.mxu0 0.0
        %3293 = vmatpush.msra.mxu0 0.0
        %3294 = vmatpush.msra.mxu0 0.0
        %3295 = vmatpush.msra.mxu0 %v3241
        %3296 = vmatmul.f32.gmra.mxu0 %v3252
        %v3297 = vpop.f32.mrf.mxu0
        %v3298 = vadd.f32 0.0, %v3297
        %3299 = vmatmul.f32.gmra.mxu0 %v3255
        %v3300 = vpop.f32.mrf.mxu0
        %v3301 = vadd.f32 0.0, %v3300
        %3302 = vdwg.mxu0
        %3303 = vmatpush.msra.mxu0 0.0
        %3304 = vmatpush.msra.mxu0 0.0
        %3305 = vmatpush.msra.mxu0 0.0
        %3306 = vmatpush.msra.mxu0 0.0
        %3307 = vmatpush.msra.mxu0 0.0
        %3308 = vmatpush.msra.mxu0 0.0
        %3309 = vmatpush.msra.mxu0 0.0
        %3310 = vmatpush.msra.mxu0 0.0
        %3311 = vmatpush.msra.mxu0 0.0
        %3312 = vmatpush.msra.mxu0 0.0
        %3313 = vmatpush.msra.mxu0 0.0
        %3314 = vmatpush.msra.mxu0 0.0
        %3315 = vmatpush.msra.mxu0 0.0
        %3316 = vmatpush.msra.mxu0 0.0
        %3317 = vmatpush.msra.mxu0 0.0
        %3318 = vmatpush.msra.mxu0 %v3242
        %3319 = vmatmul.f32.gmra.mxu0 %v3252
        %v3320 = vpop.f32.mrf.mxu0
        %v3321 = vadd.f32 0.0, %v3320
        %3322 = vmatmul.f32.gmra.mxu0 %v3255
        %v3323 = vpop.f32.mrf.mxu0
        %v3324 = vadd.f32 0.0, %v3323
        %3325 = vdwg.mxu0
        %3326 = vmatpush.msra.mxu0 0.0
        %3327 = vmatpush.msra.mxu0 0.0
        %3328 = vmatpush.msra.mxu0 0.0
        %3329 = vmatpush.msra.mxu0 0.0
        %3330 = vmatpush.msra.mxu0 0.0
        %3331 = vmatpush.msra.mxu0 0.0
        %3332 = vmatpush.msra.mxu0 0.0
        %3333 = vmatpush.msra.mxu0 0.0
        %3334 = vmatpush.msra.mxu0 0.0
        %3335 = vmatpush.msra.mxu0 0.0
        %3336 = vmatpush.msra.mxu0 0.0
        %3337 = vmatpush.msra.mxu0 0.0
        %3338 = vmatpush.msra.mxu0 0.0
        %3339 = vmatpush.msra.mxu0 0.0
        %3340 = vmatpush.msra.mxu0 0.0
        %3341 = vmatpush.msra.mxu0 %v3243
        %3342 = vmatmul.f32.gmra.mxu0 %v3252
        %v3343 = vpop.f32.mrf.mxu0
        %v3344 = vadd.f32 0.0, %v3343
        %3345 = vmatmul.f32.gmra.mxu0 %v3255
        %v3346 = vpop.f32.mrf.mxu0
        %v3347 = vadd.f32 0.0, %v3346
        %3348 = vdwg.mxu0
        %3349 = vmatpush.msra.mxu0 0.0
        %3350 = vmatpush.msra.mxu0 0.0
        %3351 = vmatpush.msra.mxu0 0.0
        %3352 = vmatpush.msra.mxu0 0.0
        %3353 = vmatpush.msra.mxu0 0.0
        %3354 = vmatpush.msra.mxu0 0.0
        %3355 = vmatpush.msra.mxu0 0.0
        %3356 = vmatpush.msra.mxu0 0.0
        %3357 = vmatpush.msra.mxu0 0.0
        %3358 = vmatpush.msra.mxu0 0.0
        %3359 = vmatpush.msra.mxu0 0.0
        %3360 = vmatpush.msra.mxu0 0.0
        %3361 = vmatpush.msra.mxu0 0.0
        %3362 = vmatpush.msra.mxu0 0.0
        %3363 = vmatpush.msra.mxu0 0.0
        %3364 = vmatpush.msra.mxu0 %v3244
        %3365 = vmatmul.f32.gmra.mxu0 %v3252
        %v3366 = vpop.f32.mrf.mxu0
        %v3367 = vadd.f32 0.0, %v3366
        %3368 = vmatmul.f32.gmra.mxu0 %v3255
        %v3369 = vpop.f32.mrf.mxu0
        %v3370 = vadd.f32 0.0, %v3369
        %3371 = vdwg.mxu0
        %3372 = vmatpush.msra.mxu0 0.0
        %3373 = vmatpush.msra.mxu0 0.0
        %3374 = vmatpush.msra.mxu0 0.0
        %3375 = vmatpush.msra.mxu0 0.0
        %3376 = vmatpush.msra.mxu0 0.0
        %3377 = vmatpush.msra.mxu0 0.0
        %3378 = vmatpush.msra.mxu0 0.0
        %3379 = vmatpush.msra.mxu0 0.0
        %3380 = vmatpush.msra.mxu0 0.0
        %3381 = vmatpush.msra.mxu0 0.0
        %3382 = vmatpush.msra.mxu0 0.0
        %3383 = vmatpush.msra.mxu0 0.0
        %3384 = vmatpush.msra.mxu0 0.0
        %3385 = vmatpush.msra.mxu0 0.0
        %3386 = vmatpush.msra.mxu0 0.0
        %3387 = vmatpush.msra.mxu0 %v3239
        %3388 = vmatmul.f32.gmra.mxu0 %v3252
        %v3389 = vpop.f32.mrf.mxu0
        %v3390 = vadd.f32 0.0, %v3389
        %3391 = vmatmul.f32.gmra.mxu0 %v3255
        %v3392 = vpop.f32.mrf.mxu0
        %v3393 = vadd.f32 0.0, %v3392
        %3394 = vdwg.mxu0
        %v3395 = vadd.f32 %v3213, %v3275
        %v3396 = vadd.f32 %v3214, %v3298
        %v3397 = vadd.f32 %v3215, %v3321
        %v3398 = vadd.f32 %v3216, %v3344
        %v3399 = vadd.f32 %v3217, %v3367
        %v3400 = vadd.f32 %v3218, %v3390
        %v3401 = vadd.f32 %v3219, %v3278
        %v3402 = vadd.f32 %v3220, %v3301
        %v3403 = vadd.f32 %v3221, %v3324
        %v3404 = vadd.f32 %v3222, %v3347
        %v3405 = vadd.f32 %v3223, %v3370
        %v3406 = vadd.f32 %v3224, %v3393
        %s3407 = scalar_lea.vmem [#allocation6], 112
        %v3408 = vld [vmem:[%s3407] sm:$0xff]
        %v3409 = vld [vmem:[%s3407 + $0x8] sm:$0xff]
        %3410 = vrot.lane.b32.xlu0 %v2169, 71
        %v3411 = vpop.permute.xlu0 %3410
        %3412 = vrot.lane.b32.xlu0 %v2170, 71
        %v3413 = vpop.permute.xlu0 %3412
        %3414 = vrot.lane.b32.xlu0 %v2171, 71
        %v3415 = vpop.permute.xlu0 %3414
        %3416 = vrot.lane.b32.xlu0 %v2172, 71
        %v3417 = vpop.permute.xlu0 %3416
        %3418 = vrot.lane.b32.xlu0 %v2173, 71
        %v3419 = vpop.permute.xlu0 %3418
        %3420 = vrot.lane.b32.xlu0 %v2174, 71
        %v3421 = vpop.permute.xlu0 %3420
        %v3422 = vsel %vm1844, %v3411, %v3413
        %v3423 = vsel %vm1844, %v3413, %v3415
        %v3424 = vsel %vm1844, %v3415, %v3417
        %v3425 = vsel %vm1844, %v3417, %v3419
        %v3426 = vsel %vm1844, %v3419, %v3421
        %v3434 = vsel %vm802, %v3408, 0
        %v3437 = vsel %vm802, %v3409, 0
        %3439 = vmatpush.msra.mxu0 0.0
        %3440 = vmatpush.msra.mxu0 0.0
        %3441 = vmatpush.msra.mxu0 0.0
        %3442 = vmatpush.msra.mxu0 0.0
        %3443 = vmatpush.msra.mxu0 0.0
        %3444 = vmatpush.msra.mxu0 0.0
        %3445 = vmatpush.msra.mxu0 0.0
        %3446 = vmatpush.msra.mxu0 0.0
        %3447 = vmatpush.msra.mxu0 0.0
        %3448 = vmatpush.msra.mxu0 0.0
        %3449 = vmatpush.msra.mxu0 0.0
        %3450 = vmatpush.msra.mxu0 0.0
        %3451 = vmatpush.msra.mxu0 0.0
        %3452 = vmatpush.msra.mxu0 0.0
        %3453 = vmatpush.msra.mxu0 0.0
        %3454 = vmatpush.msra.mxu0 %v3422
        %3455 = vmatmul.f32.gmra.mxu0 %v3434
        %v3456 = vpop.f32.mrf.mxu0
        %v3457 = vadd.f32 0.0, %v3456
        %3458 = vmatmul.f32.gmra.mxu0 %v3437
        %v3459 = vpop.f32.mrf.mxu0
        %v3460 = vadd.f32 0.0, %v3459
        %3461 = vdwg.mxu0
        %3462 = vmatpush.msra.mxu0 0.0
        %3463 = vmatpush.msra.mxu0 0.0
        %3464 = vmatpush.msra.mxu0 0.0
        %3465 = vmatpush.msra.mxu0 0.0
        %3466 = vmatpush.msra.mxu0 0.0
        %3467 = vmatpush.msra.mxu0 0.0
        %3468 = vmatpush.msra.mxu0 0.0
        %3469 = vmatpush.msra.mxu0 0.0
        %3470 = vmatpush.msra.mxu0 0.0
        %3471 = vmatpush.msra.mxu0 0.0
        %3472 = vmatpush.msra.mxu0 0.0
        %3473 = vmatpush.msra.mxu0 0.0
        %3474 = vmatpush.msra.mxu0 0.0
        %3475 = vmatpush.msra.mxu0 0.0
        %3476 = vmatpush.msra.mxu0 0.0
        %3477 = vmatpush.msra.mxu0 %v3423
        %3478 = vmatmul.f32.gmra.mxu0 %v3434
        %v3479 = vpop.f32.mrf.mxu0
        %v3480 = vadd.f32 0.0, %v3479
        %3481 = vmatmul.f32.gmra.mxu0 %v3437
        %v3482 = vpop.f32.mrf.mxu0
        %v3483 = vadd.f32 0.0, %v3482
        %3484 = vdwg.mxu0
        %3485 = vmatpush.msra.mxu0 0.0
        %3486 = vmatpush.msra.mxu0 0.0
        %3487 = vmatpush.msra.mxu0 0.0
        %3488 = vmatpush.msra.mxu0 0.0
        %3489 = vmatpush.msra.mxu0 0.0
        %3490 = vmatpush.msra.mxu0 0.0
        %3491 = vmatpush.msra.mxu0 0.0
        %3492 = vmatpush.msra.mxu0 0.0
        %3493 = vmatpush.msra.mxu0 0.0
        %3494 = vmatpush.msra.mxu0 0.0
        %3495 = vmatpush.msra.mxu0 0.0
        %3496 = vmatpush.msra.mxu0 0.0
        %3497 = vmatpush.msra.mxu0 0.0
        %3498 = vmatpush.msra.mxu0 0.0
        %3499 = vmatpush.msra.mxu0 0.0
        %3500 = vmatpush.msra.mxu0 %v3424
        %3501 = vmatmul.f32.gmra.mxu0 %v3434
        %v3502 = vpop.f32.mrf.mxu0
        %v3503 = vadd.f32 0.0, %v3502
        %3504 = vmatmul.f32.gmra.mxu0 %v3437
        %v3505 = vpop.f32.mrf.mxu0
        %v3506 = vadd.f32 0.0, %v3505
        %3507 = vdwg.mxu0
        %3508 = vmatpush.msra.mxu0 0.0
        %3509 = vmatpush.msra.mxu0 0.0
        %3510 = vmatpush.msra.mxu0 0.0
        %3511 = vmatpush.msra.mxu0 0.0
        %3512 = vmatpush.msra.mxu0 0.0
        %3513 = vmatpush.msra.mxu0 0.0
        %3514 = vmatpush.msra.mxu0 0.0
        %3515 = vmatpush.msra.mxu0 0.0
        %3516 = vmatpush.msra.mxu0 0.0
        %3517 = vmatpush.msra.mxu0 0.0
        %3518 = vmatpush.msra.mxu0 0.0
        %3519 = vmatpush.msra.mxu0 0.0
        %3520 = vmatpush.msra.mxu0 0.0
        %3521 = vmatpush.msra.mxu0 0.0
        %3522 = vmatpush.msra.mxu0 0.0
        %3523 = vmatpush.msra.mxu0 %v3425
        %3524 = vmatmul.f32.gmra.mxu0 %v3434
        %v3525 = vpop.f32.mrf.mxu0
        %v3526 = vadd.f32 0.0, %v3525
        %3527 = vmatmul.f32.gmra.mxu0 %v3437
        %v3528 = vpop.f32.mrf.mxu0
        %v3529 = vadd.f32 0.0, %v3528
        %3530 = vdwg.mxu0
        %3531 = vmatpush.msra.mxu0 0.0
        %3532 = vmatpush.msra.mxu0 0.0
        %3533 = vmatpush.msra.mxu0 0.0
        %3534 = vmatpush.msra.mxu0 0.0
        %3535 = vmatpush.msra.mxu0 0.0
        %3536 = vmatpush.msra.mxu0 0.0
        %3537 = vmatpush.msra.mxu0 0.0
        %3538 = vmatpush.msra.mxu0 0.0
        %3539 = vmatpush.msra.mxu0 0.0
        %3540 = vmatpush.msra.mxu0 0.0
        %3541 = vmatpush.msra.mxu0 0.0
        %3542 = vmatpush.msra.mxu0 0.0
        %3543 = vmatpush.msra.mxu0 0.0
        %3544 = vmatpush.msra.mxu0 0.0
        %3545 = vmatpush.msra.mxu0 0.0
        %3546 = vmatpush.msra.mxu0 %v3426
        %3547 = vmatmul.f32.gmra.mxu0 %v3434
        %v3548 = vpop.f32.mrf.mxu0
        %v3549 = vadd.f32 0.0, %v3548
        %3550 = vmatmul.f32.gmra.mxu0 %v3437
        %v3551 = vpop.f32.mrf.mxu0
        %v3552 = vadd.f32 0.0, %v3551
        %3553 = vdwg.mxu0
        %3554 = vmatpush.msra.mxu0 0.0
        %3555 = vmatpush.msra.mxu0 0.0
        %3556 = vmatpush.msra.mxu0 0.0
        %3557 = vmatpush.msra.mxu0 0.0
        %3558 = vmatpush.msra.mxu0 0.0
        %3559 = vmatpush.msra.mxu0 0.0
        %3560 = vmatpush.msra.mxu0 0.0
        %3561 = vmatpush.msra.mxu0 0.0
        %3562 = vmatpush.msra.mxu0 0.0
        %3563 = vmatpush.msra.mxu0 0.0
        %3564 = vmatpush.msra.mxu0 0.0
        %3565 = vmatpush.msra.mxu0 0.0
        %3566 = vmatpush.msra.mxu0 0.0
        %3567 = vmatpush.msra.mxu0 0.0
        %3568 = vmatpush.msra.mxu0 0.0
        %3569 = vmatpush.msra.mxu0 %v3421
        %3570 = vmatmul.f32.gmra.mxu0 %v3434
        %v3571 = vpop.f32.mrf.mxu0
        %v3572 = vadd.f32 0.0, %v3571
        %3573 = vmatmul.f32.gmra.mxu0 %v3437
        %v3574 = vpop.f32.mrf.mxu0
        %v3575 = vadd.f32 0.0, %v3574
        %3576 = vdwg.mxu0
        %v3577 = vadd.f32 %v3395, %v3457
        %v3578 = vadd.f32 %v3396, %v3480
        %v3579 = vadd.f32 %v3397, %v3503
        %v3580 = vadd.f32 %v3398, %v3526
        %v3581 = vadd.f32 %v3399, %v3549
        %v3582 = vadd.f32 %v3400, %v3572
        %v3583 = vadd.f32 %v3401, %v3460
        %v3584 = vadd.f32 %v3402, %v3483
        %v3585 = vadd.f32 %v3403, %v3506
        %v3586 = vadd.f32 %v3404, %v3529
        %v3587 = vadd.f32 %v3405, %v3552
        %v3588 = vadd.f32 %v3406, %v3575
        %s3589 = scalar_lea.vmem [#allocation6], 128
        %v3590 = vld [vmem:[%s3589] sm:$0xff]
        %v3591 = vld [vmem:[%s3589 + $0x8] sm:$0xff]
        %3592 = vrot.lane.b32.xlu0 %v2169, 70
        %v3593 = vpop.permute.xlu0 %3592
        %3594 = vrot.lane.b32.xlu0 %v2170, 70
        %v3595 = vpop.permute.xlu0 %3594
        %3596 = vrot.lane.b32.xlu0 %v2171, 70
        %v3597 = vpop.permute.xlu0 %3596
        %3598 = vrot.lane.b32.xlu0 %v2172, 70
        %v3599 = vpop.permute.xlu0 %3598
        %3600 = vrot.lane.b32.xlu0 %v2173, 70
        %v3601 = vpop.permute.xlu0 %3600
        %3602 = vrot.lane.b32.xlu0 %v2174, 70
        %v3603 = vpop.permute.xlu0 %3602
        %v3604 = vsel %vm2002, %v3593, %v3595
        %v3605 = vsel %vm2002, %v3595, %v3597
        %v3606 = vsel %vm2002, %v3597, %v3599
        %v3607 = vsel %vm2002, %v3599, %v3601
        %v3608 = vsel %vm2002, %v3601, %v3603
        %v3616 = vsel %vm802, %v3590, 0
        %v3619 = vsel %vm802, %v3591, 0
        %3621 = vmatpush.msra.mxu0 0.0
        %3622 = vmatpush.msra.mxu0 0.0
        %3623 = vmatpush.msra.mxu0 0.0
        %3624 = vmatpush.msra.mxu0 0.0
        %3625 = vmatpush.msra.mxu0 0.0
        %3626 = vmatpush.msra.mxu0 0.0
        %3627 = vmatpush.msra.mxu0 0.0
        %3628 = vmatpush.msra.mxu0 0.0
        %3629 = vmatpush.msra.mxu0 0.0
        %3630 = vmatpush.msra.mxu0 0.0
        %3631 = vmatpush.msra.mxu0 0.0
        %3632 = vmatpush.msra.mxu0 0.0
        %3633 = vmatpush.msra.mxu0 0.0
        %3634 = vmatpush.msra.mxu0 0.0
        %3635 = vmatpush.msra.mxu0 0.0
        %3636 = vmatpush.msra.mxu0 %v3604
        %3637 = vmatmul.f32.gmra.mxu0 %v3616
        %v3638 = vpop.f32.mrf.mxu0
        %v3639 = vadd.f32 0.0, %v3638
        %3640 = vmatmul.f32.gmra.mxu0 %v3619
        %v3641 = vpop.f32.mrf.mxu0
        %v3642 = vadd.f32 0.0, %v3641
        %3643 = vdwg.mxu0
        %3644 = vmatpush.msra.mxu0 0.0
        %3645 = vmatpush.msra.mxu0 0.0
        %3646 = vmatpush.msra.mxu0 0.0
        %3647 = vmatpush.msra.mxu0 0.0
        %3648 = vmatpush.msra.mxu0 0.0
        %3649 = vmatpush.msra.mxu0 0.0
        %3650 = vmatpush.msra.mxu0 0.0
        %3651 = vmatpush.msra.mxu0 0.0
        %3652 = vmatpush.msra.mxu0 0.0
        %3653 = vmatpush.msra.mxu0 0.0
        %3654 = vmatpush.msra.mxu0 0.0
        %3655 = vmatpush.msra.mxu0 0.0
        %3656 = vmatpush.msra.mxu0 0.0
        %3657 = vmatpush.msra.mxu0 0.0
        %3658 = vmatpush.msra.mxu0 0.0
        %3659 = vmatpush.msra.mxu0 %v3605
        %3660 = vmatmul.f32.gmra.mxu0 %v3616
        %v3661 = vpop.f32.mrf.mxu0
        %v3662 = vadd.f32 0.0, %v3661
        %3663 = vmatmul.f32.gmra.mxu0 %v3619
        %v3664 = vpop.f32.mrf.mxu0
        %v3665 = vadd.f32 0.0, %v3664
        %3666 = vdwg.mxu0
        %3667 = vmatpush.msra.mxu0 0.0
        %3668 = vmatpush.msra.mxu0 0.0
        %3669 = vmatpush.msra.mxu0 0.0
        %3670 = vmatpush.msra.mxu0 0.0
        %3671 = vmatpush.msra.mxu0 0.0
        %3672 = vmatpush.msra.mxu0 0.0
        %3673 = vmatpush.msra.mxu0 0.0
        %3674 = vmatpush.msra.mxu0 0.0
        %3675 = vmatpush.msra.mxu0 0.0
        %3676 = vmatpush.msra.mxu0 0.0
        %3677 = vmatpush.msra.mxu0 0.0
        %3678 = vmatpush.msra.mxu0 0.0
        %3679 = vmatpush.msra.mxu0 0.0
        %3680 = vmatpush.msra.mxu0 0.0
        %3681 = vmatpush.msra.mxu0 0.0
        %3682 = vmatpush.msra.mxu0 %v3606
        %3683 = vmatmul.f32.gmra.mxu0 %v3616
        %v3684 = vpop.f32.mrf.mxu0
        %v3685 = vadd.f32 0.0, %v3684
        %3686 = vmatmul.f32.gmra.mxu0 %v3619
        %v3687 = vpop.f32.mrf.mxu0
        %v3688 = vadd.f32 0.0, %v3687
        %3689 = vdwg.mxu0
        %3690 = vmatpush.msra.mxu0 0.0
        %3691 = vmatpush.msra.mxu0 0.0
        %3692 = vmatpush.msra.mxu0 0.0
        %3693 = vmatpush.msra.mxu0 0.0
        %3694 = vmatpush.msra.mxu0 0.0
        %3695 = vmatpush.msra.mxu0 0.0
        %3696 = vmatpush.msra.mxu0 0.0
        %3697 = vmatpush.msra.mxu0 0.0
        %3698 = vmatpush.msra.mxu0 0.0
        %3699 = vmatpush.msra.mxu0 0.0
        %3700 = vmatpush.msra.mxu0 0.0
        %3701 = vmatpush.msra.mxu0 0.0
        %3702 = vmatpush.msra.mxu0 0.0
        %3703 = vmatpush.msra.mxu0 0.0
        %3704 = vmatpush.msra.mxu0 0.0
        %3705 = vmatpush.msra.mxu0 %v3607
        %3706 = vmatmul.f32.gmra.mxu0 %v3616
        %v3707 = vpop.f32.mrf.mxu0
        %v3708 = vadd.f32 0.0, %v3707
        %3709 = vmatmul.f32.gmra.mxu0 %v3619
        %v3710 = vpop.f32.mrf.mxu0
        %v3711 = vadd.f32 0.0, %v3710
        %3712 = vdwg.mxu0
        %3713 = vmatpush.msra.mxu0 0.0
        %3714 = vmatpush.msra.mxu0 0.0
        %3715 = vmatpush.msra.mxu0 0.0
        %3716 = vmatpush.msra.mxu0 0.0
        %3717 = vmatpush.msra.mxu0 0.0
        %3718 = vmatpush.msra.mxu0 0.0
        %3719 = vmatpush.msra.mxu0 0.0
        %3720 = vmatpush.msra.mxu0 0.0
        %3721 = vmatpush.msra.mxu0 0.0
        %3722 = vmatpush.msra.mxu0 0.0
        %3723 = vmatpush.msra.mxu0 0.0
        %3724 = vmatpush.msra.mxu0 0.0
        %3725 = vmatpush.msra.mxu0 0.0
        %3726 = vmatpush.msra.mxu0 0.0
        %3727 = vmatpush.msra.mxu0 0.0
        %3728 = vmatpush.msra.mxu0 %v3608
        %3729 = vmatmul.f32.gmra.mxu0 %v3616
        %v3730 = vpop.f32.mrf.mxu0
        %v3731 = vadd.f32 0.0, %v3730
        %3732 = vmatmul.f32.gmra.mxu0 %v3619
        %v3733 = vpop.f32.mrf.mxu0
        %v3734 = vadd.f32 0.0, %v3733
        %3735 = vdwg.mxu0
        %3736 = vmatpush.msra.mxu0 0.0
        %3737 = vmatpush.msra.mxu0 0.0
        %3738 = vmatpush.msra.mxu0 0.0
        %3739 = vmatpush.msra.mxu0 0.0
        %3740 = vmatpush.msra.mxu0 0.0
        %3741 = vmatpush.msra.mxu0 0.0
        %3742 = vmatpush.msra.mxu0 0.0
        %3743 = vmatpush.msra.mxu0 0.0
        %3744 = vmatpush.msra.mxu0 0.0
        %3745 = vmatpush.msra.mxu0 0.0
        %3746 = vmatpush.msra.mxu0 0.0
        %3747 = vmatpush.msra.mxu0 0.0
        %3748 = vmatpush.msra.mxu0 0.0
        %3749 = vmatpush.msra.mxu0 0.0
        %3750 = vmatpush.msra.mxu0 0.0
        %3751 = vmatpush.msra.mxu0 %v3603
        %3752 = vmatmul.f32.gmra.mxu0 %v3616
        %v3753 = vpop.f32.mrf.mxu0
        %v3754 = vadd.f32 0.0, %v3753
        %3755 = vmatmul.f32.gmra.mxu0 %v3619
        %v3756 = vpop.f32.mrf.mxu0
        %v3757 = vadd.f32 0.0, %v3756
        %3758 = vdwg.mxu0
        %v3759 = vadd.f32 %v3577, %v3639
        %v3760 = vadd.f32 %v3578, %v3662
        %v3761 = vadd.f32 %v3579, %v3685
        %v3762 = vadd.f32 %v3580, %v3708
        %v3763 = vadd.f32 %v3581, %v3731
        %v3764 = vadd.f32 %v3582, %v3754
        %v3765 = vadd.f32 %v3583, %v3642
        %v3766 = vadd.f32 %v3584, %v3665
        %v3767 = vadd.f32 %v3585, %v3688
        %v3768 = vadd.f32 %v3586, %v3711
        %v3769 = vadd.f32 %v3587, %v3734
        %v3770 = vadd.f32 %v3588, %v3757
        %v3771 = vmax.f32 %v3759, 0.0
        %v3772 = vmax.f32 %v3760, 0.0
        %v3773 = vmax.f32 %v3761, 0.0
        %v3774 = vmax.f32 %v3762, 0.0
        %v3775 = vmax.f32 %v3763, 0.0
        %v3776 = vmax.f32 %v3764, 0.0
        %v3777 = vmax.f32 %v3765, 0.0
        %v3778 = vmax.f32 %v3766, 0.0
        %v3779 = vmax.f32 %v3767, 0.0
        %v3780 = vmax.f32 %v3768, 0.0
        %v3781 = vmax.f32 %v3769, 0.0
        %v3782 = vmax.f32 %v3770, 0.0
        %v3783 = vld [vmem:[%s4] sm:$0xff]
        %v3784 = vld [vmem:[%s4 + $0x8] sm:$0xff]
        %3786 = vset.pattern.permute.xlu0 0
        %3787 = vperm.xlu0 %3786, %v3783
        %v3788 = vpop.permute.xlu0 %3787
        %3791 = vset.pattern.permute.xlu0 0
        %3792 = vperm.xlu0 %3791, %v3784
        %v3793 = vpop.permute.xlu0 %3792
        %v3795 = vmul.f32 %v3771, %v3788
        %v3796 = vmul.f32 %v3772, %v3788
        %v3797 = vmul.f32 %v3773, %v3788
        %v3798 = vmul.f32 %v3774, %v3788
        %v3799 = vmul.f32 %v3775, %v3788
        %v3800 = vmul.f32 %v3776, %v3788
        %v3801 = vmul.f32 %v3777, %v3793
        %v3802 = vmul.f32 %v3778, %v3793
        %v3803 = vmul.f32 %v3779, %v3793
        %v3804 = vmul.f32 %v3780, %v3793
        %v3805 = vmul.f32 %v3781, %v3793
        %v3806 = vmul.f32 %v3782, %v3793
        %s3807 = scalar_lea.vmem %s4, 16
        %v3808 = vld [vmem:[%s3807] sm:$0xff]
        %v3809 = vld [vmem:[%s3807 + $0x8] sm:$0xff]
        %3811 = vset.pattern.permute.xlu0 0
        %3812 = vperm.xlu0 %3811, %v3808
        %v3813 = vpop.permute.xlu0 %3812
        %3816 = vset.pattern.permute.xlu0 0
        %3817 = vperm.xlu0 %3816, %v3809
        %v3818 = vpop.permute.xlu0 %3817
        %v3820 = vadd.f32 %v3795, %v3813
        %v3821 = vadd.f32 %v3796, %v3813
        %v3822 = vadd.f32 %v3797, %v3813
        %v3823 = vadd.f32 %v3798, %v3813
        %v3824 = vadd.f32 %v3799, %v3813
        %v3825 = vadd.f32 %v3800, %v3813
        %v3826 = vadd.f32 %v3801, %v3818
        %v3827 = vadd.f32 %v3802, %v3818
        %v3828 = vadd.f32 %v3803, %v3818
        %v3829 = vadd.f32 %v3804, %v3818
        %v3830 = vadd.f32 %v3805, %v3818
        %v3831 = vadd.f32 %v3806, %v3818
        %3844 = vrot.lane.b32.xlu0 %v3820, 127
        %v3845 = vpop.permute.xlu0 %3844
        %3846 = vrot.lane.b32.xlu0 %v3821, 127
        %v3847 = vpop.permute.xlu0 %3846
        %3848 = vrot.lane.b32.xlu0 %v3822, 127
        %v3849 = vpop.permute.xlu0 %3848
        %3850 = vrot.lane.b32.xlu0 %v3823, 127
        %v3851 = vpop.permute.xlu0 %3850
        %3852 = vrot.lane.b32.xlu0 %v3824, 127
        %v3853 = vpop.permute.xlu0 %3852
        %3854 = vrot.lane.b32.xlu0 %v3825, 127
        %v3855 = vpop.permute.xlu0 %3854
        %3856 = vrot.lane.b32.xlu0 %v3826, 127
        %v3857 = vpop.permute.xlu0 %3856
        %3858 = vrot.lane.b32.xlu0 %v3827, 127
        %v3859 = vpop.permute.xlu0 %3858
        %3860 = vrot.lane.b32.xlu0 %v3828, 127
        %v3861 = vpop.permute.xlu0 %3860
        %3862 = vrot.lane.b32.xlu0 %v3829, 127
        %v3863 = vpop.permute.xlu0 %3862
        %3864 = vrot.lane.b32.xlu0 %v3830, 127
        %v3865 = vpop.permute.xlu0 %3864
        %3866 = vrot.lane.b32.xlu0 %v3831, 127
        %v3867 = vpop.permute.xlu0 %3866
        %v3868 = vsel %vm790, %v3845, %v3847
        %v3869 = vsel %vm790, %v3847, %v3849
        %v3870 = vsel %vm790, %v3849, %v3851
        %v3871 = vsel %vm790, %v3851, %v3853
        %v3872 = vsel %vm790, %v3853, %v3855
        %v3873 = vsel %vm790, %v3857, %v3859
        %v3874 = vsel %vm790, %v3859, %v3861
        %v3875 = vsel %vm790, %v3861, %v3863
        %v3876 = vsel %vm790, %v3863, %v3865
        %v3877 = vsel %vm790, %v3865, %v3867
        %v3888 = vmax.f32 %v3820, %v3868
        %v3889 = vmax.f32 %v3821, %v3869
        %v3890 = vmax.f32 %v3822, %v3870
        %v3891 = vmax.f32 %v3823, %v3871
        %v3892 = vmax.f32 %v3824, %v3872
        %v3893 = vmax.f32 %v3826, %v3873
        %v3894 = vmax.f32 %v3827, %v3874
        %v3895 = vmax.f32 %v3828, %v3875
        %v3896 = vmax.f32 %v3829, %v3876
        %v3897 = vmax.f32 %v3830, %v3877
        %3898 = vrot.lane.b32.xlu0 %v3820, 100
        %v3899 = vpop.permute.xlu0 %3898
        %3900 = vrot.lane.b32.xlu0 %v3821, 100
        %v3901 = vpop.permute.xlu0 %3900
        %3902 = vrot.lane.b32.xlu0 %v3822, 100
        %v3903 = vpop.permute.xlu0 %3902
        %3904 = vrot.lane.b32.xlu0 %v3823, 100
        %v3905 = vpop.permute.xlu0 %3904
        %3906 = vrot.lane.b32.xlu0 %v3824, 100
        %v3907 = vpop.permute.xlu0 %3906
        %3908 = vrot.lane.b32.xlu0 %v3825, 100
        %v3909 = vpop.permute.xlu0 %3908
        %3910 = vrot.lane.b32.xlu0 %v3826, 100
        %v3911 = vpop.permute.xlu0 %3910
        %3912 = vrot.lane.b32.xlu0 %v3827, 100
        %v3913 = vpop.permute.xlu0 %3912
        %3914 = vrot.lane.b32.xlu0 %v3828, 100
        %v3915 = vpop.permute.xlu0 %3914
        %3916 = vrot.lane.b32.xlu0 %v3829, 100
        %v3917 = vpop.permute.xlu0 %3916
        %3918 = vrot.lane.b32.xlu0 %v3830, 100
        %v3919 = vpop.permute.xlu0 %3918
        %3920 = vrot.lane.b32.xlu0 %v3831, 100
        %v3921 = vpop.permute.xlu0 %3920
        %v3922 = vsel %vm1218, %v3899, %v3901
        %v3923 = vsel %vm1218, %v3901, %v3903
        %v3924 = vsel %vm1218, %v3903, %v3905
        %v3925 = vsel %vm1218, %v3905, %v3907
        %v3926 = vsel %vm1218, %v3907, %v3909
        %v3927 = vsel %vm1218, %v3911, %v3913
        %v3928 = vsel %vm1218, %v3913, %v3915
        %v3929 = vsel %vm1218, %v3915, %v3917
        %v3930 = vsel %vm1218, %v3917, %v3919
        %v3931 = vsel %vm1218, %v3919, %v3921
        %v3942 = vmax.f32 %v3888, %v3922
        %v3943 = vmax.f32 %v3889, %v3923
        %v3944 = vmax.f32 %v3890, %v3924
        %v3945 = vmax.f32 %v3891, %v3925
        %v3946 = vmax.f32 %v3892, %v3926
        %v3947 = vmax.f32 %v3893, %v3927
        %v3948 = vmax.f32 %v3894, %v3928
        %v3949 = vmax.f32 %v3895, %v3929
        %v3950 = vmax.f32 %v3896, %v3930
        %v3951 = vmax.f32 %v3897, %v3931
        %3952 = vrot.lane.b32.xlu0 %v3820, 99
        %v3953 = vpop.permute.xlu0 %3952
        %3954 = vrot.lane.b32.xlu0 %v3821, 99
        %v3955 = vpop.permute.xlu0 %3954
        %3956 = vrot.lane.b32.xlu0 %v3822, 99
        %v3957 = vpop.permute.xlu0 %3956
        %3958 = vrot.lane.b32.xlu0 %v3823, 99
        %v3959 = vpop.permute.xlu0 %3958
        %3960 = vrot.lane.b32.xlu0 %v3824, 99
        %v3961 = vpop.permute.xlu0 %3960
        %3962 = vrot.lane.b32.xlu0 %v3825, 99
        %v3963 = vpop.permute.xlu0 %3962
        %3964 = vrot.lane.b32.xlu0 %v3826, 99
        %v3965 = vpop.permute.xlu0 %3964
        %3966 = vrot.lane.b32.xlu0 %v3827, 99
        %v3967 = vpop.permute.xlu0 %3966
        %3968 = vrot.lane.b32.xlu0 %v3828, 99
        %v3969 = vpop.permute.xlu0 %3968
        %3970 = vrot.lane.b32.xlu0 %v3829, 99
        %v3971 = vpop.permute.xlu0 %3970
        %3972 = vrot.lane.b32.xlu0 %v3830, 99
        %v3973 = vpop.permute.xlu0 %3972
        %3974 = vrot.lane.b32.xlu0 %v3831, 99
        %v3975 = vpop.permute.xlu0 %3974
        %v3976 = vsel %vm1373, %v3953, %v3955
        %v3977 = vsel %vm1373, %v3955, %v3957
        %v3978 = vsel %vm1373, %v3957, %v3959
        %v3979 = vsel %vm1373, %v3959, %v3961
        %v3980 = vsel %vm1373, %v3961, %v3963
        %v3981 = vsel %vm1373, %v3965, %v3967
        %v3982 = vsel %vm1373, %v3967, %v3969
        %v3983 = vsel %vm1373, %v3969, %v3971
        %v3984 = vsel %vm1373, %v3971, %v3973
        %v3985 = vsel %vm1373, %v3973, %v3975
        %v3996 = vmax.f32 %v3942, %v3976
        %v3997 = vmax.f32 %v3943, %v3977
        %v3998 = vmax.f32 %v3944, %v3978
        %v3999 = vmax.f32 %v3945, %v3979
        %v4000 = vmax.f32 %v3946, %v3980
        %v4001 = vmax.f32 %v3947, %v3981
        %v4002 = vmax.f32 %v3948, %v3982
        %v4003 = vmax.f32 %v3949, %v3983
        %v4004 = vmax.f32 %v3950, %v3984
        %v4005 = vmax.f32 %v3951, %v3985
        %v4006 = vld [vmem:[#allocation21] sm:$0xff]
        %v4007 = vld [vmem:[#allocation21 + $0x8] sm:$0xff]
        %v4008 = vld [vmem:[#allocation21 + $0x10] sm:$0xff]
        %v4009 = vld [vmem:[#allocation21 + $0x18] sm:$0xff]
        %v4010 = vld [vmem:[#allocation21 + $0x20] sm:$0xff]
        %v4011 = vld [vmem:[#allocation21 + $0x28] sm:$0xff]
        %v4012 = vld [vmem:[#allocation21 + $0x30] sm:$0xff]
        %v4013 = vld [vmem:[#allocation21 + $0x38] sm:$0xff]
        %v4014 = vld [vmem:[#allocation21 + $0x40] sm:$0xff]
        %v4015 = vld [vmem:[#allocation21 + $0x48] sm:$0xff]
        %v4016 = vld [vmem:[#allocation21 + $0x50] sm:$0xff]
        %v4017 = vld [vmem:[#allocation21 + $0x58] sm:$0xff]
        %v4018 = vld [vmem:[#allocation21 + $0x60] sm:$0xff]
        %v4019 = vld [vmem:[#allocation21 + $0x68] sm:$0xff]
        %v4020 = vld [vmem:[#allocation21 + $0x70] sm:$0xff]
        %v4021 = vld [vmem:[#allocation21 + $0x78] sm:$0xff]
        %v4022 = vld [vmem:[#allocation21 + $0x80] sm:$0xff]
        %v4023 = vld [vmem:[#allocation21 + $0x88] sm:$0xff]
        %v4024 = vld [vmem:[#allocation21 + $0x90] sm:$0xff]
        %v4025 = vld [vmem:[#allocation21 + $0x98] sm:$0xff]
        %v4026 = vld [vmem:[#allocation21 + $0xa0] sm:$0xff]
        %v4027 = vld [vmem:[#allocation21 + $0xa8] sm:$0xff]
        %v4028 = vld [vmem:[#allocation21 + $0xb0] sm:$0xff]
        %v4029 = vld [vmem:[#allocation21 + $0xb8] sm:$0xff]
        %v4030 = vld [vmem:[#allocation21 + $0xc0] sm:$0xff]
        %v4031 = vld [vmem:[#allocation21 + $0xc8] sm:$0xff]
        %v4032 = vld [vmem:[#allocation21 + $0xd0] sm:$0xff]
        %v4033 = vld [vmem:[#allocation21 + $0xd8] sm:$0xff]
        %v4034 = vld [vmem:[#allocation21 + $0xe0] sm:$0xff]
        %v4035 = vld [vmem:[#allocation21 + $0xe8] sm:$0xff]
        %v4036 = vld [vmem:[#allocation21 + $0xf0] sm:$0xff]
        %v4037 = vld [vmem:[#allocation21 + $0xf8] sm:$0xff]
        %v4038 = vld [vmem:[#allocation21 + $0x100] sm:$0xff]
        %v4039 = vld [vmem:[#allocation21 + $0x108] sm:$0xff]
        %v4040 = vld [vmem:[#allocation21 + $0x110] sm:$0xff]
        %v4041 = vld [vmem:[#allocation21 + $0x118] sm:$0xff]
        %v4042 = vld [vmem:[#allocation21 + $0x120] sm:$0xff]
        %v4043 = vld [vmem:[#allocation21 + $0x128] sm:$0xff]
        %v4044 = vld [vmem:[#allocation21 + $0x130] sm:$0xff]
        %v4045 = vld [vmem:[#allocation21 + $0x138] sm:$0xff]
        %v4046 = vld [vmem:[#allocation21 + $0x140] sm:$0xff]
        %v4047 = vld [vmem:[#allocation21 + $0x148] sm:$0xff]
        %v4048 = vld [vmem:[#allocation21 + $0x150] sm:$0xff]
        %v4049 = vld [vmem:[#allocation21 + $0x158] sm:$0xff]
        %v4050 = vld [vmem:[#allocation21 + $0x160] sm:$0xff]
        %v4051 = vld [vmem:[#allocation21 + $0x168] sm:$0xff]
        %v4052 = vld [vmem:[#allocation21 + $0x170] sm:$0xff]
        %v4053 = vld [vmem:[#allocation21 + $0x178] sm:$0xff]
        %v4054 = vld [vmem:[#allocation21 + $0x180] sm:$0xff]
        %v4055 = vld [vmem:[#allocation21 + $0x188] sm:$0xff]
        %v4056 = vld [vmem:[#allocation21 + $0x190] sm:$0xff]
        %v4057 = vld [vmem:[#allocation21 + $0x198] sm:$0xff]
        %v4058 = vld [vmem:[#allocation21 + $0x1a0] sm:$0xff]
        %v4059 = vld [vmem:[#allocation21 + $0x1a8] sm:$0xff]
        %v4060 = vld [vmem:[#allocation21 + $0x1b0] sm:$0xff]
        %v4061 = vld [vmem:[#allocation21 + $0x1b8] sm:$0xff]
        %v4062 = vld [vmem:[#allocation21 + $0x1c0] sm:$0xff]
        %v4063 = vld [vmem:[#allocation21 + $0x1c8] sm:$0xff]
        %v4064 = vld [vmem:[#allocation21 + $0x1d0] sm:$0xff]
        %v4065 = vld [vmem:[#allocation21 + $0x1d8] sm:$0xff]
        %v4066 = vld [vmem:[#allocation21 + $0x1e0] sm:$0xff]
        %v4067 = vld [vmem:[#allocation21 + $0x1e8] sm:$0xff]
        %v4068 = vld [vmem:[#allocation21 + $0x1f0] sm:$0xff]
        %v4069 = vld [vmem:[#allocation21 + $0x1f8] sm:$0xff]
        %v4070 = vld [vmem:[#allocation21 + $0x200] sm:$0xff]
        %v4071 = vld [vmem:[#allocation21 + $0x208] sm:$0xff]
        %v4072 = vld [vmem:[#allocation21 + $0x210] sm:$0xff]
        %v4073 = vld [vmem:[#allocation21 + $0x218] sm:$0xff]
        %v4074 = vld [vmem:[#allocation21 + $0x220] sm:$0xff]
        %v4075 = vld [vmem:[#allocation21 + $0x228] sm:$0xff]
        %v4076 = vld [vmem:[#allocation21 + $0x230] sm:$0xff]
        %v4077 = vld [vmem:[#allocation21 + $0x238] sm:$0xff]
        %v4078 = vld [vmem:[#allocation21 + $0x240] sm:$0xff]
        %v4079 = vld [vmem:[#allocation21 + $0x248] sm:$0xff]
        %v4080 = vld [vmem:[#allocation21 + $0x250] sm:$0xff]
        %v4081 = vld [vmem:[#allocation21 + $0x258] sm:$0xff]
        %v4082 = vld [vmem:[#allocation21 + $0x260] sm:$0xff]
        %v4083 = vld [vmem:[#allocation21 + $0x268] sm:$0xff]
        %v4084 = vld [vmem:[#allocation21 + $0x270] sm:$0xff]
        %v4085 = vld [vmem:[#allocation21 + $0x278] sm:$0xff]
        %v4086 = vld [vmem:[#allocation21 + $0x280] sm:$0xff]
        %v4087 = vld [vmem:[#allocation21 + $0x288] sm:$0xff]
        %v4088 = vld [vmem:[#allocation21 + $0x290] sm:$0xff]
        %v4089 = vld [vmem:[#allocation21 + $0x298] sm:$0xff]
        %v4090 = vld [vmem:[#allocation21 + $0x2a0] sm:$0xff]
        %v4091 = vld [vmem:[#allocation21 + $0x2a8] sm:$0xff]
        %v4092 = vld [vmem:[#allocation21 + $0x2b0] sm:$0xff]
        %v4093 = vld [vmem:[#allocation21 + $0x2b8] sm:$0xff]
        %v4094 = vld [vmem:[#allocation21 + $0x2c0] sm:$0xff]
        %v4095 = vld [vmem:[#allocation21 + $0x2c8] sm:$0xff]
        %v4096 = vld [vmem:[#allocation21 + $0x2d0] sm:$0xff]
        %v4097 = vld [vmem:[#allocation21 + $0x2d8] sm:$0xff]
        %v4098 = vld [vmem:[#allocation21 + $0x2e0] sm:$0xff]
        %v4099 = vld [vmem:[#allocation21 + $0x2e8] sm:$0xff]
        %v4100 = vld [vmem:[#allocation21 + $0x2f0] sm:$0xff]
        %v4101 = vld [vmem:[#allocation21 + $0x2f8] sm:$0xff]
        %v4102 = vld [vmem:[#allocation21 + $0x300] sm:$0xff]
        %v4103 = vld [vmem:[#allocation21 + $0x308] sm:$0xff]
        %v4104 = vld [vmem:[#allocation21 + $0x310] sm:$0xff]
        %v4105 = vld [vmem:[#allocation21 + $0x318] sm:$0xff]
        %v4106 = vld [vmem:[#allocation21 + $0x320] sm:$0xff]
        %v4107 = vld [vmem:[#allocation21 + $0x328] sm:$0xff]
        %v4108 = vld [vmem:[#allocation21 + $0x330] sm:$0xff]
        %v4109 = vld [vmem:[#allocation21 + $0x338] sm:$0xff]
        %v4110 = vld [vmem:[#allocation21 + $0x340] sm:$0xff]
        %v4111 = vld [vmem:[#allocation21 + $0x348] sm:$0xff]
        %v4112 = vld [vmem:[#allocation21 + $0x350] sm:$0xff]
        %v4113 = vld [vmem:[#allocation21 + $0x358] sm:$0xff]
        %v4114 = vld [vmem:[#allocation21 + $0x360] sm:$0xff]
        %v4115 = vld [vmem:[#allocation21 + $0x368] sm:$0xff]
        %v4116 = vld [vmem:[#allocation21 + $0x370] sm:$0xff]
        %v4117 = vld [vmem:[#allocation21 + $0x378] sm:$0xff]
        %v4118 = vld [vmem:[#allocation21 + $0x380] sm:$0xff]
        %v4119 = vld [vmem:[#allocation21 + $0x388] sm:$0xff]
        %v4120 = vld [vmem:[#allocation21 + $0x390] sm:$0xff]
        %v4121 = vld [vmem:[#allocation21 + $0x398] sm:$0xff]
        %v4122 = vld [vmem:[#allocation21 + $0x3a0] sm:$0xff]
        %v4123 = vld [vmem:[#allocation21 + $0x3a8] sm:$0xff]
        %v4124 = vld [vmem:[#allocation21 + $0x3b0] sm:$0xff]
        %v4125 = vld [vmem:[#allocation21 + $0x3b8] sm:$0xff]
        %v4126 = vld [vmem:[#allocation21 + $0x3c0] sm:$0xff]
        %v4127 = vld [vmem:[#allocation21 + $0x3c8] sm:$0xff]
        %v4128 = vld [vmem:[#allocation21 + $0x3d0] sm:$0xff]
        %v4129 = vld [vmem:[#allocation21 + $0x3d8] sm:$0xff]
        %v4130 = vld [vmem:[#allocation21 + $0x3e0] sm:$0xff]
        %v4131 = vld [vmem:[#allocation21 + $0x3e8] sm:$0xff]
        %v4132 = vld [vmem:[#allocation21 + $0x3f0] sm:$0xff]
        %v4133 = vld [vmem:[#allocation21 + $0x3f8] sm:$0xff]
        %v4134 = vld [vmem:[#allocation21 + $0x400] sm:$0xff]
        %v4135 = vld [vmem:[#allocation21 + $0x408] sm:$0xff]
        %v4136 = vld [vmem:[#allocation21 + $0x410] sm:$0xff]
        %v4137 = vld [vmem:[#allocation21 + $0x418] sm:$0xff]
        %v4138 = vld [vmem:[#allocation21 + $0x420] sm:$0xff]
        %v4139 = vld [vmem:[#allocation21 + $0x428] sm:$0xff]
        %v4140 = vld [vmem:[#allocation21 + $0x430] sm:$0xff]
        %v4141 = vld [vmem:[#allocation21 + $0x438] sm:$0xff]
        %v4142 = vld [vmem:[#allocation21 + $0x440] sm:$0xff]
        %v4143 = vld [vmem:[#allocation21 + $0x448] sm:$0xff]
        %v4144 = vld [vmem:[#allocation21 + $0x450] sm:$0xff]
        %v4145 = vld [vmem:[#allocation21 + $0x458] sm:$0xff]
        %v4146 = vld [vmem:[#allocation21 + $0x460] sm:$0xff]
        %v4147 = vld [vmem:[#allocation21 + $0x468] sm:$0xff]
        %v4148 = vld [vmem:[#allocation21 + $0x470] sm:$0xff]
        %v4149 = vld [vmem:[#allocation21 + $0x478] sm:$0xff]
        %v4150 = vld [vmem:[#allocation21 + $0x480] sm:$0xff]
        %v4151 = vld [vmem:[#allocation21 + $0x488] sm:$0xff]
        %v4152 = vld [vmem:[#allocation21 + $0x490] sm:$0xff]
        %v4153 = vld [vmem:[#allocation21 + $0x498] sm:$0xff]
        %v4154 = vld [vmem:[#allocation21 + $0x4a0] sm:$0xff]
        %v4155 = vld [vmem:[#allocation21 + $0x4a8] sm:$0xff]
        %v4156 = vld [vmem:[#allocation21 + $0x4b0] sm:$0xff]
        %v4157 = vld [vmem:[#allocation21 + $0x4b8] sm:$0xff]
        %v4158 = vld [vmem:[#allocation21 + $0x4c0] sm:$0xff]
        %v4159 = vld [vmem:[#allocation21 + $0x4c8] sm:$0xff]
        %v4160 = vld [vmem:[#allocation21 + $0x4d0] sm:$0xff]
        %v4161 = vld [vmem:[#allocation21 + $0x4d8] sm:$0xff]
        %v4162 = vld [vmem:[#allocation21 + $0x4e0] sm:$0xff]
        %v4163 = vld [vmem:[#allocation21 + $0x4e8] sm:$0xff]
        %v4164 = vld [vmem:[#allocation21 + $0x4f0] sm:$0xff]
        %v4165 = vld [vmem:[#allocation21 + $0x4f8] sm:$0xff]
        %4166 = vmatpush.msra.mxu0 %v4036
        %4167 = vmatpush.msra.mxu0 %v4034
        %4168 = vmatpush.msra.mxu0 %v4032
        %4169 = vmatpush.msra.mxu0 %v4030
        %4170 = vmatpush.msra.mxu0 %v4028
        %4171 = vmatpush.msra.mxu0 %v4026
        %4172 = vmatpush.msra.mxu0 %v4024
        %4173 = vmatpush.msra.mxu0 %v4022
        %4174 = vmatpush.msra.mxu0 %v4020
        %4175 = vmatpush.msra.mxu0 %v4018
        %4176 = vmatpush.msra.mxu0 %v4016
        %4177 = vmatpush.msra.mxu0 %v4014
        %4178 = vmatpush.msra.mxu0 %v4012
        %4179 = vmatpush.msra.mxu0 %v4010
        %4180 = vmatpush.msra.mxu0 %v4008
        %4181 = vmatpush.msra.mxu0 %v4006
        %4182 = vmatmul.f32.gmra.mxu0 %v3996
        %v4183 = vpop.f32.mrf.mxu0
        %v4184 = vadd.f32 0.0, %v4183
        %4185 = vmatmul.f32.gmra.mxu0 %v4001
        %v4186 = vpop.f32.mrf.mxu0
        %v4187 = vadd.f32 0.0, %v4186
        %4188 = vdwg.mxu0
        %4189 = vmatpush.msra.mxu0 %v4068
        %4190 = vmatpush.msra.mxu0 %v4066
        %4191 = vmatpush.msra.mxu0 %v4064
        %4192 = vmatpush.msra.mxu0 %v4062
        %4193 = vmatpush.msra.mxu0 %v4060
        %4194 = vmatpush.msra.mxu0 %v4058
        %4195 = vmatpush.msra.mxu0 %v4056
        %4196 = vmatpush.msra.mxu0 %v4054
        %4197 = vmatpush.msra.mxu0 %v4052
        %4198 = vmatpush.msra.mxu0 %v4050
        %4199 = vmatpush.msra.mxu0 %v4048
        %4200 = vmatpush.msra.mxu0 %v4046
        %4201 = vmatpush.msra.mxu0 %v4044
        %4202 = vmatpush.msra.mxu0 %v4042
        %4203 = vmatpush.msra.mxu0 %v4040
        %4204 = vmatpush.msra.mxu0 %v4038
        %4205 = vmatmul.f32.gmra.mxu0 %v3997
        %v4206 = vpop.f32.mrf.mxu0
        %v4207 = vadd.f32 %v4184, %v4206
        %4208 = vmatmul.f32.gmra.mxu0 %v4002
        %v4209 = vpop.f32.mrf.mxu0
        %v4210 = vadd.f32 %v4187, %v4209
        %4211 = vdwg.mxu0
        %4212 = vmatpush.msra.mxu0 %v4100
        %4213 = vmatpush.msra.mxu0 %v4098
        %4214 = vmatpush.msra.mxu0 %v4096
        %4215 = vmatpush.msra.mxu0 %v4094
        %4216 = vmatpush.msra.mxu0 %v4092
        %4217 = vmatpush.msra.mxu0 %v4090
        %4218 = vmatpush.msra.mxu0 %v4088
        %4219 = vmatpush.msra.mxu0 %v4086
        %4220 = vmatpush.msra.mxu0 %v4084
        %4221 = vmatpush.msra.mxu0 %v4082
        %4222 = vmatpush.msra.mxu0 %v4080
        %4223 = vmatpush.msra.mxu0 %v4078
        %4224 = vmatpush.msra.mxu0 %v4076
        %4225 = vmatpush.msra.mxu0 %v4074
        %4226 = vmatpush.msra.mxu0 %v4072
        %4227 = vmatpush.msra.mxu0 %v4070
        %4228 = vmatmul.f32.gmra.mxu0 %v3998
        %v4229 = vpop.f32.mrf.mxu0
        %v4230 = vadd.f32 %v4207, %v4229
        %4231 = vmatmul.f32.gmra.mxu0 %v4003
        %v4232 = vpop.f32.mrf.mxu0
        %v4233 = vadd.f32 %v4210, %v4232
        %4234 = vdwg.mxu0
        %4235 = vmatpush.msra.mxu0 %v4132
        %4236 = vmatpush.msra.mxu0 %v4130
        %4237 = vmatpush.msra.mxu0 %v4128
        %4238 = vmatpush.msra.mxu0 %v4126
        %4239 = vmatpush.msra.mxu0 %v4124
        %4240 = vmatpush.msra.mxu0 %v4122
        %4241 = vmatpush.msra.mxu0 %v4120
        %4242 = vmatpush.msra.mxu0 %v4118
        %4243 = vmatpush.msra.mxu0 %v4116
        %4244 = vmatpush.msra.mxu0 %v4114
        %4245 = vmatpush.msra.mxu0 %v4112
        %4246 = vmatpush.msra.mxu0 %v4110
        %4247 = vmatpush.msra.mxu0 %v4108
        %4248 = vmatpush.msra.mxu0 %v4106
        %4249 = vmatpush.msra.mxu0 %v4104
        %4250 = vmatpush.msra.mxu0 %v4102
        %4251 = vmatmul.f32.gmra.mxu0 %v3999
        %v4252 = vpop.f32.mrf.mxu0
        %v4253 = vadd.f32 %v4230, %v4252
        %4254 = vmatmul.f32.gmra.mxu0 %v4004
        %v4255 = vpop.f32.mrf.mxu0
        %v4256 = vadd.f32 %v4233, %v4255
        %4257 = vdwg.mxu0
        %4258 = vmatpush.msra.mxu0 %v4164
        %4259 = vmatpush.msra.mxu0 %v4162
        %4260 = vmatpush.msra.mxu0 %v4160
        %4261 = vmatpush.msra.mxu0 %v4158
        %4262 = vmatpush.msra.mxu0 %v4156
        %4263 = vmatpush.msra.mxu0 %v4154
        %4264 = vmatpush.msra.mxu0 %v4152
        %4265 = vmatpush.msra.mxu0 %v4150
        %4266 = vmatpush.msra.mxu0 %v4148
        %4267 = vmatpush.msra.mxu0 %v4146
        %4268 = vmatpush.msra.mxu0 %v4144
        %4269 = vmatpush.msra.mxu0 %v4142
        %4270 = vmatpush.msra.mxu0 %v4140
        %4271 = vmatpush.msra.mxu0 %v4138
        %4272 = vmatpush.msra.mxu0 %v4136
        %4273 = vmatpush.msra.mxu0 %v4134
        %4274 = vmatmul.f32.gmra.mxu0 %v4000
        %v4275 = vpop.f32.mrf.mxu0
        %v4276 = vadd.f32 %v4253, %v4275
        %4277 = vmatmul.f32.gmra.mxu0 %v4005
        %v4278 = vpop.f32.mrf.mxu0
        %v4279 = vadd.f32 %v4256, %v4278
        %4280 = vdwg.mxu0
        %4281 = vmatpush.msra.mxu0 %v4037
        %4282 = vmatpush.msra.mxu0 %v4035
        %4283 = vmatpush.msra.mxu0 %v4033
        %4284 = vmatpush.msra.mxu0 %v4031
        %4285 = vmatpush.msra.mxu0 %v4029
        %4286 = vmatpush.msra.mxu0 %v4027
        %4287 = vmatpush.msra.mxu0 %v4025
        %4288 = vmatpush.msra.mxu0 %v4023
        %4289 = vmatpush.msra.mxu0 %v4021
        %4290 = vmatpush.msra.mxu0 %v4019
        %4291 = vmatpush.msra.mxu0 %v4017
        %4292 = vmatpush.msra.mxu0 %v4015
        %4293 = vmatpush.msra.mxu0 %v4013
        %4294 = vmatpush.msra.mxu0 %v4011
        %4295 = vmatpush.msra.mxu0 %v4009
        %4296 = vmatpush.msra.mxu0 %v4007
        %4297 = vmatmul.f32.gmra.mxu0 %v3996
        %v4298 = vpop.f32.mrf.mxu0
        %v4299 = vadd.f32 0.0, %v4298
        %4300 = vmatmul.f32.gmra.mxu0 %v4001
        %v4301 = vpop.f32.mrf.mxu0
        %v4302 = vadd.f32 0.0, %v4301
        %4303 = vdwg.mxu0
        %4304 = vmatpush.msra.mxu0 %v4069
        %4305 = vmatpush.msra.mxu0 %v4067
        %4306 = vmatpush.msra.mxu0 %v4065
        %4307 = vmatpush.msra.mxu0 %v4063
        %4308 = vmatpush.msra.mxu0 %v4061
        %4309 = vmatpush.msra.mxu0 %v4059
        %4310 = vmatpush.msra.mxu0 %v4057
        %4311 = vmatpush.msra.mxu0 %v4055
        %4312 = vmatpush.msra.mxu0 %v4053
        %4313 = vmatpush.msra.mxu0 %v4051
        %4314 = vmatpush.msra.mxu0 %v4049
        %4315 = vmatpush.msra.mxu0 %v4047
        %4316 = vmatpush.msra.mxu0 %v4045
        %4317 = vmatpush.msra.mxu0 %v4043
        %4318 = vmatpush.msra.mxu0 %v4041
        %4319 = vmatpush.msra.mxu0 %v4039
        %4320 = vmatmul.f32.gmra.mxu0 %v3997
        %v4321 = vpop.f32.mrf.mxu0
        %v4322 = vadd.f32 %v4299, %v4321
        %4323 = vmatmul.f32.gmra.mxu0 %v4002
        %v4324 = vpop.f32.mrf.mxu0
        %v4325 = vadd.f32 %v4302, %v4324
        %4326 = vdwg.mxu0
        %4327 = vmatpush.msra.mxu0 %v4101
        %4328 = vmatpush.msra.mxu0 %v4099
        %4329 = vmatpush.msra.mxu0 %v4097
        %4330 = vmatpush.msra.mxu0 %v4095
        %4331 = vmatpush.msra.mxu0 %v4093
        %4332 = vmatpush.msra.mxu0 %v4091
        %4333 = vmatpush.msra.mxu0 %v4089
        %4334 = vmatpush.msra.mxu0 %v4087
        %4335 = vmatpush.msra.mxu0 %v4085
        %4336 = vmatpush.msra.mxu0 %v4083
        %4337 = vmatpush.msra.mxu0 %v4081
        %4338 = vmatpush.msra.mxu0 %v4079
        %4339 = vmatpush.msra.mxu0 %v4077
        %4340 = vmatpush.msra.mxu0 %v4075
        %4341 = vmatpush.msra.mxu0 %v4073
        %4342 = vmatpush.msra.mxu0 %v4071
        %4343 = vmatmul.f32.gmra.mxu0 %v3998
        %v4344 = vpop.f32.mrf.mxu0
        %v4345 = vadd.f32 %v4322, %v4344
        %4346 = vmatmul.f32.gmra.mxu0 %v4003
        %v4347 = vpop.f32.mrf.mxu0
        %v4348 = vadd.f32 %v4325, %v4347
        %4349 = vdwg.mxu0
        %4350 = vmatpush.msra.mxu0 %v4133
        %4351 = vmatpush.msra.mxu0 %v4131
        %4352 = vmatpush.msra.mxu0 %v4129
        %4353 = vmatpush.msra.mxu0 %v4127
        %4354 = vmatpush.msra.mxu0 %v4125
        %4355 = vmatpush.msra.mxu0 %v4123
        %4356 = vmatpush.msra.mxu0 %v4121
        %4357 = vmatpush.msra.mxu0 %v4119
        %4358 = vmatpush.msra.mxu0 %v4117
        %4359 = vmatpush.msra.mxu0 %v4115
        %4360 = vmatpush.msra.mxu0 %v4113
        %4361 = vmatpush.msra.mxu0 %v4111
        %4362 = vmatpush.msra.mxu0 %v4109
        %4363 = vmatpush.msra.mxu0 %v4107
        %4364 = vmatpush.msra.mxu0 %v4105
        %4365 = vmatpush.msra.mxu0 %v4103
        %4366 = vmatmul.f32.gmra.mxu0 %v3999
        %v4367 = vpop.f32.mrf.mxu0
        %v4368 = vadd.f32 %v4345, %v4367
        %4369 = vmatmul.f32.gmra.mxu0 %v4004
        %v4370 = vpop.f32.mrf.mxu0
        %v4371 = vadd.f32 %v4348, %v4370
        %4372 = vdwg.mxu0
        %4373 = vmatpush.msra.mxu0 %v4165
        %4374 = vmatpush.msra.mxu0 %v4163
        %4375 = vmatpush.msra.mxu0 %v4161
        %4376 = vmatpush.msra.mxu0 %v4159
        %4377 = vmatpush.msra.mxu0 %v4157
        %4378 = vmatpush.msra.mxu0 %v4155
        %4379 = vmatpush.msra.mxu0 %v4153
        %4380 = vmatpush.msra.mxu0 %v4151
        %4381 = vmatpush.msra.mxu0 %v4149
        %4382 = vmatpush.msra.mxu0 %v4147
        %4383 = vmatpush.msra.mxu0 %v4145
        %4384 = vmatpush.msra.mxu0 %v4143
        %4385 = vmatpush.msra.mxu0 %v4141
        %4386 = vmatpush.msra.mxu0 %v4139
        %4387 = vmatpush.msra.mxu0 %v4137
        %4388 = vmatpush.msra.mxu0 %v4135
        %4389 = vmatmul.f32.gmra.mxu0 %v4000
        %v4390 = vpop.f32.mrf.mxu0
        %v4391 = vadd.f32 %v4368, %v4390
        %4392 = vmatmul.f32.gmra.mxu0 %v4005
        %v4393 = vpop.f32.mrf.mxu0
        %v4394 = vadd.f32 %v4371, %v4393
        %4395 = vdwg.mxu0
        %v4396 = vld [vmem:[#allocation7] sm:$0xff]
        %vm4397 = vcmask 130048
        %v4399 = vsel %vm4397, %v4396, 0
        %4401 = vmatpush.msra.mxu0 0.0
        %4402 = vmatpush.msra.mxu0 0.0
        %4403 = vmatpush.msra.mxu0 0.0
        %4404 = vmatpush.msra.mxu0 0.0
        %4405 = vmatpush.msra.mxu0 0.0
        %4406 = vmatpush.msra.mxu0 0.0
        %4407 = vmatpush.msra.mxu0 0.0
        %4408 = vmatpush.msra.mxu0 0.0
        %4409 = vmatpush.msra.mxu0 0.0
        %4410 = vmatpush.msra.mxu0 0.0
        %4411 = vmatpush.msra.mxu0 0.0
        %4412 = vmatpush.msra.mxu0 0.0
        %4413 = vmatpush.msra.mxu0 0.0
        %4414 = vmatpush.msra.mxu0 0.0
        %4415 = vmatpush.msra.mxu0 %v4279
        %4416 = vmatpush.msra.mxu0 %v4276
        %4417 = vmatmul.f32.gmra.mxu0 %v4399
        %v4418 = vpop.f32.mrf.mxu0
        %v4419 = vadd.f32 0.0, %v4418
        %4420 = vdwg.mxu0
        %4421 = vmatpush.msra.mxu0 0.0
        %4422 = vmatpush.msra.mxu0 0.0
        %4423 = vmatpush.msra.mxu0 0.0
        %4424 = vmatpush.msra.mxu0 0.0
        %4425 = vmatpush.msra.mxu0 0.0
        %4426 = vmatpush.msra.mxu0 0.0
        %4427 = vmatpush.msra.mxu0 0.0
        %4428 = vmatpush.msra.mxu0 0.0
        %4429 = vmatpush.msra.mxu0 0.0
        %4430 = vmatpush.msra.mxu0 0.0
        %4431 = vmatpush.msra.mxu0 0.0
        %4432 = vmatpush.msra.mxu0 0.0
        %4433 = vmatpush.msra.mxu0 0.0
        %4434 = vmatpush.msra.mxu0 0.0
        %4435 = vmatpush.msra.mxu0 %v4394
        %4436 = vmatpush.msra.mxu0 %v4391
        %4437 = vmatmul.f32.gmra.mxu0 %v4399
        %v4438 = vpop.f32.mrf.mxu0
        %v4439 = vadd.f32 0.0, %v4438
        %4440 = vdwg.mxu0
        %v4441 = vld [vmem:[#allocation9] sm:$0xff]
        %4443 = vset.pattern.permute.xlu0 0
        %4444 = vperm.xlu0 %4443, %v4441
        %v4445 = vpop.permute.xlu0 %4444
        %v4447 = vmul.f32 %v4419, %v4445
        %v4448 = vmul.f32 %v4439, %v4445
        %s4449 = scalar_lea.vmem [#allocation9], 8
        %v4450 = vld [vmem:[%s4449] sm:$0xff]
        %4452 = vset.pattern.permute.xlu0 0
        %4453 = vperm.xlu0 %4452, %v4450
        %v4454 = vpop.permute.xlu0 %4453
        %v4456 = vadd.f32 %v4447, %v4454
        %v4457 = vadd.f32 %v4448, %v4454
        %v4458 = vld [vmem:[#allocation10] sm:$0xff]
        %v4459 = vld [vmem:[#allocation10 + $0x8] sm:$0xff]
        %s4460 = scalar_lea.vmem [#allocation10], 16
        %v4461 = vld [vmem:[%s4460] sm:$0xff]
        %v4462 = vld [vmem:[%s4460 + $0x8] sm:$0xff]
        %4464 = vrot.lane.b32.xlu0 %v4456, 127
        %v4465 = vpop.permute.xlu0 %4464
        %v4468 = vsel %vm802, %v4461, 0
        %v4471 = vsel %vm802, %v4462, 0
        %4473 = vmatpush.msra.mxu0 0.0
        %4474 = vmatpush.msra.mxu0 0.0
        %4475 = vmatpush.msra.mxu0 0.0
        %4476 = vmatpush.msra.mxu0 0.0
        %4477 = vmatpush.msra.mxu0 0.0
        %4478 = vmatpush.msra.mxu0 0.0
        %4479 = vmatpush.msra.mxu0 0.0
        %4480 = vmatpush.msra.mxu0 0.0
        %4481 = vmatpush.msra.mxu0 0.0
        %4482 = vmatpush.msra.mxu0 0.0
        %4483 = vmatpush.msra.mxu0 0.0
        %4484 = vmatpush.msra.mxu0 0.0
        %4485 = vmatpush.msra.mxu0 0.0
        %4486 = vmatpush.msra.mxu0 0.0
        %4487 = vmatpush.msra.mxu0 0.0
        %4488 = vmatpush.msra.mxu0 %v4465
        %4489 = vmatmul.f32.gmra.mxu0 %v4468
        %v4490 = vpop.f32.mrf.mxu0
        %v4491 = vadd.f32 0.0, %v4490
        %4492 = vmatmul.f32.gmra.mxu0 %v4471
        %v4493 = vpop.f32.mrf.mxu0
        %v4494 = vadd.f32 0.0, %v4493
        %4495 = vdwg.mxu0
        %v4497 = vsel %vm802, %v4458, 0
        %v4500 = vsel %vm802, %v4459, 0
        %4502 = vmatpush.msra.mxu0 0.0
        %4503 = vmatpush.msra.mxu0 0.0
        %4504 = vmatpush.msra.mxu0 0.0
        %4505 = vmatpush.msra.mxu0 0.0
        %4506 = vmatpush.msra.mxu0 0.0
        %4507 = vmatpush.msra.mxu0 0.0
        %4508 = vmatpush.msra.mxu0 0.0
        %4509 = vmatpush.msra.mxu0 0.0
        %4510 = vmatpush.msra.mxu0 0.0
        %4511 = vmatpush.msra.mxu0 0.0
        %4512 = vmatpush.msra.mxu0 0.0
        %4513 = vmatpush.msra.mxu0 0.0
        %4514 = vmatpush.msra.mxu0 0.0
        %4515 = vmatpush.msra.mxu0 0.0
        %4516 = vmatpush.msra.mxu0 0.0
        %4517 = vmatpush.msra.mxu0 %v4456
        %4518 = vmatmul.f32.gmra.mxu0 %v4497
        %v4519 = vpop.f32.mrf.mxu0
        %v4520 = vadd.f32 %v4491, %v4519
        %4521 = vmatmul.f32.gmra.mxu0 %v4500
        %v4522 = vpop.f32.mrf.mxu0
        %v4523 = vadd.f32 %v4494, %v4522
        %4524 = vdwg.mxu0
        %s4525 = scalar_lea.vmem [#allocation10], 32
        %v4526 = vld [vmem:[%s4525] sm:$0xff]
        %v4527 = vld [vmem:[%s4525 + $0x8] sm:$0xff]
        %4528 = vrot.lane.b32.xlu0 %v4456, 126
        %v4529 = vpop.permute.xlu0 %4528
        %v4532 = vsel %vm802, %v4526, 0
        %v4535 = vsel %vm802, %v4527, 0
        %4537 = vmatpush.msra.mxu0 0.0
        %4538 = vmatpush.msra.mxu0 0.0
        %4539 = vmatpush.msra.mxu0 0.0
        %4540 = vmatpush.msra.mxu0 0.0
        %4541 = vmatpush.msra.mxu0 0.0
        %4542 = vmatpush.msra.mxu0 0.0
        %4543 = vmatpush.msra.mxu0 0.0
        %4544 = vmatpush.msra.mxu0 0.0
        %4545 = vmatpush.msra.mxu0 0.0
        %4546 = vmatpush.msra.mxu0 0.0
        %4547 = vmatpush.msra.mxu0 0.0
        %4548 = vmatpush.msra.mxu0 0.0
        %4549 = vmatpush.msra.mxu0 0.0
        %4550 = vmatpush.msra.mxu0 0.0
        %4551 = vmatpush.msra.mxu0 0.0
        %4552 = vmatpush.msra.mxu0 %v4529
        %4553 = vmatmul.f32.gmra.mxu0 %v4532
        %v4554 = vpop.f32.mrf.mxu0
        %v4555 = vadd.f32 0.0, %v4554
        %4556 = vmatmul.f32.gmra.mxu0 %v4535
        %v4557 = vpop.f32.mrf.mxu0
        %v4558 = vadd.f32 0.0, %v4557
        %4559 = vdwg.mxu0
        %v4560 = vadd.f32 %v4520, %v4555
        %v4561 = vadd.f32 %v4523, %v4558
        %s4562 = scalar_lea.vmem [#allocation10], 48
        %v4563 = vld [vmem:[%s4562] sm:$0xff]
        %v4564 = vld [vmem:[%s4562 + $0x8] sm:$0xff]
        %4566 = vrot.lane.b32.xlu0 %v4456, 116
        %v4567 = vpop.permute.xlu0 %4566
        %4568 = vrot.lane.b32.xlu0 %v4457, 116
        %v4569 = vpop.permute.xlu0 %4568
        %vm4570 = vcmask 949248
        %v4571 = vsel %vm4570, %v4567, %v4569
        %v4574 = vsel %vm802, %v4563, 0
        %v4577 = vsel %vm802, %v4564, 0
        %4579 = vmatpush.msra.mxu0 0.0
        %4580 = vmatpush.msra.mxu0 0.0
        %4581 = vmatpush.msra.mxu0 0.0
        %4582 = vmatpush.msra.mxu0 0.0
        %4583 = vmatpush.msra.mxu0 0.0
        %4584 = vmatpush.msra.mxu0 0.0
        %4585 = vmatpush.msra.mxu0 0.0
        %4586 = vmatpush.msra.mxu0 0.0
        %4587 = vmatpush.msra.mxu0 0.0
        %4588 = vmatpush.msra.mxu0 0.0
        %4589 = vmatpush.msra.mxu0 0.0
        %4590 = vmatpush.msra.mxu0 0.0
        %4591 = vmatpush.msra.mxu0 0.0
        %4592 = vmatpush.msra.mxu0 0.0
        %4593 = vmatpush.msra.mxu0 0.0
        %4594 = vmatpush.msra.mxu0 %v4571
        %4595 = vmatmul.f32.gmra.mxu0 %v4574
        %v4596 = vpop.f32.mrf.mxu0
        %v4597 = vadd.f32 0.0, %v4596
        %4598 = vmatmul.f32.gmra.mxu0 %v4577
        %v4599 = vpop.f32.mrf.mxu0
        %v4600 = vadd.f32 0.0, %v4599
        %4601 = vdwg.mxu0
        %v4602 = vadd.f32 %v4560, %v4597
        %v4603 = vadd.f32 %v4561, %v4600
        %s4604 = scalar_lea.vmem [#allocation10], 64
        %v4605 = vld [vmem:[%s4604] sm:$0xff]
        %v4606 = vld [vmem:[%s4604 + $0x8] sm:$0xff]
        %4607 = vrot.lane.b32.xlu0 %v4456, 115
        %v4608 = vpop.permute.xlu0 %4607
        %4609 = vrot.lane.b32.xlu0 %v4457, 115
        %v4610 = vpop.permute.xlu0 %4609
        %vm4611 = vcmask 941056
        %v4612 = vsel %vm4611, %v4608, %v4610
        %v4615 = vsel %vm802, %v4605, 0
        %v4618 = vsel %vm802, %v4606, 0
        %4620 = vmatpush.msra.mxu0 0.0
        %4621 = vmatpush.msra.mxu0 0.0
        %4622 = vmatpush.msra.mxu0 0.0
        %4623 = vmatpush.msra.mxu0 0.0
        %4624 = vmatpush.msra.mxu0 0.0
        %4625 = vmatpush.msra.mxu0 0.0
        %4626 = vmatpush.msra.mxu0 0.0
        %4627 = vmatpush.msra.mxu0 0.0
        %4628 = vmatpush.msra.mxu0 0.0
        %4629 = vmatpush.msra.mxu0 0.0
        %4630 = vmatpush.msra.mxu0 0.0
        %4631 = vmatpush.msra.mxu0 0.0
        %4632 = vmatpush.msra.mxu0 0.0
        %4633 = vmatpush.msra.mxu0 0.0
        %4634 = vmatpush.msra.mxu0 0.0
        %4635 = vmatpush.msra.mxu0 %v4612
        %4636 = vmatmul.f32.gmra.mxu0 %v4615
        %v4637 = vpop.f32.mrf.mxu0
        %v4638 = vadd.f32 0.0, %v4637
        %4639 = vmatmul.f32.gmra.mxu0 %v4618
        %v4640 = vpop.f32.mrf.mxu0
        %v4641 = vadd.f32 0.0, %v4640
        %4642 = vdwg.mxu0
        %v4643 = vadd.f32 %v4602, %v4638
        %v4644 = vadd.f32 %v4603, %v4641
        %s4645 = scalar_lea.vmem [#allocation10], 80
        %v4646 = vld [vmem:[%s4645] sm:$0xff]
        %v4647 = vld [vmem:[%s4645 + $0x8] sm:$0xff]
        %4648 = vrot.lane.b32.xlu0 %v4456, 114
        %v4649 = vpop.permute.xlu0 %4648
        %4650 = vrot.lane.b32.xlu0 %v4457, 114
        %v4651 = vpop.permute.xlu0 %4650
        %vm4652 = vcmask 932864
        %v4653 = vsel %vm4652, %v4649, %v4651
        %v4656 = vsel %vm802, %v4646, 0
        %v4659 = vsel %vm802, %v4647, 0
        %4661 = vmatpush.msra.mxu0 0.0
        %4662 = vmatpush.msra.mxu0 0.0
        %4663 = vmatpush.msra.mxu0 0.0
        %4664 = vmatpush.msra.mxu0 0.0
        %4665 = vmatpush.msra.mxu0 0.0
        %4666 = vmatpush.msra.mxu0 0.0
        %4667 = vmatpush.msra.mxu0 0.0
        %4668 = vmatpush.msra.mxu0 0.0
        %4669 = vmatpush.msra.mxu0 0.0
        %4670 = vmatpush.msra.mxu0 0.0
        %4671 = vmatpush.msra.mxu0 0.0
        %4672 = vmatpush.msra.mxu0 0.0
        %4673 = vmatpush.msra.mxu0 0.0
        %4674 = vmatpush.msra.mxu0 0.0
        %4675 = vmatpush.msra.mxu0 0.0
        %4676 = vmatpush.msra.mxu0 %v4653
        %4677 = vmatmul.f32.gmra.mxu0 %v4656
        %v4678 = vpop.f32.mrf.mxu0
        %v4679 = vadd.f32 0.0, %v4678
        %4680 = vmatmul.f32.gmra.mxu0 %v4659
        %v4681 = vpop.f32.mrf.mxu0
        %v4682 = vadd.f32 0.0, %v4681
        %4683 = vdwg.mxu0
        %v4684 = vadd.f32 %v4643, %v4679
        %v4685 = vadd.f32 %v4644, %v4682
        %s4686 = scalar_lea.vmem [#allocation10], 96
        %v4687 = vld [vmem:[%s4686] sm:$0xff]
        %v4688 = vld [vmem:[%s4686 + $0x8] sm:$0xff]
        %4689 = vrot.lane.b32.xlu0 %v4456, 104
        %v4690 = vpop.permute.xlu0 %4689
        %4691 = vrot.lane.b32.xlu0 %v4457, 104
        %v4692 = vpop.permute.xlu0 %4691
        %vm4693 = vcmask 850944
        %v4694 = vsel %vm4693, %v4690, %v4692
        %v4697 = vsel %vm802, %v4687, 0
        %v4700 = vsel %vm802, %v4688, 0
        %4702 = vmatpush.msra.mxu0 0.0
        %4703 = vmatpush.msra.mxu0 0.0
        %4704 = vmatpush.msra.mxu0 0.0
        %4705 = vmatpush.msra.mxu0 0.0
        %4706 = vmatpush.msra.mxu0 0.0
        %4707 = vmatpush.msra.mxu0 0.0
        %4708 = vmatpush.msra.mxu0 0.0
        %4709 = vmatpush.msra.mxu0 0.0
        %4710 = vmatpush.msra.mxu0 0.0
        %4711 = vmatpush.msra.mxu0 0.0
        %4712 = vmatpush.msra.mxu0 0.0
        %4713 = vmatpush.msra.mxu0 0.0
        %4714 = vmatpush.msra.mxu0 0.0
        %4715 = vmatpush.msra.mxu0 0.0
        %4716 = vmatpush.msra.mxu0 0.0
        %4717 = vmatpush.msra.mxu0 %v4694
        %4718 = vmatmul.f32.gmra.mxu0 %v4697
        %v4719 = vpop.f32.mrf.mxu0
        %v4720 = vadd.f32 0.0, %v4719
        %4721 = vmatmul.f32.gmra.mxu0 %v4700
        %v4722 = vpop.f32.mrf.mxu0
        %v4723 = vadd.f32 0.0, %v4722
        %4724 = vdwg.mxu0
        %v4725 = vadd.f32 %v4684, %v4720
        %v4726 = vadd.f32 %v4685, %v4723
        %s4727 = scalar_lea.vmem [#allocation10], 112
        %v4728 = vld [vmem:[%s4727] sm:$0xff]
        %v4729 = vld [vmem:[%s4727 + $0x8] sm:$0xff]
        %4730 = vrot.lane.b32.xlu0 %v4456, 103
        %v4731 = vpop.permute.xlu0 %4730
        %4732 = vrot.lane.b32.xlu0 %v4457, 103
        %v4733 = vpop.permute.xlu0 %4732
        %vm4734 = vcmask 842752
        %v4735 = vsel %vm4734, %v4731, %v4733
        %v4738 = vsel %vm802, %v4728, 0
        %v4741 = vsel %vm802, %v4729, 0
        %4743 = vmatpush.msra.mxu0 0.0
        %4744 = vmatpush.msra.mxu0 0.0
        %4745 = vmatpush.msra.mxu0 0.0
        %4746 = vmatpush.msra.mxu0 0.0
        %4747 = vmatpush.msra.mxu0 0.0
        %4748 = vmatpush.msra.mxu0 0.0
        %4749 = vmatpush.msra.mxu0 0.0
        %4750 = vmatpush.msra.mxu0 0.0
        %4751 = vmatpush.msra.mxu0 0.0
        %4752 = vmatpush.msra.mxu0 0.0
        %4753 = vmatpush.msra.mxu0 0.0
        %4754 = vmatpush.msra.mxu0 0.0
        %4755 = vmatpush.msra.mxu0 0.0
        %4756 = vmatpush.msra.mxu0 0.0
        %4757 = vmatpush.msra.mxu0 0.0
        %4758 = vmatpush.msra.mxu0 %v4735
        %4759 = vmatmul.f32.gmra.mxu0 %v4738
        %v4760 = vpop.f32.mrf.mxu0
        %v4761 = vadd.f32 0.0, %v4760
        %4762 = vmatmul.f32.gmra.mxu0 %v4741
        %v4763 = vpop.f32.mrf.mxu0
        %v4764 = vadd.f32 0.0, %v4763
        %4765 = vdwg.mxu0
        %v4766 = vadd.f32 %v4725, %v4761
        %v4767 = vadd.f32 %v4726, %v4764
        %s4768 = scalar_lea.vmem [#allocation10], 128
        %v4769 = vld [vmem:[%s4768] sm:$0xff]
        %v4770 = vld [vmem:[%s4768 + $0x8] sm:$0xff]
        %4771 = vrot.lane.b32.xlu0 %v4456, 102
        %v4772 = vpop.permute.xlu0 %4771
        %4773 = vrot.lane.b32.xlu0 %v4457, 102
        %v4774 = vpop.permute.xlu0 %4773
        %vm4775 = vcmask 834560
        %v4776 = vsel %vm4775, %v4772, %v4774
        %v4779 = vsel %vm802, %v4769, 0
        %v4782 = vsel %vm802, %v4770, 0
        %4784 = vmatpush.msra.mxu0 0.0
        %4785 = vmatpush.msra.mxu0 0.0
        %4786 = vmatpush.msra.mxu0 0.0
        %4787 = vmatpush.msra.mxu0 0.0
        %4788 = vmatpush.msra.mxu0 0.0
        %4789 = vmatpush.msra.mxu0 0.0
        %4790 = vmatpush.msra.mxu0 0.0
        %4791 = vmatpush.msra.mxu0 0.0
        %4792 = vmatpush.msra.mxu0 0.0
        %4793 = vmatpush.msra.mxu0 0.0
        %4794 = vmatpush.msra.mxu0 0.0
        %4795 = vmatpush.msra.mxu0 0.0
        %4796 = vmatpush.msra.mxu0 0.0
        %4797 = vmatpush.msra.mxu0 0.0
        %4798 = vmatpush.msra.mxu0 0.0
        %4799 = vmatpush.msra.mxu0 %v4776
        %4800 = vmatmul.f32.gmra.mxu0 %v4779
        %v4801 = vpop.f32.mrf.mxu0
        %v4802 = vadd.f32 0.0, %v4801
        %4803 = vmatmul.f32.gmra.mxu0 %v4782
        %v4804 = vpop.f32.mrf.mxu0
        %v4805 = vadd.f32 0.0, %v4804
        %4806 = vdwg.mxu0
        %v4807 = vadd.f32 %v4766, %v4802
        %v4808 = vadd.f32 %v4767, %v4805
        %v4809 = vmax.f32 %v4807, 0.0
        %v4810 = vmax.f32 %v4808, 0.0
        %v4811 = vld [vmem:[#allocation12] sm:$0xff]
        %v4812 = vld [vmem:[#allocation12 + $0x8] sm:$0xff]
        %4814 = vset.pattern.permute.xlu0 0
        %4815 = vperm.xlu0 %4814, %v4811
        %v4816 = vpop.permute.xlu0 %4815
        %4819 = vset.pattern.permute.xlu0 0
        %4820 = vperm.xlu0 %4819, %v4812
        %v4821 = vpop.permute.xlu0 %4820
        %v4823 = vmul.f32 %v4809, %v4816
        %v4824 = vmul.f32 %v4810, %v4821
        %s4825 = scalar_lea.vmem [#allocation12], 16
        %v4826 = vld [vmem:[%s4825] sm:$0xff]
        %v4827 = vld [vmem:[%s4825 + $0x8] sm:$0xff]
        %4829 = vset.pattern.permute.xlu0 0
        %4830 = vperm.xlu0 %4829, %v4826
        %v4831 = vpop.permute.xlu0 %4830
        %4834 = vset.pattern.permute.xlu0 0
        %4835 = vperm.xlu0 %4834, %v4827
        %v4836 = vpop.permute.xlu0 %4835
        %v4838 = vadd.f32 %v4823, %v4831
        %v4839 = vadd.f32 %v4824, %v4836
        %v4840 = vld [vmem:[%s9] sm:$0xff]
        %v4841 = vld [vmem:[%s9 + $0x8] sm:$0xff]
        %v4842 = vld [vmem:[%s9 + $0x10] sm:$0xf]
        %s4843 = scalar_lea.vmem %s9, 24
        %v4844 = vld [vmem:[%s4843] sm:$0xff]
        %v4845 = vld [vmem:[%s4843 + $0x8] sm:$0xff]
        %v4846 = vld [vmem:[%s4843 + $0x10] sm:$0xf]
        %4849 = vrot.lane.b32.xlu0 %v4838, 127
        %v4850 = vpop.permute.xlu0 %4849
        %4851 = vrot.lane.b32.xlu0 %v4839, 127
        %v4852 = vpop.permute.xlu0 %4851
        %v4856 = vsel %vm4397, %v4844, 0
        %v4859 = vsel %vm4397, %v4845, 0
        %v4862 = vsel %vm4397, %v4846, 0
        %4864 = vmatpush.msra.mxu0 0.0
        %4865 = vmatpush.msra.mxu0 0.0
        %4866 = vmatpush.msra.mxu0 0.0
        %4867 = vmatpush.msra.mxu0 0.0
        %4868 = vmatpush.msra.mxu0 0.0
        %4869 = vmatpush.msra.mxu0 0.0
        %4870 = vmatpush.msra.mxu0 0.0
        %4871 = vmatpush.msra.mxu0 0.0
        %4872 = vmatpush.msra.mxu0 0.0
        %4873 = vmatpush.msra.mxu0 0.0
        %4874 = vmatpush.msra.mxu0 0.0
        %4875 = vmatpush.msra.mxu0 0.0
        %4876 = vmatpush.msra.mxu0 0.0
        %4877 = vmatpush.msra.mxu0 0.0
        %4878 = vmatpush.msra.mxu0 %v4852
        %4879 = vmatpush.msra.mxu0 %v4850
        %4880 = vmatmul.f32.gmra.mxu0 %v4856
        %v4881 = vpop.f32.mrf.mxu0
        %v4882 = vadd.f32 0.0, %v4881
        %4883 = vmatmul.f32.gmra.mxu0 %v4859
        %v4884 = vpop.f32.mrf.mxu0
        %v4885 = vadd.f32 0.0, %v4884
        %4886 = vmatmul.f32.gmra.mxu0 %v4862
        %v4887 = vpop.f32.mrf.mxu0
        %v4888 = vadd.f32 0.0, %v4887
        %4889 = vdwg.mxu0
        %v4891 = vsel %vm4397, %v4840, 0
        %v4894 = vsel %vm4397, %v4841, 0
        %v4897 = vsel %vm4397, %v4842, 0
        %4899 = vmatpush.msra.mxu0 0.0
        %4900 = vmatpush.msra.mxu0 0.0
        %4901 = vmatpush.msra.mxu0 0.0
        %4902 = vmatpush.msra.mxu0 0.0
        %4903 = vmatpush.msra.mxu0 0.0
        %4904 = vmatpush.msra.mxu0 0.0
        %4905 = vmatpush.msra.mxu0 0.0
        %4906 = vmatpush.msra.mxu0 0.0
        %4907 = vmatpush.msra.mxu0 0.0
        %4908 = vmatpush.msra.mxu0 0.0
        %4909 = vmatpush.msra.mxu0 0.0
        %4910 = vmatpush.msra.mxu0 0.0
        %4911 = vmatpush.msra.mxu0 0.0
        %4912 = vmatpush.msra.mxu0 0.0
        %4913 = vmatpush.msra.mxu0 %v4839
        %4914 = vmatpush.msra.mxu0 %v4838
        %4915 = vmatmul.f32.gmra.mxu0 %v4891
        %v4916 = vpop.f32.mrf.mxu0
        %v4917 = vadd.f32 %v4882, %v4916
        %4918 = vmatmul.f32.gmra.mxu0 %v4894
        %v4919 = vpop.f32.mrf.mxu0
        %v4920 = vadd.f32 %v4885, %v4919
        %4921 = vmatmul.f32.gmra.mxu0 %v4897
        %v4922 = vpop.f32.mrf.mxu0
        %v4923 = vadd.f32 %v4888, %v4922
        %4924 = vdwg.mxu0
        %s4925 = scalar_lea.vmem %s9, 48
        %v4926 = vld [vmem:[%s4925] sm:$0xff]
        %v4927 = vld [vmem:[%s4925 + $0x8] sm:$0xff]
        %v4928 = vld [vmem:[%s4925 + $0x10] sm:$0xf]
        %4929 = vrot.lane.b32.xlu0 %v4838, 126
        %v4930 = vpop.permute.xlu0 %4929
        %4931 = vrot.lane.b32.xlu0 %v4839, 126
        %v4932 = vpop.permute.xlu0 %4931
        %v4936 = vsel %vm4397, %v4926, 0
        %v4939 = vsel %vm4397, %v4927, 0
        %v4942 = vsel %vm4397, %v4928, 0
        %4944 = vmatpush.msra.mxu0 0.0
        %4945 = vmatpush.msra.mxu0 0.0
        %4946 = vmatpush.msra.mxu0 0.0
        %4947 = vmatpush.msra.mxu0 0.0
        %4948 = vmatpush.msra.mxu0 0.0
        %4949 = vmatpush.msra.mxu0 0.0
        %4950 = vmatpush.msra.mxu0 0.0
        %4951 = vmatpush.msra.mxu0 0.0
        %4952 = vmatpush.msra.mxu0 0.0
        %4953 = vmatpush.msra.mxu0 0.0
        %4954 = vmatpush.msra.mxu0 0.0
        %4955 = vmatpush.msra.mxu0 0.0
        %4956 = vmatpush.msra.mxu0 0.0
        %4957 = vmatpush.msra.mxu0 0.0
        %4958 = vmatpush.msra.mxu0 %v4932
        %4959 = vmatpush.msra.mxu0 %v4930
        %4960 = vmatmul.f32.gmra.mxu0 %v4936
        %v4961 = vpop.f32.mrf.mxu0
        %v4962 = vadd.f32 0.0, %v4961
        %4963 = vmatmul.f32.gmra.mxu0 %v4939
        %v4964 = vpop.f32.mrf.mxu0
        %v4965 = vadd.f32 0.0, %v4964
        %4966 = vmatmul.f32.gmra.mxu0 %v4942
        %v4967 = vpop.f32.mrf.mxu0
        %v4968 = vadd.f32 0.0, %v4967
        %4969 = vdwg.mxu0
        %v4970 = vadd.f32 %v4917, %v4962
        %v4971 = vadd.f32 %v4920, %v4965
        %v4972 = vadd.f32 %v4923, %v4968
        %s4973 = scalar_lea.vmem %s9, 72
        %v4974 = vld [vmem:[%s4973] sm:$0xff]
        %v4975 = vld [vmem:[%s4973 + $0x8] sm:$0xff]
        %v4976 = vld [vmem:[%s4973 + $0x10] sm:$0xf]
        %4977 = vrot.lane.b32.xlu0 %v4838, 116
        %v4978 = vpop.permute.xlu0 %4977
        %4979 = vrot.lane.b32.xlu0 %v4839, 116
        %v4980 = vpop.permute.xlu0 %4979
        %v4984 = vsel %vm4397, %v4974, 0
        %v4987 = vsel %vm4397, %v4975, 0
        %v4990 = vsel %vm4397, %v4976, 0
        %4992 = vmatpush.msra.mxu0 0.0
        %4993 = vmatpush.msra.mxu0 0.0
        %4994 = vmatpush.msra.mxu0 0.0
        %4995 = vmatpush.msra.mxu0 0.0
        %4996 = vmatpush.msra.mxu0 0.0
        %4997 = vmatpush.msra.mxu0 0.0
        %4998 = vmatpush.msra.mxu0 0.0
        %4999 = vmatpush.msra.mxu0 0.0
        %5000 = vmatpush.msra.mxu0 0.0
        %5001 = vmatpush.msra.mxu0 0.0
        %5002 = vmatpush.msra.mxu0 0.0
        %5003 = vmatpush.msra.mxu0 0.0
        %5004 = vmatpush.msra.mxu0 0.0
        %5005 = vmatpush.msra.mxu0 0.0
        %5006 = vmatpush.msra.mxu0 %v4980
        %5007 = vmatpush.msra.mxu0 %v4978
        %5008 = vmatmul.f32.gmra.mxu0 %v4984
        %v5009 = vpop.f32.mrf.mxu0
        %v5010 = vadd.f32 0.0, %v5009
        %5011 = vmatmul.f32.gmra.mxu0 %v4987
        %v5012 = vpop.f32.mrf.mxu0
        %v5013 = vadd.f32 0.0, %v5012
        %5014 = vmatmul.f32.gmra.mxu0 %v4990
        %v5015 = vpop.f32.mrf.mxu0
        %v5016 = vadd.f32 0.0, %v5015
        %5017 = vdwg.mxu0
        %v5018 = vadd.f32 %v4970, %v5010
        %v5019 = vadd.f32 %v4971, %v5013
        %v5020 = vadd.f32 %v4972, %v5016
        %s5021 = scalar_lea.vmem %s9, 96
        %v5022 = vld [vmem:[%s5021] sm:$0xff]
        %v5023 = vld [vmem:[%s5021 + $0x8] sm:$0xff]
        %v5024 = vld [vmem:[%s5021 + $0x10] sm:$0xf]
        %5025 = vrot.lane.b32.xlu0 %v4838, 115
        %v5026 = vpop.permute.xlu0 %5025
        %5027 = vrot.lane.b32.xlu0 %v4839, 115
        %v5028 = vpop.permute.xlu0 %5027
        %v5032 = vsel %vm4397, %v5022, 0
        %v5035 = vsel %vm4397, %v5023, 0
        %v5038 = vsel %vm4397, %v5024, 0
        %5040 = vmatpush.msra.mxu0 0.0
        %5041 = vmatpush.msra.mxu0 0.0
        %5042 = vmatpush.msra.mxu0 0.0
        %5043 = vmatpush.msra.mxu0 0.0
        %5044 = vmatpush.msra.mxu0 0.0
        %5045 = vmatpush.msra.mxu0 0.0
        %5046 = vmatpush.msra.mxu0 0.0
        %5047 = vmatpush.msra.mxu0 0.0
        %5048 = vmatpush.msra.mxu0 0.0
        %5049 = vmatpush.msra.mxu0 0.0
        %5050 = vmatpush.msra.mxu0 0.0
        %5051 = vmatpush.msra.mxu0 0.0
        %5052 = vmatpush.msra.mxu0 0.0
        %5053 = vmatpush.msra.mxu0 0.0
        %5054 = vmatpush.msra.mxu0 %v5028
        %5055 = vmatpush.msra.mxu0 %v5026
        %5056 = vmatmul.f32.gmra.mxu0 %v5032
        %v5057 = vpop.f32.mrf.mxu0
        %v5058 = vadd.f32 0.0, %v5057
        %5059 = vmatmul.f32.gmra.mxu0 %v5035
        %v5060 = vpop.f32.mrf.mxu0
        %v5061 = vadd.f32 0.0, %v5060
        %5062 = vmatmul.f32.gmra.mxu0 %v5038
        %v5063 = vpop.f32.mrf.mxu0
        %v5064 = vadd.f32 0.0, %v5063
        %5065 = vdwg.mxu0
        %v5066 = vadd.f32 %v5018, %v5058
        %v5067 = vadd.f32 %v5019, %v5061
        %v5068 = vadd.f32 %v5020, %v5064
        %s5069 = scalar_lea.vmem %s9, 120
        %v5070 = vld [vmem:[%s5069] sm:$0xff]
        %v5071 = vld [vmem:[%s5069 + $0x8] sm:$0xff]
        %v5072 = vld [vmem:[%s5069 + $0x10] sm:$0xf]
        %5073 = vrot.lane.b32.xlu0 %v4838, 114
        %v5074 = vpop.permute.xlu0 %5073
        %5075 = vrot.lane.b32.xlu0 %v4839, 114
        %v5076 = vpop.permute.xlu0 %5075
        %v5080 = vsel %vm4397, %v5070, 0
        %v5083 = vsel %vm4397, %v5071, 0
        %v5086 = vsel %vm4397, %v5072, 0
        %5088 = vmatpush.msra.mxu0 0.0
        %5089 = vmatpush.msra.mxu0 0.0
        %5090 = vmatpush.msra.mxu0 0.0
        %5091 = vmatpush.msra.mxu0 0.0
        %5092 = vmatpush.msra.mxu0 0.0
        %5093 = vmatpush.msra.mxu0 0.0
        %5094 = vmatpush.msra.mxu0 0.0
        %5095 = vmatpush.msra.mxu0 0.0
        %5096 = vmatpush.msra.mxu0 0.0
        %5097 = vmatpush.msra.mxu0 0.0
        %5098 = vmatpush.msra.mxu0 0.0
        %5099 = vmatpush.msra.mxu0 0.0
        %5100 = vmatpush.msra.mxu0 0.0
        %5101 = vmatpush.msra.mxu0 0.0
        %5102 = vmatpush.msra.mxu0 %v5076
        %5103 = vmatpush.msra.mxu0 %v5074
        %5104 = vmatmul.f32.gmra.mxu0 %v5080
        %v5105 = vpop.f32.mrf.mxu0
        %v5106 = vadd.f32 0.0, %v5105
        %5107 = vmatmul.f32.gmra.mxu0 %v5083
        %v5108 = vpop.f32.mrf.mxu0
        %v5109 = vadd.f32 0.0, %v5108
        %5110 = vmatmul.f32.gmra.mxu0 %v5086
        %v5111 = vpop.f32.mrf.mxu0
        %v5112 = vadd.f32 0.0, %v5111
        %5113 = vdwg.mxu0
        %v5114 = vadd.f32 %v5066, %v5106
        %v5115 = vadd.f32 %v5067, %v5109
        %v5116 = vadd.f32 %v5068, %v5112
        %s5117 = scalar_lea.vmem %s9, 144
        %v5118 = vld [vmem:[%s5117] sm:$0xff]
        %v5119 = vld [vmem:[%s5117 + $0x8] sm:$0xff]
        %v5120 = vld [vmem:[%s5117 + $0x10] sm:$0xf]
        %5121 = vrot.lane.b32.xlu0 %v4838, 104
        %v5122 = vpop.permute.xlu0 %5121
        %5123 = vrot.lane.b32.xlu0 %v4839, 104
        %v5124 = vpop.permute.xlu0 %5123
        %v5128 = vsel %vm4397, %v5118, 0
        %v5131 = vsel %vm4397, %v5119, 0
        %v5134 = vsel %vm4397, %v5120, 0
        %5136 = vmatpush.msra.mxu0 0.0
        %5137 = vmatpush.msra.mxu0 0.0
        %5138 = vmatpush.msra.mxu0 0.0
        %5139 = vmatpush.msra.mxu0 0.0
        %5140 = vmatpush.msra.mxu0 0.0
        %5141 = vmatpush.msra.mxu0 0.0
        %5142 = vmatpush.msra.mxu0 0.0
        %5143 = vmatpush.msra.mxu0 0.0
        %5144 = vmatpush.msra.mxu0 0.0
        %5145 = vmatpush.msra.mxu0 0.0
        %5146 = vmatpush.msra.mxu0 0.0
        %5147 = vmatpush.msra.mxu0 0.0
        %5148 = vmatpush.msra.mxu0 0.0
        %5149 = vmatpush.msra.mxu0 0.0
        %5150 = vmatpush.msra.mxu0 %v5124
        %5151 = vmatpush.msra.mxu0 %v5122
        %5152 = vmatmul.f32.gmra.mxu0 %v5128
        %v5153 = vpop.f32.mrf.mxu0
        %v5154 = vadd.f32 0.0, %v5153
        %5155 = vmatmul.f32.gmra.mxu0 %v5131
        %v5156 = vpop.f32.mrf.mxu0
        %v5157 = vadd.f32 0.0, %v5156
        %5158 = vmatmul.f32.gmra.mxu0 %v5134
        %v5159 = vpop.f32.mrf.mxu0
        %v5160 = vadd.f32 0.0, %v5159
        %5161 = vdwg.mxu0
        %v5162 = vadd.f32 %v5114, %v5154
        %v5163 = vadd.f32 %v5115, %v5157
        %v5164 = vadd.f32 %v5116, %v5160
        %s5165 = scalar_lea.vmem %s9, 168
        %v5166 = vld [vmem:[%s5165] sm:$0xff]
        %v5167 = vld [vmem:[%s5165 + $0x8] sm:$0xff]
        %v5168 = vld [vmem:[%s5165 + $0x10] sm:$0xf]
        %5169 = vrot.lane.b32.xlu0 %v4838, 103
        %v5170 = vpop.permute.xlu0 %5169
        %5171 = vrot.lane.b32.xlu0 %v4839, 103
        %v5172 = vpop.permute.xlu0 %5171
        %v5176 = vsel %vm4397, %v5166, 0
        %v5179 = vsel %vm4397, %v5167, 0
        %v5182 = vsel %vm4397, %v5168, 0
        %5184 = vmatpush.msra.mxu0 0.0
        %5185 = vmatpush.msra.mxu0 0.0
        %5186 = vmatpush.msra.mxu0 0.0
        %5187 = vmatpush.msra.mxu0 0.0
        %5188 = vmatpush.msra.mxu0 0.0
        %5189 = vmatpush.msra.mxu0 0.0
        %5190 = vmatpush.msra.mxu0 0.0
        %5191 = vmatpush.msra.mxu0 0.0
        %5192 = vmatpush.msra.mxu0 0.0
        %5193 = vmatpush.msra.mxu0 0.0
        %5194 = vmatpush.msra.mxu0 0.0
        %5195 = vmatpush.msra.mxu0 0.0
        %5196 = vmatpush.msra.mxu0 0.0
        %5197 = vmatpush.msra.mxu0 0.0
        %5198 = vmatpush.msra.mxu0 %v5172
        %5199 = vmatpush.msra.mxu0 %v5170
        %5200 = vmatmul.f32.gmra.mxu0 %v5176
        %v5201 = vpop.f32.mrf.mxu0
        %v5202 = vadd.f32 0.0, %v5201
        %5203 = vmatmul.f32.gmra.mxu0 %v5179
        %v5204 = vpop.f32.mrf.mxu0
        %v5205 = vadd.f32 0.0, %v5204
        %5206 = vmatmul.f32.gmra.mxu0 %v5182
        %v5207 = vpop.f32.mrf.mxu0
        %v5208 = vadd.f32 0.0, %v5207
        %5209 = vdwg.mxu0
        %v5210 = vadd.f32 %v5162, %v5202
        %v5211 = vadd.f32 %v5163, %v5205
        %v5212 = vadd.f32 %v5164, %v5208
        %s5213 = scalar_lea.vmem %s9, 192
        %v5214 = vld [vmem:[%s5213] sm:$0xff]
        %v5215 = vld [vmem:[%s5213 + $0x8] sm:$0xff]
        %v5216 = vld [vmem:[%s5213 + $0x10] sm:$0xf]
        %5217 = vrot.lane.b32.xlu0 %v4838, 102
        %v5218 = vpop.permute.xlu0 %5217
        %5219 = vrot.lane.b32.xlu0 %v4839, 102
        %v5220 = vpop.permute.xlu0 %5219
        %v5224 = vsel %vm4397, %v5214, 0
        %v5227 = vsel %vm4397, %v5215, 0
        %v5230 = vsel %vm4397, %v5216, 0
        %5232 = vmatpush.msra.mxu0 0.0
        %5233 = vmatpush.msra.mxu0 0.0
        %5234 = vmatpush.msra.mxu0 0.0
        %5235 = vmatpush.msra.mxu0 0.0
        %5236 = vmatpush.msra.mxu0 0.0
        %5237 = vmatpush.msra.mxu0 0.0
        %5238 = vmatpush.msra.mxu0 0.0
        %5239 = vmatpush.msra.mxu0 0.0
        %5240 = vmatpush.msra.mxu0 0.0
        %5241 = vmatpush.msra.mxu0 0.0
        %5242 = vmatpush.msra.mxu0 0.0
        %5243 = vmatpush.msra.mxu0 0.0
        %5244 = vmatpush.msra.mxu0 0.0
        %5245 = vmatpush.msra.mxu0 0.0
        %5246 = vmatpush.msra.mxu0 %v5220
        %5247 = vmatpush.msra.mxu0 %v5218
        %5248 = vmatmul.f32.gmra.mxu0 %v5224
        %v5249 = vpop.f32.mrf.mxu0
        %v5250 = vadd.f32 0.0, %v5249
        %5251 = vmatmul.f32.gmra.mxu0 %v5227
        %v5252 = vpop.f32.mrf.mxu0
        %v5253 = vadd.f32 0.0, %v5252
        %5254 = vmatmul.f32.gmra.mxu0 %v5230
        %v5255 = vpop.f32.mrf.mxu0
        %v5256 = vadd.f32 0.0, %v5255
        %5257 = vdwg.mxu0
        %v5258 = vadd.f32 %v5210, %v5250
        %v5259 = vadd.f32 %v5211, %v5253
        %v5260 = vadd.f32 %v5212, %v5256
        %v5261 = vmax.f32 %v5258, 0.0
        %v5262 = vmax.f32 %v5259, 0.0
        %v5263 = vmax.f32 %v5260, 0.0
        %v5264 = vld [vmem:[#allocation13] sm:$0xff]
        %v5265 = vld [vmem:[#allocation13 + $0x8] sm:$0xff]
        %v5266 = vld [vmem:[#allocation13 + $0x10] sm:$0xf]
        %5268 = vset.pattern.permute.xlu0 0
        %5269 = vperm.xlu0 %5268, %v5264
        %v5270 = vpop.permute.xlu0 %5269
        %5273 = vset.pattern.permute.xlu0 0
        %5274 = vperm.xlu0 %5273, %v5265
        %v5275 = vpop.permute.xlu0 %5274
        %5278 = vset.pattern.permute.xlu0 0
        %5279 = vperm.xlu0 %5278, %v5266
        %v5280 = vpop.permute.xlu0 %5279
        %v5282 = vmul.f32 %v5261, %v5270
        %v5283 = vmul.f32 %v5262, %v5275
        %v5284 = vmul.f32 %v5263, %v5280
        %s5285 = scalar_lea.vmem [#allocation13], 24
        %v5286 = vld [vmem:[%s5285] sm:$0xff]
        %v5287 = vld [vmem:[%s5285 + $0x8] sm:$0xff]
        %v5288 = vld [vmem:[%s5285 + $0x10] sm:$0xf]
        %5290 = vset.pattern.permute.xlu0 0
        %5291 = vperm.xlu0 %5290, %v5286
        %v5292 = vpop.permute.xlu0 %5291
        %5295 = vset.pattern.permute.xlu0 0
        %5296 = vperm.xlu0 %5295, %v5287
        %v5297 = vpop.permute.xlu0 %5296
        %5300 = vset.pattern.permute.xlu0 0
        %5301 = vperm.xlu0 %5300, %v5288
        %v5302 = vpop.permute.xlu0 %5301
        %v5304 = vadd.f32 %v5282, %v5292
        %v5305 = vadd.f32 %v5283, %v5297
        %v5306 = vadd.f32 %v5284, %v5302
        %5310 = vrot.lane.b32.xlu0 %v5304, 127
        %v5311 = vpop.permute.xlu0 %5310
        %5312 = vrot.lane.b32.xlu0 %v5305, 127
        %v5313 = vpop.permute.xlu0 %5312
        %5314 = vrot.lane.b32.xlu0 %v5306, 127
        %v5315 = vpop.permute.xlu0 %5314
        %v5319 = vmax.f32 %v5304, %v5311
        %v5320 = vmax.f32 %v5305, %v5313
        %v5321 = vmax.f32 %v5306, %v5315
        %5322 = vrot.lane.b32.xlu0 %v5304, 116
        %v5323 = vpop.permute.xlu0 %5322
        %5324 = vrot.lane.b32.xlu0 %v5305, 116
        %v5325 = vpop.permute.xlu0 %5324
        %5326 = vrot.lane.b32.xlu0 %v5306, 116
        %v5327 = vpop.permute.xlu0 %5326
        %v5331 = vmax.f32 %v5319, %v5323
        %v5332 = vmax.f32 %v5320, %v5325
        %v5333 = vmax.f32 %v5321, %v5327
        %5334 = vrot.lane.b32.xlu0 %v5304, 115
        %v5335 = vpop.permute.xlu0 %5334
        %5336 = vrot.lane.b32.xlu0 %v5305, 115
        %v5337 = vpop.permute.xlu0 %5336
        %5338 = vrot.lane.b32.xlu0 %v5306, 115
        %v5339 = vpop.permute.xlu0 %5338
        %v5343 = vmax.f32 %v5331, %v5335
        %v5344 = vmax.f32 %v5332, %v5337
        %v5345 = vmax.f32 %v5333, %v5339
        %v5346 = vld [vmem:[%s16] sm:$0xff]
        %v5347 = vld [vmem:[%s16 + $0x8] sm:$0xff]
        %v5348 = vld [vmem:[%s16 + $0x10] sm:$0xff]
        %v5349 = vld [vmem:[%s16 + $0x18] sm:$0xff]
        %v5350 = vld [vmem:[%s16 + $0x20] sm:$0xff]
        %v5351 = vld [vmem:[%s16 + $0x28] sm:$0xff]
        %v5352 = vld [vmem:[%s16 + $0x30] sm:$0xff]
        %v5353 = vld [vmem:[%s16 + $0x38] sm:$0xff]
        %v5354 = vld [vmem:[%s16 + $0x40] sm:$0xff]
        %v5355 = vld [vmem:[%s16 + $0x48] sm:$0xff]
        %vm5356 = vcmask 654336
        %v5358 = vsel %vm5356, %v5343, 0
        %v5361 = vsel %vm5356, %v5344, 0
        %v5364 = vsel %vm5356, %v5345, 0
        %5366 = vmatpush.msra.mxu0 0.0
        %5367 = vmatpush.msra.mxu0 0.0
        %5368 = vmatpush.msra.mxu0 0.0
        %5369 = vmatpush.msra.mxu0 0.0
        %5370 = vmatpush.msra.mxu0 0.0
        %5371 = vmatpush.msra.mxu0 0.0
        %5372 = vmatpush.msra.mxu0 %v5355
        %5373 = vmatpush.msra.mxu0 %v5354
        %5374 = vmatpush.msra.mxu0 %v5353
        %5375 = vmatpush.msra.mxu0 %v5352
        %5376 = vmatpush.msra.mxu0 %v5351
        %5377 = vmatpush.msra.mxu0 %v5350
        %5378 = vmatpush.msra.mxu0 %v5349
        %5379 = vmatpush.msra.mxu0 %v5348
        %5380 = vmatpush.msra.mxu0 %v5347
        %5381 = vmatpush.msra.mxu0 %v5346
        %5382 = vmatmul.f32.gmra.mxu0 %v5358
        %v5383 = vpop.f32.mrf.mxu0
        %v5384 = vadd.f32 0.0, %v5383
        %5385 = vmatmul.f32.gmra.mxu0 %v5361
        %v5386 = vpop.f32.mrf.mxu0
        %v5387 = vadd.f32 0.0, %v5386
        %5388 = vmatmul.f32.gmra.mxu0 %v5364
        %v5389 = vpop.f32.mrf.mxu0
        %v5390 = vadd.f32 0.0, %v5389
        %5391 = vdwg.mxu0
        %v5392 = vld [vmem:[#allocation15] sm:$0xff]
        %v5393 = vld [vmem:[#allocation15 + $0x8] sm:$0xff]
        %vm5394 = vcmask 162816
        %v5396 = vsel %vm5394, %v5392, 0
        %v5399 = vsel %vm5394, %v5393, 0
        %vm5401 = vcmask 1043456
        %v5403 = vsel %vm5401, %v5390, 0
        %5405 = vmatpush.msra.mxu0 0.0
        %5406 = vmatpush.msra.mxu0 0.0
        %5407 = vmatpush.msra.mxu0 0.0
        %5408 = vmatpush.msra.mxu0 0.0
        %5409 = vmatpush.msra.mxu0 0.0
        %5410 = vmatpush.msra.mxu0 0.0
        %5411 = vmatpush.msra.mxu0 0.0
        %5412 = vmatpush.msra.mxu0 0.0
        %5413 = vmatpush.msra.mxu0 0.0
        %5414 = vmatpush.msra.mxu0 0.0
        %5415 = vmatpush.msra.mxu0 0.0
        %5416 = vmatpush.msra.mxu0 0.0
        %5417 = vmatpush.msra.mxu0 0.0
        %5418 = vmatpush.msra.mxu0 %v5403
        %5419 = vmatpush.msra.mxu0 %v5387
        %5420 = vmatpush.msra.mxu0 %v5384
        %5421 = vmatmul.f32.gmra.mxu0 %v5396
        %v5422 = vpop.f32.mrf.mxu0
        %v5423 = vadd.f32 0.0, %v5422
        %5424 = vmatmul.f32.gmra.mxu0 %v5399
        %v5425 = vpop.f32.mrf.mxu0
        %v5426 = vadd.f32 0.0, %v5425
        %5427 = vdwg.mxu0
        %v5428 = vld [vmem:[#allocation16] sm:$0xff]
        %v5429 = vld [vmem:[#allocation16 + $0x8] sm:$0xff]
        %5431 = vset.pattern.permute.xlu0 0
        %5432 = vperm.xlu0 %5431, %v5428
        %v5433 = vpop.permute.xlu0 %5432
        %5436 = vset.pattern.permute.xlu0 0
        %5437 = vperm.xlu0 %5436, %v5429
        %v5438 = vpop.permute.xlu0 %5437
        %v5440 = vmul.f32 %v5423, %v5433
        %v5441 = vmul.f32 %v5426, %v5438
        %s5442 = scalar_lea.vmem [#allocation16], 16
        %v5443 = vld [vmem:[%s5442] sm:$0xff]
        %v5444 = vld [vmem:[%s5442 + $0x8] sm:$0xff]
        %5446 = vset.pattern.permute.xlu0 0
        %5447 = vperm.xlu0 %5446, %v5443
        %v5448 = vpop.permute.xlu0 %5447
        %5451 = vset.pattern.permute.xlu0 0
        %5452 = vperm.xlu0 %5451, %v5444
        %v5453 = vpop.permute.xlu0 %5452
        %v5455 = vadd.f32 %v5440, %v5448
        %v5456 = vadd.f32 %v5441, %v5453
        %v5457 = vld [vmem:[#allocation18] sm:$0xff]
        %v5458 = vld [vmem:[#allocation18 + $0x8] sm:$0x3]
        %s5459 = scalar_lea.vmem [#allocation18], 16
        %v5460 = vld [vmem:[%s5459] sm:$0xff]
        %v5461 = vld [vmem:[%s5459 + $0x8] sm:$0x3]
        %5464 = vrot.lane.b32.xlu0 %v5455, 127
        %v5465 = vpop.permute.xlu0 %5464
        %5466 = vrot.lane.b32.xlu0 %v5456, 127
        %v5467 = vpop.permute.xlu0 %5466
        %v5471 = vsel %vm4397, %v5460, 0
        %v5474 = vsel %vm4397, %v5461, 0
        %5476 = vmatpush.msra.mxu0 0.0
        %5477 = vmatpush.msra.mxu0 0.0
        %5478 = vmatpush.msra.mxu0 0.0
        %5479 = vmatpush.msra.mxu0 0.0
        %5480 = vmatpush.msra.mxu0 0.0
        %5481 = vmatpush.msra.mxu0 0.0
        %5482 = vmatpush.msra.mxu0 0.0
        %5483 = vmatpush.msra.mxu0 0.0
        %5484 = vmatpush.msra.mxu0 0.0
        %5485 = vmatpush.msra.mxu0 0.0
        %5486 = vmatpush.msra.mxu0 0.0
        %5487 = vmatpush.msra.mxu0 0.0
        %5488 = vmatpush.msra.mxu0 0.0
        %5489 = vmatpush.msra.mxu0 0.0
        %5490 = vmatpush.msra.mxu0 %v5467
        %5491 = vmatpush.msra.mxu0 %v5465
        %5492 = vmatmul.f32.gmra.mxu0 %v5471
        %v5493 = vpop.f32.mrf.mxu0
        %v5494 = vadd.f32 0.0, %v5493
        %5495 = vmatmul.f32.gmra.mxu0 %v5474
        %v5496 = vpop.f32.mrf.mxu0
        %v5497 = vadd.f32 0.0, %v5496
        %5498 = vdwg.mxu0
        %v5500 = vsel %vm4397, %v5457, 0
        %v5503 = vsel %vm4397, %v5458, 0
        %5505 = vmatpush.msra.mxu0 0.0
        %5506 = vmatpush.msra.mxu0 0.0
        %5507 = vmatpush.msra.mxu0 0.0
        %5508 = vmatpush.msra.mxu0 0.0
        %5509 = vmatpush.msra.mxu0 0.0
        %5510 = vmatpush.msra.mxu0 0.0
        %5511 = vmatpush.msra.mxu0 0.0
        %5512 = vmatpush.msra.mxu0 0.0
        %5513 = vmatpush.msra.mxu0 0.0
        %5514 = vmatpush.msra.mxu0 0.0
        %5515 = vmatpush.msra.mxu0 0.0
        %5516 = vmatpush.msra.mxu0 0.0
        %5517 = vmatpush.msra.mxu0 0.0
        %5518 = vmatpush.msra.mxu0 0.0
        %5519 = vmatpush.msra.mxu0 %v5456
        %5520 = vmatpush.msra.mxu0 %v5455
        %5521 = vmatmul.f32.gmra.mxu0 %v5500
        %v5522 = vpop.f32.mrf.mxu0
        %v5523 = vadd.f32 %v5494, %v5522
        %5524 = vmatmul.f32.gmra.mxu0 %v5503
        %v5525 = vpop.f32.mrf.mxu0
        %v5526 = vadd.f32 %v5497, %v5525
        %5527 = vdwg.mxu0
        %s5528 = scalar_lea.vmem [#allocation18], 32
        %v5529 = vld [vmem:[%s5528] sm:$0xff]
        %v5530 = vld [vmem:[%s5528 + $0x8] sm:$0x3]
        %5531 = vrot.lane.b32.xlu0 %v5455, 126
        %v5532 = vpop.permute.xlu0 %5531
        %5533 = vrot.lane.b32.xlu0 %v5456, 126
        %v5534 = vpop.permute.xlu0 %5533
        %v5538 = vsel %vm4397, %v5529, 0
        %v5541 = vsel %vm4397, %v5530, 0
        %5543 = vmatpush.msra.mxu0 0.0
        %5544 = vmatpush.msra.mxu0 0.0
        %5545 = vmatpush.msra.mxu0 0.0
        %5546 = vmatpush.msra.mxu0 0.0
        %5547 = vmatpush.msra.mxu0 0.0
        %5548 = vmatpush.msra.mxu0 0.0
        %5549 = vmatpush.msra.mxu0 0.0
        %5550 = vmatpush.msra.mxu0 0.0
        %5551 = vmatpush.msra.mxu0 0.0
        %5552 = vmatpush.msra.mxu0 0.0
        %5553 = vmatpush.msra.mxu0 0.0
        %5554 = vmatpush.msra.mxu0 0.0
        %5555 = vmatpush.msra.mxu0 0.0
        %5556 = vmatpush.msra.mxu0 0.0
        %5557 = vmatpush.msra.mxu0 %v5534
        %5558 = vmatpush.msra.mxu0 %v5532
        %5559 = vmatmul.f32.gmra.mxu0 %v5538
        %v5560 = vpop.f32.mrf.mxu0
        %v5561 = vadd.f32 0.0, %v5560
        %5562 = vmatmul.f32.gmra.mxu0 %v5541
        %v5563 = vpop.f32.mrf.mxu0
        %v5564 = vadd.f32 0.0, %v5563
        %5565 = vdwg.mxu0
        %v5566 = vadd.f32 %v5523, %v5561
        %v5567 = vadd.f32 %v5526, %v5564
        %s5568 = scalar_lea.vmem [#allocation18], 48
        %v5569 = vld [vmem:[%s5568] sm:$0xff]
        %v5570 = vld [vmem:[%s5568 + $0x8] sm:$0x3]
        %5571 = vrot.lane.b32.xlu0 %v5455, 124
        %v5572 = vpop.permute.xlu0 %5571
        %5573 = vrot.lane.b32.xlu0 %v5456, 124
        %v5574 = vpop.permute.xlu0 %5573
        %v5578 = vsel %vm4397, %v5569, 0
        %v5581 = vsel %vm4397, %v5570, 0
        %5583 = vmatpush.msra.mxu0 0.0
        %5584 = vmatpush.msra.mxu0 0.0
        %5585 = vmatpush.msra.mxu0 0.0
        %5586 = vmatpush.msra.mxu0 0.0
        %5587 = vmatpush.msra.mxu0 0.0
        %5588 = vmatpush.msra.mxu0 0.0
        %5589 = vmatpush.msra.mxu0 0.0
        %5590 = vmatpush.msra.mxu0 0.0
        %5591 = vmatpush.msra.mxu0 0.0
        %5592 = vmatpush.msra.mxu0 0.0
        %5593 = vmatpush.msra.mxu0 0.0
        %5594 = vmatpush.msra.mxu0 0.0
        %5595 = vmatpush.msra.mxu0 0.0
        %5596 = vmatpush.msra.mxu0 0.0
        %5597 = vmatpush.msra.mxu0 %v5574
        %5598 = vmatpush.msra.mxu0 %v5572
        %5599 = vmatmul.f32.gmra.mxu0 %v5578
        %v5600 = vpop.f32.mrf.mxu0
        %v5601 = vadd.f32 0.0, %v5600
        %5602 = vmatmul.f32.gmra.mxu0 %v5581
        %v5603 = vpop.f32.mrf.mxu0
        %v5604 = vadd.f32 0.0, %v5603
        %5605 = vdwg.mxu0
        %v5606 = vadd.f32 %v5566, %v5601
        %v5607 = vadd.f32 %v5567, %v5604
        %s5608 = scalar_lea.vmem [#allocation18], 64
        %v5609 = vld [vmem:[%s5608] sm:$0xff]
        %v5610 = vld [vmem:[%s5608 + $0x8] sm:$0x3]
        %5611 = vrot.lane.b32.xlu0 %v5455, 123
        %v5612 = vpop.permute.xlu0 %5611
        %5613 = vrot.lane.b32.xlu0 %v5456, 123
        %v5614 = vpop.permute.xlu0 %5613
        %v5618 = vsel %vm4397, %v5609, 0
        %v5621 = vsel %vm4397, %v5610, 0
        %5623 = vmatpush.msra.mxu0 0.0
        %5624 = vmatpush.msra.mxu0 0.0
        %5625 = vmatpush.msra.mxu0 0.0
        %5626 = vmatpush.msra.mxu0 0.0
        %5627 = vmatpush.msra.mxu0 0.0
        %5628 = vmatpush.msra.mxu0 0.0
        %5629 = vmatpush.msra.mxu0 0.0
        %5630 = vmatpush.msra.mxu0 0.0
        %5631 = vmatpush.msra.mxu0 0.0
        %5632 = vmatpush.msra.mxu0 0.0
        %5633 = vmatpush.msra.mxu0 0.0
        %5634 = vmatpush.msra.mxu0 0.0
        %5635 = vmatpush.msra.mxu0 0.0
        %5636 = vmatpush.msra.mxu0 0.0
        %5637 = vmatpush.msra.mxu0 %v5614
        %5638 = vmatpush.msra.mxu0 %v5612
        %5639 = vmatmul.f32.gmra.mxu0 %v5618
        %v5640 = vpop.f32.mrf.mxu0
        %v5641 = vadd.f32 0.0, %v5640
        %5642 = vmatmul.f32.gmra.mxu0 %v5621
        %v5643 = vpop.f32.mrf.mxu0
        %v5644 = vadd.f32 0.0, %v5643
        %5645 = vdwg.mxu0
        %v5646 = vadd.f32 %v5606, %v5641
        %v5647 = vadd.f32 %v5607, %v5644
        %s5648 = scalar_lea.vmem [#allocation18], 80
        %v5649 = vld [vmem:[%s5648] sm:$0xff]
        %v5650 = vld [vmem:[%s5648 + $0x8] sm:$0x3]
        %5651 = vrot.lane.b32.xlu0 %v5455, 122
        %v5652 = vpop.permute.xlu0 %5651
        %5653 = vrot.lane.b32.xlu0 %v5456, 122
        %v5654 = vpop.permute.xlu0 %5653
        %v5658 = vsel %vm4397, %v5649, 0
        %v5661 = vsel %vm4397, %v5650, 0
        %5663 = vmatpush.msra.mxu0 0.0
        %5664 = vmatpush.msra.mxu0 0.0
        %5665 = vmatpush.msra.mxu0 0.0
        %5666 = vmatpush.msra.mxu0 0.0
        %5667 = vmatpush.msra.mxu0 0.0
        %5668 = vmatpush.msra.mxu0 0.0
        %5669 = vmatpush.msra.mxu0 0.0
        %5670 = vmatpush.msra.mxu0 0.0
        %5671 = vmatpush.msra.mxu0 0.0
        %5672 = vmatpush.msra.mxu0 0.0
        %5673 = vmatpush.msra.mxu0 0.0
        %5674 = vmatpush.msra.mxu0 0.0
        %5675 = vmatpush.msra.mxu0 0.0
        %5676 = vmatpush.msra.mxu0 0.0
        %5677 = vmatpush.msra.mxu0 %v5654
        %5678 = vmatpush.msra.mxu0 %v5652
        %5679 = vmatmul.f32.gmra.mxu0 %v5658
        %v5680 = vpop.f32.mrf.mxu0
        %v5681 = vadd.f32 0.0, %v5680
        %5682 = vmatmul.f32.gmra.mxu0 %v5661
        %v5683 = vpop.f32.mrf.mxu0
        %v5684 = vadd.f32 0.0, %v5683
        %5685 = vdwg.mxu0
        %v5686 = vadd.f32 %v5646, %v5681
        %v5687 = vadd.f32 %v5647, %v5684
        %s5688 = scalar_lea.vmem [#allocation18], 96
        %v5689 = vld [vmem:[%s5688] sm:$0xff]
        %v5690 = vld [vmem:[%s5688 + $0x8] sm:$0x3]
        %5691 = vrot.lane.b32.xlu0 %v5455, 120
        %v5692 = vpop.permute.xlu0 %5691
        %5693 = vrot.lane.b32.xlu0 %v5456, 120
        %v5694 = vpop.permute.xlu0 %5693
        %v5698 = vsel %vm4397, %v5689, 0
        %v5701 = vsel %vm4397, %v5690, 0
        %5703 = vmatpush.msra.mxu0 0.0
        %5704 = vmatpush.msra.mxu0 0.0
        %5705 = vmatpush.msra.mxu0 0.0
        %5706 = vmatpush.msra.mxu0 0.0
        %5707 = vmatpush.msra.mxu0 0.0
        %5708 = vmatpush.msra.mxu0 0.0
        %5709 = vmatpush.msra.mxu0 0.0
        %5710 = vmatpush.msra.mxu0 0.0
        %5711 = vmatpush.msra.mxu0 0.0
        %5712 = vmatpush.msra.mxu0 0.0
        %5713 = vmatpush.msra.mxu0 0.0
        %5714 = vmatpush.msra.mxu0 0.0
        %5715 = vmatpush.msra.mxu0 0.0
        %5716 = vmatpush.msra.mxu0 0.0
        %5717 = vmatpush.msra.mxu0 %v5694
        %5718 = vmatpush.msra.mxu0 %v5692
        %5719 = vmatmul.f32.gmra.mxu0 %v5698
        %v5720 = vpop.f32.mrf.mxu0
        %v5721 = vadd.f32 0.0, %v5720
        %5722 = vmatmul.f32.gmra.mxu0 %v5701
        %v5723 = vpop.f32.mrf.mxu0
        %v5724 = vadd.f32 0.0, %v5723
        %5725 = vdwg.mxu0
        %v5726 = vadd.f32 %v5686, %v5721
        %v5727 = vadd.f32 %v5687, %v5724
        %s5728 = scalar_lea.vmem [#allocation18], 112
        %v5729 = vld [vmem:[%s5728] sm:$0xff]
        %v5730 = vld [vmem:[%s5728 + $0x8] sm:$0x3]
        %5731 = vrot.lane.b32.xlu0 %v5455, 119
        %v5732 = vpop.permute.xlu0 %5731
        %5733 = vrot.lane.b32.xlu0 %v5456, 119
        %v5734 = vpop.permute.xlu0 %5733
        %v5738 = vsel %vm4397, %v5729, 0
        %v5741 = vsel %vm4397, %v5730, 0
        %5743 = vmatpush.msra.mxu0 0.0
        %5744 = vmatpush.msra.mxu0 0.0
        %5745 = vmatpush.msra.mxu0 0.0
        %5746 = vmatpush.msra.mxu0 0.0
        %5747 = vmatpush.msra.mxu0 0.0
        %5748 = vmatpush.msra.mxu0 0.0
        %5749 = vmatpush.msra.mxu0 0.0
        %5750 = vmatpush.msra.mxu0 0.0
        %5751 = vmatpush.msra.mxu0 0.0
        %5752 = vmatpush.msra.mxu0 0.0
        %5753 = vmatpush.msra.mxu0 0.0
        %5754 = vmatpush.msra.mxu0 0.0
        %5755 = vmatpush.msra.mxu0 0.0
        %5756 = vmatpush.msra.mxu0 0.0
        %5757 = vmatpush.msra.mxu0 %v5734
        %5758 = vmatpush.msra.mxu0 %v5732
        %5759 = vmatmul.f32.gmra.mxu0 %v5738
        %v5760 = vpop.f32.mrf.mxu0
        %v5761 = vadd.f32 0.0, %v5760
        %5762 = vmatmul.f32.gmra.mxu0 %v5741
        %v5763 = vpop.f32.mrf.mxu0
        %v5764 = vadd.f32 0.0, %v5763
        %5765 = vdwg.mxu0
        %v5766 = vadd.f32 %v5726, %v5761
        %v5767 = vadd.f32 %v5727, %v5764
        %s5768 = scalar_lea.vmem [#allocation18], 128
        %v5769 = vld [vmem:[%s5768] sm:$0xff]
        %v5770 = vld [vmem:[%s5768 + $0x8] sm:$0x3]
        %5771 = vrot.lane.b32.xlu0 %v5455, 118
        %v5772 = vpop.permute.xlu0 %5771
        %5773 = vrot.lane.b32.xlu0 %v5456, 118
        %v5774 = vpop.permute.xlu0 %5773
        %v5778 = vsel %vm4397, %v5769, 0
        %v5781 = vsel %vm4397, %v5770, 0
        %5783 = vmatpush.msra.mxu0 0.0
        %5784 = vmatpush.msra.mxu0 0.0
        %5785 = vmatpush.msra.mxu0 0.0
        %5786 = vmatpush.msra.mxu0 0.0
        %5787 = vmatpush.msra.mxu0 0.0
        %5788 = vmatpush.msra.mxu0 0.0
        %5789 = vmatpush.msra.mxu0 0.0
        %5790 = vmatpush.msra.mxu0 0.0
        %5791 = vmatpush.msra.mxu0 0.0
        %5792 = vmatpush.msra.mxu0 0.0
        %5793 = vmatpush.msra.mxu0 0.0
        %5794 = vmatpush.msra.mxu0 0.0
        %5795 = vmatpush.msra.mxu0 0.0
        %5796 = vmatpush.msra.mxu0 0.0
        %5797 = vmatpush.msra.mxu0 %v5774
        %5798 = vmatpush.msra.mxu0 %v5772
        %5799 = vmatmul.f32.gmra.mxu0 %v5778
        %v5800 = vpop.f32.mrf.mxu0
        %v5801 = vadd.f32 0.0, %v5800
        %5802 = vmatmul.f32.gmra.mxu0 %v5781
        %v5803 = vpop.f32.mrf.mxu0
        %v5804 = vadd.f32 0.0, %v5803
        %5805 = vdwg.mxu0
        %v5806 = vadd.f32 %v5766, %v5801
        %v5807 = vadd.f32 %v5767, %v5804
        %v5808 = vmax.f32 %v5806, 0.0
        %v5809 = vmax.f32 %v5807, 0.0
        %v5810 = vld [vmem:[#allocation19] sm:$0xff]
        %v5811 = vld [vmem:[#allocation19 + $0x8] sm:$0x3]
        %5813 = vset.pattern.permute.xlu0 0
        %5814 = vperm.xlu0 %5813, %v5810
        %v5815 = vpop.permute.xlu0 %5814
        %5818 = vset.pattern.permute.xlu0 0
        %5819 = vperm.xlu0 %5818, %v5811
        %v5820 = vpop.permute.xlu0 %5819
        %v5822 = vmul.f32 %v5808, %v5815
        %v5823 = vmul.f32 %v5809, %v5820
        %s5824 = scalar_lea.vmem [#allocation19], 16
        %v5825 = vld [vmem:[%s5824] sm:$0xff]
        %v5826 = vld [vmem:[%s5824 + $0x8] sm:$0x3]
        %5828 = vset.pattern.permute.xlu0 0
        %5829 = vperm.xlu0 %5828, %v5825
        %v5830 = vpop.permute.xlu0 %5829
        %5833 = vset.pattern.permute.xlu0 0
        %5834 = vperm.xlu0 %5833, %v5826
        %v5835 = vpop.permute.xlu0 %5834
        %v5837 = vadd.f32 %v5822, %v5830
        %v5838 = vadd.f32 %v5823, %v5835
        %5841 = vrot.lane.b32.xlu0 %v5837, 127
        %v5842 = vpop.permute.xlu0 %5841
        %5843 = vrot.lane.b32.xlu0 %v5838, 127
        %v5844 = vpop.permute.xlu0 %5843
        %v5847 = vadd.f32 %v5837, %v5842
        %v5848 = vadd.f32 %v5838, %v5844
        %5849 = vrot.lane.b32.xlu0 %v5837, 124
        %v5850 = vpop.permute.xlu0 %5849
        %5851 = vrot.lane.b32.xlu0 %v5838, 124
        %v5852 = vpop.permute.xlu0 %5851
        %v5855 = vadd.f32 %v5847, %v5850
        %v5856 = vadd.f32 %v5848, %v5852
        %5857 = vrot.lane.b32.xlu0 %v5837, 123
        %v5858 = vpop.permute.xlu0 %5857
        %5859 = vrot.lane.b32.xlu0 %v5838, 123
        %v5860 = vpop.permute.xlu0 %5859
        %v5863 = vadd.f32 %v5855, %v5858
        %v5864 = vadd.f32 %v5856, %v5860
        %v5865 = vmul.f32 %v5863, 0.25
        %v5866 = vmul.f32 %v5864, 0.25
        %vm5867 = vcmask 7168
        %v5868 = vsel %vm5867, %v5865, -inf
        %vm5869 = vcmask 1024
        %v5870 = vsel %vm5869, %v5866, -inf
        %v5871 = vmax.f32 %v5868, %v5870
        %v5872 = vrot.slane %v5871, 4
        %v5873 = vmax.f32 %v5871, %v5872
        %v5874 = vrot.slane %v5873, 2
        %v5875 = vmax.f32 %v5873, %v5874
        %v5876 = vrot.slane %v5875, 1
        %v5877 = vmax.f32 %v5875, %v5876
        %v5878 = vsub.f32 %v5865, %v5877
        %v5879 = vsub.f32 %v5866, %v5877
        %v5880 = vmul.f32 %v5878, 1.442695
        %v5881 = vpow.pop %v5880
        %v5882 = vmul.f32 %v5879, 1.442695
        %v5883 = vpow.pop %v5882
        %v5884 = vsel %vm5867, %v5881, 0.0
        %v5885 = vsel %vm5869, %v5883, 0.0
        %v5886 = vadd.f32 %v5884, %v5885
        %v5887 = vrot.slane %v5886, 4
        %v5888 = vadd.f32 %v5886, %v5887
        %v5889 = vrot.slane %v5888, 2
        %v5890 = vadd.f32 %v5888, %v5889
        %v5891 = vrot.slane %v5890, 1
        %v5892 = vadd.f32 %v5890, %v5891
        %v5893 = vlog2.pop %v5892
        %v5894 = vmul.f32 %v5893, 0.6931472
        %v5895 = vsub.f32 %v5878, %v5894
        %v5896 = vsub.f32 %v5879, %v5894
        %5897 = vst.msk [vmem:[%s761] sm:$0xff] %vm5867, %v5895
        %5898 = vst.msk [vmem:[%s761 + $0x8] sm:$0x3] %vm5869, %v5896
        %p5899 = scmp.lt.s32.totalorder %s35, 1
        %s5900 = scalar_select %p5899, %s35, 1
        %s5901 = smul.addr %s5900, 2
        %s5902 = smul.addr %s5901, 8
        %s5903 = scalar_lea.vmem %s17, %s5902
        // Predicated region
        $region141: #{_lambda_.1} parent=87 // pred_check
          %p5904 = pneg %p415
        $region142: #{_lambda_.1} parent=87 // pred_check_branch
          %5906 = sbr.rel (%p5904) target = $region144
        $region143: #{_lambda_.1} parent=87 // pred_region
          _
        $region144: #{_lambda_.1} parent=87 // pred_fallthru
          _
      $region88: #{_lambda_.1} parent=5 // pred_fallthru
        _
      %p5907 = scmp.le.s32.totalorder 2, %s30
      // Predicated region
      $region145: #{_lambda_.1} parent=5 // pred_check
        %p5908 = pneg %p5907
      $region146: #{_lambda_.1} parent=5 // pred_check_branch
        %5910 = sbr.rel (%p5908) target = $region148
      $region147: #{_lambda_.1} parent=5 // pred_region
        %s5911 = ssub.s32 %s30, 2
        // Predicated region
        $region149: #{_lambda_.1} parent=147 // pred_check
          %p5912 = pneg %p421
        $region150: #{_lambda_.1} parent=147 // pred_check_branch
          %5914 = sbr.rel (%p5912) target = $region152
        $region151: #{_lambda_.1} parent=147 // pred_region
          %p5915 = scmp.lt.s32.totalorder %s36, 1
          %s5916 = scalar_select %p5915, %s36, 1
          %s5917 = smul.addr %s5916, 2
          %s5918 = smul.addr %s5917, 8
          %s5919 = scalar_lea.vmem %s17, %s5918
        $region152: #{_lambda_.1} parent=147 // pred_fallthru
          _
      $region148: #{_lambda_.1} parent=5 // pred_fallthru
        _
    $region6: #{_lambda_.1} parent=1 // loop_footer
      %s34 = sadd.s32 1, %s30
    $region7: #{_lambda_.1} parent=1 // loop_footer_branch
      %29 = sbr.rel target = $region3
    $region8: #{_lambda_.1} parent=1 // loop_exit
      _
    %5920 = vsyncpa [#allocation3], 1
    %s5921 = scalar_lea.sflag [#allocation3], 1
    %5922 = vsyncpa %s5921, 1
    %5923 = vsyncpa [#allocation5], 1
    %5924 = vsyncpa [#allocation8], 1
    %5925 = vsyncpa [#allocation11], 1
    %5926 = vsyncpa [#allocation14], 1
    %5927 = vsyncpa [#allocation17], 1
    %5928 = vsyncpa [#allocation20], 1

</llo_original>
